<compile_context>
chip_gen: v6e
topology: v6e:2x2x1
jax: 0.10.0
libtpu: 0.0.40
codegen_flags: <defaults>
</compile_context>

<pallas_src>
import jax
import jax.numpy as jnp
from jax.experimental import pallas as pl
from jax.experimental.pallas import tpu as pltpu

# Logical (torch) dims and lane-dense padded dims.
D_IN, D_HID, D_OUT = 28 * 28, 1000, 10
D_HID_P, D_OUT_P = 1024, 128
BT_MAX = 1024   # max batch-tile rows per grid step


def _round_up(x, m):
    return (x + m - 1) // m * m


def _mlp_kernel(x_ref, w1_ref, w2_ref, w3_ref, out_ref, s1_ref, s2_ref):
    """One batch tile of the fused 3-layer MLP.

    x_ref  : (bt, 784)   bf16     w1_ref: (784, 1024)  bf16
    w2_ref : (1024,1024) bf16     w3_ref: (1024, 128)  bf16
    out_ref: (bt, 128)   f32
    s1_ref, s2_ref: (1, 1, 1024) f32 per-tile partial sums of relu(fc1) / relu(fc2)
    """
    h1 = jnp.maximum(
        jnp.dot(x_ref[...], w1_ref[...], preferred_element_type=jnp.float32), 0.0)
    s1_ref[...] = jnp.sum(h1, axis=0, keepdims=True)[None]

    h2 = jnp.maximum(
        jnp.dot(h1.astype(jnp.bfloat16), w2_ref[...],
                preferred_element_type=jnp.float32), 0.0)
    s2_ref[...] = jnp.sum(h2, axis=0, keepdims=True)[None]

    out_ref[...] = jnp.dot(h2.astype(jnp.bfloat16), w3_ref[...],
                           preferred_element_type=jnp.float32)


def prepare_params(w1, w2, w3):
    """One-time (offline) weight prep: torch (out, in) f32 -> (in, out) bf16, lane-padded."""
    w1p = jnp.zeros((D_IN, D_HID_P), jnp.bfloat16).at[:, :D_HID].set(
        w1.T.astype(jnp.bfloat16))
    w2p = jnp.zeros((D_HID_P, D_HID_P), jnp.bfloat16).at[:D_HID, :D_HID].set(
        w2.T.astype(jnp.bfloat16))
    w3p = jnp.zeros((D_HID_P, D_OUT_P), jnp.bfloat16).at[:D_HID, :D_OUT].set(
        w3.T.astype(jnp.bfloat16))
    return w1p, w2p, w3p


def _pick_batch_tile(B):
    """Large tiles to amortize per-step overhead, while minimizing batch padding."""
    if B <= 256:
        return max(16, _round_up(B, 16))            # single tile, bf16-sublane friendly
    n_tiles = -(-B // BT_MAX)                       # tile count with bt <= 1024
    return max(256, _round_up(-(-B // n_tiles), 128))


def base_model_forward(x_nchw, w1p, w2p, w3p):
    """x_nchw: (B, 1, 28, 28) f32. Weights already prepared by prepare_params.

    Returns (output (B,10) f32, [mean0 (1,784), mean1 (1,1000), mean2 (1,1000)]).
    """
    B = x_nchw.shape[0]
    x_f32 = x_nchw.reshape(B, D_IN).astype(jnp.float32)     # penultimate: flatten

    # h_list[0]: exact f32 feature mean, computed in the wrapper (kernel consumes bf16).
    m0 = jnp.mean(x_f32, axis=0, keepdims=True)

    x_bf16 = x_f32.astype(jnp.bfloat16)
    bt = _pick_batch_tile(B)
    b_pad = _round_up(B, bt)
    n_tiles = b_pad // bt
    if b_pad != B:
        # Zero rows: relu(0 @ W) == 0, so partial sums are unaffected; padded output rows
        # are discarded below.
        x_bf16 = jnp.pad(x_bf16, ((0, b_pad - B), (0, 0)))

    flops = 2 * b_pad * (D_IN * D_HID_P + D_HID_P * D_HID_P + D_HID_P * D_OUT_P)
    bytes_accessed = (x_bf16.size * 2
                      + (w1p.size + w2p.size + w3p.size) * 2
                      + b_pad * D_OUT_P * 4
                      + 2 * n_tiles * D_HID_P * 4)

    out, s1, s2 = pl.pallas_call(
        _mlp_kernel,
        grid=(n_tiles,),
        in_specs=[
            # Activations: pipelined per batch tile, full (unpadded) feature dim.
            pl.BlockSpec((bt, D_IN), lambda i: (i, 0)),
            # Weights: constant index_map -> DMA'd once, VMEM-resident across tiles.
            pl.BlockSpec((D_IN, D_HID_P), lambda i: (0, 0)),
            pl.BlockSpec((D_HID_P, D_HID_P), lambda i: (0, 0)),
            pl.BlockSpec((D_HID_P, D_OUT_P), lambda i: (0, 0)),
        ],
        out_specs=(
            pl.BlockSpec((bt, D_OUT_P), lambda i: (i, 0)),
            # Per-tile partial sums: disjoint blocks -> safe with a 'parallel' batch axis.
            pl.BlockSpec((1, 1, D_HID_P), lambda i: (i, 0, 0)),
            pl.BlockSpec((1, 1, D_HID_P), lambda i: (i, 0, 0)),
        ),
        out_shape=(
            jax.ShapeDtypeStruct((b_pad, D_OUT_P), jnp.float32),
            jax.ShapeDtypeStruct((n_tiles, 1, D_HID_P), jnp.float32),
            jax.ShapeDtypeStruct((n_tiles, 1, D_HID_P), jnp.float32),
        ),
        compiler_params=pltpu.CompilerParams(
            dimension_semantics=("parallel",),        # 2-TC sharding on v7x; no-op on v5e/v6e
            vmem_limit_bytes=32 << 20,                # footprint ~20 MiB at bt=1024
        ),
        cost_estimate=pl.CostEstimate(
            flops=flops, transcendentals=0, bytes_accessed=bytes_accessed),
    )(x_bf16, w1p, w2p, w3p)

    inv_b = 1.0 / B
    output = out[:B, :D_OUT]
    m1 = (jnp.sum(s1, axis=0) * inv_b)[:, :D_HID]
    m2 = (jnp.sum(s2, axis=0) * inv_b)[:, :D_HID]
    return output, [m0, m1, m2]


def _xavier_normal(key, shape):
    # torch.nn.init.xavier_normal_ on a Linear weight (out, in): std = sqrt(2/(fan_in+fan_out))
    fan_out, fan_in = shape
    std = (2.0 / (fan_in + fan_out)) ** 0.5
    return std * jax.random.normal(key, shape, dtype=jnp.float32)


if __name__ == "__main__":
    key = jax.random.PRNGKey(0)
    kx, k1, k2, k3 = jax.random.split(key, 4)

    B = 8
    x = jax.random.normal(kx, (B, 1, 28, 28), dtype=jnp.float32)   # MNIST-shaped NCHW input

    w1 = _xavier_normal(k1, (D_HID, D_IN))    # fc1.weight (torch layout)
    w2 = _xavier_normal(k2, (D_HID, D_HID))   # fc2.weight
    w3 = _xavier_normal(k3, (D_OUT, D_HID))   # fc3.weight

    w1p, w2p, w3p = prepare_params(w1, w2, w3)   # one-time offline prep

    output, h_list = base_model_forward(x, w1p, w2p, w3p)
    jax.block_until_ready((output, h_list))

    # Reference with identical bf16-input / f32-accumulate quantization.
    dn = (((1,), (1,)), ((), ()))
    xf = x.reshape(B, -1)
    xb = xf.astype(jnp.bfloat16)
    h1 = jnp.maximum(jax.lax.dot_general(xb, w1.astype(jnp.bfloat16), dn,
                                         preferred_element_type=jnp.float32), 0.0)
    h2 = jnp.maximum(jax.lax.dot_general(h1.astype(jnp.bfloat16), w2.astype(jnp.bfloat16), dn,
                                         preferred_element_type=jnp.float32), 0.0)
    ref_out = jax.lax.dot_general(h2.astype(jnp.bfloat16), w3.astype(jnp.bfloat16), dn,
                                  preferred_element_type=jnp.float32)

    assert jnp.allclose(output, ref_out, atol=5e-3, rtol=5e-3)
    assert jnp.allclose(h_list[0], jnp.mean(xf, 0, keepdims=True), atol=1e-5)
    assert jnp.allclose(h_list[1], jnp.mean(h1, 0, keepdims=True), atol=5e-3, rtol=5e-3)
    assert jnp.allclose(h_list[2], jnp.mean(h2, 0, keepdims=True), atol=5e-3, rtol=5e-3)
    assert output.shape == (B, D_OUT)
    assert h_list[0].shape == (1, D_IN) and h_list[1].shape == (1, D_HID)
    assert h_list[2].shape == (1, D_HID)

    print("KERNEL_OK")
</pallas_src>

<mosaic_0001>
module attributes {stable_mosaic.version = 11 : i64} {
  func.func @_mlp_kernel(%arg0: i32, %arg1: memref<16x784xbf16, #tpu.memory_space<vmem>>, %arg2: memref<784x1024xbf16, #tpu.memory_space<vmem>>, %arg3: memref<1024x1024xbf16, #tpu.memory_space<vmem>>, %arg4: memref<1024x128xbf16, #tpu.memory_space<vmem>>, %arg5: memref<16x128xf32, #tpu.memory_space<vmem>>, %arg6: memref<1x1x1024xf32, #tpu.memory_space<vmem>>, %arg7: memref<1x1x1024xf32, #tpu.memory_space<vmem>>) attributes {dimension_semantics = [#tpu.dimension_semantics<parallel>], iteration_bounds = array<i64: 1>, scalar_prefetch = 0 : i64, scratch_operands = 0 : i64, tpu.core_type = #tpu.core_type<tc>, window_params = [{transform_indices = @transform_0, window_bounds = array<i64: 16, 784>}, {pipeline_mode = #tpu.pipeline_mode<synchronous>, transform_indices = @transform_1, window_bounds = array<i64: 784, 1024>}, {pipeline_mode = #tpu.pipeline_mode<synchronous>, transform_indices = @transform_2, window_bounds = array<i64: 1024, 1024>}, {pipeline_mode = #tpu.pipeline_mode<synchronous>, transform_indices = @transform_3, window_bounds = array<i64: 1024, 128>}, {transform_indices = @transform_4, window_bounds = array<i64: 16, 128>}, {transform_indices = @transform_5, window_bounds = array<i64: 1, 1, 1024>}, {transform_indices = @transform_6, window_bounds = array<i64: 1, 1, 1024>}]} {
    %c0 = arith.constant 0 : index
    %c0_0 = arith.constant 0 : index
    %0 = vector.load %arg1[%c0, %c0_0] : memref<16x784xbf16, #tpu.memory_space<vmem>>, vector<16x784xbf16>
    %c0_1 = arith.constant 0 : index
    %c0_2 = arith.constant 0 : index
    %1 = vector.load %arg2[%c0_1, %c0_2] : memref<784x1024xbf16, #tpu.memory_space<vmem>>, vector<784x1024xbf16>
    %cst = arith.constant dense<0.000000e+00> : vector<16x1024xf32>
    %2 = tpu.matmul %0, %1, %cst {dimension_numbers = #tpu.dot_dimension_numbers<[1], [0], [0], [1], [0, 0, 1, 1], [], []>} : vector<16x784xbf16>, vector<784x1024xbf16>, vector<16x1024xf32> -> vector<16x1024xf32>
    %cst_3 = arith.constant 0.000000e+00 : f32
    %3 = vector.broadcast %cst_3 : f32 to vector<16x1024xf32>
    %4 = arith.maximumf %2, %3 : vector<16x1024xf32>
    %cst_4 = arith.constant dense<0.000000e+00> : vector<1024xf32>
    %5 = vector.multi_reduction <add>, %4, %cst_4 [0] : vector<16x1024xf32> to vector<1024xf32>
    %6 = vector.shape_cast %5 : vector<1024xf32> to vector<1x1024xf32>
    %7 = vector.shape_cast %6 : vector<1x1024xf32> to vector<1x1x1024xf32>
    %c0_5 = arith.constant 0 : index
    %c0_6 = arith.constant 0 : index
    %c0_7 = arith.constant 0 : index
    %8 = vector.load %arg6[%c0_5, %c0_6, %c0_7] : memref<1x1x1024xf32, #tpu.memory_space<vmem>>, vector<1x1x1024xf32>
    tpu.vector_store %arg6[%c0_5, %c0_6, %c0_7], %7 {strides = array<i32>} : memref<1x1x1024xf32, #tpu.memory_space<vmem>>, vector<1x1x1024xf32>,
    %9 = arith.truncf %4 : vector<16x1024xf32> to vector<16x1024xbf16>
    %c0_8 = arith.constant 0 : index
    %c0_9 = arith.constant 0 : index
    %10 = vector.load %arg3[%c0_8, %c0_9] : memref<1024x1024xbf16, #tpu.memory_space<vmem>>, vector<1024x1024xbf16>
    %cst_10 = arith.constant dense<0.000000e+00> : vector<16x1024xf32>
    %11 = tpu.matmul %9, %10, %cst_10 {dimension_numbers = #tpu.dot_dimension_numbers<[1], [0], [0], [1], [0, 0, 1, 1], [], []>} : vector<16x1024xbf16>, vector<1024x1024xbf16>, vector<16x1024xf32> -> vector<16x1024xf32>
    %cst_11 = arith.constant 0.000000e+00 : f32
    %12 = vector.broadcast %cst_11 : f32 to vector<16x1024xf32>
    %13 = arith.maximumf %11, %12 : vector<16x1024xf32>
    %cst_12 = arith.constant dense<0.000000e+00> : vector<1024xf32>
    %14 = vector.multi_reduction <add>, %13, %cst_12 [0] : vector<16x1024xf32> to vector<1024xf32>
    %15 = vector.shape_cast %14 : vector<1024xf32> to vector<1x1024xf32>
    %16 = vector.shape_cast %15 : vector<1x1024xf32> to vector<1x1x1024xf32>
    %c0_13 = arith.constant 0 : index
    %c0_14 = arith.constant 0 : index
    %c0_15 = arith.constant 0 : index
    %17 = vector.load %arg7[%c0_13, %c0_14, %c0_15] : memref<1x1x1024xf32, #tpu.memory_space<vmem>>, vector<1x1x1024xf32>
    tpu.vector_store %arg7[%c0_13, %c0_14, %c0_15], %16 {strides = array<i32>} : memref<1x1x1024xf32, #tpu.memory_space<vmem>>, vector<1x1x1024xf32>,
    %18 = arith.truncf %13 : vector<16x1024xf32> to vector<16x1024xbf16>
    %c0_16 = arith.constant 0 : index
    %c0_17 = arith.constant 0 : index
    %19 = vector.load %arg4[%c0_16, %c0_17] : memref<1024x128xbf16, #tpu.memory_space<vmem>>, vector<1024x128xbf16>
    %cst_18 = arith.constant dense<0.000000e+00> : vector<16x128xf32>
    %20 = tpu.matmul %18, %19, %cst_18 {dimension_numbers = #tpu.dot_dimension_numbers<[1], [0], [0], [1], [0, 0, 1, 1], [], []>} : vector<16x1024xbf16>, vector<1024x128xbf16>, vector<16x128xf32> -> vector<16x128xf32>
    %c0_19 = arith.constant 0 : index
    %c0_20 = arith.constant 0 : index
    %21 = vector.load %arg5[%c0_19, %c0_20] : memref<16x128xf32, #tpu.memory_space<vmem>>, vector<16x128xf32>
    tpu.vector_store %arg5[%c0_19, %c0_20], %20 {strides = array<i32>} : memref<16x128xf32, #tpu.memory_space<vmem>>, vector<16x128xf32>,
    return
  }
  func.func @transform_0(%arg0: i32) -> (i32, i32) {
    %c0_i32 = arith.constant 0 : i32
    %c0_i32_0 = arith.constant 0 : i32
    return %arg0, %c0_i32 : i32, i32
  }
  func.func @transform_1(%arg0: i32) -> (i32, i32) {
    %c0_i32 = arith.constant 0 : i32
    %c0_i32_0 = arith.constant 0 : i32
    %c0_i32_1 = arith.constant 0 : i32
    return %c0_i32, %c0_i32_0 : i32, i32
  }
  func.func @transform_2(%arg0: i32) -> (i32, i32) {
    %c0_i32 = arith.constant 0 : i32
    %c0_i32_0 = arith.constant 0 : i32
    %c0_i32_1 = arith.constant 0 : i32
    return %c0_i32, %c0_i32_0 : i32, i32
  }
  func.func @transform_3(%arg0: i32) -> (i32, i32) {
    %c0_i32 = arith.constant 0 : i32
    %c0_i32_0 = arith.constant 0 : i32
    %c0_i32_1 = arith.constant 0 : i32
    return %c0_i32, %c0_i32_0 : i32, i32
  }
  func.func @transform_4(%arg0: i32) -> (i32, i32) {
    %c0_i32 = arith.constant 0 : i32
    %c0_i32_0 = arith.constant 0 : i32
    return %arg0, %c0_i32 : i32, i32
  }
  func.func @transform_5(%arg0: i32) -> (i32, i32, i32) {
    %c0_i32 = arith.constant 0 : i32
    %c0_i32_0 = arith.constant 0 : i32
    %c0_i32_1 = arith.constant 0 : i32
    return %arg0, %c0_i32, %c0_i32_0 : i32, i32, i32
  }
  func.func @transform_6(%arg0: i32) -> (i32, i32, i32) {
    %c0_i32 = arith.constant 0 : i32
    %c0_i32_0 = arith.constant 0 : i32
    %c0_i32_1 = arith.constant 0 : i32
    return %arg0, %c0_i32, %c0_i32_0 : i32, i32, i32
  }
}

</mosaic_0001>

<llo_original>
// kernel: tpu_custom_call.1
$region0: #{tpu_custom_call.1}
  #allocation0 [shape = 'u32[]', space=smem, size = 0x4, offset = 0x4, fixed_abs, tag = 'smem constant byte address 0x4 - core index']
  #allocation1 [shape = 'u32[144,128]{1,0:T(1,128)}', space=vmem, size = 0x12000, scoped, tag = 'internal scratch']
  %s0 = inlined_call_operand.hbm [shape: bf16[16,784], index: 0, kind: input, shape index: {}]
  %s1 = inlined_call_operand.hbm [shape: bf16[784,1024], index: 1, kind: input, shape index: {}]
  %s2 = inlined_call_operand.hbm [shape: bf16[1024,1024], index: 2, kind: input, shape index: {}]
  %s3 = inlined_call_operand.hbm [shape: bf16[1024,128], index: 3, kind: input, shape index: {}]
  %s4 = inlined_call_operand.hbm [shape: f32[16,128], index: 4, kind: output, shape index: {0}]
  %s5 = inlined_call_operand.hbm [shape: f32[1,1,1024], index: 5, kind: output, shape index: {1}]
  %s6 = inlined_call_operand.hbm [shape: f32[1,1,1024], index: 6, kind: output, shape index: {2}]
  %7 = xla_tuple %s4, %s5, %s6
  %s8 = sld [smem:[#allocation0]]
  $region58: #{tpu_custom_call.1} parent=0
    _
  %s10 = ssub.s32 1, %s8
  %s11 = scalar_select 0, %s10, %s8
  $region1: #{tpu_custom_call.1} parent=0
    #allocation2 [shape = 'u8[28672]{0}', space=vmem, size = 0x7000, scoped, tag = 'input window, operand 0, single buffered']
    #allocation3 [shape = 's32[1]{0}', space=sflag, size = 0x4, scoped, tag = 'scoped memory for tpu_custom_call.1']
    #allocation4 [shape = 's32[1]{0}', space=sflag, size = 0x4, scoped, tag = 'scoped memory for tpu_custom_call.1']
    #allocation5 [shape = 'u8[1605632]{0}', space=vmem, size = 0x188000, scoped, tag = 'input window, operand 1, single buffered']
    #allocation6 [shape = 's32[1]{0}', space=sflag, size = 0x4, scoped, tag = 'scoped memory for tpu_custom_call.1']
    #allocation7 [shape = 'u8[2097152]{0}', space=vmem, size = 0x200000, scoped, tag = 'input window, operand 2, single buffered']
    #allocation8 [shape = 'u8[262144]{0}', space=vmem, size = 0x40000, scoped, tag = 'input window, operand 3, single buffered']
    #allocation9 [shape = 's32[1]{0}', space=sflag, size = 0x4, scoped, tag = 'scoped memory for tpu_custom_call.1']
    #allocation10 [shape = 'u8[8192]{0}', space=vmem, size = 0x2000, scoped, tag = 'output window, operand 0, single buffered']
    #allocation11 [shape = 'u8[4096]{0}', space=vmem, size = 0x1000, scoped, tag = 'output window, operand 1, single buffered']
    #allocation12 [shape = 's32[1]{0}', space=sflag, size = 0x4, scoped, tag = 'scoped memory for tpu_custom_call.1']
    #allocation13 [shape = 'u8[4096]{0}', space=vmem, size = 0x1000, scoped, tag = 'output window, operand 2, single buffered']
    %12 = vsyncpa [#allocation3], 0
    %13 = vsyncpa [#allocation6], 0
    %14 = vsyncpa [#allocation9], 0
    %15 = vsyncpa [#allocation4], 0
    %16 = vsyncpa [#allocation12], 0
    // Predicated region
    $region2: #{tpu_custom_call.1} parent=1 // pred_check
      _
    $region3: #{tpu_custom_call.1} parent=1 // pred_check_branch
      %18 = sbr.rel (0) target = $region5
    $region4: #{tpu_custom_call.1} parent=1 // pred_region
      %s20 = ssub.s32 896, 896
      %21 = vsyncadd [#allocation3], %s20
      %s22 = sshll.u32 [#allocation2], 4
      %s23 = int_to_ptr.vmem [resolvable:$true] %s22
      %28 = dma.hbm_to_vmem [thread:$0]  %s0, 896, %s23, [#allocation3], 448, 448, 28
    $region5: #{tpu_custom_call.1} parent=1 // pred_fallthru
      _
    // Predicated region
    $region6: #{tpu_custom_call.1} parent=1 // pred_check
      _
    $region7: #{tpu_custom_call.1} parent=1 // pred_check_branch
      %30 = sbr.rel (0) target = $region9
    $region8: #{tpu_custom_call.1} parent=1 // pred_region
      %s32 = ssub.s32 50176, 50176
      %33 = vsyncadd [#allocation6], %s32
      %s34 = sshll.u32 [#allocation5], 4
      %s35 = int_to_ptr.vmem [resolvable:$true] %s34
      %40 = dma.hbm_to_vmem [thread:$0]  %s1, 50176, %s35, [#allocation6], 512, 512, 32
    $region9: #{tpu_custom_call.1} parent=1 // pred_fallthru
      _
    // Predicated region
    $region10: #{tpu_custom_call.1} parent=1 // pred_check
      _
    $region11: #{tpu_custom_call.1} parent=1 // pred_check_branch
      %42 = sbr.rel (0) target = $region13
    $region12: #{tpu_custom_call.1} parent=1 // pred_region
      %s44 = ssub.s32 65536, 65536
      %45 = vsyncadd [#allocation6], %s44
      %s46 = sshll.u32 [#allocation7], 4
      %s47 = int_to_ptr.vmem [resolvable:$true] %s46
      %52 = dma.hbm_to_vmem [thread:$0]  %s2, 65536, %s47, [#allocation6], 512, 512, 32
    $region13: #{tpu_custom_call.1} parent=1 // pred_fallthru
      _
    // Predicated region
    $region14: #{tpu_custom_call.1} parent=1 // pred_check
      _
    $region15: #{tpu_custom_call.1} parent=1 // pred_check_branch
      %54 = sbr.rel (0) target = $region17
    $region16: #{tpu_custom_call.1} parent=1 // pred_region
      %s56 = ssub.s32 8192, 8192
      %57 = vsyncadd [#allocation9], %s56
      %s58 = sshll.u32 [#allocation8], 4
      %s59 = int_to_ptr.vmem [resolvable:$true] %s58
      %64 = dma.hbm_to_vmem [thread:$0]  %s3, 8192, %s59, [#allocation9], 64, 64, 4
    $region17: #{tpu_custom_call.1} parent=1 // pred_fallthru
      _
    // Predicated region
    $region18: #{tpu_custom_call.1} parent=1 // pred_check
      _
    $region19: #{tpu_custom_call.1} parent=1 // pred_check_branch
      %66 = sbr.rel (0) target = $region21
    $region20: #{tpu_custom_call.1} parent=1 // pred_region
      %67 = dma.done [#allocation3], 896
    $region21: #{tpu_custom_call.1} parent=1 // pred_fallthru
      _
    // Predicated region
    $region22: #{tpu_custom_call.1} parent=1 // pred_check
      _
    $region23: #{tpu_custom_call.1} parent=1 // pred_check_branch
      %69 = sbr.rel (0) target = $region25
    $region24: #{tpu_custom_call.1} parent=1 // pred_region
      %70 = dma.done [#allocation6], 50176
    $region25: #{tpu_custom_call.1} parent=1 // pred_fallthru
      _
    // Predicated region
    $region26: #{tpu_custom_call.1} parent=1 // pred_check
      _
    $region27: #{tpu_custom_call.1} parent=1 // pred_check_branch
      %72 = sbr.rel (0) target = $region29
    $region28: #{tpu_custom_call.1} parent=1 // pred_region
      %73 = dma.done [#allocation6], 65536
    $region29: #{tpu_custom_call.1} parent=1 // pred_fallthru
      _
    // Predicated region
    $region30: #{tpu_custom_call.1} parent=1 // pred_check
      _
    $region31: #{tpu_custom_call.1} parent=1 // pred_check_branch
      %75 = sbr.rel (0) target = $region33
    $region32: #{tpu_custom_call.1} parent=1 // pred_region
      %76 = dma.done [#allocation9], 8192
    $region33: #{tpu_custom_call.1} parent=1 // pred_fallthru
      _
    %v78 = vld [vmem:[#allocation2] sm:$0xff]
    %v79 = vld [vmem:[#allocation2 + $0x8] sm:$0xff]
    %v80 = vld [vmem:[#allocation2 + $0x10] sm:$0xff]
    %v81 = vld [vmem:[#allocation2 + $0x18] sm:$0xf]
    %v82 = vld [vmem:[#allocation2 + $0x1c] sm:$0xff]
    %v83 = vld [vmem:[#allocation2 + $0x24] sm:$0xff]
    %v84 = vld [vmem:[#allocation2 + $0x2c] sm:$0xff]
    %v85 = vld [vmem:[#allocation2 + $0x34] sm:$0xf]
    %v86 = vld [vmem:[#allocation5] sm:$0xff]
    %v87 = vld [vmem:[#allocation5 + $0x8] sm:$0xff]
    %v88 = vld [vmem:[#allocation5 + $0x10] sm:$0xff]
    %v89 = vld [vmem:[#allocation5 + $0x18] sm:$0xff]
    %v90 = vld [vmem:[#allocation5 + $0x20] sm:$0xff]
    %v91 = vld [vmem:[#allocation5 + $0x28] sm:$0xff]
    %v92 = vld [vmem:[#allocation5 + $0x30] sm:$0xff]
    %v93 = vld [vmem:[#allocation5 + $0x38] sm:$0xff]
    %v94 = vld [vmem:[#allocation5 + $0x40] sm:$0xff]
    %v95 = vld [vmem:[#allocation5 + $0x48] sm:$0xff]
    %v96 = vld [vmem:[#allocation5 + $0x50] sm:$0xff]
    %v97 = vld [vmem:[#allocation5 + $0x58] sm:$0xff]
    %v98 = vld [vmem:[#allocation5 + $0x60] sm:$0xff]
    %v99 = vld [vmem:[#allocation5 + $0x68] sm:$0xff]
    %v100 = vld [vmem:[#allocation5 + $0x70] sm:$0xff]
    %v101 = vld [vmem:[#allocation5 + $0x78] sm:$0xff]
    %v102 = vld [vmem:[#allocation5 + $0x80] sm:$0xff]
    %v103 = vld [vmem:[#allocation5 + $0x88] sm:$0xff]
    %v104 = vld [vmem:[#allocation5 + $0x90] sm:$0xff]
    %v105 = vld [vmem:[#allocation5 + $0x98] sm:$0xff]
    %v106 = vld [vmem:[#allocation5 + $0xa0] sm:$0xff]
    %v107 = vld [vmem:[#allocation5 + $0xa8] sm:$0xff]
    %v108 = vld [vmem:[#allocation5 + $0xb0] sm:$0xff]
    %v109 = vld [vmem:[#allocation5 + $0xb8] sm:$0xff]
    %v110 = vld [vmem:[#allocation5 + $0xc0] sm:$0xff]
    %v111 = vld [vmem:[#allocation5 + $0xc8] sm:$0xff]
    %v112 = vld [vmem:[#allocation5 + $0xd0] sm:$0xff]
    %v113 = vld [vmem:[#allocation5 + $0xd8] sm:$0xff]
    %v114 = vld [vmem:[#allocation5 + $0xe0] sm:$0xff]
    %v115 = vld [vmem:[#allocation5 + $0xe8] sm:$0xff]
    %v116 = vld [vmem:[#allocation5 + $0xf0] sm:$0xff]
    %v117 = vld [vmem:[#allocation5 + $0xf8] sm:$0xff]
    %v118 = vld [vmem:[#allocation5 + $0x100] sm:$0xff]
    %v119 = vld [vmem:[#allocation5 + $0x108] sm:$0xff]
    %v120 = vld [vmem:[#allocation5 + $0x110] sm:$0xff]
    %v121 = vld [vmem:[#allocation5 + $0x118] sm:$0xff]
    %v122 = vld [vmem:[#allocation5 + $0x120] sm:$0xff]
    %v123 = vld [vmem:[#allocation5 + $0x128] sm:$0xff]
    %v124 = vld [vmem:[#allocation5 + $0x130] sm:$0xff]
    %v125 = vld [vmem:[#allocation5 + $0x138] sm:$0xff]
    %v126 = vld [vmem:[#allocation5 + $0x140] sm:$0xff]
    %v127 = vld [vmem:[#allocation5 + $0x148] sm:$0xff]
    %v128 = vld [vmem:[#allocation5 + $0x150] sm:$0xff]
    %v129 = vld [vmem:[#allocation5 + $0x158] sm:$0xff]
    %v130 = vld [vmem:[#allocation5 + $0x160] sm:$0xff]
    %v131 = vld [vmem:[#allocation5 + $0x168] sm:$0xff]
    %v132 = vld [vmem:[#allocation5 + $0x170] sm:$0xff]
    %v133 = vld [vmem:[#allocation5 + $0x178] sm:$0xff]
    %v134 = vld [vmem:[#allocation5 + $0x180] sm:$0xff]
    %v135 = vld [vmem:[#allocation5 + $0x188] sm:$0xff]
    %v136 = vld [vmem:[#allocation5 + $0x190] sm:$0xff]
    %v137 = vld [vmem:[#allocation5 + $0x198] sm:$0xff]
    %v138 = vld [vmem:[#allocation5 + $0x1a0] sm:$0xff]
    %v139 = vld [vmem:[#allocation5 + $0x1a8] sm:$0xff]
    %v140 = vld [vmem:[#allocation5 + $0x1b0] sm:$0xff]
    %v141 = vld [vmem:[#allocation5 + $0x1b8] sm:$0xff]
    %v142 = vld [vmem:[#allocation5 + $0x1c0] sm:$0xff]
    %v143 = vld [vmem:[#allocation5 + $0x1c8] sm:$0xff]
    %v144 = vld [vmem:[#allocation5 + $0x1d0] sm:$0xff]
    %v145 = vld [vmem:[#allocation5 + $0x1d8] sm:$0xff]
    %v146 = vld [vmem:[#allocation5 + $0x1e0] sm:$0xff]
    %v147 = vld [vmem:[#allocation5 + $0x1e8] sm:$0xff]
    %v148 = vld [vmem:[#allocation5 + $0x1f0] sm:$0xff]
    %v149 = vld [vmem:[#allocation5 + $0x1f8] sm:$0xff]
    %v150 = vld [vmem:[#allocation5 + $0x200] sm:$0xff]
    %v151 = vld [vmem:[#allocation5 + $0x208] sm:$0xff]
    %v152 = vld [vmem:[#allocation5 + $0x210] sm:$0xff]
    %v153 = vld [vmem:[#allocation5 + $0x218] sm:$0xff]
    %v154 = vld [vmem:[#allocation5 + $0x220] sm:$0xff]
    %v155 = vld [vmem:[#allocation5 + $0x228] sm:$0xff]
    %v156 = vld [vmem:[#allocation5 + $0x230] sm:$0xff]
    %v157 = vld [vmem:[#allocation5 + $0x238] sm:$0xff]
    %v158 = vld [vmem:[#allocation5 + $0x240] sm:$0xff]
    %v159 = vld [vmem:[#allocation5 + $0x248] sm:$0xff]
    %v160 = vld [vmem:[#allocation5 + $0x250] sm:$0xff]
    %v161 = vld [vmem:[#allocation5 + $0x258] sm:$0xff]
    %v162 = vld [vmem:[#allocation5 + $0x260] sm:$0xff]
    %v163 = vld [vmem:[#allocation5 + $0x268] sm:$0xff]
    %v164 = vld [vmem:[#allocation5 + $0x270] sm:$0xff]
    %v165 = vld [vmem:[#allocation5 + $0x278] sm:$0xff]
    %v166 = vld [vmem:[#allocation5 + $0x280] sm:$0xff]
    %v167 = vld [vmem:[#allocation5 + $0x288] sm:$0xff]
    %v168 = vld [vmem:[#allocation5 + $0x290] sm:$0xff]
    %v169 = vld [vmem:[#allocation5 + $0x298] sm:$0xff]
    %v170 = vld [vmem:[#allocation5 + $0x2a0] sm:$0xff]
    %v171 = vld [vmem:[#allocation5 + $0x2a8] sm:$0xff]
    %v172 = vld [vmem:[#allocation5 + $0x2b0] sm:$0xff]
    %v173 = vld [vmem:[#allocation5 + $0x2b8] sm:$0xff]
    %v174 = vld [vmem:[#allocation5 + $0x2c0] sm:$0xff]
    %v175 = vld [vmem:[#allocation5 + $0x2c8] sm:$0xff]
    %v176 = vld [vmem:[#allocation5 + $0x2d0] sm:$0xff]
    %v177 = vld [vmem:[#allocation5 + $0x2d8] sm:$0xff]
    %v178 = vld [vmem:[#allocation5 + $0x2e0] sm:$0xff]
    %v179 = vld [vmem:[#allocation5 + $0x2e8] sm:$0xff]
    %v180 = vld [vmem:[#allocation5 + $0x2f0] sm:$0xff]
    %v181 = vld [vmem:[#allocation5 + $0x2f8] sm:$0xff]
    %v182 = vld [vmem:[#allocation5 + $0x300] sm:$0xff]
    %v183 = vld [vmem:[#allocation5 + $0x308] sm:$0xff]
    %v184 = vld [vmem:[#allocation5 + $0x310] sm:$0xff]
    %v185 = vld [vmem:[#allocation5 + $0x318] sm:$0xff]
    %v186 = vld [vmem:[#allocation5 + $0x320] sm:$0xff]
    %v187 = vld [vmem:[#allocation5 + $0x328] sm:$0xff]
    %v188 = vld [vmem:[#allocation5 + $0x330] sm:$0xff]
    %v189 = vld [vmem:[#allocation5 + $0x338] sm:$0xff]
    %v190 = vld [vmem:[#allocation5 + $0x340] sm:$0xff]
    %v191 = vld [vmem:[#allocation5 + $0x348] sm:$0xff]
    %v192 = vld [vmem:[#allocation5 + $0x350] sm:$0xff]
    %v193 = vld [vmem:[#allocation5 + $0x358] sm:$0xff]
    %v194 = vld [vmem:[#allocation5 + $0x360] sm:$0xff]
    %v195 = vld [vmem:[#allocation5 + $0x368] sm:$0xff]
    %v196 = vld [vmem:[#allocation5 + $0x370] sm:$0xff]
    %v197 = vld [vmem:[#allocation5 + $0x378] sm:$0xff]
    %v198 = vld [vmem:[#allocation5 + $0x380] sm:$0xff]
    %v199 = vld [vmem:[#allocation5 + $0x388] sm:$0xff]
    %v200 = vld [vmem:[#allocation5 + $0x390] sm:$0xff]
    %v201 = vld [vmem:[#allocation5 + $0x398] sm:$0xff]
    %v202 = vld [vmem:[#allocation5 + $0x3a0] sm:$0xff]
    %v203 = vld [vmem:[#allocation5 + $0x3a8] sm:$0xff]
    %v204 = vld [vmem:[#allocation5 + $0x3b0] sm:$0xff]
    %v205 = vld [vmem:[#allocation5 + $0x3b8] sm:$0xff]
    %v206 = vld [vmem:[#allocation5 + $0x3c0] sm:$0xff]
    %v207 = vld [vmem:[#allocation5 + $0x3c8] sm:$0xff]
    %v208 = vld [vmem:[#allocation5 + $0x3d0] sm:$0xff]
    %v209 = vld [vmem:[#allocation5 + $0x3d8] sm:$0xff]
    %v210 = vld [vmem:[#allocation5 + $0x3e0] sm:$0xff]
    %v211 = vld [vmem:[#allocation5 + $0x3e8] sm:$0xff]
    %v212 = vld [vmem:[#allocation5 + $0x3f0] sm:$0xff]
    %v213 = vld [vmem:[#allocation5 + $0x3f8] sm:$0xff]
    %v214 = vld [vmem:[#allocation5 + $0x400] sm:$0xff]
    %v215 = vld [vmem:[#allocation5 + $0x408] sm:$0xff]
    %v216 = vld [vmem:[#allocation5 + $0x410] sm:$0xff]
    %v217 = vld [vmem:[#allocation5 + $0x418] sm:$0xff]
    %v218 = vld [vmem:[#allocation5 + $0x420] sm:$0xff]
    %v219 = vld [vmem:[#allocation5 + $0x428] sm:$0xff]
    %v220 = vld [vmem:[#allocation5 + $0x430] sm:$0xff]
    %v221 = vld [vmem:[#allocation5 + $0x438] sm:$0xff]
    %v222 = vld [vmem:[#allocation5 + $0x440] sm:$0xff]
    %v223 = vld [vmem:[#allocation5 + $0x448] sm:$0xff]
    %v224 = vld [vmem:[#allocation5 + $0x450] sm:$0xff]
    %v225 = vld [vmem:[#allocation5 + $0x458] sm:$0xff]
    %v226 = vld [vmem:[#allocation5 + $0x460] sm:$0xff]
    %v227 = vld [vmem:[#allocation5 + $0x468] sm:$0xff]
    %v228 = vld [vmem:[#allocation5 + $0x470] sm:$0xff]
    %v229 = vld [vmem:[#allocation5 + $0x478] sm:$0xff]
    %v230 = vld [vmem:[#allocation5 + $0x480] sm:$0xff]
    %v231 = vld [vmem:[#allocation5 + $0x488] sm:$0xff]
    %v232 = vld [vmem:[#allocation5 + $0x490] sm:$0xff]
    %v233 = vld [vmem:[#allocation5 + $0x498] sm:$0xff]
    %v234 = vld [vmem:[#allocation5 + $0x4a0] sm:$0xff]
    %v235 = vld [vmem:[#allocation5 + $0x4a8] sm:$0xff]
    %v236 = vld [vmem:[#allocation5 + $0x4b0] sm:$0xff]
    %v237 = vld [vmem:[#allocation5 + $0x4b8] sm:$0xff]
    %v238 = vld [vmem:[#allocation5 + $0x4c0] sm:$0xff]
    %v239 = vld [vmem:[#allocation5 + $0x4c8] sm:$0xff]
    %v240 = vld [vmem:[#allocation5 + $0x4d0] sm:$0xff]
    %v241 = vld [vmem:[#allocation5 + $0x4d8] sm:$0xff]
    %v242 = vld [vmem:[#allocation5 + $0x4e0] sm:$0xff]
    %v243 = vld [vmem:[#allocation5 + $0x4e8] sm:$0xff]
    %v244 = vld [vmem:[#allocation5 + $0x4f0] sm:$0xff]
    %v245 = vld [vmem:[#allocation5 + $0x4f8] sm:$0xff]
    %v246 = vld [vmem:[#allocation5 + $0x500] sm:$0xff]
    %v247 = vld [vmem:[#allocation5 + $0x508] sm:$0xff]
    %v248 = vld [vmem:[#allocation5 + $0x510] sm:$0xff]
    %v249 = vld [vmem:[#allocation5 + $0x518] sm:$0xff]
    %v250 = vld [vmem:[#allocation5 + $0x520] sm:$0xff]
    %v251 = vld [vmem:[#allocation5 + $0x528] sm:$0xff]
    %v252 = vld [vmem:[#allocation5 + $0x530] sm:$0xff]
    %v253 = vld [vmem:[#allocation5 + $0x538] sm:$0xff]
    %v254 = vld [vmem:[#allocation5 + $0x540] sm:$0xff]
    %v255 = vld [vmem:[#allocation5 + $0x548] sm:$0xff]
    %v256 = vld [vmem:[#allocation5 + $0x550] sm:$0xff]
    %v257 = vld [vmem:[#allocation5 + $0x558] sm:$0xff]
    %v258 = vld [vmem:[#allocation5 + $0x560] sm:$0xff]
    %v259 = vld [vmem:[#allocation5 + $0x568] sm:$0xff]
    %v260 = vld [vmem:[#allocation5 + $0x570] sm:$0xff]
    %v261 = vld [vmem:[#allocation5 + $0x578] sm:$0xff]
    %v262 = vld [vmem:[#allocation5 + $0x580] sm:$0xff]
    %v263 = vld [vmem:[#allocation5 + $0x588] sm:$0xff]
    %v264 = vld [vmem:[#allocation5 + $0x590] sm:$0xff]
    %v265 = vld [vmem:[#allocation5 + $0x598] sm:$0xff]
    %v266 = vld [vmem:[#allocation5 + $0x5a0] sm:$0xff]
    %v267 = vld [vmem:[#allocation5 + $0x5a8] sm:$0xff]
    %v268 = vld [vmem:[#allocation5 + $0x5b0] sm:$0xff]
    %v269 = vld [vmem:[#allocation5 + $0x5b8] sm:$0xff]
    %v270 = vld [vmem:[#allocation5 + $0x5c0] sm:$0xff]
    %v271 = vld [vmem:[#allocation5 + $0x5c8] sm:$0xff]
    %v272 = vld [vmem:[#allocation5 + $0x5d0] sm:$0xff]
    %v273 = vld [vmem:[#allocation5 + $0x5d8] sm:$0xff]
    %v274 = vld [vmem:[#allocation5 + $0x5e0] sm:$0xff]
    %v275 = vld [vmem:[#allocation5 + $0x5e8] sm:$0xff]
    %v276 = vld [vmem:[#allocation5 + $0x5f0] sm:$0xff]
    %v277 = vld [vmem:[#allocation5 + $0x5f8] sm:$0xff]
    %v278 = vld [vmem:[#allocation5 + $0x600] sm:$0xff]
    %v279 = vld [vmem:[#allocation5 + $0x608] sm:$0xff]
    %v280 = vld [vmem:[#allocation5 + $0x610] sm:$0xff]
    %v281 = vld [vmem:[#allocation5 + $0x618] sm:$0xff]
    %v282 = vld [vmem:[#allocation5 + $0x620] sm:$0xff]
    %v283 = vld [vmem:[#allocation5 + $0x628] sm:$0xff]
    %v284 = vld [vmem:[#allocation5 + $0x630] sm:$0xff]
    %v285 = vld [vmem:[#allocation5 + $0x638] sm:$0xff]
    %v286 = vld [vmem:[#allocation5 + $0x640] sm:$0xff]
    %v287 = vld [vmem:[#allocation5 + $0x648] sm:$0xff]
    %v288 = vld [vmem:[#allocation5 + $0x650] sm:$0xff]
    %v289 = vld [vmem:[#allocation5 + $0x658] sm:$0xff]
    %v290 = vld [vmem:[#allocation5 + $0x660] sm:$0xff]
    %v291 = vld [vmem:[#allocation5 + $0x668] sm:$0xff]
    %v292 = vld [vmem:[#allocation5 + $0x670] sm:$0xff]
    %v293 = vld [vmem:[#allocation5 + $0x678] sm:$0xff]
    %v294 = vld [vmem:[#allocation5 + $0x680] sm:$0xff]
    %v295 = vld [vmem:[#allocation5 + $0x688] sm:$0xff]
    %v296 = vld [vmem:[#allocation5 + $0x690] sm:$0xff]
    %v297 = vld [vmem:[#allocation5 + $0x698] sm:$0xff]
    %v298 = vld [vmem:[#allocation5 + $0x6a0] sm:$0xff]
    %v299 = vld [vmem:[#allocation5 + $0x6a8] sm:$0xff]
    %v300 = vld [vmem:[#allocation5 + $0x6b0] sm:$0xff]
    %v301 = vld [vmem:[#allocation5 + $0x6b8] sm:$0xff]
    %v302 = vld [vmem:[#allocation5 + $0x6c0] sm:$0xff]
    %v303 = vld [vmem:[#allocation5 + $0x6c8] sm:$0xff]
    %v304 = vld [vmem:[#allocation5 + $0x6d0] sm:$0xff]
    %v305 = vld [vmem:[#allocation5 + $0x6d8] sm:$0xff]
    %v306 = vld [vmem:[#allocation5 + $0x6e0] sm:$0xff]
    %v307 = vld [vmem:[#allocation5 + $0x6e8] sm:$0xff]
    %v308 = vld [vmem:[#allocation5 + $0x6f0] sm:$0xff]
    %v309 = vld [vmem:[#allocation5 + $0x6f8] sm:$0xff]
    %v310 = vld [vmem:[#allocation5 + $0x700] sm:$0xff]
    %v311 = vld [vmem:[#allocation5 + $0x708] sm:$0xff]
    %v312 = vld [vmem:[#allocation5 + $0x710] sm:$0xff]
    %v313 = vld [vmem:[#allocation5 + $0x718] sm:$0xff]
    %v314 = vld [vmem:[#allocation5 + $0x720] sm:$0xff]
    %v315 = vld [vmem:[#allocation5 + $0x728] sm:$0xff]
    %v316 = vld [vmem:[#allocation5 + $0x730] sm:$0xff]
    %v317 = vld [vmem:[#allocation5 + $0x738] sm:$0xff]
    %v318 = vld [vmem:[#allocation5 + $0x740] sm:$0xff]
    %v319 = vld [vmem:[#allocation5 + $0x748] sm:$0xff]
    %v320 = vld [vmem:[#allocation5 + $0x750] sm:$0xff]
    %v321 = vld [vmem:[#allocation5 + $0x758] sm:$0xff]
    %v322 = vld [vmem:[#allocation5 + $0x760] sm:$0xff]
    %v323 = vld [vmem:[#allocation5 + $0x768] sm:$0xff]
    %v324 = vld [vmem:[#allocation5 + $0x770] sm:$0xff]
    %v325 = vld [vmem:[#allocation5 + $0x778] sm:$0xff]
    %v326 = vld [vmem:[#allocation5 + $0x780] sm:$0xff]
    %v327 = vld [vmem:[#allocation5 + $0x788] sm:$0xff]
    %v328 = vld [vmem:[#allocation5 + $0x790] sm:$0xff]
    %v329 = vld [vmem:[#allocation5 + $0x798] sm:$0xff]
    %v330 = vld [vmem:[#allocation5 + $0x7a0] sm:$0xff]
    %v331 = vld [vmem:[#allocation5 + $0x7a8] sm:$0xff]
    %v332 = vld [vmem:[#allocation5 + $0x7b0] sm:$0xff]
    %v333 = vld [vmem:[#allocation5 + $0x7b8] sm:$0xff]
    %v334 = vld [vmem:[#allocation5 + $0x7c0] sm:$0xff]
    %v335 = vld [vmem:[#allocation5 + $0x7c8] sm:$0xff]
    %v336 = vld [vmem:[#allocation5 + $0x7d0] sm:$0xff]
    %v337 = vld [vmem:[#allocation5 + $0x7d8] sm:$0xff]
    %v338 = vld [vmem:[#allocation5 + $0x7e0] sm:$0xff]
    %v339 = vld [vmem:[#allocation5 + $0x7e8] sm:$0xff]
    %v340 = vld [vmem:[#allocation5 + $0x7f0] sm:$0xff]
    %v341 = vld [vmem:[#allocation5 + $0x7f8] sm:$0xff]
    %v342 = vld [vmem:[#allocation5 + $0x800] sm:$0xff]
    %v343 = vld [vmem:[#allocation5 + $0x808] sm:$0xff]
    %v344 = vld [vmem:[#allocation5 + $0x810] sm:$0xff]
    %v345 = vld [vmem:[#allocation5 + $0x818] sm:$0xff]
    %v346 = vld [vmem:[#allocation5 + $0x820] sm:$0xff]
    %v347 = vld [vmem:[#allocation5 + $0x828] sm:$0xff]
    %v348 = vld [vmem:[#allocation5 + $0x830] sm:$0xff]
    %v349 = vld [vmem:[#allocation5 + $0x838] sm:$0xff]
    %v350 = vld [vmem:[#allocation5 + $0x840] sm:$0xff]
    %v351 = vld [vmem:[#allocation5 + $0x848] sm:$0xff]
    %v352 = vld [vmem:[#allocation5 + $0x850] sm:$0xff]
    %v353 = vld [vmem:[#allocation5 + $0x858] sm:$0xff]
    %v354 = vld [vmem:[#allocation5 + $0x860] sm:$0xff]
    %v355 = vld [vmem:[#allocation5 + $0x868] sm:$0xff]
    %v356 = vld [vmem:[#allocation5 + $0x870] sm:$0xff]
    %v357 = vld [vmem:[#allocation5 + $0x878] sm:$0xff]
    %v358 = vld [vmem:[#allocation5 + $0x880] sm:$0xff]
    %v359 = vld [vmem:[#allocation5 + $0x888] sm:$0xff]
    %v360 = vld [vmem:[#allocation5 + $0x890] sm:$0xff]
    %v361 = vld [vmem:[#allocation5 + $0x898] sm:$0xff]
    %v362 = vld [vmem:[#allocation5 + $0x8a0] sm:$0xff]
    %v363 = vld [vmem:[#allocation5 + $0x8a8] sm:$0xff]
    %v364 = vld [vmem:[#allocation5 + $0x8b0] sm:$0xff]
    %v365 = vld [vmem:[#allocation5 + $0x8b8] sm:$0xff]
    %v366 = vld [vmem:[#allocation5 + $0x8c0] sm:$0xff]
    %v367 = vld [vmem:[#allocation5 + $0x8c8] sm:$0xff]
    %v368 = vld [vmem:[#allocation5 + $0x8d0] sm:$0xff]
    %v369 = vld [vmem:[#allocation5 + $0x8d8] sm:$0xff]
    %v370 = vld [vmem:[#allocation5 + $0x8e0] sm:$0xff]
    %v371 = vld [vmem:[#allocation5 + $0x8e8] sm:$0xff]
    %v372 = vld [vmem:[#allocation5 + $0x8f0] sm:$0xff]
    %v373 = vld [vmem:[#allocation5 + $0x8f8] sm:$0xff]
    %v374 = vld [vmem:[#allocation5 + $0x900] sm:$0xff]
    %v375 = vld [vmem:[#allocation5 + $0x908] sm:$0xff]
    %v376 = vld [vmem:[#allocation5 + $0x910] sm:$0xff]
    %v377 = vld [vmem:[#allocation5 + $0x918] sm:$0xff]
    %v378 = vld [vmem:[#allocation5 + $0x920] sm:$0xff]
    %v379 = vld [vmem:[#allocation5 + $0x928] sm:$0xff]
    %v380 = vld [vmem:[#allocation5 + $0x930] sm:$0xff]
    %v381 = vld [vmem:[#allocation5 + $0x938] sm:$0xff]
    %v382 = vld [vmem:[#allocation5 + $0x940] sm:$0xff]
    %v383 = vld [vmem:[#allocation5 + $0x948] sm:$0xff]
    %v384 = vld [vmem:[#allocation5 + $0x950] sm:$0xff]
    %v385 = vld [vmem:[#allocation5 + $0x958] sm:$0xff]
    %v386 = vld [vmem:[#allocation5 + $0x960] sm:$0xff]
    %v387 = vld [vmem:[#allocation5 + $0x968] sm:$0xff]
    %v388 = vld [vmem:[#allocation5 + $0x970] sm:$0xff]
    %v389 = vld [vmem:[#allocation5 + $0x978] sm:$0xff]
    %v390 = vld [vmem:[#allocation5 + $0x980] sm:$0xff]
    %v391 = vld [vmem:[#allocation5 + $0x988] sm:$0xff]
    %v392 = vld [vmem:[#allocation5 + $0x990] sm:$0xff]
    %v393 = vld [vmem:[#allocation5 + $0x998] sm:$0xff]
    %v394 = vld [vmem:[#allocation5 + $0x9a0] sm:$0xff]
    %v395 = vld [vmem:[#allocation5 + $0x9a8] sm:$0xff]
    %v396 = vld [vmem:[#allocation5 + $0x9b0] sm:$0xff]
    %v397 = vld [vmem:[#allocation5 + $0x9b8] sm:$0xff]
    %v398 = vld [vmem:[#allocation5 + $0x9c0] sm:$0xff]
    %v399 = vld [vmem:[#allocation5 + $0x9c8] sm:$0xff]
    %v400 = vld [vmem:[#allocation5 + $0x9d0] sm:$0xff]
    %v401 = vld [vmem:[#allocation5 + $0x9d8] sm:$0xff]
    %v402 = vld [vmem:[#allocation5 + $0x9e0] sm:$0xff]
    %v403 = vld [vmem:[#allocation5 + $0x9e8] sm:$0xff]
    %v404 = vld [vmem:[#allocation5 + $0x9f0] sm:$0xff]
    %v405 = vld [vmem:[#allocation5 + $0x9f8] sm:$0xff]
    %v406 = vld [vmem:[#allocation5 + $0xa00] sm:$0xff]
    %v407 = vld [vmem:[#allocation5 + $0xa08] sm:$0xff]
    %v408 = vld [vmem:[#allocation5 + $0xa10] sm:$0xff]
    %v409 = vld [vmem:[#allocation5 + $0xa18] sm:$0xff]
    %v410 = vld [vmem:[#allocation5 + $0xa20] sm:$0xff]
    %v411 = vld [vmem:[#allocation5 + $0xa28] sm:$0xff]
    %v412 = vld [vmem:[#allocation5 + $0xa30] sm:$0xff]
    %v413 = vld [vmem:[#allocation5 + $0xa38] sm:$0xff]
    %v414 = vld [vmem:[#allocation5 + $0xa40] sm:$0xff]
    %v415 = vld [vmem:[#allocation5 + $0xa48] sm:$0xff]
    %v416 = vld [vmem:[#allocation5 + $0xa50] sm:$0xff]
    %v417 = vld [vmem:[#allocation5 + $0xa58] sm:$0xff]
    %v418 = vld [vmem:[#allocation5 + $0xa60] sm:$0xff]
    %v419 = vld [vmem:[#allocation5 + $0xa68] sm:$0xff]
    %v420 = vld [vmem:[#allocation5 + $0xa70] sm:$0xff]
    %v421 = vld [vmem:[#allocation5 + $0xa78] sm:$0xff]
    %v422 = vld [vmem:[#allocation5 + $0xa80] sm:$0xff]
    %v423 = vld [vmem:[#allocation5 + $0xa88] sm:$0xff]
    %v424 = vld [vmem:[#allocation5 + $0xa90] sm:$0xff]
    %v425 = vld [vmem:[#allocation5 + $0xa98] sm:$0xff]
    %v426 = vld [vmem:[#allocation5 + $0xaa0] sm:$0xff]
    %v427 = vld [vmem:[#allocation5 + $0xaa8] sm:$0xff]
    %v428 = vld [vmem:[#allocation5 + $0xab0] sm:$0xff]
    %v429 = vld [vmem:[#allocation5 + $0xab8] sm:$0xff]
    %v430 = vld [vmem:[#allocation5 + $0xac0] sm:$0xff]
    %v431 = vld [vmem:[#allocation5 + $0xac8] sm:$0xff]
    %v432 = vld [vmem:[#allocation5 + $0xad0] sm:$0xff]
    %v433 = vld [vmem:[#allocation5 + $0xad8] sm:$0xff]
    %v434 = vld [vmem:[#allocation5 + $0xae0] sm:$0xff]
    %v435 = vld [vmem:[#allocation5 + $0xae8] sm:$0xff]
    %v436 = vld [vmem:[#allocation5 + $0xaf0] sm:$0xff]
    %v437 = vld [vmem:[#allocation5 + $0xaf8] sm:$0xff]
    %v438 = vld [vmem:[#allocation5 + $0xb00] sm:$0xff]
    %v439 = vld [vmem:[#allocation5 + $0xb08] sm:$0xff]
    %v440 = vld [vmem:[#allocation5 + $0xb10] sm:$0xff]
    %v441 = vld [vmem:[#allocation5 + $0xb18] sm:$0xff]
    %v442 = vld [vmem:[#allocation5 + $0xb20] sm:$0xff]
    %v443 = vld [vmem:[#allocation5 + $0xb28] sm:$0xff]
    %v444 = vld [vmem:[#allocation5 + $0xb30] sm:$0xff]
    %v445 = vld [vmem:[#allocation5 + $0xb38] sm:$0xff]
    %v446 = vld [vmem:[#allocation5 + $0xb40] sm:$0xff]
    %v447 = vld [vmem:[#allocation5 + $0xb48] sm:$0xff]
    %v448 = vld [vmem:[#allocation5 + $0xb50] sm:$0xff]
    %v449 = vld [vmem:[#allocation5 + $0xb58] sm:$0xff]
    %v450 = vld [vmem:[#allocation5 + $0xb60] sm:$0xff]
    %v451 = vld [vmem:[#allocation5 + $0xb68] sm:$0xff]
    %v452 = vld [vmem:[#allocation5 + $0xb70] sm:$0xff]
    %v453 = vld [vmem:[#allocation5 + $0xb78] sm:$0xff]
    %v454 = vld [vmem:[#allocation5 + $0xb80] sm:$0xff]
    %v455 = vld [vmem:[#allocation5 + $0xb88] sm:$0xff]
    %v456 = vld [vmem:[#allocation5 + $0xb90] sm:$0xff]
    %v457 = vld [vmem:[#allocation5 + $0xb98] sm:$0xff]
    %v458 = vld [vmem:[#allocation5 + $0xba0] sm:$0xff]
    %v459 = vld [vmem:[#allocation5 + $0xba8] sm:$0xff]
    %v460 = vld [vmem:[#allocation5 + $0xbb0] sm:$0xff]
    %v461 = vld [vmem:[#allocation5 + $0xbb8] sm:$0xff]
    %v462 = vld [vmem:[#allocation5 + $0xbc0] sm:$0xff]
    %v463 = vld [vmem:[#allocation5 + $0xbc8] sm:$0xff]
    %v464 = vld [vmem:[#allocation5 + $0xbd0] sm:$0xff]
    %v465 = vld [vmem:[#allocation5 + $0xbd8] sm:$0xff]
    %v466 = vld [vmem:[#allocation5 + $0xbe0] sm:$0xff]
    %v467 = vld [vmem:[#allocation5 + $0xbe8] sm:$0xff]
    %v468 = vld [vmem:[#allocation5 + $0xbf0] sm:$0xff]
    %v469 = vld [vmem:[#allocation5 + $0xbf8] sm:$0xff]
    %v470 = vld [vmem:[#allocation5 + $0xc00] sm:$0xff]
    %v471 = vld [vmem:[#allocation5 + $0xc08] sm:$0xff]
    %v472 = vld [vmem:[#allocation5 + $0xc10] sm:$0xff]
    %v473 = vld [vmem:[#allocation5 + $0xc18] sm:$0xff]
    %v474 = vld [vmem:[#allocation5 + $0xc20] sm:$0xff]
    %v475 = vld [vmem:[#allocation5 + $0xc28] sm:$0xff]
    %v476 = vld [vmem:[#allocation5 + $0xc30] sm:$0xff]
    %v477 = vld [vmem:[#allocation5 + $0xc38] sm:$0xff]
    %v486 = vunpack.c.l.b16 %v78
    %v487 = vunpack.c.h.b16 %v78
    %v488 = vunpack.c.l.b16 %v79
    %v489 = vunpack.c.h.b16 %v79
    %v490 = vunpack.c.l.b16 %v80
    %v491 = vunpack.c.h.b16 %v80
    %v492 = vunpack.c.l.b16 %v81
    %v493 = vunpack.c.l.b16 %v82
    %v494 = vunpack.c.h.b16 %v82
    %v495 = vunpack.c.l.b16 %v83
    %v496 = vunpack.c.h.b16 %v83
    %v497 = vunpack.c.l.b16 %v84
    %v498 = vunpack.c.h.b16 %v84
    %v499 = vunpack.c.l.b16 %v85
    %v500 = vpack.c.b16 %v493, %v486
    %v501 = vpack.c.b16 %v494, %v487
    %v502 = vpack.c.b16 %v495, %v488
    %v503 = vpack.c.b16 %v496, %v489
    %v504 = vpack.c.b16 %v497, %v490
    %v505 = vpack.c.b16 %v498, %v491
    %v506 = vpack.c.b16 %v499, %v492
    %v905 = vunpack.c.l.b16 %v86
    %v906 = vunpack.c.h.b16 %v86
    %v907 = vunpack.c.l.b16 %v87
    %v908 = vunpack.c.h.b16 %v87
    %v909 = vunpack.c.l.b16 %v88
    %v910 = vunpack.c.h.b16 %v88
    %v911 = vunpack.c.l.b16 %v89
    %v912 = vunpack.c.h.b16 %v89
    %v913 = vunpack.c.l.b16 %v90
    %v914 = vunpack.c.h.b16 %v90
    %v915 = vunpack.c.l.b16 %v91
    %v916 = vunpack.c.h.b16 %v91
    %v917 = vunpack.c.l.b16 %v92
    %v918 = vunpack.c.h.b16 %v92
    %v919 = vunpack.c.l.b16 %v93
    %v920 = vunpack.c.h.b16 %v93
    %v921 = vunpack.c.l.b16 %v94
    %v922 = vunpack.c.h.b16 %v94
    %v923 = vunpack.c.l.b16 %v95
    %v924 = vunpack.c.h.b16 %v95
    %v925 = vunpack.c.l.b16 %v96
    %v926 = vunpack.c.h.b16 %v96
    %v927 = vunpack.c.l.b16 %v97
    %v928 = vunpack.c.h.b16 %v97
    %v929 = vunpack.c.l.b16 %v98
    %v930 = vunpack.c.h.b16 %v98
    %v931 = vunpack.c.l.b16 %v99
    %v932 = vunpack.c.h.b16 %v99
    %v933 = vunpack.c.l.b16 %v100
    %v934 = vunpack.c.h.b16 %v100
    %v935 = vunpack.c.l.b16 %v101
    %v936 = vunpack.c.h.b16 %v101
    %v937 = vunpack.c.l.b16 %v102
    %v938 = vunpack.c.h.b16 %v102
    %v939 = vunpack.c.l.b16 %v103
    %v940 = vunpack.c.h.b16 %v103
    %v941 = vunpack.c.l.b16 %v104
    %v942 = vunpack.c.h.b16 %v104
    %v943 = vunpack.c.l.b16 %v105
    %v944 = vunpack.c.h.b16 %v105
    %v945 = vunpack.c.l.b16 %v106
    %v946 = vunpack.c.h.b16 %v106
    %v947 = vunpack.c.l.b16 %v107
    %v948 = vunpack.c.h.b16 %v107
    %v949 = vunpack.c.l.b16 %v108
    %v950 = vunpack.c.h.b16 %v108
    %v951 = vunpack.c.l.b16 %v109
    %v952 = vunpack.c.h.b16 %v109
    %v953 = vunpack.c.l.b16 %v110
    %v954 = vunpack.c.h.b16 %v110
    %v955 = vunpack.c.l.b16 %v111
    %v956 = vunpack.c.h.b16 %v111
    %v957 = vunpack.c.l.b16 %v112
    %v958 = vunpack.c.h.b16 %v112
    %v959 = vunpack.c.l.b16 %v113
    %v960 = vunpack.c.h.b16 %v113
    %v961 = vunpack.c.l.b16 %v114
    %v962 = vunpack.c.h.b16 %v114
    %v963 = vunpack.c.l.b16 %v115
    %v964 = vunpack.c.h.b16 %v115
    %v965 = vunpack.c.l.b16 %v116
    %v966 = vunpack.c.h.b16 %v116
    %v967 = vunpack.c.l.b16 %v117
    %v968 = vunpack.c.h.b16 %v117
    %v969 = vunpack.c.l.b16 %v118
    %v970 = vunpack.c.h.b16 %v118
    %v971 = vunpack.c.l.b16 %v119
    %v972 = vunpack.c.h.b16 %v119
    %v973 = vunpack.c.l.b16 %v120
    %v974 = vunpack.c.h.b16 %v120
    %v975 = vunpack.c.l.b16 %v121
    %v976 = vunpack.c.h.b16 %v121
    %v977 = vunpack.c.l.b16 %v122
    %v978 = vunpack.c.h.b16 %v122
    %v979 = vunpack.c.l.b16 %v123
    %v980 = vunpack.c.h.b16 %v123
    %v981 = vunpack.c.l.b16 %v124
    %v982 = vunpack.c.h.b16 %v124
    %v983 = vunpack.c.l.b16 %v125
    %v984 = vunpack.c.h.b16 %v125
    %v985 = vunpack.c.l.b16 %v126
    %v986 = vunpack.c.h.b16 %v126
    %v987 = vunpack.c.l.b16 %v127
    %v988 = vunpack.c.h.b16 %v127
    %v989 = vunpack.c.l.b16 %v128
    %v990 = vunpack.c.h.b16 %v128
    %v991 = vunpack.c.l.b16 %v129
    %v992 = vunpack.c.h.b16 %v129
    %v993 = vunpack.c.l.b16 %v130
    %v994 = vunpack.c.h.b16 %v130
    %v995 = vunpack.c.l.b16 %v131
    %v996 = vunpack.c.h.b16 %v131
    %v997 = vunpack.c.l.b16 %v132
    %v998 = vunpack.c.h.b16 %v132
    %v999 = vunpack.c.l.b16 %v133
    %v1000 = vunpack.c.h.b16 %v133
    %v1001 = vunpack.c.l.b16 %v134
    %v1002 = vunpack.c.h.b16 %v134
    %v1003 = vunpack.c.l.b16 %v135
    %v1004 = vunpack.c.h.b16 %v135
    %v1005 = vunpack.c.l.b16 %v136
    %v1006 = vunpack.c.h.b16 %v136
    %v1007 = vunpack.c.l.b16 %v137
    %v1008 = vunpack.c.h.b16 %v137
    %v1009 = vunpack.c.l.b16 %v138
    %v1010 = vunpack.c.h.b16 %v138
    %v1011 = vunpack.c.l.b16 %v139
    %v1012 = vunpack.c.h.b16 %v139
    %v1013 = vunpack.c.l.b16 %v140
    %v1014 = vunpack.c.h.b16 %v140
    %v1015 = vunpack.c.l.b16 %v141
    %v1016 = vunpack.c.h.b16 %v141
    %v1017 = vunpack.c.l.b16 %v142
    %v1018 = vunpack.c.h.b16 %v142
    %v1019 = vunpack.c.l.b16 %v143
    %v1020 = vunpack.c.h.b16 %v143
    %v1021 = vunpack.c.l.b16 %v144
    %v1022 = vunpack.c.h.b16 %v144
    %v1023 = vunpack.c.l.b16 %v145
    %v1024 = vunpack.c.h.b16 %v145
    %v1025 = vunpack.c.l.b16 %v146
    %v1026 = vunpack.c.h.b16 %v146
    %v1027 = vunpack.c.l.b16 %v147
    %v1028 = vunpack.c.h.b16 %v147
    %v1029 = vunpack.c.l.b16 %v148
    %v1030 = vunpack.c.h.b16 %v148
    %v1031 = vunpack.c.l.b16 %v149
    %v1032 = vunpack.c.h.b16 %v149
    %v1033 = vunpack.c.l.b16 %v150
    %v1034 = vunpack.c.h.b16 %v150
    %v1035 = vunpack.c.l.b16 %v151
    %v1036 = vunpack.c.h.b16 %v151
    %v1037 = vunpack.c.l.b16 %v152
    %v1038 = vunpack.c.h.b16 %v152
    %v1039 = vunpack.c.l.b16 %v153
    %v1040 = vunpack.c.h.b16 %v153
    %v1041 = vunpack.c.l.b16 %v154
    %v1042 = vunpack.c.h.b16 %v154
    %v1043 = vunpack.c.l.b16 %v155
    %v1044 = vunpack.c.h.b16 %v155
    %v1045 = vunpack.c.l.b16 %v156
    %v1046 = vunpack.c.h.b16 %v156
    %v1047 = vunpack.c.l.b16 %v157
    %v1048 = vunpack.c.h.b16 %v157
    %v1049 = vunpack.c.l.b16 %v158
    %v1050 = vunpack.c.h.b16 %v158
    %v1051 = vunpack.c.l.b16 %v159
    %v1052 = vunpack.c.h.b16 %v159
    %v1053 = vunpack.c.l.b16 %v160
    %v1054 = vunpack.c.h.b16 %v160
    %v1055 = vunpack.c.l.b16 %v161
    %v1056 = vunpack.c.h.b16 %v161
    %v1057 = vunpack.c.l.b16 %v162
    %v1058 = vunpack.c.h.b16 %v162
    %v1059 = vunpack.c.l.b16 %v163
    %v1060 = vunpack.c.h.b16 %v163
    %v1061 = vunpack.c.l.b16 %v164
    %v1062 = vunpack.c.h.b16 %v164
    %v1063 = vunpack.c.l.b16 %v165
    %v1064 = vunpack.c.h.b16 %v165
    %v1065 = vunpack.c.l.b16 %v166
    %v1066 = vunpack.c.h.b16 %v166
    %v1067 = vunpack.c.l.b16 %v167
    %v1068 = vunpack.c.h.b16 %v167
    %v1069 = vunpack.c.l.b16 %v168
    %v1070 = vunpack.c.h.b16 %v168
    %v1071 = vunpack.c.l.b16 %v169
    %v1072 = vunpack.c.h.b16 %v169
    %v1073 = vunpack.c.l.b16 %v170
    %v1074 = vunpack.c.h.b16 %v170
    %v1075 = vunpack.c.l.b16 %v171
    %v1076 = vunpack.c.h.b16 %v171
    %v1077 = vunpack.c.l.b16 %v172
    %v1078 = vunpack.c.h.b16 %v172
    %v1079 = vunpack.c.l.b16 %v173
    %v1080 = vunpack.c.h.b16 %v173
    %v1081 = vunpack.c.l.b16 %v174
    %v1082 = vunpack.c.h.b16 %v174
    %v1083 = vunpack.c.l.b16 %v175
    %v1084 = vunpack.c.h.b16 %v175
    %v1085 = vunpack.c.l.b16 %v176
    %v1086 = vunpack.c.h.b16 %v176
    %v1087 = vunpack.c.l.b16 %v177
    %v1088 = vunpack.c.h.b16 %v177
    %v1089 = vunpack.c.l.b16 %v178
    %v1090 = vunpack.c.h.b16 %v178
    %v1091 = vunpack.c.l.b16 %v179
    %v1092 = vunpack.c.h.b16 %v179
    %v1093 = vunpack.c.l.b16 %v180
    %v1094 = vunpack.c.h.b16 %v180
    %v1095 = vunpack.c.l.b16 %v181
    %v1096 = vunpack.c.h.b16 %v181
    %v1097 = vunpack.c.l.b16 %v182
    %v1098 = vunpack.c.h.b16 %v182
    %v1099 = vunpack.c.l.b16 %v183
    %v1100 = vunpack.c.h.b16 %v183
    %v1101 = vunpack.c.l.b16 %v184
    %v1102 = vunpack.c.h.b16 %v184
    %v1103 = vunpack.c.l.b16 %v185
    %v1104 = vunpack.c.h.b16 %v185
    %v1105 = vunpack.c.l.b16 %v186
    %v1106 = vunpack.c.h.b16 %v186
    %v1107 = vunpack.c.l.b16 %v187
    %v1108 = vunpack.c.h.b16 %v187
    %v1109 = vunpack.c.l.b16 %v188
    %v1110 = vunpack.c.h.b16 %v188
    %v1111 = vunpack.c.l.b16 %v189
    %v1112 = vunpack.c.h.b16 %v189
    %v1113 = vunpack.c.l.b16 %v190
    %v1114 = vunpack.c.h.b16 %v190
    %v1115 = vunpack.c.l.b16 %v191
    %v1116 = vunpack.c.h.b16 %v191
    %v1117 = vunpack.c.l.b16 %v192
    %v1118 = vunpack.c.h.b16 %v192
    %v1119 = vunpack.c.l.b16 %v193
    %v1120 = vunpack.c.h.b16 %v193
    %v1121 = vunpack.c.l.b16 %v194
    %v1122 = vunpack.c.h.b16 %v194
    %v1123 = vunpack.c.l.b16 %v195
    %v1124 = vunpack.c.h.b16 %v195
    %v1125 = vunpack.c.l.b16 %v196
    %v1126 = vunpack.c.h.b16 %v196
    %v1127 = vunpack.c.l.b16 %v197
    %v1128 = vunpack.c.h.b16 %v197
    %v1129 = vunpack.c.l.b16 %v198
    %v1130 = vunpack.c.h.b16 %v198
    %v1131 = vunpack.c.l.b16 %v199
    %v1132 = vunpack.c.h.b16 %v199
    %v1133 = vunpack.c.l.b16 %v200
    %v1134 = vunpack.c.h.b16 %v200
    %v1135 = vunpack.c.l.b16 %v201
    %v1136 = vunpack.c.h.b16 %v201
    %v1137 = vunpack.c.l.b16 %v202
    %v1138 = vunpack.c.h.b16 %v202
    %v1139 = vunpack.c.l.b16 %v203
    %v1140 = vunpack.c.h.b16 %v203
    %v1141 = vunpack.c.l.b16 %v204
    %v1142 = vunpack.c.h.b16 %v204
    %v1143 = vunpack.c.l.b16 %v205
    %v1144 = vunpack.c.h.b16 %v205
    %v1145 = vunpack.c.l.b16 %v206
    %v1146 = vunpack.c.h.b16 %v206
    %v1147 = vunpack.c.l.b16 %v207
    %v1148 = vunpack.c.h.b16 %v207
    %v1149 = vunpack.c.l.b16 %v208
    %v1150 = vunpack.c.h.b16 %v208
    %v1151 = vunpack.c.l.b16 %v209
    %v1152 = vunpack.c.h.b16 %v209
    %v1153 = vunpack.c.l.b16 %v210
    %v1154 = vunpack.c.h.b16 %v210
    %v1155 = vunpack.c.l.b16 %v211
    %v1156 = vunpack.c.h.b16 %v211
    %v1157 = vunpack.c.l.b16 %v212
    %v1158 = vunpack.c.h.b16 %v212
    %v1159 = vunpack.c.l.b16 %v213
    %v1160 = vunpack.c.h.b16 %v213
    %v1161 = vunpack.c.l.b16 %v214
    %v1162 = vunpack.c.h.b16 %v214
    %v1163 = vunpack.c.l.b16 %v215
    %v1164 = vunpack.c.h.b16 %v215
    %v1165 = vunpack.c.l.b16 %v216
    %v1166 = vunpack.c.h.b16 %v216
    %v1167 = vunpack.c.l.b16 %v217
    %v1168 = vunpack.c.h.b16 %v217
    %v1169 = vunpack.c.l.b16 %v218
    %v1170 = vunpack.c.h.b16 %v218
    %v1171 = vunpack.c.l.b16 %v219
    %v1172 = vunpack.c.h.b16 %v219
    %v1173 = vunpack.c.l.b16 %v220
    %v1174 = vunpack.c.h.b16 %v220
    %v1175 = vunpack.c.l.b16 %v221
    %v1176 = vunpack.c.h.b16 %v221
    %v1177 = vunpack.c.l.b16 %v222
    %v1178 = vunpack.c.h.b16 %v222
    %v1179 = vunpack.c.l.b16 %v223
    %v1180 = vunpack.c.h.b16 %v223
    %v1181 = vunpack.c.l.b16 %v224
    %v1182 = vunpack.c.h.b16 %v224
    %v1183 = vunpack.c.l.b16 %v225
    %v1184 = vunpack.c.h.b16 %v225
    %v1185 = vunpack.c.l.b16 %v226
    %v1186 = vunpack.c.h.b16 %v226
    %v1187 = vunpack.c.l.b16 %v227
    %v1188 = vunpack.c.h.b16 %v227
    %v1189 = vunpack.c.l.b16 %v228
    %v1190 = vunpack.c.h.b16 %v228
    %v1191 = vunpack.c.l.b16 %v229
    %v1192 = vunpack.c.h.b16 %v229
    %v1193 = vunpack.c.l.b16 %v230
    %v1194 = vunpack.c.h.b16 %v230
    %v1195 = vunpack.c.l.b16 %v231
    %v1196 = vunpack.c.h.b16 %v231
    %v1197 = vunpack.c.l.b16 %v232
    %v1198 = vunpack.c.h.b16 %v232
    %v1199 = vunpack.c.l.b16 %v233
    %v1200 = vunpack.c.h.b16 %v233
    %v1201 = vunpack.c.l.b16 %v234
    %v1202 = vunpack.c.h.b16 %v234
    %v1203 = vunpack.c.l.b16 %v235
    %v1204 = vunpack.c.h.b16 %v235
    %v1205 = vunpack.c.l.b16 %v236
    %v1206 = vunpack.c.h.b16 %v236
    %v1207 = vunpack.c.l.b16 %v237
    %v1208 = vunpack.c.h.b16 %v237
    %v1209 = vunpack.c.l.b16 %v238
    %v1210 = vunpack.c.h.b16 %v238
    %v1211 = vunpack.c.l.b16 %v239
    %v1212 = vunpack.c.h.b16 %v239
    %v1213 = vunpack.c.l.b16 %v240
    %v1214 = vunpack.c.h.b16 %v240
    %v1215 = vunpack.c.l.b16 %v241
    %v1216 = vunpack.c.h.b16 %v241
    %v1217 = vunpack.c.l.b16 %v242
    %v1218 = vunpack.c.h.b16 %v242
    %v1219 = vunpack.c.l.b16 %v243
    %v1220 = vunpack.c.h.b16 %v243
    %v1221 = vunpack.c.l.b16 %v244
    %v1222 = vunpack.c.h.b16 %v244
    %v1223 = vunpack.c.l.b16 %v245
    %v1224 = vunpack.c.h.b16 %v245
    %v1225 = vunpack.c.l.b16 %v246
    %v1226 = vunpack.c.h.b16 %v246
    %v1227 = vunpack.c.l.b16 %v247
    %v1228 = vunpack.c.h.b16 %v247
    %v1229 = vunpack.c.l.b16 %v248
    %v1230 = vunpack.c.h.b16 %v248
    %v1231 = vunpack.c.l.b16 %v249
    %v1232 = vunpack.c.h.b16 %v249
    %v1233 = vunpack.c.l.b16 %v250
    %v1234 = vunpack.c.h.b16 %v250
    %v1235 = vunpack.c.l.b16 %v251
    %v1236 = vunpack.c.h.b16 %v251
    %v1237 = vunpack.c.l.b16 %v252
    %v1238 = vunpack.c.h.b16 %v252
    %v1239 = vunpack.c.l.b16 %v253
    %v1240 = vunpack.c.h.b16 %v253
    %v1241 = vunpack.c.l.b16 %v254
    %v1242 = vunpack.c.h.b16 %v254
    %v1243 = vunpack.c.l.b16 %v255
    %v1244 = vunpack.c.h.b16 %v255
    %v1245 = vunpack.c.l.b16 %v256
    %v1246 = vunpack.c.h.b16 %v256
    %v1247 = vunpack.c.l.b16 %v257
    %v1248 = vunpack.c.h.b16 %v257
    %v1249 = vunpack.c.l.b16 %v258
    %v1250 = vunpack.c.h.b16 %v258
    %v1251 = vunpack.c.l.b16 %v259
    %v1252 = vunpack.c.h.b16 %v259
    %v1253 = vunpack.c.l.b16 %v260
    %v1254 = vunpack.c.h.b16 %v260
    %v1255 = vunpack.c.l.b16 %v261
    %v1256 = vunpack.c.h.b16 %v261
    %v1257 = vunpack.c.l.b16 %v262
    %v1258 = vunpack.c.h.b16 %v262
    %v1259 = vunpack.c.l.b16 %v263
    %v1260 = vunpack.c.h.b16 %v263
    %v1261 = vunpack.c.l.b16 %v264
    %v1262 = vunpack.c.h.b16 %v264
    %v1263 = vunpack.c.l.b16 %v265
    %v1264 = vunpack.c.h.b16 %v265
    %v1265 = vunpack.c.l.b16 %v266
    %v1266 = vunpack.c.h.b16 %v266
    %v1267 = vunpack.c.l.b16 %v267
    %v1268 = vunpack.c.h.b16 %v267
    %v1269 = vunpack.c.l.b16 %v268
    %v1270 = vunpack.c.h.b16 %v268
    %v1271 = vunpack.c.l.b16 %v269
    %v1272 = vunpack.c.h.b16 %v269
    %v1273 = vunpack.c.l.b16 %v270
    %v1274 = vunpack.c.h.b16 %v270
    %v1275 = vunpack.c.l.b16 %v271
    %v1276 = vunpack.c.h.b16 %v271
    %v1277 = vunpack.c.l.b16 %v272
    %v1278 = vunpack.c.h.b16 %v272
    %v1279 = vunpack.c.l.b16 %v273
    %v1280 = vunpack.c.h.b16 %v273
    %v1281 = vunpack.c.l.b16 %v274
    %v1282 = vunpack.c.h.b16 %v274
    %v1283 = vunpack.c.l.b16 %v275
    %v1284 = vunpack.c.h.b16 %v275
    %v1285 = vunpack.c.l.b16 %v276
    %v1286 = vunpack.c.h.b16 %v276
    %v1287 = vunpack.c.l.b16 %v277
    %v1288 = vunpack.c.h.b16 %v277
    %v1289 = vunpack.c.l.b16 %v278
    %v1290 = vunpack.c.h.b16 %v278
    %v1291 = vunpack.c.l.b16 %v279
    %v1292 = vunpack.c.h.b16 %v279
    %v1293 = vunpack.c.l.b16 %v280
    %v1294 = vunpack.c.h.b16 %v280
    %v1295 = vunpack.c.l.b16 %v281
    %v1296 = vunpack.c.h.b16 %v281
    %v1297 = vunpack.c.l.b16 %v282
    %v1298 = vunpack.c.h.b16 %v282
    %v1299 = vunpack.c.l.b16 %v283
    %v1300 = vunpack.c.h.b16 %v283
    %v1301 = vunpack.c.l.b16 %v284
    %v1302 = vunpack.c.h.b16 %v284
    %v1303 = vunpack.c.l.b16 %v285
    %v1304 = vunpack.c.h.b16 %v285
    %v1305 = vunpack.c.l.b16 %v286
    %v1306 = vunpack.c.h.b16 %v286
    %v1307 = vunpack.c.l.b16 %v287
    %v1308 = vunpack.c.h.b16 %v287
    %v1309 = vunpack.c.l.b16 %v288
    %v1310 = vunpack.c.h.b16 %v288
    %v1311 = vunpack.c.l.b16 %v289
    %v1312 = vunpack.c.h.b16 %v289
    %v1313 = vunpack.c.l.b16 %v290
    %v1314 = vunpack.c.h.b16 %v290
    %v1315 = vunpack.c.l.b16 %v291
    %v1316 = vunpack.c.h.b16 %v291
    %v1317 = vunpack.c.l.b16 %v292
    %v1318 = vunpack.c.h.b16 %v292
    %v1319 = vunpack.c.l.b16 %v293
    %v1320 = vunpack.c.h.b16 %v293
    %v1321 = vunpack.c.l.b16 %v294
    %v1322 = vunpack.c.h.b16 %v294
    %v1323 = vunpack.c.l.b16 %v295
    %v1324 = vunpack.c.h.b16 %v295
    %v1325 = vunpack.c.l.b16 %v296
    %v1326 = vunpack.c.h.b16 %v296
    %v1327 = vunpack.c.l.b16 %v297
    %v1328 = vunpack.c.h.b16 %v297
    %v1329 = vunpack.c.l.b16 %v298
    %v1330 = vunpack.c.h.b16 %v298
    %v1331 = vunpack.c.l.b16 %v299
    %v1332 = vunpack.c.h.b16 %v299
    %v1333 = vunpack.c.l.b16 %v300
    %v1334 = vunpack.c.h.b16 %v300
    %v1335 = vunpack.c.l.b16 %v301
    %v1336 = vunpack.c.h.b16 %v301
    %v1337 = vunpack.c.l.b16 %v302
    %v1338 = vunpack.c.h.b16 %v302
    %v1339 = vunpack.c.l.b16 %v303
    %v1340 = vunpack.c.h.b16 %v303
    %v1341 = vunpack.c.l.b16 %v304
    %v1342 = vunpack.c.h.b16 %v304
    %v1343 = vunpack.c.l.b16 %v305
    %v1344 = vunpack.c.h.b16 %v305
    %v1345 = vunpack.c.l.b16 %v306
    %v1346 = vunpack.c.h.b16 %v306
    %v1347 = vunpack.c.l.b16 %v307
    %v1348 = vunpack.c.h.b16 %v307
    %v1349 = vunpack.c.l.b16 %v308
    %v1350 = vunpack.c.h.b16 %v308
    %v1351 = vunpack.c.l.b16 %v309
    %v1352 = vunpack.c.h.b16 %v309
    %v1353 = vunpack.c.l.b16 %v310
    %v1354 = vunpack.c.h.b16 %v310
    %v1355 = vunpack.c.l.b16 %v311
    %v1356 = vunpack.c.h.b16 %v311
    %v1357 = vunpack.c.l.b16 %v312
    %v1358 = vunpack.c.h.b16 %v312
    %v1359 = vunpack.c.l.b16 %v313
    %v1360 = vunpack.c.h.b16 %v313
    %v1361 = vunpack.c.l.b16 %v314
    %v1362 = vunpack.c.h.b16 %v314
    %v1363 = vunpack.c.l.b16 %v315
    %v1364 = vunpack.c.h.b16 %v315
    %v1365 = vunpack.c.l.b16 %v316
    %v1366 = vunpack.c.h.b16 %v316
    %v1367 = vunpack.c.l.b16 %v317
    %v1368 = vunpack.c.h.b16 %v317
    %v1369 = vunpack.c.l.b16 %v318
    %v1370 = vunpack.c.h.b16 %v318
    %v1371 = vunpack.c.l.b16 %v319
    %v1372 = vunpack.c.h.b16 %v319
    %v1373 = vunpack.c.l.b16 %v320
    %v1374 = vunpack.c.h.b16 %v320
    %v1375 = vunpack.c.l.b16 %v321
    %v1376 = vunpack.c.h.b16 %v321
    %v1377 = vunpack.c.l.b16 %v322
    %v1378 = vunpack.c.h.b16 %v322
    %v1379 = vunpack.c.l.b16 %v323
    %v1380 = vunpack.c.h.b16 %v323
    %v1381 = vunpack.c.l.b16 %v324
    %v1382 = vunpack.c.h.b16 %v324
    %v1383 = vunpack.c.l.b16 %v325
    %v1384 = vunpack.c.h.b16 %v325
    %v1385 = vunpack.c.l.b16 %v326
    %v1386 = vunpack.c.h.b16 %v326
    %v1387 = vunpack.c.l.b16 %v327
    %v1388 = vunpack.c.h.b16 %v327
    %v1389 = vunpack.c.l.b16 %v328
    %v1390 = vunpack.c.h.b16 %v328
    %v1391 = vunpack.c.l.b16 %v329
    %v1392 = vunpack.c.h.b16 %v329
    %v1393 = vunpack.c.l.b16 %v330
    %v1394 = vunpack.c.h.b16 %v330
    %v1395 = vunpack.c.l.b16 %v331
    %v1396 = vunpack.c.h.b16 %v331
    %v1397 = vunpack.c.l.b16 %v332
    %v1398 = vunpack.c.h.b16 %v332
    %v1399 = vunpack.c.l.b16 %v333
    %v1400 = vunpack.c.h.b16 %v333
    %v1401 = vunpack.c.l.b16 %v334
    %v1402 = vunpack.c.h.b16 %v334
    %v1403 = vunpack.c.l.b16 %v335
    %v1404 = vunpack.c.h.b16 %v335
    %v1405 = vunpack.c.l.b16 %v336
    %v1406 = vunpack.c.h.b16 %v336
    %v1407 = vunpack.c.l.b16 %v337
    %v1408 = vunpack.c.h.b16 %v337
    %v1409 = vunpack.c.l.b16 %v338
    %v1410 = vunpack.c.h.b16 %v338
    %v1411 = vunpack.c.l.b16 %v339
    %v1412 = vunpack.c.h.b16 %v339
    %v1413 = vunpack.c.l.b16 %v340
    %v1414 = vunpack.c.h.b16 %v340
    %v1415 = vunpack.c.l.b16 %v341
    %v1416 = vunpack.c.h.b16 %v341
    %v1417 = vunpack.c.l.b16 %v342
    %v1418 = vunpack.c.h.b16 %v342
    %v1419 = vunpack.c.l.b16 %v343
    %v1420 = vunpack.c.h.b16 %v343
    %v1421 = vunpack.c.l.b16 %v344
    %v1422 = vunpack.c.h.b16 %v344
    %v1423 = vunpack.c.l.b16 %v345
    %v1424 = vunpack.c.h.b16 %v345
    %v1425 = vunpack.c.l.b16 %v346
    %v1426 = vunpack.c.h.b16 %v346
    %v1427 = vunpack.c.l.b16 %v347
    %v1428 = vunpack.c.h.b16 %v347
    %v1429 = vunpack.c.l.b16 %v348
    %v1430 = vunpack.c.h.b16 %v348
    %v1431 = vunpack.c.l.b16 %v349
    %v1432 = vunpack.c.h.b16 %v349
    %v1433 = vunpack.c.l.b16 %v350
    %v1434 = vunpack.c.h.b16 %v350
    %v1435 = vunpack.c.l.b16 %v351
    %v1436 = vunpack.c.h.b16 %v351
    %v1437 = vunpack.c.l.b16 %v352
    %v1438 = vunpack.c.h.b16 %v352
    %v1439 = vunpack.c.l.b16 %v353
    %v1440 = vunpack.c.h.b16 %v353
    %v1441 = vunpack.c.l.b16 %v354
    %v1442 = vunpack.c.h.b16 %v354
    %v1443 = vunpack.c.l.b16 %v355
    %v1444 = vunpack.c.h.b16 %v355
    %v1445 = vunpack.c.l.b16 %v356
    %v1446 = vunpack.c.h.b16 %v356
    %v1447 = vunpack.c.l.b16 %v357
    %v1448 = vunpack.c.h.b16 %v357
    %v1449 = vunpack.c.l.b16 %v358
    %v1450 = vunpack.c.h.b16 %v358
    %v1451 = vunpack.c.l.b16 %v359
    %v1452 = vunpack.c.h.b16 %v359
    %v1453 = vunpack.c.l.b16 %v360
    %v1454 = vunpack.c.h.b16 %v360
    %v1455 = vunpack.c.l.b16 %v361
    %v1456 = vunpack.c.h.b16 %v361
    %v1457 = vunpack.c.l.b16 %v362
    %v1458 = vunpack.c.h.b16 %v362
    %v1459 = vunpack.c.l.b16 %v363
    %v1460 = vunpack.c.h.b16 %v363
    %v1461 = vunpack.c.l.b16 %v364
    %v1462 = vunpack.c.h.b16 %v364
    %v1463 = vunpack.c.l.b16 %v365
    %v1464 = vunpack.c.h.b16 %v365
    %v1465 = vunpack.c.l.b16 %v366
    %v1466 = vunpack.c.h.b16 %v366
    %v1467 = vunpack.c.l.b16 %v367
    %v1468 = vunpack.c.h.b16 %v367
    %v1469 = vunpack.c.l.b16 %v368
    %v1470 = vunpack.c.h.b16 %v368
    %v1471 = vunpack.c.l.b16 %v369
    %v1472 = vunpack.c.h.b16 %v369
    %v1473 = vunpack.c.l.b16 %v370
    %v1474 = vunpack.c.h.b16 %v370
    %v1475 = vunpack.c.l.b16 %v371
    %v1476 = vunpack.c.h.b16 %v371
    %v1477 = vunpack.c.l.b16 %v372
    %v1478 = vunpack.c.h.b16 %v372
    %v1479 = vunpack.c.l.b16 %v373
    %v1480 = vunpack.c.h.b16 %v373
    %v1481 = vunpack.c.l.b16 %v374
    %v1482 = vunpack.c.h.b16 %v374
    %v1483 = vunpack.c.l.b16 %v375
    %v1484 = vunpack.c.h.b16 %v375
    %v1485 = vunpack.c.l.b16 %v376
    %v1486 = vunpack.c.h.b16 %v376
    %v1487 = vunpack.c.l.b16 %v377
    %v1488 = vunpack.c.h.b16 %v377
    %v1489 = vunpack.c.l.b16 %v378
    %v1490 = vunpack.c.h.b16 %v378
    %v1491 = vunpack.c.l.b16 %v379
    %v1492 = vunpack.c.h.b16 %v379
    %v1493 = vunpack.c.l.b16 %v380
    %v1494 = vunpack.c.h.b16 %v380
    %v1495 = vunpack.c.l.b16 %v381
    %v1496 = vunpack.c.h.b16 %v381
    %v1497 = vunpack.c.l.b16 %v382
    %v1498 = vunpack.c.h.b16 %v382
    %v1499 = vunpack.c.l.b16 %v383
    %v1500 = vunpack.c.h.b16 %v383
    %v1501 = vunpack.c.l.b16 %v384
    %v1502 = vunpack.c.h.b16 %v384
    %v1503 = vunpack.c.l.b16 %v385
    %v1504 = vunpack.c.h.b16 %v385
    %v1505 = vunpack.c.l.b16 %v386
    %v1506 = vunpack.c.h.b16 %v386
    %v1507 = vunpack.c.l.b16 %v387
    %v1508 = vunpack.c.h.b16 %v387
    %v1509 = vunpack.c.l.b16 %v388
    %v1510 = vunpack.c.h.b16 %v388
    %v1511 = vunpack.c.l.b16 %v389
    %v1512 = vunpack.c.h.b16 %v389
    %v1513 = vunpack.c.l.b16 %v390
    %v1514 = vunpack.c.h.b16 %v390
    %v1515 = vunpack.c.l.b16 %v391
    %v1516 = vunpack.c.h.b16 %v391
    %v1517 = vunpack.c.l.b16 %v392
    %v1518 = vunpack.c.h.b16 %v392
    %v1519 = vunpack.c.l.b16 %v393
    %v1520 = vunpack.c.h.b16 %v393
    %v1521 = vunpack.c.l.b16 %v394
    %v1522 = vunpack.c.h.b16 %v394
    %v1523 = vunpack.c.l.b16 %v395
    %v1524 = vunpack.c.h.b16 %v395
    %v1525 = vunpack.c.l.b16 %v396
    %v1526 = vunpack.c.h.b16 %v396
    %v1527 = vunpack.c.l.b16 %v397
    %v1528 = vunpack.c.h.b16 %v397
    %v1529 = vunpack.c.l.b16 %v398
    %v1530 = vunpack.c.h.b16 %v398
    %v1531 = vunpack.c.l.b16 %v399
    %v1532 = vunpack.c.h.b16 %v399
    %v1533 = vunpack.c.l.b16 %v400
    %v1534 = vunpack.c.h.b16 %v400
    %v1535 = vunpack.c.l.b16 %v401
    %v1536 = vunpack.c.h.b16 %v401
    %v1537 = vunpack.c.l.b16 %v402
    %v1538 = vunpack.c.h.b16 %v402
    %v1539 = vunpack.c.l.b16 %v403
    %v1540 = vunpack.c.h.b16 %v403
    %v1541 = vunpack.c.l.b16 %v404
    %v1542 = vunpack.c.h.b16 %v404
    %v1543 = vunpack.c.l.b16 %v405
    %v1544 = vunpack.c.h.b16 %v405
    %v1545 = vunpack.c.l.b16 %v406
    %v1546 = vunpack.c.h.b16 %v406
    %v1547 = vunpack.c.l.b16 %v407
    %v1548 = vunpack.c.h.b16 %v407
    %v1549 = vunpack.c.l.b16 %v408
    %v1550 = vunpack.c.h.b16 %v408
    %v1551 = vunpack.c.l.b16 %v409
    %v1552 = vunpack.c.h.b16 %v409
    %v1553 = vunpack.c.l.b16 %v410
    %v1554 = vunpack.c.h.b16 %v410
    %v1555 = vunpack.c.l.b16 %v411
    %v1556 = vunpack.c.h.b16 %v411
    %v1557 = vunpack.c.l.b16 %v412
    %v1558 = vunpack.c.h.b16 %v412
    %v1559 = vunpack.c.l.b16 %v413
    %v1560 = vunpack.c.h.b16 %v413
    %v1561 = vunpack.c.l.b16 %v414
    %v1562 = vunpack.c.h.b16 %v414
    %v1563 = vunpack.c.l.b16 %v415
    %v1564 = vunpack.c.h.b16 %v415
    %v1565 = vunpack.c.l.b16 %v416
    %v1566 = vunpack.c.h.b16 %v416
    %v1567 = vunpack.c.l.b16 %v417
    %v1568 = vunpack.c.h.b16 %v417
    %v1569 = vunpack.c.l.b16 %v418
    %v1570 = vunpack.c.h.b16 %v418
    %v1571 = vunpack.c.l.b16 %v419
    %v1572 = vunpack.c.h.b16 %v419
    %v1573 = vunpack.c.l.b16 %v420
    %v1574 = vunpack.c.h.b16 %v420
    %v1575 = vunpack.c.l.b16 %v421
    %v1576 = vunpack.c.h.b16 %v421
    %v1577 = vunpack.c.l.b16 %v422
    %v1578 = vunpack.c.h.b16 %v422
    %v1579 = vunpack.c.l.b16 %v423
    %v1580 = vunpack.c.h.b16 %v423
    %v1581 = vunpack.c.l.b16 %v424
    %v1582 = vunpack.c.h.b16 %v424
    %v1583 = vunpack.c.l.b16 %v425
    %v1584 = vunpack.c.h.b16 %v425
    %v1585 = vunpack.c.l.b16 %v426
    %v1586 = vunpack.c.h.b16 %v426
    %v1587 = vunpack.c.l.b16 %v427
    %v1588 = vunpack.c.h.b16 %v427
    %v1589 = vunpack.c.l.b16 %v428
    %v1590 = vunpack.c.h.b16 %v428
    %v1591 = vunpack.c.l.b16 %v429
    %v1592 = vunpack.c.h.b16 %v429
    %v1593 = vunpack.c.l.b16 %v430
    %v1594 = vunpack.c.h.b16 %v430
    %v1595 = vunpack.c.l.b16 %v431
    %v1596 = vunpack.c.h.b16 %v431
    %v1597 = vunpack.c.l.b16 %v432
    %v1598 = vunpack.c.h.b16 %v432
    %v1599 = vunpack.c.l.b16 %v433
    %v1600 = vunpack.c.h.b16 %v433
    %v1601 = vunpack.c.l.b16 %v434
    %v1602 = vunpack.c.h.b16 %v434
    %v1603 = vunpack.c.l.b16 %v435
    %v1604 = vunpack.c.h.b16 %v435
    %v1605 = vunpack.c.l.b16 %v436
    %v1606 = vunpack.c.h.b16 %v436
    %v1607 = vunpack.c.l.b16 %v437
    %v1608 = vunpack.c.h.b16 %v437
    %v1609 = vunpack.c.l.b16 %v438
    %v1610 = vunpack.c.h.b16 %v438
    %v1611 = vunpack.c.l.b16 %v439
    %v1612 = vunpack.c.h.b16 %v439
    %v1613 = vunpack.c.l.b16 %v440
    %v1614 = vunpack.c.h.b16 %v440
    %v1615 = vunpack.c.l.b16 %v441
    %v1616 = vunpack.c.h.b16 %v441
    %v1617 = vunpack.c.l.b16 %v442
    %v1618 = vunpack.c.h.b16 %v442
    %v1619 = vunpack.c.l.b16 %v443
    %v1620 = vunpack.c.h.b16 %v443
    %v1621 = vunpack.c.l.b16 %v444
    %v1622 = vunpack.c.h.b16 %v444
    %v1623 = vunpack.c.l.b16 %v445
    %v1624 = vunpack.c.h.b16 %v445
    %v1625 = vunpack.c.l.b16 %v446
    %v1626 = vunpack.c.h.b16 %v446
    %v1627 = vunpack.c.l.b16 %v447
    %v1628 = vunpack.c.h.b16 %v447
    %v1629 = vunpack.c.l.b16 %v448
    %v1630 = vunpack.c.h.b16 %v448
    %v1631 = vunpack.c.l.b16 %v449
    %v1632 = vunpack.c.h.b16 %v449
    %v1633 = vunpack.c.l.b16 %v450
    %v1634 = vunpack.c.h.b16 %v450
    %v1635 = vunpack.c.l.b16 %v451
    %v1636 = vunpack.c.h.b16 %v451
    %v1637 = vunpack.c.l.b16 %v452
    %v1638 = vunpack.c.h.b16 %v452
    %v1639 = vunpack.c.l.b16 %v453
    %v1640 = vunpack.c.h.b16 %v453
    %v1641 = vunpack.c.l.b16 %v454
    %v1642 = vunpack.c.h.b16 %v454
    %v1643 = vunpack.c.l.b16 %v455
    %v1644 = vunpack.c.h.b16 %v455
    %v1645 = vunpack.c.l.b16 %v456
    %v1646 = vunpack.c.h.b16 %v456
    %v1647 = vunpack.c.l.b16 %v457
    %v1648 = vunpack.c.h.b16 %v457
    %v1649 = vunpack.c.l.b16 %v458
    %v1650 = vunpack.c.h.b16 %v458
    %v1651 = vunpack.c.l.b16 %v459
    %v1652 = vunpack.c.h.b16 %v459
    %v1653 = vunpack.c.l.b16 %v460
    %v1654 = vunpack.c.h.b16 %v460
    %v1655 = vunpack.c.l.b16 %v461
    %v1656 = vunpack.c.h.b16 %v461
    %v1657 = vunpack.c.l.b16 %v462
    %v1658 = vunpack.c.h.b16 %v462
    %v1659 = vunpack.c.l.b16 %v463
    %v1660 = vunpack.c.h.b16 %v463
    %v1661 = vunpack.c.l.b16 %v464
    %v1662 = vunpack.c.h.b16 %v464
    %v1663 = vunpack.c.l.b16 %v465
    %v1664 = vunpack.c.h.b16 %v465
    %v1665 = vunpack.c.l.b16 %v466
    %v1666 = vunpack.c.h.b16 %v466
    %v1667 = vunpack.c.l.b16 %v467
    %v1668 = vunpack.c.h.b16 %v467
    %v1669 = vunpack.c.l.b16 %v468
    %v1670 = vunpack.c.h.b16 %v468
    %v1671 = vunpack.c.l.b16 %v469
    %v1672 = vunpack.c.h.b16 %v469
    %v1673 = vunpack.c.l.b16 %v470
    %v1674 = vunpack.c.h.b16 %v470
    %v1675 = vunpack.c.l.b16 %v471
    %v1676 = vunpack.c.h.b16 %v471
    %v1677 = vunpack.c.l.b16 %v472
    %v1678 = vunpack.c.h.b16 %v472
    %v1679 = vunpack.c.l.b16 %v473
    %v1680 = vunpack.c.h.b16 %v473
    %v1681 = vunpack.c.l.b16 %v474
    %v1682 = vunpack.c.h.b16 %v474
    %v1683 = vunpack.c.l.b16 %v475
    %v1684 = vunpack.c.h.b16 %v475
    %v1685 = vunpack.c.l.b16 %v476
    %v1686 = vunpack.c.h.b16 %v476
    %v1687 = vunpack.c.l.b16 %v477
    %v1688 = vunpack.c.h.b16 %v477
    %v1689 = vpack.c.b16 %v913, %v905
    %v1690 = vpack.c.b16 %v914, %v906
    %v1691 = vpack.c.b16 %v915, %v907
    %v1692 = vpack.c.b16 %v916, %v908
    %v1693 = vpack.c.b16 %v917, %v909
    %v1694 = vpack.c.b16 %v918, %v910
    %v1695 = vpack.c.b16 %v919, %v911
    %v1696 = vpack.c.b16 %v920, %v912
    %v1697 = vpack.c.b16 %v929, %v921
    %v1698 = vpack.c.b16 %v930, %v922
    %v1699 = vpack.c.b16 %v931, %v923
    %v1700 = vpack.c.b16 %v932, %v924
    %v1701 = vpack.c.b16 %v933, %v925
    %v1702 = vpack.c.b16 %v934, %v926
    %v1703 = vpack.c.b16 %v935, %v927
    %v1704 = vpack.c.b16 %v936, %v928
    %v1705 = vpack.c.b16 %v945, %v937
    %v1706 = vpack.c.b16 %v946, %v938
    %v1707 = vpack.c.b16 %v947, %v939
    %v1708 = vpack.c.b16 %v948, %v940
    %v1709 = vpack.c.b16 %v949, %v941
    %v1710 = vpack.c.b16 %v950, %v942
    %v1711 = vpack.c.b16 %v951, %v943
    %v1712 = vpack.c.b16 %v952, %v944
    %v1713 = vpack.c.b16 %v961, %v953
    %v1714 = vpack.c.b16 %v962, %v954
    %v1715 = vpack.c.b16 %v963, %v955
    %v1716 = vpack.c.b16 %v964, %v956
    %v1717 = vpack.c.b16 %v965, %v957
    %v1718 = vpack.c.b16 %v966, %v958
    %v1719 = vpack.c.b16 %v967, %v959
    %v1720 = vpack.c.b16 %v968, %v960
    %v1721 = vpack.c.b16 %v977, %v969
    %v1722 = vpack.c.b16 %v978, %v970
    %v1723 = vpack.c.b16 %v979, %v971
    %v1724 = vpack.c.b16 %v980, %v972
    %v1725 = vpack.c.b16 %v981, %v973
    %v1726 = vpack.c.b16 %v982, %v974
    %v1727 = vpack.c.b16 %v983, %v975
    %v1728 = vpack.c.b16 %v984, %v976
    %v1729 = vpack.c.b16 %v993, %v985
    %v1730 = vpack.c.b16 %v994, %v986
    %v1731 = vpack.c.b16 %v995, %v987
    %v1732 = vpack.c.b16 %v996, %v988
    %v1733 = vpack.c.b16 %v997, %v989
    %v1734 = vpack.c.b16 %v998, %v990
    %v1735 = vpack.c.b16 %v999, %v991
    %v1736 = vpack.c.b16 %v1000, %v992
    %v1737 = vpack.c.b16 %v1009, %v1001
    %v1738 = vpack.c.b16 %v1010, %v1002
    %v1739 = vpack.c.b16 %v1011, %v1003
    %v1740 = vpack.c.b16 %v1012, %v1004
    %v1741 = vpack.c.b16 %v1013, %v1005
    %v1742 = vpack.c.b16 %v1014, %v1006
    %v1743 = vpack.c.b16 %v1015, %v1007
    %v1744 = vpack.c.b16 %v1016, %v1008
    %v1745 = vpack.c.b16 %v1025, %v1017
    %v1746 = vpack.c.b16 %v1026, %v1018
    %v1747 = vpack.c.b16 %v1027, %v1019
    %v1748 = vpack.c.b16 %v1028, %v1020
    %v1749 = vpack.c.b16 %v1029, %v1021
    %v1750 = vpack.c.b16 %v1030, %v1022
    %v1751 = vpack.c.b16 %v1031, %v1023
    %v1752 = vpack.c.b16 %v1032, %v1024
    %v1753 = vpack.c.b16 %v1041, %v1033
    %v1754 = vpack.c.b16 %v1042, %v1034
    %v1755 = vpack.c.b16 %v1043, %v1035
    %v1756 = vpack.c.b16 %v1044, %v1036
    %v1757 = vpack.c.b16 %v1045, %v1037
    %v1758 = vpack.c.b16 %v1046, %v1038
    %v1759 = vpack.c.b16 %v1047, %v1039
    %v1760 = vpack.c.b16 %v1048, %v1040
    %v1761 = vpack.c.b16 %v1057, %v1049
    %v1762 = vpack.c.b16 %v1058, %v1050
    %v1763 = vpack.c.b16 %v1059, %v1051
    %v1764 = vpack.c.b16 %v1060, %v1052
    %v1765 = vpack.c.b16 %v1061, %v1053
    %v1766 = vpack.c.b16 %v1062, %v1054
    %v1767 = vpack.c.b16 %v1063, %v1055
    %v1768 = vpack.c.b16 %v1064, %v1056
    %v1769 = vpack.c.b16 %v1073, %v1065
    %v1770 = vpack.c.b16 %v1074, %v1066
    %v1771 = vpack.c.b16 %v1075, %v1067
    %v1772 = vpack.c.b16 %v1076, %v1068
    %v1773 = vpack.c.b16 %v1077, %v1069
    %v1774 = vpack.c.b16 %v1078, %v1070
    %v1775 = vpack.c.b16 %v1079, %v1071
    %v1776 = vpack.c.b16 %v1080, %v1072
    %v1777 = vpack.c.b16 %v1089, %v1081
    %v1778 = vpack.c.b16 %v1090, %v1082
    %v1779 = vpack.c.b16 %v1091, %v1083
    %v1780 = vpack.c.b16 %v1092, %v1084
    %v1781 = vpack.c.b16 %v1093, %v1085
    %v1782 = vpack.c.b16 %v1094, %v1086
    %v1783 = vpack.c.b16 %v1095, %v1087
    %v1784 = vpack.c.b16 %v1096, %v1088
    %v1785 = vpack.c.b16 %v1105, %v1097
    %v1786 = vpack.c.b16 %v1106, %v1098
    %v1787 = vpack.c.b16 %v1107, %v1099
    %v1788 = vpack.c.b16 %v1108, %v1100
    %v1789 = vpack.c.b16 %v1109, %v1101
    %v1790 = vpack.c.b16 %v1110, %v1102
    %v1791 = vpack.c.b16 %v1111, %v1103
    %v1792 = vpack.c.b16 %v1112, %v1104
    %v1793 = vpack.c.b16 %v1121, %v1113
    %v1794 = vpack.c.b16 %v1122, %v1114
    %v1795 = vpack.c.b16 %v1123, %v1115
    %v1796 = vpack.c.b16 %v1124, %v1116
    %v1797 = vpack.c.b16 %v1125, %v1117
    %v1798 = vpack.c.b16 %v1126, %v1118
    %v1799 = vpack.c.b16 %v1127, %v1119
    %v1800 = vpack.c.b16 %v1128, %v1120
    %v1801 = vpack.c.b16 %v1137, %v1129
    %v1802 = vpack.c.b16 %v1138, %v1130
    %v1803 = vpack.c.b16 %v1139, %v1131
    %v1804 = vpack.c.b16 %v1140, %v1132
    %v1805 = vpack.c.b16 %v1141, %v1133
    %v1806 = vpack.c.b16 %v1142, %v1134
    %v1807 = vpack.c.b16 %v1143, %v1135
    %v1808 = vpack.c.b16 %v1144, %v1136
    %v1809 = vpack.c.b16 %v1153, %v1145
    %v1810 = vpack.c.b16 %v1154, %v1146
    %v1811 = vpack.c.b16 %v1155, %v1147
    %v1812 = vpack.c.b16 %v1156, %v1148
    %v1813 = vpack.c.b16 %v1157, %v1149
    %v1814 = vpack.c.b16 %v1158, %v1150
    %v1815 = vpack.c.b16 %v1159, %v1151
    %v1816 = vpack.c.b16 %v1160, %v1152
    %v1817 = vpack.c.b16 %v1169, %v1161
    %v1818 = vpack.c.b16 %v1170, %v1162
    %v1819 = vpack.c.b16 %v1171, %v1163
    %v1820 = vpack.c.b16 %v1172, %v1164
    %v1821 = vpack.c.b16 %v1173, %v1165
    %v1822 = vpack.c.b16 %v1174, %v1166
    %v1823 = vpack.c.b16 %v1175, %v1167
    %v1824 = vpack.c.b16 %v1176, %v1168
    %v1825 = vpack.c.b16 %v1185, %v1177
    %v1826 = vpack.c.b16 %v1186, %v1178
    %v1827 = vpack.c.b16 %v1187, %v1179
    %v1828 = vpack.c.b16 %v1188, %v1180
    %v1829 = vpack.c.b16 %v1189, %v1181
    %v1830 = vpack.c.b16 %v1190, %v1182
    %v1831 = vpack.c.b16 %v1191, %v1183
    %v1832 = vpack.c.b16 %v1192, %v1184
    %v1833 = vpack.c.b16 %v1201, %v1193
    %v1834 = vpack.c.b16 %v1202, %v1194
    %v1835 = vpack.c.b16 %v1203, %v1195
    %v1836 = vpack.c.b16 %v1204, %v1196
    %v1837 = vpack.c.b16 %v1205, %v1197
    %v1838 = vpack.c.b16 %v1206, %v1198
    %v1839 = vpack.c.b16 %v1207, %v1199
    %v1840 = vpack.c.b16 %v1208, %v1200
    %v1841 = vpack.c.b16 %v1217, %v1209
    %v1842 = vpack.c.b16 %v1218, %v1210
    %v1843 = vpack.c.b16 %v1219, %v1211
    %v1844 = vpack.c.b16 %v1220, %v1212
    %v1845 = vpack.c.b16 %v1221, %v1213
    %v1846 = vpack.c.b16 %v1222, %v1214
    %v1847 = vpack.c.b16 %v1223, %v1215
    %v1848 = vpack.c.b16 %v1224, %v1216
    %v1849 = vpack.c.b16 %v1233, %v1225
    %v1850 = vpack.c.b16 %v1234, %v1226
    %v1851 = vpack.c.b16 %v1235, %v1227
    %v1852 = vpack.c.b16 %v1236, %v1228
    %v1853 = vpack.c.b16 %v1237, %v1229
    %v1854 = vpack.c.b16 %v1238, %v1230
    %v1855 = vpack.c.b16 %v1239, %v1231
    %v1856 = vpack.c.b16 %v1240, %v1232
    %v1857 = vpack.c.b16 %v1249, %v1241
    %v1858 = vpack.c.b16 %v1250, %v1242
    %v1859 = vpack.c.b16 %v1251, %v1243
    %v1860 = vpack.c.b16 %v1252, %v1244
    %v1861 = vpack.c.b16 %v1253, %v1245
    %v1862 = vpack.c.b16 %v1254, %v1246
    %v1863 = vpack.c.b16 %v1255, %v1247
    %v1864 = vpack.c.b16 %v1256, %v1248
    %v1865 = vpack.c.b16 %v1265, %v1257
    %v1866 = vpack.c.b16 %v1266, %v1258
    %v1867 = vpack.c.b16 %v1267, %v1259
    %v1868 = vpack.c.b16 %v1268, %v1260
    %v1869 = vpack.c.b16 %v1269, %v1261
    %v1870 = vpack.c.b16 %v1270, %v1262
    %v1871 = vpack.c.b16 %v1271, %v1263
    %v1872 = vpack.c.b16 %v1272, %v1264
    %v1873 = vpack.c.b16 %v1281, %v1273
    %v1874 = vpack.c.b16 %v1282, %v1274
    %v1875 = vpack.c.b16 %v1283, %v1275
    %v1876 = vpack.c.b16 %v1284, %v1276
    %v1877 = vpack.c.b16 %v1285, %v1277
    %v1878 = vpack.c.b16 %v1286, %v1278
    %v1879 = vpack.c.b16 %v1287, %v1279
    %v1880 = vpack.c.b16 %v1288, %v1280
    %v1881 = vpack.c.b16 %v1297, %v1289
    %v1882 = vpack.c.b16 %v1298, %v1290
    %v1883 = vpack.c.b16 %v1299, %v1291
    %v1884 = vpack.c.b16 %v1300, %v1292
    %v1885 = vpack.c.b16 %v1301, %v1293
    %v1886 = vpack.c.b16 %v1302, %v1294
    %v1887 = vpack.c.b16 %v1303, %v1295
    %v1888 = vpack.c.b16 %v1304, %v1296
    %v1889 = vpack.c.b16 %v1313, %v1305
    %v1890 = vpack.c.b16 %v1314, %v1306
    %v1891 = vpack.c.b16 %v1315, %v1307
    %v1892 = vpack.c.b16 %v1316, %v1308
    %v1893 = vpack.c.b16 %v1317, %v1309
    %v1894 = vpack.c.b16 %v1318, %v1310
    %v1895 = vpack.c.b16 %v1319, %v1311
    %v1896 = vpack.c.b16 %v1320, %v1312
    %v1897 = vpack.c.b16 %v1329, %v1321
    %v1898 = vpack.c.b16 %v1330, %v1322
    %v1899 = vpack.c.b16 %v1331, %v1323
    %v1900 = vpack.c.b16 %v1332, %v1324
    %v1901 = vpack.c.b16 %v1333, %v1325
    %v1902 = vpack.c.b16 %v1334, %v1326
    %v1903 = vpack.c.b16 %v1335, %v1327
    %v1904 = vpack.c.b16 %v1336, %v1328
    %v1905 = vpack.c.b16 %v1345, %v1337
    %v1906 = vpack.c.b16 %v1346, %v1338
    %v1907 = vpack.c.b16 %v1347, %v1339
    %v1908 = vpack.c.b16 %v1348, %v1340
    %v1909 = vpack.c.b16 %v1349, %v1341
    %v1910 = vpack.c.b16 %v1350, %v1342
    %v1911 = vpack.c.b16 %v1351, %v1343
    %v1912 = vpack.c.b16 %v1352, %v1344
    %v1913 = vpack.c.b16 %v1361, %v1353
    %v1914 = vpack.c.b16 %v1362, %v1354
    %v1915 = vpack.c.b16 %v1363, %v1355
    %v1916 = vpack.c.b16 %v1364, %v1356
    %v1917 = vpack.c.b16 %v1365, %v1357
    %v1918 = vpack.c.b16 %v1366, %v1358
    %v1919 = vpack.c.b16 %v1367, %v1359
    %v1920 = vpack.c.b16 %v1368, %v1360
    %v1921 = vpack.c.b16 %v1377, %v1369
    %v1922 = vpack.c.b16 %v1378, %v1370
    %v1923 = vpack.c.b16 %v1379, %v1371
    %v1924 = vpack.c.b16 %v1380, %v1372
    %v1925 = vpack.c.b16 %v1381, %v1373
    %v1926 = vpack.c.b16 %v1382, %v1374
    %v1927 = vpack.c.b16 %v1383, %v1375
    %v1928 = vpack.c.b16 %v1384, %v1376
    %v1929 = vpack.c.b16 %v1393, %v1385
    %v1930 = vpack.c.b16 %v1394, %v1386
    %v1931 = vpack.c.b16 %v1395, %v1387
    %v1932 = vpack.c.b16 %v1396, %v1388
    %v1933 = vpack.c.b16 %v1397, %v1389
    %v1934 = vpack.c.b16 %v1398, %v1390
    %v1935 = vpack.c.b16 %v1399, %v1391
    %v1936 = vpack.c.b16 %v1400, %v1392
    %v1937 = vpack.c.b16 %v1409, %v1401
    %v1938 = vpack.c.b16 %v1410, %v1402
    %v1939 = vpack.c.b16 %v1411, %v1403
    %v1940 = vpack.c.b16 %v1412, %v1404
    %v1941 = vpack.c.b16 %v1413, %v1405
    %v1942 = vpack.c.b16 %v1414, %v1406
    %v1943 = vpack.c.b16 %v1415, %v1407
    %v1944 = vpack.c.b16 %v1416, %v1408
    %v1945 = vpack.c.b16 %v1425, %v1417
    %v1946 = vpack.c.b16 %v1426, %v1418
    %v1947 = vpack.c.b16 %v1427, %v1419
    %v1948 = vpack.c.b16 %v1428, %v1420
    %v1949 = vpack.c.b16 %v1429, %v1421
    %v1950 = vpack.c.b16 %v1430, %v1422
    %v1951 = vpack.c.b16 %v1431, %v1423
    %v1952 = vpack.c.b16 %v1432, %v1424
    %v1953 = vpack.c.b16 %v1441, %v1433
    %v1954 = vpack.c.b16 %v1442, %v1434
    %v1955 = vpack.c.b16 %v1443, %v1435
    %v1956 = vpack.c.b16 %v1444, %v1436
    %v1957 = vpack.c.b16 %v1445, %v1437
    %v1958 = vpack.c.b16 %v1446, %v1438
    %v1959 = vpack.c.b16 %v1447, %v1439
    %v1960 = vpack.c.b16 %v1448, %v1440
    %v1961 = vpack.c.b16 %v1457, %v1449
    %v1962 = vpack.c.b16 %v1458, %v1450
    %v1963 = vpack.c.b16 %v1459, %v1451
    %v1964 = vpack.c.b16 %v1460, %v1452
    %v1965 = vpack.c.b16 %v1461, %v1453
    %v1966 = vpack.c.b16 %v1462, %v1454
    %v1967 = vpack.c.b16 %v1463, %v1455
    %v1968 = vpack.c.b16 %v1464, %v1456
    %v1969 = vpack.c.b16 %v1473, %v1465
    %v1970 = vpack.c.b16 %v1474, %v1466
    %v1971 = vpack.c.b16 %v1475, %v1467
    %v1972 = vpack.c.b16 %v1476, %v1468
    %v1973 = vpack.c.b16 %v1477, %v1469
    %v1974 = vpack.c.b16 %v1478, %v1470
    %v1975 = vpack.c.b16 %v1479, %v1471
    %v1976 = vpack.c.b16 %v1480, %v1472
    %v1977 = vpack.c.b16 %v1489, %v1481
    %v1978 = vpack.c.b16 %v1490, %v1482
    %v1979 = vpack.c.b16 %v1491, %v1483
    %v1980 = vpack.c.b16 %v1492, %v1484
    %v1981 = vpack.c.b16 %v1493, %v1485
    %v1982 = vpack.c.b16 %v1494, %v1486
    %v1983 = vpack.c.b16 %v1495, %v1487
    %v1984 = vpack.c.b16 %v1496, %v1488
    %v1985 = vpack.c.b16 %v1505, %v1497
    %v1986 = vpack.c.b16 %v1506, %v1498
    %v1987 = vpack.c.b16 %v1507, %v1499
    %v1988 = vpack.c.b16 %v1508, %v1500
    %v1989 = vpack.c.b16 %v1509, %v1501
    %v1990 = vpack.c.b16 %v1510, %v1502
    %v1991 = vpack.c.b16 %v1511, %v1503
    %v1992 = vpack.c.b16 %v1512, %v1504
    %v1993 = vpack.c.b16 %v1521, %v1513
    %v1994 = vpack.c.b16 %v1522, %v1514
    %v1995 = vpack.c.b16 %v1523, %v1515
    %v1996 = vpack.c.b16 %v1524, %v1516
    %v1997 = vpack.c.b16 %v1525, %v1517
    %v1998 = vpack.c.b16 %v1526, %v1518
    %v1999 = vpack.c.b16 %v1527, %v1519
    %v2000 = vpack.c.b16 %v1528, %v1520
    %v2001 = vpack.c.b16 %v1537, %v1529
    %v2002 = vpack.c.b16 %v1538, %v1530
    %v2003 = vpack.c.b16 %v1539, %v1531
    %v2004 = vpack.c.b16 %v1540, %v1532
    %v2005 = vpack.c.b16 %v1541, %v1533
    %v2006 = vpack.c.b16 %v1542, %v1534
    %v2007 = vpack.c.b16 %v1543, %v1535
    %v2008 = vpack.c.b16 %v1544, %v1536
    %v2009 = vpack.c.b16 %v1553, %v1545
    %v2010 = vpack.c.b16 %v1554, %v1546
    %v2011 = vpack.c.b16 %v1555, %v1547
    %v2012 = vpack.c.b16 %v1556, %v1548
    %v2013 = vpack.c.b16 %v1557, %v1549
    %v2014 = vpack.c.b16 %v1558, %v1550
    %v2015 = vpack.c.b16 %v1559, %v1551
    %v2016 = vpack.c.b16 %v1560, %v1552
    %v2017 = vpack.c.b16 %v1569, %v1561
    %v2018 = vpack.c.b16 %v1570, %v1562
    %v2019 = vpack.c.b16 %v1571, %v1563
    %v2020 = vpack.c.b16 %v1572, %v1564
    %v2021 = vpack.c.b16 %v1573, %v1565
    %v2022 = vpack.c.b16 %v1574, %v1566
    %v2023 = vpack.c.b16 %v1575, %v1567
    %v2024 = vpack.c.b16 %v1576, %v1568
    %v2025 = vpack.c.b16 %v1585, %v1577
    %v2026 = vpack.c.b16 %v1586, %v1578
    %v2027 = vpack.c.b16 %v1587, %v1579
    %v2028 = vpack.c.b16 %v1588, %v1580
    %v2029 = vpack.c.b16 %v1589, %v1581
    %v2030 = vpack.c.b16 %v1590, %v1582
    %v2031 = vpack.c.b16 %v1591, %v1583
    %v2032 = vpack.c.b16 %v1592, %v1584
    %v2033 = vpack.c.b16 %v1601, %v1593
    %v2034 = vpack.c.b16 %v1602, %v1594
    %v2035 = vpack.c.b16 %v1603, %v1595
    %v2036 = vpack.c.b16 %v1604, %v1596
    %v2037 = vpack.c.b16 %v1605, %v1597
    %v2038 = vpack.c.b16 %v1606, %v1598
    %v2039 = vpack.c.b16 %v1607, %v1599
    %v2040 = vpack.c.b16 %v1608, %v1600
    %v2041 = vpack.c.b16 %v1617, %v1609
    %v2042 = vpack.c.b16 %v1618, %v1610
    %v2043 = vpack.c.b16 %v1619, %v1611
    %v2044 = vpack.c.b16 %v1620, %v1612
    %v2045 = vpack.c.b16 %v1621, %v1613
    %v2046 = vpack.c.b16 %v1622, %v1614
    %v2047 = vpack.c.b16 %v1623, %v1615
    %v2048 = vpack.c.b16 %v1624, %v1616
    %v2049 = vpack.c.b16 %v1633, %v1625
    %v2050 = vpack.c.b16 %v1634, %v1626
    %v2051 = vpack.c.b16 %v1635, %v1627
    %v2052 = vpack.c.b16 %v1636, %v1628
    %v2053 = vpack.c.b16 %v1637, %v1629
    %v2054 = vpack.c.b16 %v1638, %v1630
    %v2055 = vpack.c.b16 %v1639, %v1631
    %v2056 = vpack.c.b16 %v1640, %v1632
    %v2057 = vpack.c.b16 %v1649, %v1641
    %v2058 = vpack.c.b16 %v1650, %v1642
    %v2059 = vpack.c.b16 %v1651, %v1643
    %v2060 = vpack.c.b16 %v1652, %v1644
    %v2061 = vpack.c.b16 %v1653, %v1645
    %v2062 = vpack.c.b16 %v1654, %v1646
    %v2063 = vpack.c.b16 %v1655, %v1647
    %v2064 = vpack.c.b16 %v1656, %v1648
    %v2065 = vpack.c.b16 %v1665, %v1657
    %v2066 = vpack.c.b16 %v1666, %v1658
    %v2067 = vpack.c.b16 %v1667, %v1659
    %v2068 = vpack.c.b16 %v1668, %v1660
    %v2069 = vpack.c.b16 %v1669, %v1661
    %v2070 = vpack.c.b16 %v1670, %v1662
    %v2071 = vpack.c.b16 %v1671, %v1663
    %v2072 = vpack.c.b16 %v1672, %v1664
    %v2073 = vpack.c.b16 %v1681, %v1673
    %v2074 = vpack.c.b16 %v1682, %v1674
    %v2075 = vpack.c.b16 %v1683, %v1675
    %v2076 = vpack.c.b16 %v1684, %v1676
    %v2077 = vpack.c.b16 %v1685, %v1677
    %v2078 = vpack.c.b16 %v1686, %v1678
    %v2079 = vpack.c.b16 %v1687, %v1679
    %v2080 = vpack.c.b16 %v1688, %v1680
    %vm2473 = vcmask 130048
    %v2475 = vsel %vm2473, %v506, 0
    %2477 = vmatprep.subr.bf16.mxu0 %v1746
    %2478 = vmatpush1.bf16.msra.mxu0 %v1745
    %2479 = vmatprep.subr.bf16.mxu0 %v1738
    %2480 = vmatpush1.bf16.msra.mxu0 %v1737
    %2481 = vmatprep.subr.bf16.mxu0 %v1730
    %2482 = vmatpush1.bf16.msra.mxu0 %v1729
    %2483 = vmatprep.subr.bf16.mxu0 %v1722
    %2484 = vmatpush1.bf16.msra.mxu0 %v1721
    %2485 = vmatprep.subr.bf16.mxu0 %v1714
    %2486 = vmatpush1.bf16.msra.mxu0 %v1713
    %2487 = vmatprep.subr.bf16.mxu0 %v1706
    %2488 = vmatpush1.bf16.msra.mxu0 %v1705
    %2489 = vmatprep.subr.bf16.mxu0 %v1698
    %2490 = vmatpush1.bf16.msra.mxu0 %v1697
    %2491 = vmatprep.subr.bf16.mxu0 %v1690
    %2492 = vmatpush1.bf16.msra.mxu0 %v1689
    %2493 = vmatprep.subr.bf16.mxu0 %v1810
    %2494 = vmatpush2.bf16.msra.mxu0 %v1809
    %2495 = vmatprep.subr.bf16.mxu0 %v1802
    %2496 = vmatpush2.bf16.msra.mxu0 %v1801
    %2497 = vmatprep.subr.bf16.mxu0 %v1794
    %2498 = vmatpush2.bf16.msra.mxu0 %v1793
    %2499 = vmatprep.subr.bf16.mxu0 %v1786
    %2500 = vmatpush2.bf16.msra.mxu0 %v1785
    %2501 = vmatprep.subr.bf16.mxu0 %v1778
    %2502 = vmatpush2.bf16.msra.mxu0 %v1777
    %2503 = vmatprep.subr.bf16.mxu0 %v1770
    %2504 = vmatpush2.bf16.msra.mxu0 %v1769
    %2505 = vmatprep.subr.bf16.mxu0 %v1762
    %2506 = vmatpush2.bf16.msra.mxu0 %v1761
    %2507 = vmatprep.subr.bf16.mxu0 %v1754
    %2508 = vmatpush2.bf16.msra.mxu0 %v1753
    %2509 = vmatprep.mubr.bf16.mxu0 %v501
    %2510 = vmatmul.mubr.bf16.gmra.mxu0 %v500
    %v2511 = vpop.f32.mrf.mxu0
    %v2512 = vadd.f32 0.0, %v2511
    %v2513 = vpop.f32.mrf.mxu0
    %v2514 = vadd.f32 0.0, %v2513
    %v2515 = vpop.f32.mrf.mxu0
    %v2516 = vadd.f32 0.0, %v2515
    %v2517 = vpop.f32.mrf.mxu0
    %v2518 = vadd.f32 0.0, %v2517
    %2519 = vdwg.mxu0
    %2520 = vmatprep.subr.bf16.mxu0 %v1874
    %2521 = vmatpush1.bf16.msra.mxu0 %v1873
    %2522 = vmatprep.subr.bf16.mxu0 %v1866
    %2523 = vmatpush1.bf16.msra.mxu0 %v1865
    %2524 = vmatprep.subr.bf16.mxu0 %v1858
    %2525 = vmatpush1.bf16.msra.mxu0 %v1857
    %2526 = vmatprep.subr.bf16.mxu0 %v1850
    %2527 = vmatpush1.bf16.msra.mxu0 %v1849
    %2528 = vmatprep.subr.bf16.mxu0 %v1842
    %2529 = vmatpush1.bf16.msra.mxu0 %v1841
    %2530 = vmatprep.subr.bf16.mxu0 %v1834
    %2531 = vmatpush1.bf16.msra.mxu0 %v1833
    %2532 = vmatprep.subr.bf16.mxu0 %v1826
    %2533 = vmatpush1.bf16.msra.mxu0 %v1825
    %2534 = vmatprep.subr.bf16.mxu0 %v1818
    %2535 = vmatpush1.bf16.msra.mxu0 %v1817
    %2536 = vmatprep.subr.bf16.mxu0 %v1938
    %2537 = vmatpush2.bf16.msra.mxu0 %v1937
    %2538 = vmatprep.subr.bf16.mxu0 %v1930
    %2539 = vmatpush2.bf16.msra.mxu0 %v1929
    %2540 = vmatprep.subr.bf16.mxu0 %v1922
    %2541 = vmatpush2.bf16.msra.mxu0 %v1921
    %2542 = vmatprep.subr.bf16.mxu0 %v1914
    %2543 = vmatpush2.bf16.msra.mxu0 %v1913
    %2544 = vmatprep.subr.bf16.mxu0 %v1906
    %2545 = vmatpush2.bf16.msra.mxu0 %v1905
    %2546 = vmatprep.subr.bf16.mxu0 %v1898
    %2547 = vmatpush2.bf16.msra.mxu0 %v1897
    %2548 = vmatprep.subr.bf16.mxu0 %v1890
    %2549 = vmatpush2.bf16.msra.mxu0 %v1889
    %2550 = vmatprep.subr.bf16.mxu0 %v1882
    %2551 = vmatpush2.bf16.msra.mxu0 %v1881
    %2552 = vmatprep.mubr.bf16.mxu0 %v503
    %2553 = vmatmul.mubr.bf16.gmra.mxu0 %v502
    %v2554 = vpop.f32.mrf.mxu0
    %v2555 = vadd.f32 %v2512, %v2554
    %v2556 = vpop.f32.mrf.mxu0
    %v2557 = vadd.f32 %v2514, %v2556
    %v2558 = vpop.f32.mrf.mxu0
    %v2559 = vadd.f32 %v2516, %v2558
    %v2560 = vpop.f32.mrf.mxu0
    %v2561 = vadd.f32 %v2518, %v2560
    %2562 = vdwg.mxu0
    %2563 = vmatprep.subr.bf16.mxu0 %v2002
    %2564 = vmatpush1.bf16.msra.mxu0 %v2001
    %2565 = vmatprep.subr.bf16.mxu0 %v1994
    %2566 = vmatpush1.bf16.msra.mxu0 %v1993
    %2567 = vmatprep.subr.bf16.mxu0 %v1986
    %2568 = vmatpush1.bf16.msra.mxu0 %v1985
    %2569 = vmatprep.subr.bf16.mxu0 %v1978
    %2570 = vmatpush1.bf16.msra.mxu0 %v1977
    %2571 = vmatprep.subr.bf16.mxu0 %v1970
    %2572 = vmatpush1.bf16.msra.mxu0 %v1969
    %2573 = vmatprep.subr.bf16.mxu0 %v1962
    %2574 = vmatpush1.bf16.msra.mxu0 %v1961
    %2575 = vmatprep.subr.bf16.mxu0 %v1954
    %2576 = vmatpush1.bf16.msra.mxu0 %v1953
    %2577 = vmatprep.subr.bf16.mxu0 %v1946
    %2578 = vmatpush1.bf16.msra.mxu0 %v1945
    %2579 = vmatprep.subr.bf16.mxu0 %v2066
    %2580 = vmatpush2.bf16.msra.mxu0 %v2065
    %2581 = vmatprep.subr.bf16.mxu0 %v2058
    %2582 = vmatpush2.bf16.msra.mxu0 %v2057
    %2583 = vmatprep.subr.bf16.mxu0 %v2050
    %2584 = vmatpush2.bf16.msra.mxu0 %v2049
    %2585 = vmatprep.subr.bf16.mxu0 %v2042
    %2586 = vmatpush2.bf16.msra.mxu0 %v2041
    %2587 = vmatprep.subr.bf16.mxu0 %v2034
    %2588 = vmatpush2.bf16.msra.mxu0 %v2033
    %2589 = vmatprep.subr.bf16.mxu0 %v2026
    %2590 = vmatpush2.bf16.msra.mxu0 %v2025
    %2591 = vmatprep.subr.bf16.mxu0 %v2018
    %2592 = vmatpush2.bf16.msra.mxu0 %v2017
    %2593 = vmatprep.subr.bf16.mxu0 %v2010
    %2594 = vmatpush2.bf16.msra.mxu0 %v2009
    %2595 = vmatprep.mubr.bf16.mxu0 %v505
    %2596 = vmatmul.mubr.bf16.gmra.mxu0 %v504
    %v2597 = vpop.f32.mrf.mxu0
    %v2598 = vadd.f32 %v2555, %v2597
    %v2599 = vpop.f32.mrf.mxu0
    %v2600 = vadd.f32 %v2557, %v2599
    %v2601 = vpop.f32.mrf.mxu0
    %v2602 = vadd.f32 %v2559, %v2601
    %v2603 = vpop.f32.mrf.mxu0
    %v2604 = vadd.f32 %v2561, %v2603
    %2605 = vdwg.mxu0
    %2606 = vmatprep.subr.bf16.mxu0 0
    %2607 = vmatpush1.bf16.msra.mxu0 0
    %2608 = vmatprep.subr.bf16.mxu0 0
    %2609 = vmatpush1.bf16.msra.mxu0 0
    %2610 = vmatprep.subr.bf16.mxu0 0
    %2611 = vmatpush1.bf16.msra.mxu0 0
    %2612 = vmatprep.subr.bf16.mxu0 0
    %2613 = vmatpush1.bf16.msra.mxu0 0
    %2614 = vmatprep.subr.bf16.mxu0 0
    %2615 = vmatpush1.bf16.msra.mxu0 0
    %2616 = vmatprep.subr.bf16.mxu0 0
    %2617 = vmatpush1.bf16.msra.mxu0 0
    %2618 = vmatprep.subr.bf16.mxu0 0
    %2619 = vmatpush1.bf16.msra.mxu0 0
    %2620 = vmatprep.subr.bf16.mxu0 %v2074
    %2621 = vmatpush1.bf16.msra.mxu0 %v2073
    %2622 = vmatprep.subr.bf16.mxu0 0
    %2623 = vmatpush2.bf16.msra.mxu0 0
    %2624 = vmatprep.subr.bf16.mxu0 0
    %2625 = vmatpush2.bf16.msra.mxu0 0
    %2626 = vmatprep.subr.bf16.mxu0 0
    %2627 = vmatpush2.bf16.msra.mxu0 0
    %2628 = vmatprep.subr.bf16.mxu0 0
    %2629 = vmatpush2.bf16.msra.mxu0 0
    %2630 = vmatprep.subr.bf16.mxu0 0
    %2631 = vmatpush2.bf16.msra.mxu0 0
    %2632 = vmatprep.subr.bf16.mxu0 0
    %2633 = vmatpush2.bf16.msra.mxu0 0
    %2634 = vmatprep.subr.bf16.mxu0 0
    %2635 = vmatpush2.bf16.msra.mxu0 0
    %2636 = vmatprep.subr.bf16.mxu0 0
    %2637 = vmatpush2.bf16.msra.mxu0 0
    %2638 = vmatprep.mubr.bf16.mxu0 0
    %2639 = vmatmul.mubr.bf16.gmra.mxu0 %v2475
    %v2640 = vpop.f32.mrf.mxu0
    %v2641 = vadd.f32 %v2598, %v2640
    %v2642 = vpop.f32.mrf.mxu0
    %v2643 = vadd.f32 %v2600, %v2642
    %v2644 = vpop.f32.mrf.mxu0
    %v2645 = vadd.f32 %v2602, %v2644
    %v2646 = vpop.f32.mrf.mxu0
    %v2647 = vadd.f32 %v2604, %v2646
    %2648 = vdwg.mxu0
    %2649 = vmatprep.subr.bf16.mxu0 %v1748
    %2650 = vmatpush1.bf16.msra.mxu0 %v1747
    %2651 = vmatprep.subr.bf16.mxu0 %v1740
    %2652 = vmatpush1.bf16.msra.mxu0 %v1739
    %2653 = vmatprep.subr.bf16.mxu0 %v1732
    %2654 = vmatpush1.bf16.msra.mxu0 %v1731
    %2655 = vmatprep.subr.bf16.mxu0 %v1724
    %2656 = vmatpush1.bf16.msra.mxu0 %v1723
    %2657 = vmatprep.subr.bf16.mxu0 %v1716
    %2658 = vmatpush1.bf16.msra.mxu0 %v1715
    %2659 = vmatprep.subr.bf16.mxu0 %v1708
    %2660 = vmatpush1.bf16.msra.mxu0 %v1707
    %2661 = vmatprep.subr.bf16.mxu0 %v1700
    %2662 = vmatpush1.bf16.msra.mxu0 %v1699
    %2663 = vmatprep.subr.bf16.mxu0 %v1692
    %2664 = vmatpush1.bf16.msra.mxu0 %v1691
    %2665 = vmatprep.subr.bf16.mxu0 %v1812
    %2666 = vmatpush2.bf16.msra.mxu0 %v1811
    %2667 = vmatprep.subr.bf16.mxu0 %v1804
    %2668 = vmatpush2.bf16.msra.mxu0 %v1803
    %2669 = vmatprep.subr.bf16.mxu0 %v1796
    %2670 = vmatpush2.bf16.msra.mxu0 %v1795
    %2671 = vmatprep.subr.bf16.mxu0 %v1788
    %2672 = vmatpush2.bf16.msra.mxu0 %v1787
    %2673 = vmatprep.subr.bf16.mxu0 %v1780
    %2674 = vmatpush2.bf16.msra.mxu0 %v1779
    %2675 = vmatprep.subr.bf16.mxu0 %v1772
    %2676 = vmatpush2.bf16.msra.mxu0 %v1771
    %2677 = vmatprep.subr.bf16.mxu0 %v1764
    %2678 = vmatpush2.bf16.msra.mxu0 %v1763
    %2679 = vmatprep.subr.bf16.mxu0 %v1756
    %2680 = vmatpush2.bf16.msra.mxu0 %v1755
    %2681 = vmatprep.mubr.bf16.mxu0 %v501
    %2682 = vmatmul.mubr.bf16.gmra.mxu0 %v500
    %v2683 = vpop.f32.mrf.mxu0
    %v2684 = vadd.f32 0.0, %v2683
    %v2685 = vpop.f32.mrf.mxu0
    %v2686 = vadd.f32 0.0, %v2685
    %v2687 = vpop.f32.mrf.mxu0
    %v2688 = vadd.f32 0.0, %v2687
    %v2689 = vpop.f32.mrf.mxu0
    %v2690 = vadd.f32 0.0, %v2689
    %2691 = vdwg.mxu0
    %2692 = vmatprep.subr.bf16.mxu0 %v1876
    %2693 = vmatpush1.bf16.msra.mxu0 %v1875
    %2694 = vmatprep.subr.bf16.mxu0 %v1868
    %2695 = vmatpush1.bf16.msra.mxu0 %v1867
    %2696 = vmatprep.subr.bf16.mxu0 %v1860
    %2697 = vmatpush1.bf16.msra.mxu0 %v1859
    %2698 = vmatprep.subr.bf16.mxu0 %v1852
    %2699 = vmatpush1.bf16.msra.mxu0 %v1851
    %2700 = vmatprep.subr.bf16.mxu0 %v1844
    %2701 = vmatpush1.bf16.msra.mxu0 %v1843
    %2702 = vmatprep.subr.bf16.mxu0 %v1836
    %2703 = vmatpush1.bf16.msra.mxu0 %v1835
    %2704 = vmatprep.subr.bf16.mxu0 %v1828
    %2705 = vmatpush1.bf16.msra.mxu0 %v1827
    %2706 = vmatprep.subr.bf16.mxu0 %v1820
    %2707 = vmatpush1.bf16.msra.mxu0 %v1819
    %2708 = vmatprep.subr.bf16.mxu0 %v1940
    %2709 = vmatpush2.bf16.msra.mxu0 %v1939
    %2710 = vmatprep.subr.bf16.mxu0 %v1932
    %2711 = vmatpush2.bf16.msra.mxu0 %v1931
    %2712 = vmatprep.subr.bf16.mxu0 %v1924
    %2713 = vmatpush2.bf16.msra.mxu0 %v1923
    %2714 = vmatprep.subr.bf16.mxu0 %v1916
    %2715 = vmatpush2.bf16.msra.mxu0 %v1915
    %2716 = vmatprep.subr.bf16.mxu0 %v1908
    %2717 = vmatpush2.bf16.msra.mxu0 %v1907
    %2718 = vmatprep.subr.bf16.mxu0 %v1900
    %2719 = vmatpush2.bf16.msra.mxu0 %v1899
    %2720 = vmatprep.subr.bf16.mxu0 %v1892
    %2721 = vmatpush2.bf16.msra.mxu0 %v1891
    %2722 = vmatprep.subr.bf16.mxu0 %v1884
    %2723 = vmatpush2.bf16.msra.mxu0 %v1883
    %2724 = vmatprep.mubr.bf16.mxu0 %v503
    %2725 = vmatmul.mubr.bf16.gmra.mxu0 %v502
    %v2726 = vpop.f32.mrf.mxu0
    %v2727 = vadd.f32 %v2684, %v2726
    %v2728 = vpop.f32.mrf.mxu0
    %v2729 = vadd.f32 %v2686, %v2728
    %v2730 = vpop.f32.mrf.mxu0
    %v2731 = vadd.f32 %v2688, %v2730
    %v2732 = vpop.f32.mrf.mxu0
    %v2733 = vadd.f32 %v2690, %v2732
    %2734 = vdwg.mxu0
    %2735 = vmatprep.subr.bf16.mxu0 %v2004
    %2736 = vmatpush1.bf16.msra.mxu0 %v2003
    %2737 = vmatprep.subr.bf16.mxu0 %v1996
    %2738 = vmatpush1.bf16.msra.mxu0 %v1995
    %2739 = vmatprep.subr.bf16.mxu0 %v1988
    %2740 = vmatpush1.bf16.msra.mxu0 %v1987
    %2741 = vmatprep.subr.bf16.mxu0 %v1980
    %2742 = vmatpush1.bf16.msra.mxu0 %v1979
    %2743 = vmatprep.subr.bf16.mxu0 %v1972
    %2744 = vmatpush1.bf16.msra.mxu0 %v1971
    %2745 = vmatprep.subr.bf16.mxu0 %v1964
    %2746 = vmatpush1.bf16.msra.mxu0 %v1963
    %2747 = vmatprep.subr.bf16.mxu0 %v1956
    %2748 = vmatpush1.bf16.msra.mxu0 %v1955
    %2749 = vmatprep.subr.bf16.mxu0 %v1948
    %2750 = vmatpush1.bf16.msra.mxu0 %v1947
    %2751 = vmatprep.subr.bf16.mxu0 %v2068
    %2752 = vmatpush2.bf16.msra.mxu0 %v2067
    %2753 = vmatprep.subr.bf16.mxu0 %v2060
    %2754 = vmatpush2.bf16.msra.mxu0 %v2059
    %2755 = vmatprep.subr.bf16.mxu0 %v2052
    %2756 = vmatpush2.bf16.msra.mxu0 %v2051
    %2757 = vmatprep.subr.bf16.mxu0 %v2044
    %2758 = vmatpush2.bf16.msra.mxu0 %v2043
    %2759 = vmatprep.subr.bf16.mxu0 %v2036
    %2760 = vmatpush2.bf16.msra.mxu0 %v2035
    %2761 = vmatprep.subr.bf16.mxu0 %v2028
    %2762 = vmatpush2.bf16.msra.mxu0 %v2027
    %2763 = vmatprep.subr.bf16.mxu0 %v2020
    %2764 = vmatpush2.bf16.msra.mxu0 %v2019
    %2765 = vmatprep.subr.bf16.mxu0 %v2012
    %2766 = vmatpush2.bf16.msra.mxu0 %v2011
    %2767 = vmatprep.mubr.bf16.mxu0 %v505
    %2768 = vmatmul.mubr.bf16.gmra.mxu0 %v504
    %v2769 = vpop.f32.mrf.mxu0
    %v2770 = vadd.f32 %v2727, %v2769
    %v2771 = vpop.f32.mrf.mxu0
    %v2772 = vadd.f32 %v2729, %v2771
    %v2773 = vpop.f32.mrf.mxu0
    %v2774 = vadd.f32 %v2731, %v2773
    %v2775 = vpop.f32.mrf.mxu0
    %v2776 = vadd.f32 %v2733, %v2775
    %2777 = vdwg.mxu0
    %2778 = vmatprep.subr.bf16.mxu0 0
    %2779 = vmatpush1.bf16.msra.mxu0 0
    %2780 = vmatprep.subr.bf16.mxu0 0
    %2781 = vmatpush1.bf16.msra.mxu0 0
    %2782 = vmatprep.subr.bf16.mxu0 0
    %2783 = vmatpush1.bf16.msra.mxu0 0
    %2784 = vmatprep.subr.bf16.mxu0 0
    %2785 = vmatpush1.bf16.msra.mxu0 0
    %2786 = vmatprep.subr.bf16.mxu0 0
    %2787 = vmatpush1.bf16.msra.mxu0 0
    %2788 = vmatprep.subr.bf16.mxu0 0
    %2789 = vmatpush1.bf16.msra.mxu0 0
    %2790 = vmatprep.subr.bf16.mxu0 0
    %2791 = vmatpush1.bf16.msra.mxu0 0
    %2792 = vmatprep.subr.bf16.mxu0 %v2076
    %2793 = vmatpush1.bf16.msra.mxu0 %v2075
    %2794 = vmatprep.subr.bf16.mxu0 0
    %2795 = vmatpush2.bf16.msra.mxu0 0
    %2796 = vmatprep.subr.bf16.mxu0 0
    %2797 = vmatpush2.bf16.msra.mxu0 0
    %2798 = vmatprep.subr.bf16.mxu0 0
    %2799 = vmatpush2.bf16.msra.mxu0 0
    %2800 = vmatprep.subr.bf16.mxu0 0
    %2801 = vmatpush2.bf16.msra.mxu0 0
    %2802 = vmatprep.subr.bf16.mxu0 0
    %2803 = vmatpush2.bf16.msra.mxu0 0
    %2804 = vmatprep.subr.bf16.mxu0 0
    %2805 = vmatpush2.bf16.msra.mxu0 0
    %2806 = vmatprep.subr.bf16.mxu0 0
    %2807 = vmatpush2.bf16.msra.mxu0 0
    %2808 = vmatprep.subr.bf16.mxu0 0
    %2809 = vmatpush2.bf16.msra.mxu0 0
    %2810 = vmatprep.mubr.bf16.mxu0 0
    %2811 = vmatmul.mubr.bf16.gmra.mxu0 %v2475
    %v2812 = vpop.f32.mrf.mxu0
    %v2813 = vadd.f32 %v2770, %v2812
    %v2814 = vpop.f32.mrf.mxu0
    %v2815 = vadd.f32 %v2772, %v2814
    %v2816 = vpop.f32.mrf.mxu0
    %v2817 = vadd.f32 %v2774, %v2816
    %v2818 = vpop.f32.mrf.mxu0
    %v2819 = vadd.f32 %v2776, %v2818
    %2820 = vdwg.mxu0
    %2821 = vmatprep.subr.bf16.mxu0 %v1750
    %2822 = vmatpush1.bf16.msra.mxu0 %v1749
    %2823 = vmatprep.subr.bf16.mxu0 %v1742
    %2824 = vmatpush1.bf16.msra.mxu0 %v1741
    %2825 = vmatprep.subr.bf16.mxu0 %v1734
    %2826 = vmatpush1.bf16.msra.mxu0 %v1733
    %2827 = vmatprep.subr.bf16.mxu0 %v1726
    %2828 = vmatpush1.bf16.msra.mxu0 %v1725
    %2829 = vmatprep.subr.bf16.mxu0 %v1718
    %2830 = vmatpush1.bf16.msra.mxu0 %v1717
    %2831 = vmatprep.subr.bf16.mxu0 %v1710
    %2832 = vmatpush1.bf16.msra.mxu0 %v1709
    %2833 = vmatprep.subr.bf16.mxu0 %v1702
    %2834 = vmatpush1.bf16.msra.mxu0 %v1701
    %2835 = vmatprep.subr.bf16.mxu0 %v1694
    %2836 = vmatpush1.bf16.msra.mxu0 %v1693
    %2837 = vmatprep.subr.bf16.mxu0 %v1814
    %2838 = vmatpush2.bf16.msra.mxu0 %v1813
    %2839 = vmatprep.subr.bf16.mxu0 %v1806
    %2840 = vmatpush2.bf16.msra.mxu0 %v1805
    %2841 = vmatprep.subr.bf16.mxu0 %v1798
    %2842 = vmatpush2.bf16.msra.mxu0 %v1797
    %2843 = vmatprep.subr.bf16.mxu0 %v1790
    %2844 = vmatpush2.bf16.msra.mxu0 %v1789
    %2845 = vmatprep.subr.bf16.mxu0 %v1782
    %2846 = vmatpush2.bf16.msra.mxu0 %v1781
    %2847 = vmatprep.subr.bf16.mxu0 %v1774
    %2848 = vmatpush2.bf16.msra.mxu0 %v1773
    %2849 = vmatprep.subr.bf16.mxu0 %v1766
    %2850 = vmatpush2.bf16.msra.mxu0 %v1765
    %2851 = vmatprep.subr.bf16.mxu0 %v1758
    %2852 = vmatpush2.bf16.msra.mxu0 %v1757
    %2853 = vmatprep.mubr.bf16.mxu0 %v501
    %2854 = vmatmul.mubr.bf16.gmra.mxu0 %v500
    %v2855 = vpop.f32.mrf.mxu0
    %v2856 = vadd.f32 0.0, %v2855
    %v2857 = vpop.f32.mrf.mxu0
    %v2858 = vadd.f32 0.0, %v2857
    %v2859 = vpop.f32.mrf.mxu0
    %v2860 = vadd.f32 0.0, %v2859
    %v2861 = vpop.f32.mrf.mxu0
    %v2862 = vadd.f32 0.0, %v2861
    %2863 = vdwg.mxu0
    %2864 = vmatprep.subr.bf16.mxu0 %v1878
    %2865 = vmatpush1.bf16.msra.mxu0 %v1877
    %2866 = vmatprep.subr.bf16.mxu0 %v1870
    %2867 = vmatpush1.bf16.msra.mxu0 %v1869
    %2868 = vmatprep.subr.bf16.mxu0 %v1862
    %2869 = vmatpush1.bf16.msra.mxu0 %v1861
    %2870 = vmatprep.subr.bf16.mxu0 %v1854
    %2871 = vmatpush1.bf16.msra.mxu0 %v1853
    %2872 = vmatprep.subr.bf16.mxu0 %v1846
    %2873 = vmatpush1.bf16.msra.mxu0 %v1845
    %2874 = vmatprep.subr.bf16.mxu0 %v1838
    %2875 = vmatpush1.bf16.msra.mxu0 %v1837
    %2876 = vmatprep.subr.bf16.mxu0 %v1830
    %2877 = vmatpush1.bf16.msra.mxu0 %v1829
    %2878 = vmatprep.subr.bf16.mxu0 %v1822
    %2879 = vmatpush1.bf16.msra.mxu0 %v1821
    %2880 = vmatprep.subr.bf16.mxu0 %v1942
    %2881 = vmatpush2.bf16.msra.mxu0 %v1941
    %2882 = vmatprep.subr.bf16.mxu0 %v1934
    %2883 = vmatpush2.bf16.msra.mxu0 %v1933
    %2884 = vmatprep.subr.bf16.mxu0 %v1926
    %2885 = vmatpush2.bf16.msra.mxu0 %v1925
    %2886 = vmatprep.subr.bf16.mxu0 %v1918
    %2887 = vmatpush2.bf16.msra.mxu0 %v1917
    %2888 = vmatprep.subr.bf16.mxu0 %v1910
    %2889 = vmatpush2.bf16.msra.mxu0 %v1909
    %2890 = vmatprep.subr.bf16.mxu0 %v1902
    %2891 = vmatpush2.bf16.msra.mxu0 %v1901
    %2892 = vmatprep.subr.bf16.mxu0 %v1894
    %2893 = vmatpush2.bf16.msra.mxu0 %v1893
    %2894 = vmatprep.subr.bf16.mxu0 %v1886
    %2895 = vmatpush2.bf16.msra.mxu0 %v1885
    %2896 = vmatprep.mubr.bf16.mxu0 %v503
    %2897 = vmatmul.mubr.bf16.gmra.mxu0 %v502
    %v2898 = vpop.f32.mrf.mxu0
    %v2899 = vadd.f32 %v2856, %v2898
    %v2900 = vpop.f32.mrf.mxu0
    %v2901 = vadd.f32 %v2858, %v2900
    %v2902 = vpop.f32.mrf.mxu0
    %v2903 = vadd.f32 %v2860, %v2902
    %v2904 = vpop.f32.mrf.mxu0
    %v2905 = vadd.f32 %v2862, %v2904
    %2906 = vdwg.mxu0
    %2907 = vmatprep.subr.bf16.mxu0 %v2006
    %2908 = vmatpush1.bf16.msra.mxu0 %v2005
    %2909 = vmatprep.subr.bf16.mxu0 %v1998
    %2910 = vmatpush1.bf16.msra.mxu0 %v1997
    %2911 = vmatprep.subr.bf16.mxu0 %v1990
    %2912 = vmatpush1.bf16.msra.mxu0 %v1989
    %2913 = vmatprep.subr.bf16.mxu0 %v1982
    %2914 = vmatpush1.bf16.msra.mxu0 %v1981
    %2915 = vmatprep.subr.bf16.mxu0 %v1974
    %2916 = vmatpush1.bf16.msra.mxu0 %v1973
    %2917 = vmatprep.subr.bf16.mxu0 %v1966
    %2918 = vmatpush1.bf16.msra.mxu0 %v1965
    %2919 = vmatprep.subr.bf16.mxu0 %v1958
    %2920 = vmatpush1.bf16.msra.mxu0 %v1957
    %2921 = vmatprep.subr.bf16.mxu0 %v1950
    %2922 = vmatpush1.bf16.msra.mxu0 %v1949
    %2923 = vmatprep.subr.bf16.mxu0 %v2070
    %2924 = vmatpush2.bf16.msra.mxu0 %v2069
    %2925 = vmatprep.subr.bf16.mxu0 %v2062
    %2926 = vmatpush2.bf16.msra.mxu0 %v2061
    %2927 = vmatprep.subr.bf16.mxu0 %v2054
    %2928 = vmatpush2.bf16.msra.mxu0 %v2053
    %2929 = vmatprep.subr.bf16.mxu0 %v2046
    %2930 = vmatpush2.bf16.msra.mxu0 %v2045
    %2931 = vmatprep.subr.bf16.mxu0 %v2038
    %2932 = vmatpush2.bf16.msra.mxu0 %v2037
    %2933 = vmatprep.subr.bf16.mxu0 %v2030
    %2934 = vmatpush2.bf16.msra.mxu0 %v2029
    %2935 = vmatprep.subr.bf16.mxu0 %v2022
    %2936 = vmatpush2.bf16.msra.mxu0 %v2021
    %2937 = vmatprep.subr.bf16.mxu0 %v2014
    %2938 = vmatpush2.bf16.msra.mxu0 %v2013
    %2939 = vmatprep.mubr.bf16.mxu0 %v505
    %2940 = vmatmul.mubr.bf16.gmra.mxu0 %v504
    %v2941 = vpop.f32.mrf.mxu0
    %v2942 = vadd.f32 %v2899, %v2941
    %v2943 = vpop.f32.mrf.mxu0
    %v2944 = vadd.f32 %v2901, %v2943
    %v2945 = vpop.f32.mrf.mxu0
    %v2946 = vadd.f32 %v2903, %v2945
    %v2947 = vpop.f32.mrf.mxu0
    %v2948 = vadd.f32 %v2905, %v2947
    %2949 = vdwg.mxu0
    %2950 = vmatprep.subr.bf16.mxu0 0
    %2951 = vmatpush1.bf16.msra.mxu0 0
    %2952 = vmatprep.subr.bf16.mxu0 0
    %2953 = vmatpush1.bf16.msra.mxu0 0
    %2954 = vmatprep.subr.bf16.mxu0 0
    %2955 = vmatpush1.bf16.msra.mxu0 0
    %2956 = vmatprep.subr.bf16.mxu0 0
    %2957 = vmatpush1.bf16.msra.mxu0 0
    %2958 = vmatprep.subr.bf16.mxu0 0
    %2959 = vmatpush1.bf16.msra.mxu0 0
    %2960 = vmatprep.subr.bf16.mxu0 0
    %2961 = vmatpush1.bf16.msra.mxu0 0
    %2962 = vmatprep.subr.bf16.mxu0 0
    %2963 = vmatpush1.bf16.msra.mxu0 0
    %2964 = vmatprep.subr.bf16.mxu0 %v2078
    %2965 = vmatpush1.bf16.msra.mxu0 %v2077
    %2966 = vmatprep.subr.bf16.mxu0 0
    %2967 = vmatpush2.bf16.msra.mxu0 0
    %2968 = vmatprep.subr.bf16.mxu0 0
    %2969 = vmatpush2.bf16.msra.mxu0 0
    %2970 = vmatprep.subr.bf16.mxu0 0
    %2971 = vmatpush2.bf16.msra.mxu0 0
    %2972 = vmatprep.subr.bf16.mxu0 0
    %2973 = vmatpush2.bf16.msra.mxu0 0
    %2974 = vmatprep.subr.bf16.mxu0 0
    %2975 = vmatpush2.bf16.msra.mxu0 0
    %2976 = vmatprep.subr.bf16.mxu0 0
    %2977 = vmatpush2.bf16.msra.mxu0 0
    %2978 = vmatprep.subr.bf16.mxu0 0
    %2979 = vmatpush2.bf16.msra.mxu0 0
    %2980 = vmatprep.subr.bf16.mxu0 0
    %2981 = vmatpush2.bf16.msra.mxu0 0
    %2982 = vmatprep.mubr.bf16.mxu0 0
    %2983 = vmatmul.mubr.bf16.gmra.mxu0 %v2475
    %v2984 = vpop.f32.mrf.mxu0
    %v2985 = vadd.f32 %v2942, %v2984
    %v2986 = vpop.f32.mrf.mxu0
    %v2987 = vadd.f32 %v2944, %v2986
    %v2988 = vpop.f32.mrf.mxu0
    %v2989 = vadd.f32 %v2946, %v2988
    %v2990 = vpop.f32.mrf.mxu0
    %v2991 = vadd.f32 %v2948, %v2990
    %2992 = vdwg.mxu0
    %2993 = vmatprep.subr.bf16.mxu0 %v1752
    %2994 = vmatpush1.bf16.msra.mxu0 %v1751
    %2995 = vmatprep.subr.bf16.mxu0 %v1744
    %2996 = vmatpush1.bf16.msra.mxu0 %v1743
    %2997 = vmatprep.subr.bf16.mxu0 %v1736
    %2998 = vmatpush1.bf16.msra.mxu0 %v1735
    %2999 = vmatprep.subr.bf16.mxu0 %v1728
    %3000 = vmatpush1.bf16.msra.mxu0 %v1727
    %3001 = vmatprep.subr.bf16.mxu0 %v1720
    %3002 = vmatpush1.bf16.msra.mxu0 %v1719
    %3003 = vmatprep.subr.bf16.mxu0 %v1712
    %3004 = vmatpush1.bf16.msra.mxu0 %v1711
    %3005 = vmatprep.subr.bf16.mxu0 %v1704
    %3006 = vmatpush1.bf16.msra.mxu0 %v1703
    %3007 = vmatprep.subr.bf16.mxu0 %v1696
    %3008 = vmatpush1.bf16.msra.mxu0 %v1695
    %3009 = vmatprep.subr.bf16.mxu0 %v1816
    %3010 = vmatpush2.bf16.msra.mxu0 %v1815
    %3011 = vmatprep.subr.bf16.mxu0 %v1808
    %3012 = vmatpush2.bf16.msra.mxu0 %v1807
    %3013 = vmatprep.subr.bf16.mxu0 %v1800
    %3014 = vmatpush2.bf16.msra.mxu0 %v1799
    %3015 = vmatprep.subr.bf16.mxu0 %v1792
    %3016 = vmatpush2.bf16.msra.mxu0 %v1791
    %3017 = vmatprep.subr.bf16.mxu0 %v1784
    %3018 = vmatpush2.bf16.msra.mxu0 %v1783
    %3019 = vmatprep.subr.bf16.mxu0 %v1776
    %3020 = vmatpush2.bf16.msra.mxu0 %v1775
    %3021 = vmatprep.subr.bf16.mxu0 %v1768
    %3022 = vmatpush2.bf16.msra.mxu0 %v1767
    %3023 = vmatprep.subr.bf16.mxu0 %v1760
    %3024 = vmatpush2.bf16.msra.mxu0 %v1759
    %3025 = vmatprep.mubr.bf16.mxu0 %v501
    %3026 = vmatmul.mubr.bf16.gmra.mxu0 %v500
    %v3027 = vpop.f32.mrf.mxu0
    %v3028 = vadd.f32 0.0, %v3027
    %v3029 = vpop.f32.mrf.mxu0
    %v3030 = vadd.f32 0.0, %v3029
    %v3031 = vpop.f32.mrf.mxu0
    %v3032 = vadd.f32 0.0, %v3031
    %v3033 = vpop.f32.mrf.mxu0
    %v3034 = vadd.f32 0.0, %v3033
    %3035 = vdwg.mxu0
    %3036 = vmatprep.subr.bf16.mxu0 %v1880
    %3037 = vmatpush1.bf16.msra.mxu0 %v1879
    %3038 = vmatprep.subr.bf16.mxu0 %v1872
    %3039 = vmatpush1.bf16.msra.mxu0 %v1871
    %3040 = vmatprep.subr.bf16.mxu0 %v1864
    %3041 = vmatpush1.bf16.msra.mxu0 %v1863
    %3042 = vmatprep.subr.bf16.mxu0 %v1856
    %3043 = vmatpush1.bf16.msra.mxu0 %v1855
    %3044 = vmatprep.subr.bf16.mxu0 %v1848
    %3045 = vmatpush1.bf16.msra.mxu0 %v1847
    %3046 = vmatprep.subr.bf16.mxu0 %v1840
    %3047 = vmatpush1.bf16.msra.mxu0 %v1839
    %3048 = vmatprep.subr.bf16.mxu0 %v1832
    %3049 = vmatpush1.bf16.msra.mxu0 %v1831
    %3050 = vmatprep.subr.bf16.mxu0 %v1824
    %3051 = vmatpush1.bf16.msra.mxu0 %v1823
    %3052 = vmatprep.subr.bf16.mxu0 %v1944
    %3053 = vmatpush2.bf16.msra.mxu0 %v1943
    %3054 = vmatprep.subr.bf16.mxu0 %v1936
    %3055 = vmatpush2.bf16.msra.mxu0 %v1935
    %3056 = vmatprep.subr.bf16.mxu0 %v1928
    %3057 = vmatpush2.bf16.msra.mxu0 %v1927
    %3058 = vmatprep.subr.bf16.mxu0 %v1920
    %3059 = vmatpush2.bf16.msra.mxu0 %v1919
    %3060 = vmatprep.subr.bf16.mxu0 %v1912
    %3061 = vmatpush2.bf16.msra.mxu0 %v1911
    %3062 = vmatprep.subr.bf16.mxu0 %v1904
    %3063 = vmatpush2.bf16.msra.mxu0 %v1903
    %3064 = vmatprep.subr.bf16.mxu0 %v1896
    %3065 = vmatpush2.bf16.msra.mxu0 %v1895
    %3066 = vmatprep.subr.bf16.mxu0 %v1888
    %3067 = vmatpush2.bf16.msra.mxu0 %v1887
    %3068 = vmatprep.mubr.bf16.mxu0 %v503
    %3069 = vmatmul.mubr.bf16.gmra.mxu0 %v502
    %v3070 = vpop.f32.mrf.mxu0
    %v3071 = vadd.f32 %v3028, %v3070
    %v3072 = vpop.f32.mrf.mxu0
    %v3073 = vadd.f32 %v3030, %v3072
    %v3074 = vpop.f32.mrf.mxu0
    %v3075 = vadd.f32 %v3032, %v3074
    %v3076 = vpop.f32.mrf.mxu0
    %v3077 = vadd.f32 %v3034, %v3076
    %3078 = vdwg.mxu0
    %3079 = vmatprep.subr.bf16.mxu0 %v2008
    %3080 = vmatpush1.bf16.msra.mxu0 %v2007
    %3081 = vmatprep.subr.bf16.mxu0 %v2000
    %3082 = vmatpush1.bf16.msra.mxu0 %v1999
    %3083 = vmatprep.subr.bf16.mxu0 %v1992
    %3084 = vmatpush1.bf16.msra.mxu0 %v1991
    %3085 = vmatprep.subr.bf16.mxu0 %v1984
    %3086 = vmatpush1.bf16.msra.mxu0 %v1983
    %3087 = vmatprep.subr.bf16.mxu0 %v1976
    %3088 = vmatpush1.bf16.msra.mxu0 %v1975
    %3089 = vmatprep.subr.bf16.mxu0 %v1968
    %3090 = vmatpush1.bf16.msra.mxu0 %v1967
    %3091 = vmatprep.subr.bf16.mxu0 %v1960
    %3092 = vmatpush1.bf16.msra.mxu0 %v1959
    %3093 = vmatprep.subr.bf16.mxu0 %v1952
    %3094 = vmatpush1.bf16.msra.mxu0 %v1951
    %3095 = vmatprep.subr.bf16.mxu0 %v2072
    %3096 = vmatpush2.bf16.msra.mxu0 %v2071
    %3097 = vmatprep.subr.bf16.mxu0 %v2064
    %3098 = vmatpush2.bf16.msra.mxu0 %v2063
    %3099 = vmatprep.subr.bf16.mxu0 %v2056
    %3100 = vmatpush2.bf16.msra.mxu0 %v2055
    %3101 = vmatprep.subr.bf16.mxu0 %v2048
    %3102 = vmatpush2.bf16.msra.mxu0 %v2047
    %3103 = vmatprep.subr.bf16.mxu0 %v2040
    %3104 = vmatpush2.bf16.msra.mxu0 %v2039
    %3105 = vmatprep.subr.bf16.mxu0 %v2032
    %3106 = vmatpush2.bf16.msra.mxu0 %v2031
    %3107 = vmatprep.subr.bf16.mxu0 %v2024
    %3108 = vmatpush2.bf16.msra.mxu0 %v2023
    %3109 = vmatprep.subr.bf16.mxu0 %v2016
    %3110 = vmatpush2.bf16.msra.mxu0 %v2015
    %3111 = vmatprep.mubr.bf16.mxu0 %v505
    %3112 = vmatmul.mubr.bf16.gmra.mxu0 %v504
    %v3113 = vpop.f32.mrf.mxu0
    %v3114 = vadd.f32 %v3071, %v3113
    %v3115 = vpop.f32.mrf.mxu0
    %v3116 = vadd.f32 %v3073, %v3115
    %v3117 = vpop.f32.mrf.mxu0
    %v3118 = vadd.f32 %v3075, %v3117
    %v3119 = vpop.f32.mrf.mxu0
    %v3120 = vadd.f32 %v3077, %v3119
    %3121 = vdwg.mxu0
    %3122 = vmatprep.subr.bf16.mxu0 0
    %3123 = vmatpush1.bf16.msra.mxu0 0
    %3124 = vmatprep.subr.bf16.mxu0 0
    %3125 = vmatpush1.bf16.msra.mxu0 0
    %3126 = vmatprep.subr.bf16.mxu0 0
    %3127 = vmatpush1.bf16.msra.mxu0 0
    %3128 = vmatprep.subr.bf16.mxu0 0
    %3129 = vmatpush1.bf16.msra.mxu0 0
    %3130 = vmatprep.subr.bf16.mxu0 0
    %3131 = vmatpush1.bf16.msra.mxu0 0
    %3132 = vmatprep.subr.bf16.mxu0 0
    %3133 = vmatpush1.bf16.msra.mxu0 0
    %3134 = vmatprep.subr.bf16.mxu0 0
    %3135 = vmatpush1.bf16.msra.mxu0 0
    %3136 = vmatprep.subr.bf16.mxu0 %v2080
    %3137 = vmatpush1.bf16.msra.mxu0 %v2079
    %3138 = vmatprep.subr.bf16.mxu0 0
    %3139 = vmatpush2.bf16.msra.mxu0 0
    %3140 = vmatprep.subr.bf16.mxu0 0
    %3141 = vmatpush2.bf16.msra.mxu0 0
    %3142 = vmatprep.subr.bf16.mxu0 0
    %3143 = vmatpush2.bf16.msra.mxu0 0
    %3144 = vmatprep.subr.bf16.mxu0 0
    %3145 = vmatpush2.bf16.msra.mxu0 0
    %3146 = vmatprep.subr.bf16.mxu0 0
    %3147 = vmatpush2.bf16.msra.mxu0 0
    %3148 = vmatprep.subr.bf16.mxu0 0
    %3149 = vmatpush2.bf16.msra.mxu0 0
    %3150 = vmatprep.subr.bf16.mxu0 0
    %3151 = vmatpush2.bf16.msra.mxu0 0
    %3152 = vmatprep.subr.bf16.mxu0 0
    %3153 = vmatpush2.bf16.msra.mxu0 0
    %3154 = vmatprep.mubr.bf16.mxu0 0
    %3155 = vmatmul.mubr.bf16.gmra.mxu0 %v2475
    %v3156 = vpop.f32.mrf.mxu0
    %v3157 = vadd.f32 %v3114, %v3156
    %v3158 = vpop.f32.mrf.mxu0
    %v3159 = vadd.f32 %v3116, %v3158
    %v3160 = vpop.f32.mrf.mxu0
    %v3161 = vadd.f32 %v3118, %v3160
    %v3162 = vpop.f32.mrf.mxu0
    %v3163 = vadd.f32 %v3120, %v3162
    %3164 = vdwg.mxu0
    %v3165 = vmax.f32 %v2641, 0.0
    %v3166 = vmax.f32 %v2643, 0.0
    %v3167 = vmax.f32 %v2813, 0.0
    %v3168 = vmax.f32 %v2815, 0.0
    %v3169 = vmax.f32 %v2985, 0.0
    %v3170 = vmax.f32 %v2987, 0.0
    %v3171 = vmax.f32 %v3157, 0.0
    %v3172 = vmax.f32 %v3159, 0.0
    %v3173 = vmax.f32 %v2645, 0.0
    %v3174 = vmax.f32 %v2647, 0.0
    %v3175 = vmax.f32 %v2817, 0.0
    %v3176 = vmax.f32 %v2819, 0.0
    %v3177 = vmax.f32 %v2989, 0.0
    %v3178 = vmax.f32 %v2991, 0.0
    %v3179 = vmax.f32 %v3161, 0.0
    %v3180 = vmax.f32 %v3163, 0.0
    %v3181 = vadd.f32 %v3165, %v3173
    %v3182 = vrot.slane %v3181, 4
    %v3183 = vadd.f32 %v3181, %v3182
    %v3184 = vrot.slane %v3183, 2
    %v3185 = vadd.f32 %v3183, %v3184
    %v3186 = vrot.slane %v3185, 1
    %v3187 = vadd.f32 %v3185, %v3186
    %v3188 = vadd.f32 %v3166, %v3174
    %v3189 = vrot.slane %v3188, 4
    %v3190 = vadd.f32 %v3188, %v3189
    %v3191 = vrot.slane %v3190, 2
    %v3192 = vadd.f32 %v3190, %v3191
    %v3193 = vrot.slane %v3192, 1
    %v3194 = vadd.f32 %v3192, %v3193
    %v3195 = vadd.f32 %v3167, %v3175
    %v3196 = vrot.slane %v3195, 4
    %v3197 = vadd.f32 %v3195, %v3196
    %v3198 = vrot.slane %v3197, 2
    %v3199 = vadd.f32 %v3197, %v3198
    %v3200 = vrot.slane %v3199, 1
    %v3201 = vadd.f32 %v3199, %v3200
    %v3202 = vadd.f32 %v3168, %v3176
    %v3203 = vrot.slane %v3202, 4
    %v3204 = vadd.f32 %v3202, %v3203
    %v3205 = vrot.slane %v3204, 2
    %v3206 = vadd.f32 %v3204, %v3205
    %v3207 = vrot.slane %v3206, 1
    %v3208 = vadd.f32 %v3206, %v3207
    %v3209 = vadd.f32 %v3169, %v3177
    %v3210 = vrot.slane %v3209, 4
    %v3211 = vadd.f32 %v3209, %v3210
    %v3212 = vrot.slane %v3211, 2
    %v3213 = vadd.f32 %v3211, %v3212
    %v3214 = vrot.slane %v3213, 1
    %v3215 = vadd.f32 %v3213, %v3214
    %v3216 = vadd.f32 %v3170, %v3178
    %v3217 = vrot.slane %v3216, 4
    %v3218 = vadd.f32 %v3216, %v3217
    %v3219 = vrot.slane %v3218, 2
    %v3220 = vadd.f32 %v3218, %v3219
    %v3221 = vrot.slane %v3220, 1
    %v3222 = vadd.f32 %v3220, %v3221
    %v3223 = vadd.f32 %v3171, %v3179
    %v3224 = vrot.slane %v3223, 4
    %v3225 = vadd.f32 %v3223, %v3224
    %v3226 = vrot.slane %v3225, 2
    %v3227 = vadd.f32 %v3225, %v3226
    %v3228 = vrot.slane %v3227, 1
    %v3229 = vadd.f32 %v3227, %v3228
    %v3230 = vadd.f32 %v3172, %v3180
    %v3231 = vrot.slane %v3230, 4
    %v3232 = vadd.f32 %v3230, %v3231
    %v3233 = vrot.slane %v3232, 2
    %v3234 = vadd.f32 %v3232, %v3233
    %v3235 = vrot.slane %v3234, 1
    %v3236 = vadd.f32 %v3234, %v3235
    %v3245 = vcombine.low %v3187, %v3194
    %v3246 = vcombine.low %v3201, %v3208
    %v3247 = vcombine.low %v3215, %v3222
    %v3248 = vcombine.low %v3229, %v3236
    %v3250 = vunpack.c.l.s4 1966171168
    %v3251 = vunpack.c.0.s8 %v3250
    %v3252 = vlaneseq
    %v3253 = vshrl.u32 %v3252, 7
    %v3254 = vsub.s32 %v3251, %v3253
    %v3255 = vrot.slane %v3245, %v3254
    %v3257 = vunpack.c.l.s4 1966171168
    %v3258 = vunpack.c.0.s8 %v3257
    %v3259 = vlaneseq
    %v3260 = vshrl.u32 %v3259, 7
    %v3261 = vsub.s32 %v3258, %v3260
    %v3262 = vrot.slane %v3246, %v3261
    %v3264 = vunpack.c.l.s4 1966171168
    %v3265 = vunpack.c.0.s8 %v3264
    %v3266 = vlaneseq
    %v3267 = vshrl.u32 %v3266, 7
    %v3268 = vsub.s32 %v3265, %v3267
    %v3269 = vrot.slane %v3247, %v3268
    %v3271 = vunpack.c.l.s4 1966171168
    %v3272 = vunpack.c.0.s8 %v3271
    %v3273 = vlaneseq
    %v3274 = vshrl.u32 %v3273, 7
    %v3275 = vsub.s32 %v3272, %v3274
    %v3276 = vrot.slane %v3248, %v3275
    %v3277 = vcombine.low %v3255, %v3262
    %v3278 = vcombine.low %v3269, %v3276
    %v3280 = vunpack.c.l.s4 1966171168
    %v3281 = vunpack.c.0.s8 %v3280
    %v3282 = vlaneseq
    %v3283 = vshrl.u32 %v3282, 7
    %v3284 = vsub.s32 %v3281, %v3283
    %v3285 = vrot.slane %v3277, %v3284
    %v3287 = vunpack.c.l.s4 1966171168
    %v3288 = vunpack.c.0.s8 %v3287
    %v3289 = vlaneseq
    %v3290 = vshrl.u32 %v3289, 7
    %v3291 = vsub.s32 %v3288, %v3290
    %v3292 = vrot.slane %v3278, %v3291
    %v3293 = vcombine.low %v3285, %v3292
    %3295 = vst [vmem:[#allocation11] sm:$0xff] %v3293
    %v3296 = vpack.c.bf16 %v3173, %v3165
    %v3297 = vpack.c.bf16 %v3174, %v3166
    %v3298 = vpack.c.bf16 %v3175, %v3167
    %v3299 = vpack.c.bf16 %v3176, %v3168
    %v3300 = vpack.c.bf16 %v3177, %v3169
    %v3301 = vpack.c.bf16 %v3178, %v3170
    %v3302 = vpack.c.bf16 %v3179, %v3171
    %v3303 = vpack.c.bf16 %v3180, %v3172
    %v3304 = vld [vmem:[#allocation7] sm:$0xff]
    %v3305 = vld [vmem:[#allocation7 + $0x8] sm:$0xff]
    %v3306 = vld [vmem:[#allocation7 + $0x10] sm:$0xff]
    %v3307 = vld [vmem:[#allocation7 + $0x18] sm:$0xff]
    %v3308 = vld [vmem:[#allocation7 + $0x20] sm:$0xff]
    %v3309 = vld [vmem:[#allocation7 + $0x28] sm:$0xff]
    %v3310 = vld [vmem:[#allocation7 + $0x30] sm:$0xff]
    %v3311 = vld [vmem:[#allocation7 + $0x38] sm:$0xff]
    %v3312 = vld [vmem:[#allocation7 + $0x40] sm:$0xff]
    %v3313 = vld [vmem:[#allocation7 + $0x48] sm:$0xff]
    %v3314 = vld [vmem:[#allocation7 + $0x50] sm:$0xff]
    %v3315 = vld [vmem:[#allocation7 + $0x58] sm:$0xff]
    %v3316 = vld [vmem:[#allocation7 + $0x60] sm:$0xff]
    %v3317 = vld [vmem:[#allocation7 + $0x68] sm:$0xff]
    %v3318 = vld [vmem:[#allocation7 + $0x70] sm:$0xff]
    %v3319 = vld [vmem:[#allocation7 + $0x78] sm:$0xff]
    %v3320 = vld [vmem:[#allocation7 + $0x80] sm:$0xff]
    %v3321 = vld [vmem:[#allocation7 + $0x88] sm:$0xff]
    %v3322 = vld [vmem:[#allocation7 + $0x90] sm:$0xff]
    %v3323 = vld [vmem:[#allocation7 + $0x98] sm:$0xff]
    %v3324 = vld [vmem:[#allocation7 + $0xa0] sm:$0xff]
    %v3325 = vld [vmem:[#allocation7 + $0xa8] sm:$0xff]
    %v3326 = vld [vmem:[#allocation7 + $0xb0] sm:$0xff]
    %v3327 = vld [vmem:[#allocation7 + $0xb8] sm:$0xff]
    %v3328 = vld [vmem:[#allocation7 + $0xc0] sm:$0xff]
    %v3329 = vld [vmem:[#allocation7 + $0xc8] sm:$0xff]
    %v3330 = vld [vmem:[#allocation7 + $0xd0] sm:$0xff]
    %v3331 = vld [vmem:[#allocation7 + $0xd8] sm:$0xff]
    %v3332 = vld [vmem:[#allocation7 + $0xe0] sm:$0xff]
    %v3333 = vld [vmem:[#allocation7 + $0xe8] sm:$0xff]
    %v3334 = vld [vmem:[#allocation7 + $0xf0] sm:$0xff]
    %v3335 = vld [vmem:[#allocation7 + $0xf8] sm:$0xff]
    %v3336 = vld [vmem:[#allocation7 + $0x100] sm:$0xff]
    %v3337 = vld [vmem:[#allocation7 + $0x108] sm:$0xff]
    %v3338 = vld [vmem:[#allocation7 + $0x110] sm:$0xff]
    %v3339 = vld [vmem:[#allocation7 + $0x118] sm:$0xff]
    %v3340 = vld [vmem:[#allocation7 + $0x120] sm:$0xff]
    %v3341 = vld [vmem:[#allocation7 + $0x128] sm:$0xff]
    %v3342 = vld [vmem:[#allocation7 + $0x130] sm:$0xff]
    %v3343 = vld [vmem:[#allocation7 + $0x138] sm:$0xff]
    %v3344 = vld [vmem:[#allocation7 + $0x140] sm:$0xff]
    %v3345 = vld [vmem:[#allocation7 + $0x148] sm:$0xff]
    %v3346 = vld [vmem:[#allocation7 + $0x150] sm:$0xff]
    %v3347 = vld [vmem:[#allocation7 + $0x158] sm:$0xff]
    %v3348 = vld [vmem:[#allocation7 + $0x160] sm:$0xff]
    %v3349 = vld [vmem:[#allocation7 + $0x168] sm:$0xff]
    %v3350 = vld [vmem:[#allocation7 + $0x170] sm:$0xff]
    %v3351 = vld [vmem:[#allocation7 + $0x178] sm:$0xff]
    %v3352 = vld [vmem:[#allocation7 + $0x180] sm:$0xff]
    %v3353 = vld [vmem:[#allocation7 + $0x188] sm:$0xff]
    %v3354 = vld [vmem:[#allocation7 + $0x190] sm:$0xff]
    %v3355 = vld [vmem:[#allocation7 + $0x198] sm:$0xff]
    %v3356 = vld [vmem:[#allocation7 + $0x1a0] sm:$0xff]
    %v3357 = vld [vmem:[#allocation7 + $0x1a8] sm:$0xff]
    %v3358 = vld [vmem:[#allocation7 + $0x1b0] sm:$0xff]
    %v3359 = vld [vmem:[#allocation7 + $0x1b8] sm:$0xff]
    %v3360 = vld [vmem:[#allocation7 + $0x1c0] sm:$0xff]
    %v3361 = vld [vmem:[#allocation7 + $0x1c8] sm:$0xff]
    %v3362 = vld [vmem:[#allocation7 + $0x1d0] sm:$0xff]
    %v3363 = vld [vmem:[#allocation7 + $0x1d8] sm:$0xff]
    %v3364 = vld [vmem:[#allocation7 + $0x1e0] sm:$0xff]
    %v3365 = vld [vmem:[#allocation7 + $0x1e8] sm:$0xff]
    %v3366 = vld [vmem:[#allocation7 + $0x1f0] sm:$0xff]
    %v3367 = vld [vmem:[#allocation7 + $0x1f8] sm:$0xff]
    %v3368 = vld [vmem:[#allocation7 + $0x200] sm:$0xff]
    %v3369 = vld [vmem:[#allocation7 + $0x208] sm:$0xff]
    %v3370 = vld [vmem:[#allocation7 + $0x210] sm:$0xff]
    %v3371 = vld [vmem:[#allocation7 + $0x218] sm:$0xff]
    %v3372 = vld [vmem:[#allocation7 + $0x220] sm:$0xff]
    %v3373 = vld [vmem:[#allocation7 + $0x228] sm:$0xff]
    %v3374 = vld [vmem:[#allocation7 + $0x230] sm:$0xff]
    %v3375 = vld [vmem:[#allocation7 + $0x238] sm:$0xff]
    %v3376 = vld [vmem:[#allocation7 + $0x240] sm:$0xff]
    %v3377 = vld [vmem:[#allocation7 + $0x248] sm:$0xff]
    %v3378 = vld [vmem:[#allocation7 + $0x250] sm:$0xff]
    %v3379 = vld [vmem:[#allocation7 + $0x258] sm:$0xff]
    %v3380 = vld [vmem:[#allocation7 + $0x260] sm:$0xff]
    %v3381 = vld [vmem:[#allocation7 + $0x268] sm:$0xff]
    %v3382 = vld [vmem:[#allocation7 + $0x270] sm:$0xff]
    %v3383 = vld [vmem:[#allocation7 + $0x278] sm:$0xff]
    %v3384 = vld [vmem:[#allocation7 + $0x280] sm:$0xff]
    %v3385 = vld [vmem:[#allocation7 + $0x288] sm:$0xff]
    %v3386 = vld [vmem:[#allocation7 + $0x290] sm:$0xff]
    %v3387 = vld [vmem:[#allocation7 + $0x298] sm:$0xff]
    %v3388 = vld [vmem:[#allocation7 + $0x2a0] sm:$0xff]
    %v3389 = vld [vmem:[#allocation7 + $0x2a8] sm:$0xff]
    %v3390 = vld [vmem:[#allocation7 + $0x2b0] sm:$0xff]
    %v3391 = vld [vmem:[#allocation7 + $0x2b8] sm:$0xff]
    %v3392 = vld [vmem:[#allocation7 + $0x2c0] sm:$0xff]
    %v3393 = vld [vmem:[#allocation7 + $0x2c8] sm:$0xff]
    %v3394 = vld [vmem:[#allocation7 + $0x2d0] sm:$0xff]
    %v3395 = vld [vmem:[#allocation7 + $0x2d8] sm:$0xff]
    %v3396 = vld [vmem:[#allocation7 + $0x2e0] sm:$0xff]
    %v3397 = vld [vmem:[#allocation7 + $0x2e8] sm:$0xff]
    %v3398 = vld [vmem:[#allocation7 + $0x2f0] sm:$0xff]
    %v3399 = vld [vmem:[#allocation7 + $0x2f8] sm:$0xff]
    %v3400 = vld [vmem:[#allocation7 + $0x300] sm:$0xff]
    %v3401 = vld [vmem:[#allocation7 + $0x308] sm:$0xff]
    %v3402 = vld [vmem:[#allocation7 + $0x310] sm:$0xff]
    %v3403 = vld [vmem:[#allocation7 + $0x318] sm:$0xff]
    %v3404 = vld [vmem:[#allocation7 + $0x320] sm:$0xff]
    %v3405 = vld [vmem:[#allocation7 + $0x328] sm:$0xff]
    %v3406 = vld [vmem:[#allocation7 + $0x330] sm:$0xff]
    %v3407 = vld [vmem:[#allocation7 + $0x338] sm:$0xff]
    %v3408 = vld [vmem:[#allocation7 + $0x340] sm:$0xff]
    %v3409 = vld [vmem:[#allocation7 + $0x348] sm:$0xff]
    %v3410 = vld [vmem:[#allocation7 + $0x350] sm:$0xff]
    %v3411 = vld [vmem:[#allocation7 + $0x358] sm:$0xff]
    %v3412 = vld [vmem:[#allocation7 + $0x360] sm:$0xff]
    %v3413 = vld [vmem:[#allocation7 + $0x368] sm:$0xff]
    %v3414 = vld [vmem:[#allocation7 + $0x370] sm:$0xff]
    %v3415 = vld [vmem:[#allocation7 + $0x378] sm:$0xff]
    %v3416 = vld [vmem:[#allocation7 + $0x380] sm:$0xff]
    %v3417 = vld [vmem:[#allocation7 + $0x388] sm:$0xff]
    %v3418 = vld [vmem:[#allocation7 + $0x390] sm:$0xff]
    %v3419 = vld [vmem:[#allocation7 + $0x398] sm:$0xff]
    %v3420 = vld [vmem:[#allocation7 + $0x3a0] sm:$0xff]
    %v3421 = vld [vmem:[#allocation7 + $0x3a8] sm:$0xff]
    %v3422 = vld [vmem:[#allocation7 + $0x3b0] sm:$0xff]
    %v3423 = vld [vmem:[#allocation7 + $0x3b8] sm:$0xff]
    %v3424 = vld [vmem:[#allocation7 + $0x3c0] sm:$0xff]
    %v3425 = vld [vmem:[#allocation7 + $0x3c8] sm:$0xff]
    %v3426 = vld [vmem:[#allocation7 + $0x3d0] sm:$0xff]
    %v3427 = vld [vmem:[#allocation7 + $0x3d8] sm:$0xff]
    %v3428 = vld [vmem:[#allocation7 + $0x3e0] sm:$0xff]
    %v3429 = vld [vmem:[#allocation7 + $0x3e8] sm:$0xff]
    %v3430 = vld [vmem:[#allocation7 + $0x3f0] sm:$0xff]
    %v3431 = vld [vmem:[#allocation7 + $0x3f8] sm:$0xff]
    %v3432 = vld [vmem:[#allocation7 + $0x400] sm:$0xff]
    %v3433 = vld [vmem:[#allocation7 + $0x408] sm:$0xff]
    %v3434 = vld [vmem:[#allocation7 + $0x410] sm:$0xff]
    %v3435 = vld [vmem:[#allocation7 + $0x418] sm:$0xff]
    %v3436 = vld [vmem:[#allocation7 + $0x420] sm:$0xff]
    %v3437 = vld [vmem:[#allocation7 + $0x428] sm:$0xff]
    %v3438 = vld [vmem:[#allocation7 + $0x430] sm:$0xff]
    %v3439 = vld [vmem:[#allocation7 + $0x438] sm:$0xff]
    %v3440 = vld [vmem:[#allocation7 + $0x440] sm:$0xff]
    %v3441 = vld [vmem:[#allocation7 + $0x448] sm:$0xff]
    %v3442 = vld [vmem:[#allocation7 + $0x450] sm:$0xff]
    %v3443 = vld [vmem:[#allocation7 + $0x458] sm:$0xff]
    %v3444 = vld [vmem:[#allocation7 + $0x460] sm:$0xff]
    %v3445 = vld [vmem:[#allocation7 + $0x468] sm:$0xff]
    %v3446 = vld [vmem:[#allocation7 + $0x470] sm:$0xff]
    %v3447 = vld [vmem:[#allocation7 + $0x478] sm:$0xff]
    %v3448 = vld [vmem:[#allocation7 + $0x480] sm:$0xff]
    %v3449 = vld [vmem:[#allocation7 + $0x488] sm:$0xff]
    %v3450 = vld [vmem:[#allocation7 + $0x490] sm:$0xff]
    %v3451 = vld [vmem:[#allocation7 + $0x498] sm:$0xff]
    %v3452 = vld [vmem:[#allocation7 + $0x4a0] sm:$0xff]
    %v3453 = vld [vmem:[#allocation7 + $0x4a8] sm:$0xff]
    %v3454 = vld [vmem:[#allocation7 + $0x4b0] sm:$0xff]
    %v3455 = vld [vmem:[#allocation7 + $0x4b8] sm:$0xff]
    %v3456 = vld [vmem:[#allocation7 + $0x4c0] sm:$0xff]
    %v3457 = vld [vmem:[#allocation7 + $0x4c8] sm:$0xff]
    %v3458 = vld [vmem:[#allocation7 + $0x4d0] sm:$0xff]
    %v3459 = vld [vmem:[#allocation7 + $0x4d8] sm:$0xff]
    %v3460 = vld [vmem:[#allocation7 + $0x4e0] sm:$0xff]
    %v3461 = vld [vmem:[#allocation7 + $0x4e8] sm:$0xff]
    %v3462 = vld [vmem:[#allocation7 + $0x4f0] sm:$0xff]
    %v3463 = vld [vmem:[#allocation7 + $0x4f8] sm:$0xff]
    %v3464 = vld [vmem:[#allocation7 + $0x500] sm:$0xff]
    %v3465 = vld [vmem:[#allocation7 + $0x508] sm:$0xff]
    %v3466 = vld [vmem:[#allocation7 + $0x510] sm:$0xff]
    %v3467 = vld [vmem:[#allocation7 + $0x518] sm:$0xff]
    %v3468 = vld [vmem:[#allocation7 + $0x520] sm:$0xff]
    %v3469 = vld [vmem:[#allocation7 + $0x528] sm:$0xff]
    %v3470 = vld [vmem:[#allocation7 + $0x530] sm:$0xff]
    %v3471 = vld [vmem:[#allocation7 + $0x538] sm:$0xff]
    %v3472 = vld [vmem:[#allocation7 + $0x540] sm:$0xff]
    %v3473 = vld [vmem:[#allocation7 + $0x548] sm:$0xff]
    %v3474 = vld [vmem:[#allocation7 + $0x550] sm:$0xff]
    %v3475 = vld [vmem:[#allocation7 + $0x558] sm:$0xff]
    %v3476 = vld [vmem:[#allocation7 + $0x560] sm:$0xff]
    %v3477 = vld [vmem:[#allocation7 + $0x568] sm:$0xff]
    %v3478 = vld [vmem:[#allocation7 + $0x570] sm:$0xff]
    %v3479 = vld [vmem:[#allocation7 + $0x578] sm:$0xff]
    %v3480 = vld [vmem:[#allocation7 + $0x580] sm:$0xff]
    %v3481 = vld [vmem:[#allocation7 + $0x588] sm:$0xff]
    %v3482 = vld [vmem:[#allocation7 + $0x590] sm:$0xff]
    %v3483 = vld [vmem:[#allocation7 + $0x598] sm:$0xff]
    %v3484 = vld [vmem:[#allocation7 + $0x5a0] sm:$0xff]
    %v3485 = vld [vmem:[#allocation7 + $0x5a8] sm:$0xff]
    %v3486 = vld [vmem:[#allocation7 + $0x5b0] sm:$0xff]
    %v3487 = vld [vmem:[#allocation7 + $0x5b8] sm:$0xff]
    %v3488 = vld [vmem:[#allocation7 + $0x5c0] sm:$0xff]
    %v3489 = vld [vmem:[#allocation7 + $0x5c8] sm:$0xff]
    %v3490 = vld [vmem:[#allocation7 + $0x5d0] sm:$0xff]
    %v3491 = vld [vmem:[#allocation7 + $0x5d8] sm:$0xff]
    %v3492 = vld [vmem:[#allocation7 + $0x5e0] sm:$0xff]
    %v3493 = vld [vmem:[#allocation7 + $0x5e8] sm:$0xff]
    %v3494 = vld [vmem:[#allocation7 + $0x5f0] sm:$0xff]
    %v3495 = vld [vmem:[#allocation7 + $0x5f8] sm:$0xff]
    %v3496 = vld [vmem:[#allocation7 + $0x600] sm:$0xff]
    %v3497 = vld [vmem:[#allocation7 + $0x608] sm:$0xff]
    %v3498 = vld [vmem:[#allocation7 + $0x610] sm:$0xff]
    %v3499 = vld [vmem:[#allocation7 + $0x618] sm:$0xff]
    %v3500 = vld [vmem:[#allocation7 + $0x620] sm:$0xff]
    %v3501 = vld [vmem:[#allocation7 + $0x628] sm:$0xff]
    %v3502 = vld [vmem:[#allocation7 + $0x630] sm:$0xff]
    %v3503 = vld [vmem:[#allocation7 + $0x638] sm:$0xff]
    %v3504 = vld [vmem:[#allocation7 + $0x640] sm:$0xff]
    %v3505 = vld [vmem:[#allocation7 + $0x648] sm:$0xff]
    %v3506 = vld [vmem:[#allocation7 + $0x650] sm:$0xff]
    %v3507 = vld [vmem:[#allocation7 + $0x658] sm:$0xff]
    %v3508 = vld [vmem:[#allocation7 + $0x660] sm:$0xff]
    %v3509 = vld [vmem:[#allocation7 + $0x668] sm:$0xff]
    %v3510 = vld [vmem:[#allocation7 + $0x670] sm:$0xff]
    %v3511 = vld [vmem:[#allocation7 + $0x678] sm:$0xff]
    %v3512 = vld [vmem:[#allocation7 + $0x680] sm:$0xff]
    %v3513 = vld [vmem:[#allocation7 + $0x688] sm:$0xff]
    %v3514 = vld [vmem:[#allocation7 + $0x690] sm:$0xff]
    %v3515 = vld [vmem:[#allocation7 + $0x698] sm:$0xff]
    %v3516 = vld [vmem:[#allocation7 + $0x6a0] sm:$0xff]
    %v3517 = vld [vmem:[#allocation7 + $0x6a8] sm:$0xff]
    %v3518 = vld [vmem:[#allocation7 + $0x6b0] sm:$0xff]
    %v3519 = vld [vmem:[#allocation7 + $0x6b8] sm:$0xff]
    %v3520 = vld [vmem:[#allocation7 + $0x6c0] sm:$0xff]
    %v3521 = vld [vmem:[#allocation7 + $0x6c8] sm:$0xff]
    %v3522 = vld [vmem:[#allocation7 + $0x6d0] sm:$0xff]
    %v3523 = vld [vmem:[#allocation7 + $0x6d8] sm:$0xff]
    %v3524 = vld [vmem:[#allocation7 + $0x6e0] sm:$0xff]
    %v3525 = vld [vmem:[#allocation7 + $0x6e8] sm:$0xff]
    %v3526 = vld [vmem:[#allocation7 + $0x6f0] sm:$0xff]
    %v3527 = vld [vmem:[#allocation7 + $0x6f8] sm:$0xff]
    %v3528 = vld [vmem:[#allocation7 + $0x700] sm:$0xff]
    %v3529 = vld [vmem:[#allocation7 + $0x708] sm:$0xff]
    %v3530 = vld [vmem:[#allocation7 + $0x710] sm:$0xff]
    %v3531 = vld [vmem:[#allocation7 + $0x718] sm:$0xff]
    %v3532 = vld [vmem:[#allocation7 + $0x720] sm:$0xff]
    %v3533 = vld [vmem:[#allocation7 + $0x728] sm:$0xff]
    %v3534 = vld [vmem:[#allocation7 + $0x730] sm:$0xff]
    %v3535 = vld [vmem:[#allocation7 + $0x738] sm:$0xff]
    %v3536 = vld [vmem:[#allocation7 + $0x740] sm:$0xff]
    %v3537 = vld [vmem:[#allocation7 + $0x748] sm:$0xff]
    %v3538 = vld [vmem:[#allocation7 + $0x750] sm:$0xff]
    %v3539 = vld [vmem:[#allocation7 + $0x758] sm:$0xff]
    %v3540 = vld [vmem:[#allocation7 + $0x760] sm:$0xff]
    %v3541 = vld [vmem:[#allocation7 + $0x768] sm:$0xff]
    %v3542 = vld [vmem:[#allocation7 + $0x770] sm:$0xff]
    %v3543 = vld [vmem:[#allocation7 + $0x778] sm:$0xff]
    %v3544 = vld [vmem:[#allocation7 + $0x780] sm:$0xff]
    %v3545 = vld [vmem:[#allocation7 + $0x788] sm:$0xff]
    %v3546 = vld [vmem:[#allocation7 + $0x790] sm:$0xff]
    %v3547 = vld [vmem:[#allocation7 + $0x798] sm:$0xff]
    %v3548 = vld [vmem:[#allocation7 + $0x7a0] sm:$0xff]
    %v3549 = vld [vmem:[#allocation7 + $0x7a8] sm:$0xff]
    %v3550 = vld [vmem:[#allocation7 + $0x7b0] sm:$0xff]
    %v3551 = vld [vmem:[#allocation7 + $0x7b8] sm:$0xff]
    %v3552 = vld [vmem:[#allocation7 + $0x7c0] sm:$0xff]
    %v3553 = vld [vmem:[#allocation7 + $0x7c8] sm:$0xff]
    %v3554 = vld [vmem:[#allocation7 + $0x7d0] sm:$0xff]
    %v3555 = vld [vmem:[#allocation7 + $0x7d8] sm:$0xff]
    %v3556 = vld [vmem:[#allocation7 + $0x7e0] sm:$0xff]
    %v3557 = vld [vmem:[#allocation7 + $0x7e8] sm:$0xff]
    %v3558 = vld [vmem:[#allocation7 + $0x7f0] sm:$0xff]
    %v3559 = vld [vmem:[#allocation7 + $0x7f8] sm:$0xff]
    %v3560 = vld [vmem:[#allocation7 + $0x800] sm:$0xff]
    %v3561 = vld [vmem:[#allocation7 + $0x808] sm:$0xff]
    %v3562 = vld [vmem:[#allocation7 + $0x810] sm:$0xff]
    %v3563 = vld [vmem:[#allocation7 + $0x818] sm:$0xff]
    %v3564 = vld [vmem:[#allocation7 + $0x820] sm:$0xff]
    %v3565 = vld [vmem:[#allocation7 + $0x828] sm:$0xff]
    %v3566 = vld [vmem:[#allocation7 + $0x830] sm:$0xff]
    %v3567 = vld [vmem:[#allocation7 + $0x838] sm:$0xff]
    %v3568 = vld [vmem:[#allocation7 + $0x840] sm:$0xff]
    %v3569 = vld [vmem:[#allocation7 + $0x848] sm:$0xff]
    %v3570 = vld [vmem:[#allocation7 + $0x850] sm:$0xff]
    %v3571 = vld [vmem:[#allocation7 + $0x858] sm:$0xff]
    %v3572 = vld [vmem:[#allocation7 + $0x860] sm:$0xff]
    %v3573 = vld [vmem:[#allocation7 + $0x868] sm:$0xff]
    %v3574 = vld [vmem:[#allocation7 + $0x870] sm:$0xff]
    %v3575 = vld [vmem:[#allocation7 + $0x878] sm:$0xff]
    %v3576 = vld [vmem:[#allocation7 + $0x880] sm:$0xff]
    %v3577 = vld [vmem:[#allocation7 + $0x888] sm:$0xff]
    %v3578 = vld [vmem:[#allocation7 + $0x890] sm:$0xff]
    %v3579 = vld [vmem:[#allocation7 + $0x898] sm:$0xff]
    %v3580 = vld [vmem:[#allocation7 + $0x8a0] sm:$0xff]
    %v3581 = vld [vmem:[#allocation7 + $0x8a8] sm:$0xff]
    %v3582 = vld [vmem:[#allocation7 + $0x8b0] sm:$0xff]
    %v3583 = vld [vmem:[#allocation7 + $0x8b8] sm:$0xff]
    %v3584 = vld [vmem:[#allocation7 + $0x8c0] sm:$0xff]
    %v3585 = vld [vmem:[#allocation7 + $0x8c8] sm:$0xff]
    %v3586 = vld [vmem:[#allocation7 + $0x8d0] sm:$0xff]
    %v3587 = vld [vmem:[#allocation7 + $0x8d8] sm:$0xff]
    %v3588 = vld [vmem:[#allocation7 + $0x8e0] sm:$0xff]
    %v3589 = vld [vmem:[#allocation7 + $0x8e8] sm:$0xff]
    %v3590 = vld [vmem:[#allocation7 + $0x8f0] sm:$0xff]
    %v3591 = vld [vmem:[#allocation7 + $0x8f8] sm:$0xff]
    %v3592 = vld [vmem:[#allocation7 + $0x900] sm:$0xff]
    %v3593 = vld [vmem:[#allocation7 + $0x908] sm:$0xff]
    %v3594 = vld [vmem:[#allocation7 + $0x910] sm:$0xff]
    %v3595 = vld [vmem:[#allocation7 + $0x918] sm:$0xff]
    %v3596 = vld [vmem:[#allocation7 + $0x920] sm:$0xff]
    %v3597 = vld [vmem:[#allocation7 + $0x928] sm:$0xff]
    %v3598 = vld [vmem:[#allocation7 + $0x930] sm:$0xff]
    %v3599 = vld [vmem:[#allocation7 + $0x938] sm:$0xff]
    %v3600 = vld [vmem:[#allocation7 + $0x940] sm:$0xff]
    %v3601 = vld [vmem:[#allocation7 + $0x948] sm:$0xff]
    %v3602 = vld [vmem:[#allocation7 + $0x950] sm:$0xff]
    %v3603 = vld [vmem:[#allocation7 + $0x958] sm:$0xff]
    %v3604 = vld [vmem:[#allocation7 + $0x960] sm:$0xff]
    %v3605 = vld [vmem:[#allocation7 + $0x968] sm:$0xff]
    %v3606 = vld [vmem:[#allocation7 + $0x970] sm:$0xff]
    %v3607 = vld [vmem:[#allocation7 + $0x978] sm:$0xff]
    %v3608 = vld [vmem:[#allocation7 + $0x980] sm:$0xff]
    %v3609 = vld [vmem:[#allocation7 + $0x988] sm:$0xff]
    %v3610 = vld [vmem:[#allocation7 + $0x990] sm:$0xff]
    %v3611 = vld [vmem:[#allocation7 + $0x998] sm:$0xff]
    %v3612 = vld [vmem:[#allocation7 + $0x9a0] sm:$0xff]
    %v3613 = vld [vmem:[#allocation7 + $0x9a8] sm:$0xff]
    %v3614 = vld [vmem:[#allocation7 + $0x9b0] sm:$0xff]
    %v3615 = vld [vmem:[#allocation7 + $0x9b8] sm:$0xff]
    %v3616 = vld [vmem:[#allocation7 + $0x9c0] sm:$0xff]
    %v3617 = vld [vmem:[#allocation7 + $0x9c8] sm:$0xff]
    %v3618 = vld [vmem:[#allocation7 + $0x9d0] sm:$0xff]
    %v3619 = vld [vmem:[#allocation7 + $0x9d8] sm:$0xff]
    %v3620 = vld [vmem:[#allocation7 + $0x9e0] sm:$0xff]
    %v3621 = vld [vmem:[#allocation7 + $0x9e8] sm:$0xff]
    %v3622 = vld [vmem:[#allocation7 + $0x9f0] sm:$0xff]
    %v3623 = vld [vmem:[#allocation7 + $0x9f8] sm:$0xff]
    %v3624 = vld [vmem:[#allocation7 + $0xa00] sm:$0xff]
    %v3625 = vld [vmem:[#allocation7 + $0xa08] sm:$0xff]
    %v3626 = vld [vmem:[#allocation7 + $0xa10] sm:$0xff]
    %v3627 = vld [vmem:[#allocation7 + $0xa18] sm:$0xff]
    %v3628 = vld [vmem:[#allocation7 + $0xa20] sm:$0xff]
    %v3629 = vld [vmem:[#allocation7 + $0xa28] sm:$0xff]
    %v3630 = vld [vmem:[#allocation7 + $0xa30] sm:$0xff]
    %v3631 = vld [vmem:[#allocation7 + $0xa38] sm:$0xff]
    %v3632 = vld [vmem:[#allocation7 + $0xa40] sm:$0xff]
    %v3633 = vld [vmem:[#allocation7 + $0xa48] sm:$0xff]
    %v3634 = vld [vmem:[#allocation7 + $0xa50] sm:$0xff]
    %v3635 = vld [vmem:[#allocation7 + $0xa58] sm:$0xff]
    %v3636 = vld [vmem:[#allocation7 + $0xa60] sm:$0xff]
    %v3637 = vld [vmem:[#allocation7 + $0xa68] sm:$0xff]
    %v3638 = vld [vmem:[#allocation7 + $0xa70] sm:$0xff]
    %v3639 = vld [vmem:[#allocation7 + $0xa78] sm:$0xff]
    %v3640 = vld [vmem:[#allocation7 + $0xa80] sm:$0xff]
    %v3641 = vld [vmem:[#allocation7 + $0xa88] sm:$0xff]
    %v3642 = vld [vmem:[#allocation7 + $0xa90] sm:$0xff]
    %v3643 = vld [vmem:[#allocation7 + $0xa98] sm:$0xff]
    %v3644 = vld [vmem:[#allocation7 + $0xaa0] sm:$0xff]
    %v3645 = vld [vmem:[#allocation7 + $0xaa8] sm:$0xff]
    %v3646 = vld [vmem:[#allocation7 + $0xab0] sm:$0xff]
    %v3647 = vld [vmem:[#allocation7 + $0xab8] sm:$0xff]
    %v3648 = vld [vmem:[#allocation7 + $0xac0] sm:$0xff]
    %v3649 = vld [vmem:[#allocation7 + $0xac8] sm:$0xff]
    %v3650 = vld [vmem:[#allocation7 + $0xad0] sm:$0xff]
    %v3651 = vld [vmem:[#allocation7 + $0xad8] sm:$0xff]
    %v3652 = vld [vmem:[#allocation7 + $0xae0] sm:$0xff]
    %v3653 = vld [vmem:[#allocation7 + $0xae8] sm:$0xff]
    %v3654 = vld [vmem:[#allocation7 + $0xaf0] sm:$0xff]
    %v3655 = vld [vmem:[#allocation7 + $0xaf8] sm:$0xff]
    %v3656 = vld [vmem:[#allocation7 + $0xb00] sm:$0xff]
    %v3657 = vld [vmem:[#allocation7 + $0xb08] sm:$0xff]
    %v3658 = vld [vmem:[#allocation7 + $0xb10] sm:$0xff]
    %v3659 = vld [vmem:[#allocation7 + $0xb18] sm:$0xff]
    %v3660 = vld [vmem:[#allocation7 + $0xb20] sm:$0xff]
    %v3661 = vld [vmem:[#allocation7 + $0xb28] sm:$0xff]
    %v3662 = vld [vmem:[#allocation7 + $0xb30] sm:$0xff]
    %v3663 = vld [vmem:[#allocation7 + $0xb38] sm:$0xff]
    %v3664 = vld [vmem:[#allocation7 + $0xb40] sm:$0xff]
    %v3665 = vld [vmem:[#allocation7 + $0xb48] sm:$0xff]
    %v3666 = vld [vmem:[#allocation7 + $0xb50] sm:$0xff]
    %v3667 = vld [vmem:[#allocation7 + $0xb58] sm:$0xff]
    %v3668 = vld [vmem:[#allocation7 + $0xb60] sm:$0xff]
    %v3669 = vld [vmem:[#allocation7 + $0xb68] sm:$0xff]
    %v3670 = vld [vmem:[#allocation7 + $0xb70] sm:$0xff]
    %v3671 = vld [vmem:[#allocation7 + $0xb78] sm:$0xff]
    %v3672 = vld [vmem:[#allocation7 + $0xb80] sm:$0xff]
    %v3673 = vld [vmem:[#allocation7 + $0xb88] sm:$0xff]
    %v3674 = vld [vmem:[#allocation7 + $0xb90] sm:$0xff]
    %v3675 = vld [vmem:[#allocation7 + $0xb98] sm:$0xff]
    %v3676 = vld [vmem:[#allocation7 + $0xba0] sm:$0xff]
    %v3677 = vld [vmem:[#allocation7 + $0xba8] sm:$0xff]
    %v3678 = vld [vmem:[#allocation7 + $0xbb0] sm:$0xff]
    %v3679 = vld [vmem:[#allocation7 + $0xbb8] sm:$0xff]
    %v3680 = vld [vmem:[#allocation7 + $0xbc0] sm:$0xff]
    %v3681 = vld [vmem:[#allocation7 + $0xbc8] sm:$0xff]
    %v3682 = vld [vmem:[#allocation7 + $0xbd0] sm:$0xff]
    %v3683 = vld [vmem:[#allocation7 + $0xbd8] sm:$0xff]
    %v3684 = vld [vmem:[#allocation7 + $0xbe0] sm:$0xff]
    %v3685 = vld [vmem:[#allocation7 + $0xbe8] sm:$0xff]
    %v3686 = vld [vmem:[#allocation7 + $0xbf0] sm:$0xff]
    %v3687 = vld [vmem:[#allocation7 + $0xbf8] sm:$0xff]
    %v3688 = vld [vmem:[#allocation7 + $0xc00] sm:$0xff]
    %v3689 = vld [vmem:[#allocation7 + $0xc08] sm:$0xff]
    %v3690 = vld [vmem:[#allocation7 + $0xc10] sm:$0xff]
    %v3691 = vld [vmem:[#allocation7 + $0xc18] sm:$0xff]
    %v3692 = vld [vmem:[#allocation7 + $0xc20] sm:$0xff]
    %v3693 = vld [vmem:[#allocation7 + $0xc28] sm:$0xff]
    %v3694 = vld [vmem:[#allocation7 + $0xc30] sm:$0xff]
    %v3695 = vld [vmem:[#allocation7 + $0xc38] sm:$0xff]
    %v3696 = vld [vmem:[#allocation7 + $0xc40] sm:$0xff]
    %v3697 = vld [vmem:[#allocation7 + $0xc48] sm:$0xff]
    %v3698 = vld [vmem:[#allocation7 + $0xc50] sm:$0xff]
    %v3699 = vld [vmem:[#allocation7 + $0xc58] sm:$0xff]
    %v3700 = vld [vmem:[#allocation7 + $0xc60] sm:$0xff]
    %v3701 = vld [vmem:[#allocation7 + $0xc68] sm:$0xff]
    %v3702 = vld [vmem:[#allocation7 + $0xc70] sm:$0xff]
    %v3703 = vld [vmem:[#allocation7 + $0xc78] sm:$0xff]
    %v3704 = vld [vmem:[#allocation7 + $0xc80] sm:$0xff]
    %v3705 = vld [vmem:[#allocation7 + $0xc88] sm:$0xff]
    %v3706 = vld [vmem:[#allocation7 + $0xc90] sm:$0xff]
    %v3707 = vld [vmem:[#allocation7 + $0xc98] sm:$0xff]
    %v3708 = vld [vmem:[#allocation7 + $0xca0] sm:$0xff]
    %v3709 = vld [vmem:[#allocation7 + $0xca8] sm:$0xff]
    %v3710 = vld [vmem:[#allocation7 + $0xcb0] sm:$0xff]
    %v3711 = vld [vmem:[#allocation7 + $0xcb8] sm:$0xff]
    %v3712 = vld [vmem:[#allocation7 + $0xcc0] sm:$0xff]
    %v3713 = vld [vmem:[#allocation7 + $0xcc8] sm:$0xff]
    %v3714 = vld [vmem:[#allocation7 + $0xcd0] sm:$0xff]
    %v3715 = vld [vmem:[#allocation7 + $0xcd8] sm:$0xff]
    %v3716 = vld [vmem:[#allocation7 + $0xce0] sm:$0xff]
    %v3717 = vld [vmem:[#allocation7 + $0xce8] sm:$0xff]
    %v3718 = vld [vmem:[#allocation7 + $0xcf0] sm:$0xff]
    %v3719 = vld [vmem:[#allocation7 + $0xcf8] sm:$0xff]
    %v3720 = vld [vmem:[#allocation7 + $0xd00] sm:$0xff]
    %v3721 = vld [vmem:[#allocation7 + $0xd08] sm:$0xff]
    %v3722 = vld [vmem:[#allocation7 + $0xd10] sm:$0xff]
    %v3723 = vld [vmem:[#allocation7 + $0xd18] sm:$0xff]
    %v3724 = vld [vmem:[#allocation7 + $0xd20] sm:$0xff]
    %v3725 = vld [vmem:[#allocation7 + $0xd28] sm:$0xff]
    %v3726 = vld [vmem:[#allocation7 + $0xd30] sm:$0xff]
    %v3727 = vld [vmem:[#allocation7 + $0xd38] sm:$0xff]
    %v3728 = vld [vmem:[#allocation7 + $0xd40] sm:$0xff]
    %v3729 = vld [vmem:[#allocation7 + $0xd48] sm:$0xff]
    %v3730 = vld [vmem:[#allocation7 + $0xd50] sm:$0xff]
    %v3731 = vld [vmem:[#allocation7 + $0xd58] sm:$0xff]
    %v3732 = vld [vmem:[#allocation7 + $0xd60] sm:$0xff]
    %v3733 = vld [vmem:[#allocation7 + $0xd68] sm:$0xff]
    %v3734 = vld [vmem:[#allocation7 + $0xd70] sm:$0xff]
    %v3735 = vld [vmem:[#allocation7 + $0xd78] sm:$0xff]
    %v3736 = vld [vmem:[#allocation7 + $0xd80] sm:$0xff]
    %v3737 = vld [vmem:[#allocation7 + $0xd88] sm:$0xff]
    %v3738 = vld [vmem:[#allocation7 + $0xd90] sm:$0xff]
    %v3739 = vld [vmem:[#allocation7 + $0xd98] sm:$0xff]
    %v3740 = vld [vmem:[#allocation7 + $0xda0] sm:$0xff]
    %v3741 = vld [vmem:[#allocation7 + $0xda8] sm:$0xff]
    %v3742 = vld [vmem:[#allocation7 + $0xdb0] sm:$0xff]
    %v3743 = vld [vmem:[#allocation7 + $0xdb8] sm:$0xff]
    %v3744 = vld [vmem:[#allocation7 + $0xdc0] sm:$0xff]
    %v3745 = vld [vmem:[#allocation7 + $0xdc8] sm:$0xff]
    %v3746 = vld [vmem:[#allocation7 + $0xdd0] sm:$0xff]
    %v3747 = vld [vmem:[#allocation7 + $0xdd8] sm:$0xff]
    %v3748 = vld [vmem:[#allocation7 + $0xde0] sm:$0xff]
    %v3749 = vld [vmem:[#allocation7 + $0xde8] sm:$0xff]
    %v3750 = vld [vmem:[#allocation7 + $0xdf0] sm:$0xff]
    %v3751 = vld [vmem:[#allocation7 + $0xdf8] sm:$0xff]
    %v3752 = vld [vmem:[#allocation7 + $0xe00] sm:$0xff]
    %v3753 = vld [vmem:[#allocation7 + $0xe08] sm:$0xff]
    %v3754 = vld [vmem:[#allocation7 + $0xe10] sm:$0xff]
    %v3755 = vld [vmem:[#allocation7 + $0xe18] sm:$0xff]
    %v3756 = vld [vmem:[#allocation7 + $0xe20] sm:$0xff]
    %v3757 = vld [vmem:[#allocation7 + $0xe28] sm:$0xff]
    %v3758 = vld [vmem:[#allocation7 + $0xe30] sm:$0xff]
    %v3759 = vld [vmem:[#allocation7 + $0xe38] sm:$0xff]
    %v3760 = vld [vmem:[#allocation7 + $0xe40] sm:$0xff]
    %v3761 = vld [vmem:[#allocation7 + $0xe48] sm:$0xff]
    %v3762 = vld [vmem:[#allocation7 + $0xe50] sm:$0xff]
    %v3763 = vld [vmem:[#allocation7 + $0xe58] sm:$0xff]
    %v3764 = vld [vmem:[#allocation7 + $0xe60] sm:$0xff]
    %v3765 = vld [vmem:[#allocation7 + $0xe68] sm:$0xff]
    %v3766 = vld [vmem:[#allocation7 + $0xe70] sm:$0xff]
    %v3767 = vld [vmem:[#allocation7 + $0xe78] sm:$0xff]
    %v3768 = vld [vmem:[#allocation7 + $0xe80] sm:$0xff]
    %v3769 = vld [vmem:[#allocation7 + $0xe88] sm:$0xff]
    %v3770 = vld [vmem:[#allocation7 + $0xe90] sm:$0xff]
    %v3771 = vld [vmem:[#allocation7 + $0xe98] sm:$0xff]
    %v3772 = vld [vmem:[#allocation7 + $0xea0] sm:$0xff]
    %v3773 = vld [vmem:[#allocation7 + $0xea8] sm:$0xff]
    %v3774 = vld [vmem:[#allocation7 + $0xeb0] sm:$0xff]
    %v3775 = vld [vmem:[#allocation7 + $0xeb8] sm:$0xff]
    %v3776 = vld [vmem:[#allocation7 + $0xec0] sm:$0xff]
    %v3777 = vld [vmem:[#allocation7 + $0xec8] sm:$0xff]
    %v3778 = vld [vmem:[#allocation7 + $0xed0] sm:$0xff]
    %v3779 = vld [vmem:[#allocation7 + $0xed8] sm:$0xff]
    %v3780 = vld [vmem:[#allocation7 + $0xee0] sm:$0xff]
    %v3781 = vld [vmem:[#allocation7 + $0xee8] sm:$0xff]
    %v3782 = vld [vmem:[#allocation7 + $0xef0] sm:$0xff]
    %v3783 = vld [vmem:[#allocation7 + $0xef8] sm:$0xff]
    %v3784 = vld [vmem:[#allocation7 + $0xf00] sm:$0xff]
    %v3785 = vld [vmem:[#allocation7 + $0xf08] sm:$0xff]
    %v3786 = vld [vmem:[#allocation7 + $0xf10] sm:$0xff]
    %v3787 = vld [vmem:[#allocation7 + $0xf18] sm:$0xff]
    %v3788 = vld [vmem:[#allocation7 + $0xf20] sm:$0xff]
    %v3789 = vld [vmem:[#allocation7 + $0xf28] sm:$0xff]
    %v3790 = vld [vmem:[#allocation7 + $0xf30] sm:$0xff]
    %v3791 = vld [vmem:[#allocation7 + $0xf38] sm:$0xff]
    %v3792 = vld [vmem:[#allocation7 + $0xf40] sm:$0xff]
    %v3793 = vld [vmem:[#allocation7 + $0xf48] sm:$0xff]
    %v3794 = vld [vmem:[#allocation7 + $0xf50] sm:$0xff]
    %v3795 = vld [vmem:[#allocation7 + $0xf58] sm:$0xff]
    %v3796 = vld [vmem:[#allocation7 + $0xf60] sm:$0xff]
    %v3797 = vld [vmem:[#allocation7 + $0xf68] sm:$0xff]
    %v3798 = vld [vmem:[#allocation7 + $0xf70] sm:$0xff]
    %v3799 = vld [vmem:[#allocation7 + $0xf78] sm:$0xff]
    %v3800 = vld [vmem:[#allocation7 + $0xf80] sm:$0xff]
    %v3801 = vld [vmem:[#allocation7 + $0xf88] sm:$0xff]
    %v3802 = vld [vmem:[#allocation7 + $0xf90] sm:$0xff]
    %v3803 = vld [vmem:[#allocation7 + $0xf98] sm:$0xff]
    %v3804 = vld [vmem:[#allocation7 + $0xfa0] sm:$0xff]
    %v3805 = vld [vmem:[#allocation7 + $0xfa8] sm:$0xff]
    %v3806 = vld [vmem:[#allocation7 + $0xfb0] sm:$0xff]
    %v3807 = vld [vmem:[#allocation7 + $0xfb8] sm:$0xff]
    %v3808 = vld [vmem:[#allocation7 + $0xfc0] sm:$0xff]
    %v3809 = vld [vmem:[#allocation7 + $0xfc8] sm:$0xff]
    %v3810 = vld [vmem:[#allocation7 + $0xfd0] sm:$0xff]
    %v3811 = vld [vmem:[#allocation7 + $0xfd8] sm:$0xff]
    %v3812 = vld [vmem:[#allocation7 + $0xfe0] sm:$0xff]
    %v3813 = vld [vmem:[#allocation7 + $0xfe8] sm:$0xff]
    %v3814 = vld [vmem:[#allocation7 + $0xff0] sm:$0xff]
    %v3815 = vld [vmem:[#allocation7 + $0xff8] sm:$0xff]
    %v4328 = vunpack.c.l.b16 %v3304
    %v4329 = vunpack.c.h.b16 %v3304
    %v4330 = vunpack.c.l.b16 %v3305
    %v4331 = vunpack.c.h.b16 %v3305
    %v4332 = vunpack.c.l.b16 %v3306
    %v4333 = vunpack.c.h.b16 %v3306
    %v4334 = vunpack.c.l.b16 %v3307
    %v4335 = vunpack.c.h.b16 %v3307
    %v4336 = vunpack.c.l.b16 %v3308
    %v4337 = vunpack.c.h.b16 %v3308
    %v4338 = vunpack.c.l.b16 %v3309
    %v4339 = vunpack.c.h.b16 %v3309
    %v4340 = vunpack.c.l.b16 %v3310
    %v4341 = vunpack.c.h.b16 %v3310
    %v4342 = vunpack.c.l.b16 %v3311
    %v4343 = vunpack.c.h.b16 %v3311
    %v4344 = vunpack.c.l.b16 %v3312
    %v4345 = vunpack.c.h.b16 %v3312
    %v4346 = vunpack.c.l.b16 %v3313
    %v4347 = vunpack.c.h.b16 %v3313
    %v4348 = vunpack.c.l.b16 %v3314
    %v4349 = vunpack.c.h.b16 %v3314
    %v4350 = vunpack.c.l.b16 %v3315
    %v4351 = vunpack.c.h.b16 %v3315
    %v4352 = vunpack.c.l.b16 %v3316
    %v4353 = vunpack.c.h.b16 %v3316
    %v4354 = vunpack.c.l.b16 %v3317
    %v4355 = vunpack.c.h.b16 %v3317
    %v4356 = vunpack.c.l.b16 %v3318
    %v4357 = vunpack.c.h.b16 %v3318
    %v4358 = vunpack.c.l.b16 %v3319
    %v4359 = vunpack.c.h.b16 %v3319
    %v4360 = vunpack.c.l.b16 %v3320
    %v4361 = vunpack.c.h.b16 %v3320
    %v4362 = vunpack.c.l.b16 %v3321
    %v4363 = vunpack.c.h.b16 %v3321
    %v4364 = vunpack.c.l.b16 %v3322
    %v4365 = vunpack.c.h.b16 %v3322
    %v4366 = vunpack.c.l.b16 %v3323
    %v4367 = vunpack.c.h.b16 %v3323
    %v4368 = vunpack.c.l.b16 %v3324
    %v4369 = vunpack.c.h.b16 %v3324
    %v4370 = vunpack.c.l.b16 %v3325
    %v4371 = vunpack.c.h.b16 %v3325
    %v4372 = vunpack.c.l.b16 %v3326
    %v4373 = vunpack.c.h.b16 %v3326
    %v4374 = vunpack.c.l.b16 %v3327
    %v4375 = vunpack.c.h.b16 %v3327
    %v4376 = vunpack.c.l.b16 %v3328
    %v4377 = vunpack.c.h.b16 %v3328
    %v4378 = vunpack.c.l.b16 %v3329
    %v4379 = vunpack.c.h.b16 %v3329
    %v4380 = vunpack.c.l.b16 %v3330
    %v4381 = vunpack.c.h.b16 %v3330
    %v4382 = vunpack.c.l.b16 %v3331
    %v4383 = vunpack.c.h.b16 %v3331
    %v4384 = vunpack.c.l.b16 %v3332
    %v4385 = vunpack.c.h.b16 %v3332
    %v4386 = vunpack.c.l.b16 %v3333
    %v4387 = vunpack.c.h.b16 %v3333
    %v4388 = vunpack.c.l.b16 %v3334
    %v4389 = vunpack.c.h.b16 %v3334
    %v4390 = vunpack.c.l.b16 %v3335
    %v4391 = vunpack.c.h.b16 %v3335
    %v4392 = vunpack.c.l.b16 %v3336
    %v4393 = vunpack.c.h.b16 %v3336
    %v4394 = vunpack.c.l.b16 %v3337
    %v4395 = vunpack.c.h.b16 %v3337
    %v4396 = vunpack.c.l.b16 %v3338
    %v4397 = vunpack.c.h.b16 %v3338
    %v4398 = vunpack.c.l.b16 %v3339
    %v4399 = vunpack.c.h.b16 %v3339
    %v4400 = vunpack.c.l.b16 %v3340
    %v4401 = vunpack.c.h.b16 %v3340
    %v4402 = vunpack.c.l.b16 %v3341
    %v4403 = vunpack.c.h.b16 %v3341
    %v4404 = vunpack.c.l.b16 %v3342
    %v4405 = vunpack.c.h.b16 %v3342
    %v4406 = vunpack.c.l.b16 %v3343
    %v4407 = vunpack.c.h.b16 %v3343
    %v4408 = vunpack.c.l.b16 %v3344
    %v4409 = vunpack.c.h.b16 %v3344
    %v4410 = vunpack.c.l.b16 %v3345
    %v4411 = vunpack.c.h.b16 %v3345
    %v4412 = vunpack.c.l.b16 %v3346
    %v4413 = vunpack.c.h.b16 %v3346
    %v4414 = vunpack.c.l.b16 %v3347
    %v4415 = vunpack.c.h.b16 %v3347
    %v4416 = vunpack.c.l.b16 %v3348
    %v4417 = vunpack.c.h.b16 %v3348
    %v4418 = vunpack.c.l.b16 %v3349
    %v4419 = vunpack.c.h.b16 %v3349
    %v4420 = vunpack.c.l.b16 %v3350
    %v4421 = vunpack.c.h.b16 %v3350
    %v4422 = vunpack.c.l.b16 %v3351
    %v4423 = vunpack.c.h.b16 %v3351
    %v4424 = vunpack.c.l.b16 %v3352
    %v4425 = vunpack.c.h.b16 %v3352
    %v4426 = vunpack.c.l.b16 %v3353
    %v4427 = vunpack.c.h.b16 %v3353
    %v4428 = vunpack.c.l.b16 %v3354
    %v4429 = vunpack.c.h.b16 %v3354
    %v4430 = vunpack.c.l.b16 %v3355
    %v4431 = vunpack.c.h.b16 %v3355
    %v4432 = vunpack.c.l.b16 %v3356
    %v4433 = vunpack.c.h.b16 %v3356
    %v4434 = vunpack.c.l.b16 %v3357
    %v4435 = vunpack.c.h.b16 %v3357
    %v4436 = vunpack.c.l.b16 %v3358
    %v4437 = vunpack.c.h.b16 %v3358
    %v4438 = vunpack.c.l.b16 %v3359
    %v4439 = vunpack.c.h.b16 %v3359
    %v4440 = vunpack.c.l.b16 %v3360
    %v4441 = vunpack.c.h.b16 %v3360
    %v4442 = vunpack.c.l.b16 %v3361
    %v4443 = vunpack.c.h.b16 %v3361
    %v4444 = vunpack.c.l.b16 %v3362
    %v4445 = vunpack.c.h.b16 %v3362
    %v4446 = vunpack.c.l.b16 %v3363
    %v4447 = vunpack.c.h.b16 %v3363
    %v4448 = vunpack.c.l.b16 %v3364
    %v4449 = vunpack.c.h.b16 %v3364
    %v4450 = vunpack.c.l.b16 %v3365
    %v4451 = vunpack.c.h.b16 %v3365
    %v4452 = vunpack.c.l.b16 %v3366
    %v4453 = vunpack.c.h.b16 %v3366
    %v4454 = vunpack.c.l.b16 %v3367
    %v4455 = vunpack.c.h.b16 %v3367
    %v4456 = vunpack.c.l.b16 %v3368
    %v4457 = vunpack.c.h.b16 %v3368
    %v4458 = vunpack.c.l.b16 %v3369
    %v4459 = vunpack.c.h.b16 %v3369
    %v4460 = vunpack.c.l.b16 %v3370
    %v4461 = vunpack.c.h.b16 %v3370
    %v4462 = vunpack.c.l.b16 %v3371
    %v4463 = vunpack.c.h.b16 %v3371
    %v4464 = vunpack.c.l.b16 %v3372
    %v4465 = vunpack.c.h.b16 %v3372
    %v4466 = vunpack.c.l.b16 %v3373
    %v4467 = vunpack.c.h.b16 %v3373
    %v4468 = vunpack.c.l.b16 %v3374
    %v4469 = vunpack.c.h.b16 %v3374
    %v4470 = vunpack.c.l.b16 %v3375
    %v4471 = vunpack.c.h.b16 %v3375
    %v4472 = vunpack.c.l.b16 %v3376
    %v4473 = vunpack.c.h.b16 %v3376
    %v4474 = vunpack.c.l.b16 %v3377
    %v4475 = vunpack.c.h.b16 %v3377
    %v4476 = vunpack.c.l.b16 %v3378
    %v4477 = vunpack.c.h.b16 %v3378
    %v4478 = vunpack.c.l.b16 %v3379
    %v4479 = vunpack.c.h.b16 %v3379
    %v4480 = vunpack.c.l.b16 %v3380
    %v4481 = vunpack.c.h.b16 %v3380
    %v4482 = vunpack.c.l.b16 %v3381
    %v4483 = vunpack.c.h.b16 %v3381
    %v4484 = vunpack.c.l.b16 %v3382
    %v4485 = vunpack.c.h.b16 %v3382
    %v4486 = vunpack.c.l.b16 %v3383
    %v4487 = vunpack.c.h.b16 %v3383
    %v4488 = vunpack.c.l.b16 %v3384
    %v4489 = vunpack.c.h.b16 %v3384
    %v4490 = vunpack.c.l.b16 %v3385
    %v4491 = vunpack.c.h.b16 %v3385
    %v4492 = vunpack.c.l.b16 %v3386
    %v4493 = vunpack.c.h.b16 %v3386
    %v4494 = vunpack.c.l.b16 %v3387
    %v4495 = vunpack.c.h.b16 %v3387
    %v4496 = vunpack.c.l.b16 %v3388
    %v4497 = vunpack.c.h.b16 %v3388
    %v4498 = vunpack.c.l.b16 %v3389
    %v4499 = vunpack.c.h.b16 %v3389
    %v4500 = vunpack.c.l.b16 %v3390
    %v4501 = vunpack.c.h.b16 %v3390
    %v4502 = vunpack.c.l.b16 %v3391
    %v4503 = vunpack.c.h.b16 %v3391
    %v4504 = vunpack.c.l.b16 %v3392
    %v4505 = vunpack.c.h.b16 %v3392
    %v4506 = vunpack.c.l.b16 %v3393
    %v4507 = vunpack.c.h.b16 %v3393
    %v4508 = vunpack.c.l.b16 %v3394
    %v4509 = vunpack.c.h.b16 %v3394
    %v4510 = vunpack.c.l.b16 %v3395
    %v4511 = vunpack.c.h.b16 %v3395
    %v4512 = vunpack.c.l.b16 %v3396
    %v4513 = vunpack.c.h.b16 %v3396
    %v4514 = vunpack.c.l.b16 %v3397
    %v4515 = vunpack.c.h.b16 %v3397
    %v4516 = vunpack.c.l.b16 %v3398
    %v4517 = vunpack.c.h.b16 %v3398
    %v4518 = vunpack.c.l.b16 %v3399
    %v4519 = vunpack.c.h.b16 %v3399
    %v4520 = vunpack.c.l.b16 %v3400
    %v4521 = vunpack.c.h.b16 %v3400
    %v4522 = vunpack.c.l.b16 %v3401
    %v4523 = vunpack.c.h.b16 %v3401
    %v4524 = vunpack.c.l.b16 %v3402
    %v4525 = vunpack.c.h.b16 %v3402
    %v4526 = vunpack.c.l.b16 %v3403
    %v4527 = vunpack.c.h.b16 %v3403
    %v4528 = vunpack.c.l.b16 %v3404
    %v4529 = vunpack.c.h.b16 %v3404
    %v4530 = vunpack.c.l.b16 %v3405
    %v4531 = vunpack.c.h.b16 %v3405
    %v4532 = vunpack.c.l.b16 %v3406
    %v4533 = vunpack.c.h.b16 %v3406
    %v4534 = vunpack.c.l.b16 %v3407
    %v4535 = vunpack.c.h.b16 %v3407
    %v4536 = vunpack.c.l.b16 %v3408
    %v4537 = vunpack.c.h.b16 %v3408
    %v4538 = vunpack.c.l.b16 %v3409
    %v4539 = vunpack.c.h.b16 %v3409
    %v4540 = vunpack.c.l.b16 %v3410
    %v4541 = vunpack.c.h.b16 %v3410
    %v4542 = vunpack.c.l.b16 %v3411
    %v4543 = vunpack.c.h.b16 %v3411
    %v4544 = vunpack.c.l.b16 %v3412
    %v4545 = vunpack.c.h.b16 %v3412
    %v4546 = vunpack.c.l.b16 %v3413
    %v4547 = vunpack.c.h.b16 %v3413
    %v4548 = vunpack.c.l.b16 %v3414
    %v4549 = vunpack.c.h.b16 %v3414
    %v4550 = vunpack.c.l.b16 %v3415
    %v4551 = vunpack.c.h.b16 %v3415
    %v4552 = vunpack.c.l.b16 %v3416
    %v4553 = vunpack.c.h.b16 %v3416
    %v4554 = vunpack.c.l.b16 %v3417
    %v4555 = vunpack.c.h.b16 %v3417
    %v4556 = vunpack.c.l.b16 %v3418
    %v4557 = vunpack.c.h.b16 %v3418
    %v4558 = vunpack.c.l.b16 %v3419
    %v4559 = vunpack.c.h.b16 %v3419
    %v4560 = vunpack.c.l.b16 %v3420
    %v4561 = vunpack.c.h.b16 %v3420
    %v4562 = vunpack.c.l.b16 %v3421
    %v4563 = vunpack.c.h.b16 %v3421
    %v4564 = vunpack.c.l.b16 %v3422
    %v4565 = vunpack.c.h.b16 %v3422
    %v4566 = vunpack.c.l.b16 %v3423
    %v4567 = vunpack.c.h.b16 %v3423
    %v4568 = vunpack.c.l.b16 %v3424
    %v4569 = vunpack.c.h.b16 %v3424
    %v4570 = vunpack.c.l.b16 %v3425
    %v4571 = vunpack.c.h.b16 %v3425
    %v4572 = vunpack.c.l.b16 %v3426
    %v4573 = vunpack.c.h.b16 %v3426
    %v4574 = vunpack.c.l.b16 %v3427
    %v4575 = vunpack.c.h.b16 %v3427
    %v4576 = vunpack.c.l.b16 %v3428
    %v4577 = vunpack.c.h.b16 %v3428
    %v4578 = vunpack.c.l.b16 %v3429
    %v4579 = vunpack.c.h.b16 %v3429
    %v4580 = vunpack.c.l.b16 %v3430
    %v4581 = vunpack.c.h.b16 %v3430
    %v4582 = vunpack.c.l.b16 %v3431
    %v4583 = vunpack.c.h.b16 %v3431
    %v4584 = vunpack.c.l.b16 %v3432
    %v4585 = vunpack.c.h.b16 %v3432
    %v4586 = vunpack.c.l.b16 %v3433
    %v4587 = vunpack.c.h.b16 %v3433
    %v4588 = vunpack.c.l.b16 %v3434
    %v4589 = vunpack.c.h.b16 %v3434
    %v4590 = vunpack.c.l.b16 %v3435
    %v4591 = vunpack.c.h.b16 %v3435
    %v4592 = vunpack.c.l.b16 %v3436
    %v4593 = vunpack.c.h.b16 %v3436
    %v4594 = vunpack.c.l.b16 %v3437
    %v4595 = vunpack.c.h.b16 %v3437
    %v4596 = vunpack.c.l.b16 %v3438
    %v4597 = vunpack.c.h.b16 %v3438
    %v4598 = vunpack.c.l.b16 %v3439
    %v4599 = vunpack.c.h.b16 %v3439
    %v4600 = vunpack.c.l.b16 %v3440
    %v4601 = vunpack.c.h.b16 %v3440
    %v4602 = vunpack.c.l.b16 %v3441
    %v4603 = vunpack.c.h.b16 %v3441
    %v4604 = vunpack.c.l.b16 %v3442
    %v4605 = vunpack.c.h.b16 %v3442
    %v4606 = vunpack.c.l.b16 %v3443
    %v4607 = vunpack.c.h.b16 %v3443
    %v4608 = vunpack.c.l.b16 %v3444
    %v4609 = vunpack.c.h.b16 %v3444
    %v4610 = vunpack.c.l.b16 %v3445
    %v4611 = vunpack.c.h.b16 %v3445
    %v4612 = vunpack.c.l.b16 %v3446
    %v4613 = vunpack.c.h.b16 %v3446
    %v4614 = vunpack.c.l.b16 %v3447
    %v4615 = vunpack.c.h.b16 %v3447
    %v4616 = vunpack.c.l.b16 %v3448
    %v4617 = vunpack.c.h.b16 %v3448
    %v4618 = vunpack.c.l.b16 %v3449
    %v4619 = vunpack.c.h.b16 %v3449
    %v4620 = vunpack.c.l.b16 %v3450
    %v4621 = vunpack.c.h.b16 %v3450
    %v4622 = vunpack.c.l.b16 %v3451
    %v4623 = vunpack.c.h.b16 %v3451
    %v4624 = vunpack.c.l.b16 %v3452
    %v4625 = vunpack.c.h.b16 %v3452
    %v4626 = vunpack.c.l.b16 %v3453
    %v4627 = vunpack.c.h.b16 %v3453
    %v4628 = vunpack.c.l.b16 %v3454
    %v4629 = vunpack.c.h.b16 %v3454
    %v4630 = vunpack.c.l.b16 %v3455
    %v4631 = vunpack.c.h.b16 %v3455
    %v4632 = vunpack.c.l.b16 %v3456
    %v4633 = vunpack.c.h.b16 %v3456
    %v4634 = vunpack.c.l.b16 %v3457
    %v4635 = vunpack.c.h.b16 %v3457
    %v4636 = vunpack.c.l.b16 %v3458
    %v4637 = vunpack.c.h.b16 %v3458
    %v4638 = vunpack.c.l.b16 %v3459
    %v4639 = vunpack.c.h.b16 %v3459
    %v4640 = vunpack.c.l.b16 %v3460
    %v4641 = vunpack.c.h.b16 %v3460
    %v4642 = vunpack.c.l.b16 %v3461
    %v4643 = vunpack.c.h.b16 %v3461
    %v4644 = vunpack.c.l.b16 %v3462
    %v4645 = vunpack.c.h.b16 %v3462
    %v4646 = vunpack.c.l.b16 %v3463
    %v4647 = vunpack.c.h.b16 %v3463
    %v4648 = vunpack.c.l.b16 %v3464
    %v4649 = vunpack.c.h.b16 %v3464
    %v4650 = vunpack.c.l.b16 %v3465
    %v4651 = vunpack.c.h.b16 %v3465
    %v4652 = vunpack.c.l.b16 %v3466
    %v4653 = vunpack.c.h.b16 %v3466
    %v4654 = vunpack.c.l.b16 %v3467
    %v4655 = vunpack.c.h.b16 %v3467
    %v4656 = vunpack.c.l.b16 %v3468
    %v4657 = vunpack.c.h.b16 %v3468
    %v4658 = vunpack.c.l.b16 %v3469
    %v4659 = vunpack.c.h.b16 %v3469
    %v4660 = vunpack.c.l.b16 %v3470
    %v4661 = vunpack.c.h.b16 %v3470
    %v4662 = vunpack.c.l.b16 %v3471
    %v4663 = vunpack.c.h.b16 %v3471
    %v4664 = vunpack.c.l.b16 %v3472
    %v4665 = vunpack.c.h.b16 %v3472
    %v4666 = vunpack.c.l.b16 %v3473
    %v4667 = vunpack.c.h.b16 %v3473
    %v4668 = vunpack.c.l.b16 %v3474
    %v4669 = vunpack.c.h.b16 %v3474
    %v4670 = vunpack.c.l.b16 %v3475
    %v4671 = vunpack.c.h.b16 %v3475
    %v4672 = vunpack.c.l.b16 %v3476
    %v4673 = vunpack.c.h.b16 %v3476
    %v4674 = vunpack.c.l.b16 %v3477
    %v4675 = vunpack.c.h.b16 %v3477
    %v4676 = vunpack.c.l.b16 %v3478
    %v4677 = vunpack.c.h.b16 %v3478
    %v4678 = vunpack.c.l.b16 %v3479
    %v4679 = vunpack.c.h.b16 %v3479
    %v4680 = vunpack.c.l.b16 %v3480
    %v4681 = vunpack.c.h.b16 %v3480
    %v4682 = vunpack.c.l.b16 %v3481
    %v4683 = vunpack.c.h.b16 %v3481
    %v4684 = vunpack.c.l.b16 %v3482
    %v4685 = vunpack.c.h.b16 %v3482
    %v4686 = vunpack.c.l.b16 %v3483
    %v4687 = vunpack.c.h.b16 %v3483
    %v4688 = vunpack.c.l.b16 %v3484
    %v4689 = vunpack.c.h.b16 %v3484
    %v4690 = vunpack.c.l.b16 %v3485
    %v4691 = vunpack.c.h.b16 %v3485
    %v4692 = vunpack.c.l.b16 %v3486
    %v4693 = vunpack.c.h.b16 %v3486
    %v4694 = vunpack.c.l.b16 %v3487
    %v4695 = vunpack.c.h.b16 %v3487
    %v4696 = vunpack.c.l.b16 %v3488
    %v4697 = vunpack.c.h.b16 %v3488
    %v4698 = vunpack.c.l.b16 %v3489
    %v4699 = vunpack.c.h.b16 %v3489
    %v4700 = vunpack.c.l.b16 %v3490
    %v4701 = vunpack.c.h.b16 %v3490
    %v4702 = vunpack.c.l.b16 %v3491
    %v4703 = vunpack.c.h.b16 %v3491
    %v4704 = vunpack.c.l.b16 %v3492
    %v4705 = vunpack.c.h.b16 %v3492
    %v4706 = vunpack.c.l.b16 %v3493
    %v4707 = vunpack.c.h.b16 %v3493
    %v4708 = vunpack.c.l.b16 %v3494
    %v4709 = vunpack.c.h.b16 %v3494
    %v4710 = vunpack.c.l.b16 %v3495
    %v4711 = vunpack.c.h.b16 %v3495
    %v4712 = vunpack.c.l.b16 %v3496
    %v4713 = vunpack.c.h.b16 %v3496
    %v4714 = vunpack.c.l.b16 %v3497
    %v4715 = vunpack.c.h.b16 %v3497
    %v4716 = vunpack.c.l.b16 %v3498
    %v4717 = vunpack.c.h.b16 %v3498
    %v4718 = vunpack.c.l.b16 %v3499
    %v4719 = vunpack.c.h.b16 %v3499
    %v4720 = vunpack.c.l.b16 %v3500
    %v4721 = vunpack.c.h.b16 %v3500
    %v4722 = vunpack.c.l.b16 %v3501
    %v4723 = vunpack.c.h.b16 %v3501
    %v4724 = vunpack.c.l.b16 %v3502
    %v4725 = vunpack.c.h.b16 %v3502
    %v4726 = vunpack.c.l.b16 %v3503
    %v4727 = vunpack.c.h.b16 %v3503
    %v4728 = vunpack.c.l.b16 %v3504
    %v4729 = vunpack.c.h.b16 %v3504
    %v4730 = vunpack.c.l.b16 %v3505
    %v4731 = vunpack.c.h.b16 %v3505
    %v4732 = vunpack.c.l.b16 %v3506
    %v4733 = vunpack.c.h.b16 %v3506
    %v4734 = vunpack.c.l.b16 %v3507
    %v4735 = vunpack.c.h.b16 %v3507
    %v4736 = vunpack.c.l.b16 %v3508
    %v4737 = vunpack.c.h.b16 %v3508
    %v4738 = vunpack.c.l.b16 %v3509
    %v4739 = vunpack.c.h.b16 %v3509
    %v4740 = vunpack.c.l.b16 %v3510
    %v4741 = vunpack.c.h.b16 %v3510
    %v4742 = vunpack.c.l.b16 %v3511
    %v4743 = vunpack.c.h.b16 %v3511
    %v4744 = vunpack.c.l.b16 %v3512
    %v4745 = vunpack.c.h.b16 %v3512
    %v4746 = vunpack.c.l.b16 %v3513
    %v4747 = vunpack.c.h.b16 %v3513
    %v4748 = vunpack.c.l.b16 %v3514
    %v4749 = vunpack.c.h.b16 %v3514
    %v4750 = vunpack.c.l.b16 %v3515
    %v4751 = vunpack.c.h.b16 %v3515
    %v4752 = vunpack.c.l.b16 %v3516
    %v4753 = vunpack.c.h.b16 %v3516
    %v4754 = vunpack.c.l.b16 %v3517
    %v4755 = vunpack.c.h.b16 %v3517
    %v4756 = vunpack.c.l.b16 %v3518
    %v4757 = vunpack.c.h.b16 %v3518
    %v4758 = vunpack.c.l.b16 %v3519
    %v4759 = vunpack.c.h.b16 %v3519
    %v4760 = vunpack.c.l.b16 %v3520
    %v4761 = vunpack.c.h.b16 %v3520
    %v4762 = vunpack.c.l.b16 %v3521
    %v4763 = vunpack.c.h.b16 %v3521
    %v4764 = vunpack.c.l.b16 %v3522
    %v4765 = vunpack.c.h.b16 %v3522
    %v4766 = vunpack.c.l.b16 %v3523
    %v4767 = vunpack.c.h.b16 %v3523
    %v4768 = vunpack.c.l.b16 %v3524
    %v4769 = vunpack.c.h.b16 %v3524
    %v4770 = vunpack.c.l.b16 %v3525
    %v4771 = vunpack.c.h.b16 %v3525
    %v4772 = vunpack.c.l.b16 %v3526
    %v4773 = vunpack.c.h.b16 %v3526
    %v4774 = vunpack.c.l.b16 %v3527
    %v4775 = vunpack.c.h.b16 %v3527
    %v4776 = vunpack.c.l.b16 %v3528
    %v4777 = vunpack.c.h.b16 %v3528
    %v4778 = vunpack.c.l.b16 %v3529
    %v4779 = vunpack.c.h.b16 %v3529
    %v4780 = vunpack.c.l.b16 %v3530
    %v4781 = vunpack.c.h.b16 %v3530
    %v4782 = vunpack.c.l.b16 %v3531
    %v4783 = vunpack.c.h.b16 %v3531
    %v4784 = vunpack.c.l.b16 %v3532
    %v4785 = vunpack.c.h.b16 %v3532
    %v4786 = vunpack.c.l.b16 %v3533
    %v4787 = vunpack.c.h.b16 %v3533
    %v4788 = vunpack.c.l.b16 %v3534
    %v4789 = vunpack.c.h.b16 %v3534
    %v4790 = vunpack.c.l.b16 %v3535
    %v4791 = vunpack.c.h.b16 %v3535
    %v4792 = vunpack.c.l.b16 %v3536
    %v4793 = vunpack.c.h.b16 %v3536
    %v4794 = vunpack.c.l.b16 %v3537
    %v4795 = vunpack.c.h.b16 %v3537
    %v4796 = vunpack.c.l.b16 %v3538
    %v4797 = vunpack.c.h.b16 %v3538
    %v4798 = vunpack.c.l.b16 %v3539
    %v4799 = vunpack.c.h.b16 %v3539
    %v4800 = vunpack.c.l.b16 %v3540
    %v4801 = vunpack.c.h.b16 %v3540
    %v4802 = vunpack.c.l.b16 %v3541
    %v4803 = vunpack.c.h.b16 %v3541
    %v4804 = vunpack.c.l.b16 %v3542
    %v4805 = vunpack.c.h.b16 %v3542
    %v4806 = vunpack.c.l.b16 %v3543
    %v4807 = vunpack.c.h.b16 %v3543
    %v4808 = vunpack.c.l.b16 %v3544
    %v4809 = vunpack.c.h.b16 %v3544
    %v4810 = vunpack.c.l.b16 %v3545
    %v4811 = vunpack.c.h.b16 %v3545
    %v4812 = vunpack.c.l.b16 %v3546
    %v4813 = vunpack.c.h.b16 %v3546
    %v4814 = vunpack.c.l.b16 %v3547
    %v4815 = vunpack.c.h.b16 %v3547
    %v4816 = vunpack.c.l.b16 %v3548
    %v4817 = vunpack.c.h.b16 %v3548
    %v4818 = vunpack.c.l.b16 %v3549
    %v4819 = vunpack.c.h.b16 %v3549
    %v4820 = vunpack.c.l.b16 %v3550
    %v4821 = vunpack.c.h.b16 %v3550
    %v4822 = vunpack.c.l.b16 %v3551
    %v4823 = vunpack.c.h.b16 %v3551
    %v4824 = vunpack.c.l.b16 %v3552
    %v4825 = vunpack.c.h.b16 %v3552
    %v4826 = vunpack.c.l.b16 %v3553
    %v4827 = vunpack.c.h.b16 %v3553
    %v4828 = vunpack.c.l.b16 %v3554
    %v4829 = vunpack.c.h.b16 %v3554
    %v4830 = vunpack.c.l.b16 %v3555
    %v4831 = vunpack.c.h.b16 %v3555
    %v4832 = vunpack.c.l.b16 %v3556
    %v4833 = vunpack.c.h.b16 %v3556
    %v4834 = vunpack.c.l.b16 %v3557
    %v4835 = vunpack.c.h.b16 %v3557
    %v4836 = vunpack.c.l.b16 %v3558
    %v4837 = vunpack.c.h.b16 %v3558
    %v4838 = vunpack.c.l.b16 %v3559
    %v4839 = vunpack.c.h.b16 %v3559
    %v4840 = vunpack.c.l.b16 %v3560
    %v4841 = vunpack.c.h.b16 %v3560
    %v4842 = vunpack.c.l.b16 %v3561
    %v4843 = vunpack.c.h.b16 %v3561
    %v4844 = vunpack.c.l.b16 %v3562
    %v4845 = vunpack.c.h.b16 %v3562
    %v4846 = vunpack.c.l.b16 %v3563
    %v4847 = vunpack.c.h.b16 %v3563
    %v4848 = vunpack.c.l.b16 %v3564
    %v4849 = vunpack.c.h.b16 %v3564
    %v4850 = vunpack.c.l.b16 %v3565
    %v4851 = vunpack.c.h.b16 %v3565
    %v4852 = vunpack.c.l.b16 %v3566
    %v4853 = vunpack.c.h.b16 %v3566
    %v4854 = vunpack.c.l.b16 %v3567
    %v4855 = vunpack.c.h.b16 %v3567
    %v4856 = vunpack.c.l.b16 %v3568
    %v4857 = vunpack.c.h.b16 %v3568
    %v4858 = vunpack.c.l.b16 %v3569
    %v4859 = vunpack.c.h.b16 %v3569
    %v4860 = vunpack.c.l.b16 %v3570
    %v4861 = vunpack.c.h.b16 %v3570
    %v4862 = vunpack.c.l.b16 %v3571
    %v4863 = vunpack.c.h.b16 %v3571
    %v4864 = vunpack.c.l.b16 %v3572
    %v4865 = vunpack.c.h.b16 %v3572
    %v4866 = vunpack.c.l.b16 %v3573
    %v4867 = vunpack.c.h.b16 %v3573
    %v4868 = vunpack.c.l.b16 %v3574
    %v4869 = vunpack.c.h.b16 %v3574
    %v4870 = vunpack.c.l.b16 %v3575
    %v4871 = vunpack.c.h.b16 %v3575
    %v4872 = vunpack.c.l.b16 %v3576
    %v4873 = vunpack.c.h.b16 %v3576
    %v4874 = vunpack.c.l.b16 %v3577
    %v4875 = vunpack.c.h.b16 %v3577
    %v4876 = vunpack.c.l.b16 %v3578
    %v4877 = vunpack.c.h.b16 %v3578
    %v4878 = vunpack.c.l.b16 %v3579
    %v4879 = vunpack.c.h.b16 %v3579
    %v4880 = vunpack.c.l.b16 %v3580
    %v4881 = vunpack.c.h.b16 %v3580
    %v4882 = vunpack.c.l.b16 %v3581
    %v4883 = vunpack.c.h.b16 %v3581
    %v4884 = vunpack.c.l.b16 %v3582
    %v4885 = vunpack.c.h.b16 %v3582
    %v4886 = vunpack.c.l.b16 %v3583
    %v4887 = vunpack.c.h.b16 %v3583
    %v4888 = vunpack.c.l.b16 %v3584
    %v4889 = vunpack.c.h.b16 %v3584
    %v4890 = vunpack.c.l.b16 %v3585
    %v4891 = vunpack.c.h.b16 %v3585
    %v4892 = vunpack.c.l.b16 %v3586
    %v4893 = vunpack.c.h.b16 %v3586
    %v4894 = vunpack.c.l.b16 %v3587
    %v4895 = vunpack.c.h.b16 %v3587
    %v4896 = vunpack.c.l.b16 %v3588
    %v4897 = vunpack.c.h.b16 %v3588
    %v4898 = vunpack.c.l.b16 %v3589
    %v4899 = vunpack.c.h.b16 %v3589
    %v4900 = vunpack.c.l.b16 %v3590
    %v4901 = vunpack.c.h.b16 %v3590
    %v4902 = vunpack.c.l.b16 %v3591
    %v4903 = vunpack.c.h.b16 %v3591
    %v4904 = vunpack.c.l.b16 %v3592
    %v4905 = vunpack.c.h.b16 %v3592
    %v4906 = vunpack.c.l.b16 %v3593
    %v4907 = vunpack.c.h.b16 %v3593
    %v4908 = vunpack.c.l.b16 %v3594
    %v4909 = vunpack.c.h.b16 %v3594
    %v4910 = vunpack.c.l.b16 %v3595
    %v4911 = vunpack.c.h.b16 %v3595
    %v4912 = vunpack.c.l.b16 %v3596
    %v4913 = vunpack.c.h.b16 %v3596
    %v4914 = vunpack.c.l.b16 %v3597
    %v4915 = vunpack.c.h.b16 %v3597
    %v4916 = vunpack.c.l.b16 %v3598
    %v4917 = vunpack.c.h.b16 %v3598
    %v4918 = vunpack.c.l.b16 %v3599
    %v4919 = vunpack.c.h.b16 %v3599
    %v4920 = vunpack.c.l.b16 %v3600
    %v4921 = vunpack.c.h.b16 %v3600
    %v4922 = vunpack.c.l.b16 %v3601
    %v4923 = vunpack.c.h.b16 %v3601
    %v4924 = vunpack.c.l.b16 %v3602
    %v4925 = vunpack.c.h.b16 %v3602
    %v4926 = vunpack.c.l.b16 %v3603
    %v4927 = vunpack.c.h.b16 %v3603
    %v4928 = vunpack.c.l.b16 %v3604
    %v4929 = vunpack.c.h.b16 %v3604
    %v4930 = vunpack.c.l.b16 %v3605
    %v4931 = vunpack.c.h.b16 %v3605
    %v4932 = vunpack.c.l.b16 %v3606
    %v4933 = vunpack.c.h.b16 %v3606
    %v4934 = vunpack.c.l.b16 %v3607
    %v4935 = vunpack.c.h.b16 %v3607
    %v4936 = vunpack.c.l.b16 %v3608
    %v4937 = vunpack.c.h.b16 %v3608
    %v4938 = vunpack.c.l.b16 %v3609
    %v4939 = vunpack.c.h.b16 %v3609
    %v4940 = vunpack.c.l.b16 %v3610
    %v4941 = vunpack.c.h.b16 %v3610
    %v4942 = vunpack.c.l.b16 %v3611
    %v4943 = vunpack.c.h.b16 %v3611
    %v4944 = vunpack.c.l.b16 %v3612
    %v4945 = vunpack.c.h.b16 %v3612
    %v4946 = vunpack.c.l.b16 %v3613
    %v4947 = vunpack.c.h.b16 %v3613
    %v4948 = vunpack.c.l.b16 %v3614
    %v4949 = vunpack.c.h.b16 %v3614
    %v4950 = vunpack.c.l.b16 %v3615
    %v4951 = vunpack.c.h.b16 %v3615
    %v4952 = vunpack.c.l.b16 %v3616
    %v4953 = vunpack.c.h.b16 %v3616
    %v4954 = vunpack.c.l.b16 %v3617
    %v4955 = vunpack.c.h.b16 %v3617
    %v4956 = vunpack.c.l.b16 %v3618
    %v4957 = vunpack.c.h.b16 %v3618
    %v4958 = vunpack.c.l.b16 %v3619
    %v4959 = vunpack.c.h.b16 %v3619
    %v4960 = vunpack.c.l.b16 %v3620
    %v4961 = vunpack.c.h.b16 %v3620
    %v4962 = vunpack.c.l.b16 %v3621
    %v4963 = vunpack.c.h.b16 %v3621
    %v4964 = vunpack.c.l.b16 %v3622
    %v4965 = vunpack.c.h.b16 %v3622
    %v4966 = vunpack.c.l.b16 %v3623
    %v4967 = vunpack.c.h.b16 %v3623
    %v4968 = vunpack.c.l.b16 %v3624
    %v4969 = vunpack.c.h.b16 %v3624
    %v4970 = vunpack.c.l.b16 %v3625
    %v4971 = vunpack.c.h.b16 %v3625
    %v4972 = vunpack.c.l.b16 %v3626
    %v4973 = vunpack.c.h.b16 %v3626
    %v4974 = vunpack.c.l.b16 %v3627
    %v4975 = vunpack.c.h.b16 %v3627
    %v4976 = vunpack.c.l.b16 %v3628
    %v4977 = vunpack.c.h.b16 %v3628
    %v4978 = vunpack.c.l.b16 %v3629
    %v4979 = vunpack.c.h.b16 %v3629
    %v4980 = vunpack.c.l.b16 %v3630
    %v4981 = vunpack.c.h.b16 %v3630
    %v4982 = vunpack.c.l.b16 %v3631
    %v4983 = vunpack.c.h.b16 %v3631
    %v4984 = vunpack.c.l.b16 %v3632
    %v4985 = vunpack.c.h.b16 %v3632
    %v4986 = vunpack.c.l.b16 %v3633
    %v4987 = vunpack.c.h.b16 %v3633
    %v4988 = vunpack.c.l.b16 %v3634
    %v4989 = vunpack.c.h.b16 %v3634
    %v4990 = vunpack.c.l.b16 %v3635
    %v4991 = vunpack.c.h.b16 %v3635
    %v4992 = vunpack.c.l.b16 %v3636
    %v4993 = vunpack.c.h.b16 %v3636
    %v4994 = vunpack.c.l.b16 %v3637
    %v4995 = vunpack.c.h.b16 %v3637
    %v4996 = vunpack.c.l.b16 %v3638
    %v4997 = vunpack.c.h.b16 %v3638
    %v4998 = vunpack.c.l.b16 %v3639
    %v4999 = vunpack.c.h.b16 %v3639
    %v5000 = vunpack.c.l.b16 %v3640
    %v5001 = vunpack.c.h.b16 %v3640
    %v5002 = vunpack.c.l.b16 %v3641
    %v5003 = vunpack.c.h.b16 %v3641
    %v5004 = vunpack.c.l.b16 %v3642
    %v5005 = vunpack.c.h.b16 %v3642
    %v5006 = vunpack.c.l.b16 %v3643
    %v5007 = vunpack.c.h.b16 %v3643
    %v5008 = vunpack.c.l.b16 %v3644
    %v5009 = vunpack.c.h.b16 %v3644
    %v5010 = vunpack.c.l.b16 %v3645
    %v5011 = vunpack.c.h.b16 %v3645
    %v5012 = vunpack.c.l.b16 %v3646
    %v5013 = vunpack.c.h.b16 %v3646
    %v5014 = vunpack.c.l.b16 %v3647
    %v5015 = vunpack.c.h.b16 %v3647
    %v5016 = vunpack.c.l.b16 %v3648
    %v5017 = vunpack.c.h.b16 %v3648
    %v5018 = vunpack.c.l.b16 %v3649
    %v5019 = vunpack.c.h.b16 %v3649
    %v5020 = vunpack.c.l.b16 %v3650
    %v5021 = vunpack.c.h.b16 %v3650
    %v5022 = vunpack.c.l.b16 %v3651
    %v5023 = vunpack.c.h.b16 %v3651
    %v5024 = vunpack.c.l.b16 %v3652
    %v5025 = vunpack.c.h.b16 %v3652
    %v5026 = vunpack.c.l.b16 %v3653
    %v5027 = vunpack.c.h.b16 %v3653
    %v5028 = vunpack.c.l.b16 %v3654
    %v5029 = vunpack.c.h.b16 %v3654
    %v5030 = vunpack.c.l.b16 %v3655
    %v5031 = vunpack.c.h.b16 %v3655
    %v5032 = vunpack.c.l.b16 %v3656
    %v5033 = vunpack.c.h.b16 %v3656
    %v5034 = vunpack.c.l.b16 %v3657
    %v5035 = vunpack.c.h.b16 %v3657
    %v5036 = vunpack.c.l.b16 %v3658
    %v5037 = vunpack.c.h.b16 %v3658
    %v5038 = vunpack.c.l.b16 %v3659
    %v5039 = vunpack.c.h.b16 %v3659
    %v5040 = vunpack.c.l.b16 %v3660
    %v5041 = vunpack.c.h.b16 %v3660
    %v5042 = vunpack.c.l.b16 %v3661
    %v5043 = vunpack.c.h.b16 %v3661
    %v5044 = vunpack.c.l.b16 %v3662
    %v5045 = vunpack.c.h.b16 %v3662
    %v5046 = vunpack.c.l.b16 %v3663
    %v5047 = vunpack.c.h.b16 %v3663
    %v5048 = vunpack.c.l.b16 %v3664
    %v5049 = vunpack.c.h.b16 %v3664
    %v5050 = vunpack.c.l.b16 %v3665
    %v5051 = vunpack.c.h.b16 %v3665
    %v5052 = vunpack.c.l.b16 %v3666
    %v5053 = vunpack.c.h.b16 %v3666
    %v5054 = vunpack.c.l.b16 %v3667
    %v5055 = vunpack.c.h.b16 %v3667
    %v5056 = vunpack.c.l.b16 %v3668
    %v5057 = vunpack.c.h.b16 %v3668
    %v5058 = vunpack.c.l.b16 %v3669
    %v5059 = vunpack.c.h.b16 %v3669
    %v5060 = vunpack.c.l.b16 %v3670
    %v5061 = vunpack.c.h.b16 %v3670
    %v5062 = vunpack.c.l.b16 %v3671
    %v5063 = vunpack.c.h.b16 %v3671
    %v5064 = vunpack.c.l.b16 %v3672
    %v5065 = vunpack.c.h.b16 %v3672
    %v5066 = vunpack.c.l.b16 %v3673
    %v5067 = vunpack.c.h.b16 %v3673
    %v5068 = vunpack.c.l.b16 %v3674
    %v5069 = vunpack.c.h.b16 %v3674
    %v5070 = vunpack.c.l.b16 %v3675
    %v5071 = vunpack.c.h.b16 %v3675
    %v5072 = vunpack.c.l.b16 %v3676
    %v5073 = vunpack.c.h.b16 %v3676
    %v5074 = vunpack.c.l.b16 %v3677
    %v5075 = vunpack.c.h.b16 %v3677
    %v5076 = vunpack.c.l.b16 %v3678
    %v5077 = vunpack.c.h.b16 %v3678
    %v5078 = vunpack.c.l.b16 %v3679
    %v5079 = vunpack.c.h.b16 %v3679
    %v5080 = vunpack.c.l.b16 %v3680
    %v5081 = vunpack.c.h.b16 %v3680
    %v5082 = vunpack.c.l.b16 %v3681
    %v5083 = vunpack.c.h.b16 %v3681
    %v5084 = vunpack.c.l.b16 %v3682
    %v5085 = vunpack.c.h.b16 %v3682
    %v5086 = vunpack.c.l.b16 %v3683
    %v5087 = vunpack.c.h.b16 %v3683
    %v5088 = vunpack.c.l.b16 %v3684
    %v5089 = vunpack.c.h.b16 %v3684
    %v5090 = vunpack.c.l.b16 %v3685
    %v5091 = vunpack.c.h.b16 %v3685
    %v5092 = vunpack.c.l.b16 %v3686
    %v5093 = vunpack.c.h.b16 %v3686
    %v5094 = vunpack.c.l.b16 %v3687
    %v5095 = vunpack.c.h.b16 %v3687
    %v5096 = vunpack.c.l.b16 %v3688
    %v5097 = vunpack.c.h.b16 %v3688
    %v5098 = vunpack.c.l.b16 %v3689
    %v5099 = vunpack.c.h.b16 %v3689
    %v5100 = vunpack.c.l.b16 %v3690
    %v5101 = vunpack.c.h.b16 %v3690
    %v5102 = vunpack.c.l.b16 %v3691
    %v5103 = vunpack.c.h.b16 %v3691
    %v5104 = vunpack.c.l.b16 %v3692
    %v5105 = vunpack.c.h.b16 %v3692
    %v5106 = vunpack.c.l.b16 %v3693
    %v5107 = vunpack.c.h.b16 %v3693
    %v5108 = vunpack.c.l.b16 %v3694
    %v5109 = vunpack.c.h.b16 %v3694
    %v5110 = vunpack.c.l.b16 %v3695
    %v5111 = vunpack.c.h.b16 %v3695
    %v5112 = vunpack.c.l.b16 %v3696
    %v5113 = vunpack.c.h.b16 %v3696
    %v5114 = vunpack.c.l.b16 %v3697
    %v5115 = vunpack.c.h.b16 %v3697
    %v5116 = vunpack.c.l.b16 %v3698
    %v5117 = vunpack.c.h.b16 %v3698
    %v5118 = vunpack.c.l.b16 %v3699
    %v5119 = vunpack.c.h.b16 %v3699
    %v5120 = vunpack.c.l.b16 %v3700
    %v5121 = vunpack.c.h.b16 %v3700
    %v5122 = vunpack.c.l.b16 %v3701
    %v5123 = vunpack.c.h.b16 %v3701
    %v5124 = vunpack.c.l.b16 %v3702
    %v5125 = vunpack.c.h.b16 %v3702
    %v5126 = vunpack.c.l.b16 %v3703
    %v5127 = vunpack.c.h.b16 %v3703
    %v5128 = vunpack.c.l.b16 %v3704
    %v5129 = vunpack.c.h.b16 %v3704
    %v5130 = vunpack.c.l.b16 %v3705
    %v5131 = vunpack.c.h.b16 %v3705
    %v5132 = vunpack.c.l.b16 %v3706
    %v5133 = vunpack.c.h.b16 %v3706
    %v5134 = vunpack.c.l.b16 %v3707
    %v5135 = vunpack.c.h.b16 %v3707
    %v5136 = vunpack.c.l.b16 %v3708
    %v5137 = vunpack.c.h.b16 %v3708
    %v5138 = vunpack.c.l.b16 %v3709
    %v5139 = vunpack.c.h.b16 %v3709
    %v5140 = vunpack.c.l.b16 %v3710
    %v5141 = vunpack.c.h.b16 %v3710
    %v5142 = vunpack.c.l.b16 %v3711
    %v5143 = vunpack.c.h.b16 %v3711
    %v5144 = vunpack.c.l.b16 %v3712
    %v5145 = vunpack.c.h.b16 %v3712
    %v5146 = vunpack.c.l.b16 %v3713
    %v5147 = vunpack.c.h.b16 %v3713
    %v5148 = vunpack.c.l.b16 %v3714
    %v5149 = vunpack.c.h.b16 %v3714
    %v5150 = vunpack.c.l.b16 %v3715
    %v5151 = vunpack.c.h.b16 %v3715
    %v5152 = vunpack.c.l.b16 %v3716
    %v5153 = vunpack.c.h.b16 %v3716
    %v5154 = vunpack.c.l.b16 %v3717
    %v5155 = vunpack.c.h.b16 %v3717
    %v5156 = vunpack.c.l.b16 %v3718
    %v5157 = vunpack.c.h.b16 %v3718
    %v5158 = vunpack.c.l.b16 %v3719
    %v5159 = vunpack.c.h.b16 %v3719
    %v5160 = vunpack.c.l.b16 %v3720
    %v5161 = vunpack.c.h.b16 %v3720
    %v5162 = vunpack.c.l.b16 %v3721
    %v5163 = vunpack.c.h.b16 %v3721
    %v5164 = vunpack.c.l.b16 %v3722
    %v5165 = vunpack.c.h.b16 %v3722
    %v5166 = vunpack.c.l.b16 %v3723
    %v5167 = vunpack.c.h.b16 %v3723
    %v5168 = vunpack.c.l.b16 %v3724
    %v5169 = vunpack.c.h.b16 %v3724
    %v5170 = vunpack.c.l.b16 %v3725
    %v5171 = vunpack.c.h.b16 %v3725
    %v5172 = vunpack.c.l.b16 %v3726
    %v5173 = vunpack.c.h.b16 %v3726
    %v5174 = vunpack.c.l.b16 %v3727
    %v5175 = vunpack.c.h.b16 %v3727
    %v5176 = vunpack.c.l.b16 %v3728
    %v5177 = vunpack.c.h.b16 %v3728
    %v5178 = vunpack.c.l.b16 %v3729
    %v5179 = vunpack.c.h.b16 %v3729
    %v5180 = vunpack.c.l.b16 %v3730
    %v5181 = vunpack.c.h.b16 %v3730
    %v5182 = vunpack.c.l.b16 %v3731
    %v5183 = vunpack.c.h.b16 %v3731
    %v5184 = vunpack.c.l.b16 %v3732
    %v5185 = vunpack.c.h.b16 %v3732
    %v5186 = vunpack.c.l.b16 %v3733
    %v5187 = vunpack.c.h.b16 %v3733
    %v5188 = vunpack.c.l.b16 %v3734
    %v5189 = vunpack.c.h.b16 %v3734
    %v5190 = vunpack.c.l.b16 %v3735
    %v5191 = vunpack.c.h.b16 %v3735
    %v5192 = vunpack.c.l.b16 %v3736
    %v5193 = vunpack.c.h.b16 %v3736
    %v5194 = vunpack.c.l.b16 %v3737
    %v5195 = vunpack.c.h.b16 %v3737
    %v5196 = vunpack.c.l.b16 %v3738
    %v5197 = vunpack.c.h.b16 %v3738
    %v5198 = vunpack.c.l.b16 %v3739
    %v5199 = vunpack.c.h.b16 %v3739
    %v5200 = vunpack.c.l.b16 %v3740
    %v5201 = vunpack.c.h.b16 %v3740
    %v5202 = vunpack.c.l.b16 %v3741
    %v5203 = vunpack.c.h.b16 %v3741
    %v5204 = vunpack.c.l.b16 %v3742
    %v5205 = vunpack.c.h.b16 %v3742
    %v5206 = vunpack.c.l.b16 %v3743
    %v5207 = vunpack.c.h.b16 %v3743
    %v5208 = vunpack.c.l.b16 %v3744
    %v5209 = vunpack.c.h.b16 %v3744
    %v5210 = vunpack.c.l.b16 %v3745
    %v5211 = vunpack.c.h.b16 %v3745
    %v5212 = vunpack.c.l.b16 %v3746
    %v5213 = vunpack.c.h.b16 %v3746
    %v5214 = vunpack.c.l.b16 %v3747
    %v5215 = vunpack.c.h.b16 %v3747
    %v5216 = vunpack.c.l.b16 %v3748
    %v5217 = vunpack.c.h.b16 %v3748
    %v5218 = vunpack.c.l.b16 %v3749
    %v5219 = vunpack.c.h.b16 %v3749
    %v5220 = vunpack.c.l.b16 %v3750
    %v5221 = vunpack.c.h.b16 %v3750
    %v5222 = vunpack.c.l.b16 %v3751
    %v5223 = vunpack.c.h.b16 %v3751
    %v5224 = vunpack.c.l.b16 %v3752
    %v5225 = vunpack.c.h.b16 %v3752
    %v5226 = vunpack.c.l.b16 %v3753
    %v5227 = vunpack.c.h.b16 %v3753
    %v5228 = vunpack.c.l.b16 %v3754
    %v5229 = vunpack.c.h.b16 %v3754
    %v5230 = vunpack.c.l.b16 %v3755
    %v5231 = vunpack.c.h.b16 %v3755
    %v5232 = vunpack.c.l.b16 %v3756
    %v5233 = vunpack.c.h.b16 %v3756
    %v5234 = vunpack.c.l.b16 %v3757
    %v5235 = vunpack.c.h.b16 %v3757
    %v5236 = vunpack.c.l.b16 %v3758
    %v5237 = vunpack.c.h.b16 %v3758
    %v5238 = vunpack.c.l.b16 %v3759
    %v5239 = vunpack.c.h.b16 %v3759
    %v5240 = vunpack.c.l.b16 %v3760
    %v5241 = vunpack.c.h.b16 %v3760
    %v5242 = vunpack.c.l.b16 %v3761
    %v5243 = vunpack.c.h.b16 %v3761
    %v5244 = vunpack.c.l.b16 %v3762
    %v5245 = vunpack.c.h.b16 %v3762
    %v5246 = vunpack.c.l.b16 %v3763
    %v5247 = vunpack.c.h.b16 %v3763
    %v5248 = vunpack.c.l.b16 %v3764
    %v5249 = vunpack.c.h.b16 %v3764
    %v5250 = vunpack.c.l.b16 %v3765
    %v5251 = vunpack.c.h.b16 %v3765
    %v5252 = vunpack.c.l.b16 %v3766
    %v5253 = vunpack.c.h.b16 %v3766
    %v5254 = vunpack.c.l.b16 %v3767
    %v5255 = vunpack.c.h.b16 %v3767
    %v5256 = vunpack.c.l.b16 %v3768
    %v5257 = vunpack.c.h.b16 %v3768
    %v5258 = vunpack.c.l.b16 %v3769
    %v5259 = vunpack.c.h.b16 %v3769
    %v5260 = vunpack.c.l.b16 %v3770
    %v5261 = vunpack.c.h.b16 %v3770
    %v5262 = vunpack.c.l.b16 %v3771
    %v5263 = vunpack.c.h.b16 %v3771
    %v5264 = vunpack.c.l.b16 %v3772
    %v5265 = vunpack.c.h.b16 %v3772
    %v5266 = vunpack.c.l.b16 %v3773
    %v5267 = vunpack.c.h.b16 %v3773
    %v5268 = vunpack.c.l.b16 %v3774
    %v5269 = vunpack.c.h.b16 %v3774
    %v5270 = vunpack.c.l.b16 %v3775
    %v5271 = vunpack.c.h.b16 %v3775
    %v5272 = vunpack.c.l.b16 %v3776
    %v5273 = vunpack.c.h.b16 %v3776
    %v5274 = vunpack.c.l.b16 %v3777
    %v5275 = vunpack.c.h.b16 %v3777
    %v5276 = vunpack.c.l.b16 %v3778
    %v5277 = vunpack.c.h.b16 %v3778
    %v5278 = vunpack.c.l.b16 %v3779
    %v5279 = vunpack.c.h.b16 %v3779
    %v5280 = vunpack.c.l.b16 %v3780
    %v5281 = vunpack.c.h.b16 %v3780
    %v5282 = vunpack.c.l.b16 %v3781
    %v5283 = vunpack.c.h.b16 %v3781
    %v5284 = vunpack.c.l.b16 %v3782
    %v5285 = vunpack.c.h.b16 %v3782
    %v5286 = vunpack.c.l.b16 %v3783
    %v5287 = vunpack.c.h.b16 %v3783
    %v5288 = vunpack.c.l.b16 %v3784
    %v5289 = vunpack.c.h.b16 %v3784
    %v5290 = vunpack.c.l.b16 %v3785
    %v5291 = vunpack.c.h.b16 %v3785
    %v5292 = vunpack.c.l.b16 %v3786
    %v5293 = vunpack.c.h.b16 %v3786
    %v5294 = vunpack.c.l.b16 %v3787
    %v5295 = vunpack.c.h.b16 %v3787
    %v5296 = vunpack.c.l.b16 %v3788
    %v5297 = vunpack.c.h.b16 %v3788
    %v5298 = vunpack.c.l.b16 %v3789
    %v5299 = vunpack.c.h.b16 %v3789
    %v5300 = vunpack.c.l.b16 %v3790
    %v5301 = vunpack.c.h.b16 %v3790
    %v5302 = vunpack.c.l.b16 %v3791
    %v5303 = vunpack.c.h.b16 %v3791
    %v5304 = vunpack.c.l.b16 %v3792
    %v5305 = vunpack.c.h.b16 %v3792
    %v5306 = vunpack.c.l.b16 %v3793
    %v5307 = vunpack.c.h.b16 %v3793
    %v5308 = vunpack.c.l.b16 %v3794
    %v5309 = vunpack.c.h.b16 %v3794
    %v5310 = vunpack.c.l.b16 %v3795
    %v5311 = vunpack.c.h.b16 %v3795
    %v5312 = vunpack.c.l.b16 %v3796
    %v5313 = vunpack.c.h.b16 %v3796
    %v5314 = vunpack.c.l.b16 %v3797
    %v5315 = vunpack.c.h.b16 %v3797
    %v5316 = vunpack.c.l.b16 %v3798
    %v5317 = vunpack.c.h.b16 %v3798
    %v5318 = vunpack.c.l.b16 %v3799
    %v5319 = vunpack.c.h.b16 %v3799
    %v5320 = vunpack.c.l.b16 %v3800
    %v5321 = vunpack.c.h.b16 %v3800
    %v5322 = vunpack.c.l.b16 %v3801
    %v5323 = vunpack.c.h.b16 %v3801
    %v5324 = vunpack.c.l.b16 %v3802
    %v5325 = vunpack.c.h.b16 %v3802
    %v5326 = vunpack.c.l.b16 %v3803
    %v5327 = vunpack.c.h.b16 %v3803
    %v5328 = vunpack.c.l.b16 %v3804
    %v5329 = vunpack.c.h.b16 %v3804
    %v5330 = vunpack.c.l.b16 %v3805
    %v5331 = vunpack.c.h.b16 %v3805
    %v5332 = vunpack.c.l.b16 %v3806
    %v5333 = vunpack.c.h.b16 %v3806
    %v5334 = vunpack.c.l.b16 %v3807
    %v5335 = vunpack.c.h.b16 %v3807
    %v5336 = vunpack.c.l.b16 %v3808
    %v5337 = vunpack.c.h.b16 %v3808
    %v5338 = vunpack.c.l.b16 %v3809
    %v5339 = vunpack.c.h.b16 %v3809
    %v5340 = vunpack.c.l.b16 %v3810
    %v5341 = vunpack.c.h.b16 %v3810
    %v5342 = vunpack.c.l.b16 %v3811
    %v5343 = vunpack.c.h.b16 %v3811
    %v5344 = vunpack.c.l.b16 %v3812
    %v5345 = vunpack.c.h.b16 %v3812
    %v5346 = vunpack.c.l.b16 %v3813
    %v5347 = vunpack.c.h.b16 %v3813
    %v5348 = vunpack.c.l.b16 %v3814
    %v5349 = vunpack.c.h.b16 %v3814
    %v5350 = vunpack.c.l.b16 %v3815
    %v5351 = vunpack.c.h.b16 %v3815
    %v5352 = vpack.c.b16 %v4336, %v4328
    %v5353 = vpack.c.b16 %v4337, %v4329
    %v5354 = vpack.c.b16 %v4338, %v4330
    %v5355 = vpack.c.b16 %v4339, %v4331
    %v5356 = vpack.c.b16 %v4340, %v4332
    %v5357 = vpack.c.b16 %v4341, %v4333
    %v5358 = vpack.c.b16 %v4342, %v4334
    %v5359 = vpack.c.b16 %v4343, %v4335
    %v5360 = vpack.c.b16 %v4352, %v4344
    %v5361 = vpack.c.b16 %v4353, %v4345
    %v5362 = vpack.c.b16 %v4354, %v4346
    %v5363 = vpack.c.b16 %v4355, %v4347
    %v5364 = vpack.c.b16 %v4356, %v4348
    %v5365 = vpack.c.b16 %v4357, %v4349
    %v5366 = vpack.c.b16 %v4358, %v4350
    %v5367 = vpack.c.b16 %v4359, %v4351
    %v5368 = vpack.c.b16 %v4368, %v4360
    %v5369 = vpack.c.b16 %v4369, %v4361
    %v5370 = vpack.c.b16 %v4370, %v4362
    %v5371 = vpack.c.b16 %v4371, %v4363
    %v5372 = vpack.c.b16 %v4372, %v4364
    %v5373 = vpack.c.b16 %v4373, %v4365
    %v5374 = vpack.c.b16 %v4374, %v4366
    %v5375 = vpack.c.b16 %v4375, %v4367
    %v5376 = vpack.c.b16 %v4384, %v4376
    %v5377 = vpack.c.b16 %v4385, %v4377
    %v5378 = vpack.c.b16 %v4386, %v4378
    %v5379 = vpack.c.b16 %v4387, %v4379
    %v5380 = vpack.c.b16 %v4388, %v4380
    %v5381 = vpack.c.b16 %v4389, %v4381
    %v5382 = vpack.c.b16 %v4390, %v4382
    %v5383 = vpack.c.b16 %v4391, %v4383
    %v5384 = vpack.c.b16 %v4400, %v4392
    %v5385 = vpack.c.b16 %v4401, %v4393
    %v5386 = vpack.c.b16 %v4402, %v4394
    %v5387 = vpack.c.b16 %v4403, %v4395
    %v5388 = vpack.c.b16 %v4404, %v4396
    %v5389 = vpack.c.b16 %v4405, %v4397
    %v5390 = vpack.c.b16 %v4406, %v4398
    %v5391 = vpack.c.b16 %v4407, %v4399
    %v5392 = vpack.c.b16 %v4416, %v4408
    %v5393 = vpack.c.b16 %v4417, %v4409
    %v5394 = vpack.c.b16 %v4418, %v4410
    %v5395 = vpack.c.b16 %v4419, %v4411
    %v5396 = vpack.c.b16 %v4420, %v4412
    %v5397 = vpack.c.b16 %v4421, %v4413
    %v5398 = vpack.c.b16 %v4422, %v4414
    %v5399 = vpack.c.b16 %v4423, %v4415
    %v5400 = vpack.c.b16 %v4432, %v4424
    %v5401 = vpack.c.b16 %v4433, %v4425
    %v5402 = vpack.c.b16 %v4434, %v4426
    %v5403 = vpack.c.b16 %v4435, %v4427
    %v5404 = vpack.c.b16 %v4436, %v4428
    %v5405 = vpack.c.b16 %v4437, %v4429
    %v5406 = vpack.c.b16 %v4438, %v4430
    %v5407 = vpack.c.b16 %v4439, %v4431
    %v5408 = vpack.c.b16 %v4448, %v4440
    %v5409 = vpack.c.b16 %v4449, %v4441
    %v5410 = vpack.c.b16 %v4450, %v4442
    %v5411 = vpack.c.b16 %v4451, %v4443
    %v5412 = vpack.c.b16 %v4452, %v4444
    %v5413 = vpack.c.b16 %v4453, %v4445
    %v5414 = vpack.c.b16 %v4454, %v4446
    %v5415 = vpack.c.b16 %v4455, %v4447
    %v5416 = vpack.c.b16 %v4464, %v4456
    %v5417 = vpack.c.b16 %v4465, %v4457
    %v5418 = vpack.c.b16 %v4466, %v4458
    %v5419 = vpack.c.b16 %v4467, %v4459
    %v5420 = vpack.c.b16 %v4468, %v4460
    %v5421 = vpack.c.b16 %v4469, %v4461
    %v5422 = vpack.c.b16 %v4470, %v4462
    %v5423 = vpack.c.b16 %v4471, %v4463
    %v5424 = vpack.c.b16 %v4480, %v4472
    %v5425 = vpack.c.b16 %v4481, %v4473
    %v5426 = vpack.c.b16 %v4482, %v4474
    %v5427 = vpack.c.b16 %v4483, %v4475
    %v5428 = vpack.c.b16 %v4484, %v4476
    %v5429 = vpack.c.b16 %v4485, %v4477
    %v5430 = vpack.c.b16 %v4486, %v4478
    %v5431 = vpack.c.b16 %v4487, %v4479
    %v5432 = vpack.c.b16 %v4496, %v4488
    %v5433 = vpack.c.b16 %v4497, %v4489
    %v5434 = vpack.c.b16 %v4498, %v4490
    %v5435 = vpack.c.b16 %v4499, %v4491
    %v5436 = vpack.c.b16 %v4500, %v4492
    %v5437 = vpack.c.b16 %v4501, %v4493
    %v5438 = vpack.c.b16 %v4502, %v4494
    %v5439 = vpack.c.b16 %v4503, %v4495
    %v5440 = vpack.c.b16 %v4512, %v4504
    %v5441 = vpack.c.b16 %v4513, %v4505
    %v5442 = vpack.c.b16 %v4514, %v4506
    %v5443 = vpack.c.b16 %v4515, %v4507
    %v5444 = vpack.c.b16 %v4516, %v4508
    %v5445 = vpack.c.b16 %v4517, %v4509
    %v5446 = vpack.c.b16 %v4518, %v4510
    %v5447 = vpack.c.b16 %v4519, %v4511
    %v5448 = vpack.c.b16 %v4528, %v4520
    %v5449 = vpack.c.b16 %v4529, %v4521
    %v5450 = vpack.c.b16 %v4530, %v4522
    %v5451 = vpack.c.b16 %v4531, %v4523
    %v5452 = vpack.c.b16 %v4532, %v4524
    %v5453 = vpack.c.b16 %v4533, %v4525
    %v5454 = vpack.c.b16 %v4534, %v4526
    %v5455 = vpack.c.b16 %v4535, %v4527
    %v5456 = vpack.c.b16 %v4544, %v4536
    %v5457 = vpack.c.b16 %v4545, %v4537
    %v5458 = vpack.c.b16 %v4546, %v4538
    %v5459 = vpack.c.b16 %v4547, %v4539
    %v5460 = vpack.c.b16 %v4548, %v4540
    %v5461 = vpack.c.b16 %v4549, %v4541
    %v5462 = vpack.c.b16 %v4550, %v4542
    %v5463 = vpack.c.b16 %v4551, %v4543
    %v5464 = vpack.c.b16 %v4560, %v4552
    %v5465 = vpack.c.b16 %v4561, %v4553
    %v5466 = vpack.c.b16 %v4562, %v4554
    %v5467 = vpack.c.b16 %v4563, %v4555
    %v5468 = vpack.c.b16 %v4564, %v4556
    %v5469 = vpack.c.b16 %v4565, %v4557
    %v5470 = vpack.c.b16 %v4566, %v4558
    %v5471 = vpack.c.b16 %v4567, %v4559
    %v5472 = vpack.c.b16 %v4576, %v4568
    %v5473 = vpack.c.b16 %v4577, %v4569
    %v5474 = vpack.c.b16 %v4578, %v4570
    %v5475 = vpack.c.b16 %v4579, %v4571
    %v5476 = vpack.c.b16 %v4580, %v4572
    %v5477 = vpack.c.b16 %v4581, %v4573
    %v5478 = vpack.c.b16 %v4582, %v4574
    %v5479 = vpack.c.b16 %v4583, %v4575
    %v5480 = vpack.c.b16 %v4592, %v4584
    %v5481 = vpack.c.b16 %v4593, %v4585
    %v5482 = vpack.c.b16 %v4594, %v4586
    %v5483 = vpack.c.b16 %v4595, %v4587
    %v5484 = vpack.c.b16 %v4596, %v4588
    %v5485 = vpack.c.b16 %v4597, %v4589
    %v5486 = vpack.c.b16 %v4598, %v4590
    %v5487 = vpack.c.b16 %v4599, %v4591
    %v5488 = vpack.c.b16 %v4608, %v4600
    %v5489 = vpack.c.b16 %v4609, %v4601
    %v5490 = vpack.c.b16 %v4610, %v4602
    %v5491 = vpack.c.b16 %v4611, %v4603
    %v5492 = vpack.c.b16 %v4612, %v4604
    %v5493 = vpack.c.b16 %v4613, %v4605
    %v5494 = vpack.c.b16 %v4614, %v4606
    %v5495 = vpack.c.b16 %v4615, %v4607
    %v5496 = vpack.c.b16 %v4624, %v4616
    %v5497 = vpack.c.b16 %v4625, %v4617
    %v5498 = vpack.c.b16 %v4626, %v4618
    %v5499 = vpack.c.b16 %v4627, %v4619
    %v5500 = vpack.c.b16 %v4628, %v4620
    %v5501 = vpack.c.b16 %v4629, %v4621
    %v5502 = vpack.c.b16 %v4630, %v4622
    %v5503 = vpack.c.b16 %v4631, %v4623
    %v5504 = vpack.c.b16 %v4640, %v4632
    %v5505 = vpack.c.b16 %v4641, %v4633
    %v5506 = vpack.c.b16 %v4642, %v4634
    %v5507 = vpack.c.b16 %v4643, %v4635
    %v5508 = vpack.c.b16 %v4644, %v4636
    %v5509 = vpack.c.b16 %v4645, %v4637
    %v5510 = vpack.c.b16 %v4646, %v4638
    %v5511 = vpack.c.b16 %v4647, %v4639
    %v5512 = vpack.c.b16 %v4656, %v4648
    %v5513 = vpack.c.b16 %v4657, %v4649
    %v5514 = vpack.c.b16 %v4658, %v4650
    %v5515 = vpack.c.b16 %v4659, %v4651
    %v5516 = vpack.c.b16 %v4660, %v4652
    %v5517 = vpack.c.b16 %v4661, %v4653
    %v5518 = vpack.c.b16 %v4662, %v4654
    %v5519 = vpack.c.b16 %v4663, %v4655
    %v5520 = vpack.c.b16 %v4672, %v4664
    %v5521 = vpack.c.b16 %v4673, %v4665
    %v5522 = vpack.c.b16 %v4674, %v4666
    %v5523 = vpack.c.b16 %v4675, %v4667
    %v5524 = vpack.c.b16 %v4676, %v4668
    %v5525 = vpack.c.b16 %v4677, %v4669
    %v5526 = vpack.c.b16 %v4678, %v4670
    %v5527 = vpack.c.b16 %v4679, %v4671
    %v5528 = vpack.c.b16 %v4688, %v4680
    %v5529 = vpack.c.b16 %v4689, %v4681
    %v5530 = vpack.c.b16 %v4690, %v4682
    %v5531 = vpack.c.b16 %v4691, %v4683
    %v5532 = vpack.c.b16 %v4692, %v4684
    %v5533 = vpack.c.b16 %v4693, %v4685
    %v5534 = vpack.c.b16 %v4694, %v4686
    %v5535 = vpack.c.b16 %v4695, %v4687
    %v5536 = vpack.c.b16 %v4704, %v4696
    %v5537 = vpack.c.b16 %v4705, %v4697
    %v5538 = vpack.c.b16 %v4706, %v4698
    %v5539 = vpack.c.b16 %v4707, %v4699
    %v5540 = vpack.c.b16 %v4708, %v4700
    %v5541 = vpack.c.b16 %v4709, %v4701
    %v5542 = vpack.c.b16 %v4710, %v4702
    %v5543 = vpack.c.b16 %v4711, %v4703
    %v5544 = vpack.c.b16 %v4720, %v4712
    %v5545 = vpack.c.b16 %v4721, %v4713
    %v5546 = vpack.c.b16 %v4722, %v4714
    %v5547 = vpack.c.b16 %v4723, %v4715
    %v5548 = vpack.c.b16 %v4724, %v4716
    %v5549 = vpack.c.b16 %v4725, %v4717
    %v5550 = vpack.c.b16 %v4726, %v4718
    %v5551 = vpack.c.b16 %v4727, %v4719
    %v5552 = vpack.c.b16 %v4736, %v4728
    %v5553 = vpack.c.b16 %v4737, %v4729
    %v5554 = vpack.c.b16 %v4738, %v4730
    %v5555 = vpack.c.b16 %v4739, %v4731
    %v5556 = vpack.c.b16 %v4740, %v4732
    %v5557 = vpack.c.b16 %v4741, %v4733
    %v5558 = vpack.c.b16 %v4742, %v4734
    %v5559 = vpack.c.b16 %v4743, %v4735
    %v5560 = vpack.c.b16 %v4752, %v4744
    %v5561 = vpack.c.b16 %v4753, %v4745
    %v5562 = vpack.c.b16 %v4754, %v4746
    %v5563 = vpack.c.b16 %v4755, %v4747
    %v5564 = vpack.c.b16 %v4756, %v4748
    %v5565 = vpack.c.b16 %v4757, %v4749
    %v5566 = vpack.c.b16 %v4758, %v4750
    %v5567 = vpack.c.b16 %v4759, %v4751
    %v5568 = vpack.c.b16 %v4768, %v4760
    %v5569 = vpack.c.b16 %v4769, %v4761
    %v5570 = vpack.c.b16 %v4770, %v4762
    %v5571 = vpack.c.b16 %v4771, %v4763
    %v5572 = vpack.c.b16 %v4772, %v4764
    %v5573 = vpack.c.b16 %v4773, %v4765
    %v5574 = vpack.c.b16 %v4774, %v4766
    %v5575 = vpack.c.b16 %v4775, %v4767
    %v5576 = vpack.c.b16 %v4784, %v4776
    %v5577 = vpack.c.b16 %v4785, %v4777
    %v5578 = vpack.c.b16 %v4786, %v4778
    %v5579 = vpack.c.b16 %v4787, %v4779
    %v5580 = vpack.c.b16 %v4788, %v4780
    %v5581 = vpack.c.b16 %v4789, %v4781
    %v5582 = vpack.c.b16 %v4790, %v4782
    %v5583 = vpack.c.b16 %v4791, %v4783
    %v5584 = vpack.c.b16 %v4800, %v4792
    %v5585 = vpack.c.b16 %v4801, %v4793
    %v5586 = vpack.c.b16 %v4802, %v4794
    %v5587 = vpack.c.b16 %v4803, %v4795
    %v5588 = vpack.c.b16 %v4804, %v4796
    %v5589 = vpack.c.b16 %v4805, %v4797
    %v5590 = vpack.c.b16 %v4806, %v4798
    %v5591 = vpack.c.b16 %v4807, %v4799
    %v5592 = vpack.c.b16 %v4816, %v4808
    %v5593 = vpack.c.b16 %v4817, %v4809
    %v5594 = vpack.c.b16 %v4818, %v4810
    %v5595 = vpack.c.b16 %v4819, %v4811
    %v5596 = vpack.c.b16 %v4820, %v4812
    %v5597 = vpack.c.b16 %v4821, %v4813
    %v5598 = vpack.c.b16 %v4822, %v4814
    %v5599 = vpack.c.b16 %v4823, %v4815
    %v5600 = vpack.c.b16 %v4832, %v4824
    %v5601 = vpack.c.b16 %v4833, %v4825
    %v5602 = vpack.c.b16 %v4834, %v4826
    %v5603 = vpack.c.b16 %v4835, %v4827
    %v5604 = vpack.c.b16 %v4836, %v4828
    %v5605 = vpack.c.b16 %v4837, %v4829
    %v5606 = vpack.c.b16 %v4838, %v4830
    %v5607 = vpack.c.b16 %v4839, %v4831
    %v5608 = vpack.c.b16 %v4848, %v4840
    %v5609 = vpack.c.b16 %v4849, %v4841
    %v5610 = vpack.c.b16 %v4850, %v4842
    %v5611 = vpack.c.b16 %v4851, %v4843
    %v5612 = vpack.c.b16 %v4852, %v4844
    %v5613 = vpack.c.b16 %v4853, %v4845
    %v5614 = vpack.c.b16 %v4854, %v4846
    %v5615 = vpack.c.b16 %v4855, %v4847
    %v5616 = vpack.c.b16 %v4864, %v4856
    %v5617 = vpack.c.b16 %v4865, %v4857
    %v5618 = vpack.c.b16 %v4866, %v4858
    %v5619 = vpack.c.b16 %v4867, %v4859
    %v5620 = vpack.c.b16 %v4868, %v4860
    %v5621 = vpack.c.b16 %v4869, %v4861
    %v5622 = vpack.c.b16 %v4870, %v4862
    %v5623 = vpack.c.b16 %v4871, %v4863
    %v5624 = vpack.c.b16 %v4880, %v4872
    %v5625 = vpack.c.b16 %v4881, %v4873
    %v5626 = vpack.c.b16 %v4882, %v4874
    %v5627 = vpack.c.b16 %v4883, %v4875
    %v5628 = vpack.c.b16 %v4884, %v4876
    %v5629 = vpack.c.b16 %v4885, %v4877
    %v5630 = vpack.c.b16 %v4886, %v4878
    %v5631 = vpack.c.b16 %v4887, %v4879
    %v5632 = vpack.c.b16 %v4896, %v4888
    %v5633 = vpack.c.b16 %v4897, %v4889
    %v5634 = vpack.c.b16 %v4898, %v4890
    %v5635 = vpack.c.b16 %v4899, %v4891
    %v5636 = vpack.c.b16 %v4900, %v4892
    %v5637 = vpack.c.b16 %v4901, %v4893
    %v5638 = vpack.c.b16 %v4902, %v4894
    %v5639 = vpack.c.b16 %v4903, %v4895
    %v5640 = vpack.c.b16 %v4912, %v4904
    %v5641 = vpack.c.b16 %v4913, %v4905
    %v5642 = vpack.c.b16 %v4914, %v4906
    %v5643 = vpack.c.b16 %v4915, %v4907
    %v5644 = vpack.c.b16 %v4916, %v4908
    %v5645 = vpack.c.b16 %v4917, %v4909
    %v5646 = vpack.c.b16 %v4918, %v4910
    %v5647 = vpack.c.b16 %v4919, %v4911
    %v5648 = vpack.c.b16 %v4928, %v4920
    %v5649 = vpack.c.b16 %v4929, %v4921
    %v5650 = vpack.c.b16 %v4930, %v4922
    %v5651 = vpack.c.b16 %v4931, %v4923
    %v5652 = vpack.c.b16 %v4932, %v4924
    %v5653 = vpack.c.b16 %v4933, %v4925
    %v5654 = vpack.c.b16 %v4934, %v4926
    %v5655 = vpack.c.b16 %v4935, %v4927
    %v5656 = vpack.c.b16 %v4944, %v4936
    %v5657 = vpack.c.b16 %v4945, %v4937
    %v5658 = vpack.c.b16 %v4946, %v4938
    %v5659 = vpack.c.b16 %v4947, %v4939
    %v5660 = vpack.c.b16 %v4948, %v4940
    %v5661 = vpack.c.b16 %v4949, %v4941
    %v5662 = vpack.c.b16 %v4950, %v4942
    %v5663 = vpack.c.b16 %v4951, %v4943
    %v5664 = vpack.c.b16 %v4960, %v4952
    %v5665 = vpack.c.b16 %v4961, %v4953
    %v5666 = vpack.c.b16 %v4962, %v4954
    %v5667 = vpack.c.b16 %v4963, %v4955
    %v5668 = vpack.c.b16 %v4964, %v4956
    %v5669 = vpack.c.b16 %v4965, %v4957
    %v5670 = vpack.c.b16 %v4966, %v4958
    %v5671 = vpack.c.b16 %v4967, %v4959
    %v5672 = vpack.c.b16 %v4976, %v4968
    %v5673 = vpack.c.b16 %v4977, %v4969
    %v5674 = vpack.c.b16 %v4978, %v4970
    %v5675 = vpack.c.b16 %v4979, %v4971
    %v5676 = vpack.c.b16 %v4980, %v4972
    %v5677 = vpack.c.b16 %v4981, %v4973
    %v5678 = vpack.c.b16 %v4982, %v4974
    %v5679 = vpack.c.b16 %v4983, %v4975
    %v5680 = vpack.c.b16 %v4992, %v4984
    %v5681 = vpack.c.b16 %v4993, %v4985
    %v5682 = vpack.c.b16 %v4994, %v4986
    %v5683 = vpack.c.b16 %v4995, %v4987
    %v5684 = vpack.c.b16 %v4996, %v4988
    %v5685 = vpack.c.b16 %v4997, %v4989
    %v5686 = vpack.c.b16 %v4998, %v4990
    %v5687 = vpack.c.b16 %v4999, %v4991
    %v5688 = vpack.c.b16 %v5008, %v5000
    %v5689 = vpack.c.b16 %v5009, %v5001
    %v5690 = vpack.c.b16 %v5010, %v5002
    %v5691 = vpack.c.b16 %v5011, %v5003
    %v5692 = vpack.c.b16 %v5012, %v5004
    %v5693 = vpack.c.b16 %v5013, %v5005
    %v5694 = vpack.c.b16 %v5014, %v5006
    %v5695 = vpack.c.b16 %v5015, %v5007
    %v5696 = vpack.c.b16 %v5024, %v5016
    %v5697 = vpack.c.b16 %v5025, %v5017
    %v5698 = vpack.c.b16 %v5026, %v5018
    %v5699 = vpack.c.b16 %v5027, %v5019
    %v5700 = vpack.c.b16 %v5028, %v5020
    %v5701 = vpack.c.b16 %v5029, %v5021
    %v5702 = vpack.c.b16 %v5030, %v5022
    %v5703 = vpack.c.b16 %v5031, %v5023
    %v5704 = vpack.c.b16 %v5040, %v5032
    %v5705 = vpack.c.b16 %v5041, %v5033
    %v5706 = vpack.c.b16 %v5042, %v5034
    %v5707 = vpack.c.b16 %v5043, %v5035
    %v5708 = vpack.c.b16 %v5044, %v5036
    %v5709 = vpack.c.b16 %v5045, %v5037
    %v5710 = vpack.c.b16 %v5046, %v5038
    %v5711 = vpack.c.b16 %v5047, %v5039
    %v5712 = vpack.c.b16 %v5056, %v5048
    %v5713 = vpack.c.b16 %v5057, %v5049
    %v5714 = vpack.c.b16 %v5058, %v5050
    %v5715 = vpack.c.b16 %v5059, %v5051
    %v5716 = vpack.c.b16 %v5060, %v5052
    %v5717 = vpack.c.b16 %v5061, %v5053
    %v5718 = vpack.c.b16 %v5062, %v5054
    %v5719 = vpack.c.b16 %v5063, %v5055
    %v5720 = vpack.c.b16 %v5072, %v5064
    %v5721 = vpack.c.b16 %v5073, %v5065
    %v5722 = vpack.c.b16 %v5074, %v5066
    %v5723 = vpack.c.b16 %v5075, %v5067
    %v5724 = vpack.c.b16 %v5076, %v5068
    %v5725 = vpack.c.b16 %v5077, %v5069
    %v5726 = vpack.c.b16 %v5078, %v5070
    %v5727 = vpack.c.b16 %v5079, %v5071
    %v5728 = vpack.c.b16 %v5088, %v5080
    %v5729 = vpack.c.b16 %v5089, %v5081
    %v5730 = vpack.c.b16 %v5090, %v5082
    %v5731 = vpack.c.b16 %v5091, %v5083
    %v5732 = vpack.c.b16 %v5092, %v5084
    %v5733 = vpack.c.b16 %v5093, %v5085
    %v5734 = vpack.c.b16 %v5094, %v5086
    %v5735 = vpack.c.b16 %v5095, %v5087
    %v5736 = vpack.c.b16 %v5104, %v5096
    %v5737 = vpack.c.b16 %v5105, %v5097
    %v5738 = vpack.c.b16 %v5106, %v5098
    %v5739 = vpack.c.b16 %v5107, %v5099
    %v5740 = vpack.c.b16 %v5108, %v5100
    %v5741 = vpack.c.b16 %v5109, %v5101
    %v5742 = vpack.c.b16 %v5110, %v5102
    %v5743 = vpack.c.b16 %v5111, %v5103
    %v5744 = vpack.c.b16 %v5120, %v5112
    %v5745 = vpack.c.b16 %v5121, %v5113
    %v5746 = vpack.c.b16 %v5122, %v5114
    %v5747 = vpack.c.b16 %v5123, %v5115
    %v5748 = vpack.c.b16 %v5124, %v5116
    %v5749 = vpack.c.b16 %v5125, %v5117
    %v5750 = vpack.c.b16 %v5126, %v5118
    %v5751 = vpack.c.b16 %v5127, %v5119
    %v5752 = vpack.c.b16 %v5136, %v5128
    %v5753 = vpack.c.b16 %v5137, %v5129
    %v5754 = vpack.c.b16 %v5138, %v5130
    %v5755 = vpack.c.b16 %v5139, %v5131
    %v5756 = vpack.c.b16 %v5140, %v5132
    %v5757 = vpack.c.b16 %v5141, %v5133
    %v5758 = vpack.c.b16 %v5142, %v5134
    %v5759 = vpack.c.b16 %v5143, %v5135
    %v5760 = vpack.c.b16 %v5152, %v5144
    %v5761 = vpack.c.b16 %v5153, %v5145
    %v5762 = vpack.c.b16 %v5154, %v5146
    %v5763 = vpack.c.b16 %v5155, %v5147
    %v5764 = vpack.c.b16 %v5156, %v5148
    %v5765 = vpack.c.b16 %v5157, %v5149
    %v5766 = vpack.c.b16 %v5158, %v5150
    %v5767 = vpack.c.b16 %v5159, %v5151
    %v5768 = vpack.c.b16 %v5168, %v5160
    %v5769 = vpack.c.b16 %v5169, %v5161
    %v5770 = vpack.c.b16 %v5170, %v5162
    %v5771 = vpack.c.b16 %v5171, %v5163
    %v5772 = vpack.c.b16 %v5172, %v5164
    %v5773 = vpack.c.b16 %v5173, %v5165
    %v5774 = vpack.c.b16 %v5174, %v5166
    %v5775 = vpack.c.b16 %v5175, %v5167
    %v5776 = vpack.c.b16 %v5184, %v5176
    %v5777 = vpack.c.b16 %v5185, %v5177
    %v5778 = vpack.c.b16 %v5186, %v5178
    %v5779 = vpack.c.b16 %v5187, %v5179
    %v5780 = vpack.c.b16 %v5188, %v5180
    %v5781 = vpack.c.b16 %v5189, %v5181
    %v5782 = vpack.c.b16 %v5190, %v5182
    %v5783 = vpack.c.b16 %v5191, %v5183
    %v5784 = vpack.c.b16 %v5200, %v5192
    %v5785 = vpack.c.b16 %v5201, %v5193
    %v5786 = vpack.c.b16 %v5202, %v5194
    %v5787 = vpack.c.b16 %v5203, %v5195
    %v5788 = vpack.c.b16 %v5204, %v5196
    %v5789 = vpack.c.b16 %v5205, %v5197
    %v5790 = vpack.c.b16 %v5206, %v5198
    %v5791 = vpack.c.b16 %v5207, %v5199
    %v5792 = vpack.c.b16 %v5216, %v5208
    %v5793 = vpack.c.b16 %v5217, %v5209
    %v5794 = vpack.c.b16 %v5218, %v5210
    %v5795 = vpack.c.b16 %v5219, %v5211
    %v5796 = vpack.c.b16 %v5220, %v5212
    %v5797 = vpack.c.b16 %v5221, %v5213
    %v5798 = vpack.c.b16 %v5222, %v5214
    %v5799 = vpack.c.b16 %v5223, %v5215
    %v5800 = vpack.c.b16 %v5232, %v5224
    %v5801 = vpack.c.b16 %v5233, %v5225
    %v5802 = vpack.c.b16 %v5234, %v5226
    %v5803 = vpack.c.b16 %v5235, %v5227
    %v5804 = vpack.c.b16 %v5236, %v5228
    %v5805 = vpack.c.b16 %v5237, %v5229
    %v5806 = vpack.c.b16 %v5238, %v5230
    %v5807 = vpack.c.b16 %v5239, %v5231
    %v5808 = vpack.c.b16 %v5248, %v5240
    %v5809 = vpack.c.b16 %v5249, %v5241
    %v5810 = vpack.c.b16 %v5250, %v5242
    %v5811 = vpack.c.b16 %v5251, %v5243
    %v5812 = vpack.c.b16 %v5252, %v5244
    %v5813 = vpack.c.b16 %v5253, %v5245
    %v5814 = vpack.c.b16 %v5254, %v5246
    %v5815 = vpack.c.b16 %v5255, %v5247
    %v5816 = vpack.c.b16 %v5264, %v5256
    %v5817 = vpack.c.b16 %v5265, %v5257
    %v5818 = vpack.c.b16 %v5266, %v5258
    %v5819 = vpack.c.b16 %v5267, %v5259
    %v5820 = vpack.c.b16 %v5268, %v5260
    %v5821 = vpack.c.b16 %v5269, %v5261
    %v5822 = vpack.c.b16 %v5270, %v5262
    %v5823 = vpack.c.b16 %v5271, %v5263
    %v5824 = vpack.c.b16 %v5280, %v5272
    %v5825 = vpack.c.b16 %v5281, %v5273
    %v5826 = vpack.c.b16 %v5282, %v5274
    %v5827 = vpack.c.b16 %v5283, %v5275
    %v5828 = vpack.c.b16 %v5284, %v5276
    %v5829 = vpack.c.b16 %v5285, %v5277
    %v5830 = vpack.c.b16 %v5286, %v5278
    %v5831 = vpack.c.b16 %v5287, %v5279
    %v5832 = vpack.c.b16 %v5296, %v5288
    %v5833 = vpack.c.b16 %v5297, %v5289
    %v5834 = vpack.c.b16 %v5298, %v5290
    %v5835 = vpack.c.b16 %v5299, %v5291
    %v5836 = vpack.c.b16 %v5300, %v5292
    %v5837 = vpack.c.b16 %v5301, %v5293
    %v5838 = vpack.c.b16 %v5302, %v5294
    %v5839 = vpack.c.b16 %v5303, %v5295
    %v5840 = vpack.c.b16 %v5312, %v5304
    %v5841 = vpack.c.b16 %v5313, %v5305
    %v5842 = vpack.c.b16 %v5314, %v5306
    %v5843 = vpack.c.b16 %v5315, %v5307
    %v5844 = vpack.c.b16 %v5316, %v5308
    %v5845 = vpack.c.b16 %v5317, %v5309
    %v5846 = vpack.c.b16 %v5318, %v5310
    %v5847 = vpack.c.b16 %v5319, %v5311
    %v5848 = vpack.c.b16 %v5328, %v5320
    %v5849 = vpack.c.b16 %v5329, %v5321
    %v5850 = vpack.c.b16 %v5330, %v5322
    %v5851 = vpack.c.b16 %v5331, %v5323
    %v5852 = vpack.c.b16 %v5332, %v5324
    %v5853 = vpack.c.b16 %v5333, %v5325
    %v5854 = vpack.c.b16 %v5334, %v5326
    %v5855 = vpack.c.b16 %v5335, %v5327
    %v5856 = vpack.c.b16 %v5344, %v5336
    %v5857 = vpack.c.b16 %v5345, %v5337
    %v5858 = vpack.c.b16 %v5346, %v5338
    %v5859 = vpack.c.b16 %v5347, %v5339
    %v5860 = vpack.c.b16 %v5348, %v5340
    %v5861 = vpack.c.b16 %v5349, %v5341
    %v5862 = vpack.c.b16 %v5350, %v5342
    %v5863 = vpack.c.b16 %v5351, %v5343
    %6376 = vmatprep.subr.bf16.mxu0 %v5409
    %6377 = vmatpush1.bf16.msra.mxu0 %v5408
    %6378 = vmatprep.subr.bf16.mxu0 %v5401
    %6379 = vmatpush1.bf16.msra.mxu0 %v5400
    %6380 = vmatprep.subr.bf16.mxu0 %v5393
    %6381 = vmatpush1.bf16.msra.mxu0 %v5392
    %6382 = vmatprep.subr.bf16.mxu0 %v5385
    %6383 = vmatpush1.bf16.msra.mxu0 %v5384
    %6384 = vmatprep.subr.bf16.mxu0 %v5377
    %6385 = vmatpush1.bf16.msra.mxu0 %v5376
    %6386 = vmatprep.subr.bf16.mxu0 %v5369
    %6387 = vmatpush1.bf16.msra.mxu0 %v5368
    %6388 = vmatprep.subr.bf16.mxu0 %v5361
    %6389 = vmatpush1.bf16.msra.mxu0 %v5360
    %6390 = vmatprep.subr.bf16.mxu0 %v5353
    %6391 = vmatpush1.bf16.msra.mxu0 %v5352
    %6392 = vmatprep.subr.bf16.mxu0 %v5473
    %6393 = vmatpush2.bf16.msra.mxu0 %v5472
    %6394 = vmatprep.subr.bf16.mxu0 %v5465
    %6395 = vmatpush2.bf16.msra.mxu0 %v5464
    %6396 = vmatprep.subr.bf16.mxu0 %v5457
    %6397 = vmatpush2.bf16.msra.mxu0 %v5456
    %6398 = vmatprep.subr.bf16.mxu0 %v5449
    %6399 = vmatpush2.bf16.msra.mxu0 %v5448
    %6400 = vmatprep.subr.bf16.mxu0 %v5441
    %6401 = vmatpush2.bf16.msra.mxu0 %v5440
    %6402 = vmatprep.subr.bf16.mxu0 %v5433
    %6403 = vmatpush2.bf16.msra.mxu0 %v5432
    %6404 = vmatprep.subr.bf16.mxu0 %v5425
    %6405 = vmatpush2.bf16.msra.mxu0 %v5424
    %6406 = vmatprep.subr.bf16.mxu0 %v5417
    %6407 = vmatpush2.bf16.msra.mxu0 %v5416
    %6408 = vmatprep.mubr.bf16.mxu0 %v3297
    %6409 = vmatmul.mubr.bf16.gmra.mxu0 %v3296
    %v6410 = vpop.f32.mrf.mxu0
    %v6411 = vadd.f32 0.0, %v6410
    %v6412 = vpop.f32.mrf.mxu0
    %v6413 = vadd.f32 0.0, %v6412
    %v6414 = vpop.f32.mrf.mxu0
    %v6415 = vadd.f32 0.0, %v6414
    %v6416 = vpop.f32.mrf.mxu0
    %v6417 = vadd.f32 0.0, %v6416
    %6418 = vdwg.mxu0
    %6419 = vmatprep.subr.bf16.mxu0 %v5537
    %6420 = vmatpush1.bf16.msra.mxu0 %v5536
    %6421 = vmatprep.subr.bf16.mxu0 %v5529
    %6422 = vmatpush1.bf16.msra.mxu0 %v5528
    %6423 = vmatprep.subr.bf16.mxu0 %v5521
    %6424 = vmatpush1.bf16.msra.mxu0 %v5520
    %6425 = vmatprep.subr.bf16.mxu0 %v5513
    %6426 = vmatpush1.bf16.msra.mxu0 %v5512
    %6427 = vmatprep.subr.bf16.mxu0 %v5505
    %6428 = vmatpush1.bf16.msra.mxu0 %v5504
    %6429 = vmatprep.subr.bf16.mxu0 %v5497
    %6430 = vmatpush1.bf16.msra.mxu0 %v5496
    %6431 = vmatprep.subr.bf16.mxu0 %v5489
    %6432 = vmatpush1.bf16.msra.mxu0 %v5488
    %6433 = vmatprep.subr.bf16.mxu0 %v5481
    %6434 = vmatpush1.bf16.msra.mxu0 %v5480
    %6435 = vmatprep.subr.bf16.mxu0 %v5601
    %6436 = vmatpush2.bf16.msra.mxu0 %v5600
    %6437 = vmatprep.subr.bf16.mxu0 %v5593
    %6438 = vmatpush2.bf16.msra.mxu0 %v5592
    %6439 = vmatprep.subr.bf16.mxu0 %v5585
    %6440 = vmatpush2.bf16.msra.mxu0 %v5584
    %6441 = vmatprep.subr.bf16.mxu0 %v5577
    %6442 = vmatpush2.bf16.msra.mxu0 %v5576
    %6443 = vmatprep.subr.bf16.mxu0 %v5569
    %6444 = vmatpush2.bf16.msra.mxu0 %v5568
    %6445 = vmatprep.subr.bf16.mxu0 %v5561
    %6446 = vmatpush2.bf16.msra.mxu0 %v5560
    %6447 = vmatprep.subr.bf16.mxu0 %v5553
    %6448 = vmatpush2.bf16.msra.mxu0 %v5552
    %6449 = vmatprep.subr.bf16.mxu0 %v5545
    %6450 = vmatpush2.bf16.msra.mxu0 %v5544
    %6451 = vmatprep.mubr.bf16.mxu0 %v3299
    %6452 = vmatmul.mubr.bf16.gmra.mxu0 %v3298
    %v6453 = vpop.f32.mrf.mxu0
    %v6454 = vadd.f32 %v6411, %v6453
    %v6455 = vpop.f32.mrf.mxu0
    %v6456 = vadd.f32 %v6413, %v6455
    %v6457 = vpop.f32.mrf.mxu0
    %v6458 = vadd.f32 %v6415, %v6457
    %v6459 = vpop.f32.mrf.mxu0
    %v6460 = vadd.f32 %v6417, %v6459
    %6461 = vdwg.mxu0
    %6462 = vmatprep.subr.bf16.mxu0 %v5665
    %6463 = vmatpush1.bf16.msra.mxu0 %v5664
    %6464 = vmatprep.subr.bf16.mxu0 %v5657
    %6465 = vmatpush1.bf16.msra.mxu0 %v5656
    %6466 = vmatprep.subr.bf16.mxu0 %v5649
    %6467 = vmatpush1.bf16.msra.mxu0 %v5648
    %6468 = vmatprep.subr.bf16.mxu0 %v5641
    %6469 = vmatpush1.bf16.msra.mxu0 %v5640
    %6470 = vmatprep.subr.bf16.mxu0 %v5633
    %6471 = vmatpush1.bf16.msra.mxu0 %v5632
    %6472 = vmatprep.subr.bf16.mxu0 %v5625
    %6473 = vmatpush1.bf16.msra.mxu0 %v5624
    %6474 = vmatprep.subr.bf16.mxu0 %v5617
    %6475 = vmatpush1.bf16.msra.mxu0 %v5616
    %6476 = vmatprep.subr.bf16.mxu0 %v5609
    %6477 = vmatpush1.bf16.msra.mxu0 %v5608
    %6478 = vmatprep.subr.bf16.mxu0 %v5729
    %6479 = vmatpush2.bf16.msra.mxu0 %v5728
    %6480 = vmatprep.subr.bf16.mxu0 %v5721
    %6481 = vmatpush2.bf16.msra.mxu0 %v5720
    %6482 = vmatprep.subr.bf16.mxu0 %v5713
    %6483 = vmatpush2.bf16.msra.mxu0 %v5712
    %6484 = vmatprep.subr.bf16.mxu0 %v5705
    %6485 = vmatpush2.bf16.msra.mxu0 %v5704
    %6486 = vmatprep.subr.bf16.mxu0 %v5697
    %6487 = vmatpush2.bf16.msra.mxu0 %v5696
    %6488 = vmatprep.subr.bf16.mxu0 %v5689
    %6489 = vmatpush2.bf16.msra.mxu0 %v5688
    %6490 = vmatprep.subr.bf16.mxu0 %v5681
    %6491 = vmatpush2.bf16.msra.mxu0 %v5680
    %6492 = vmatprep.subr.bf16.mxu0 %v5673
    %6493 = vmatpush2.bf16.msra.mxu0 %v5672
    %6494 = vmatprep.mubr.bf16.mxu0 %v3301
    %6495 = vmatmul.mubr.bf16.gmra.mxu0 %v3300
    %v6496 = vpop.f32.mrf.mxu0
    %v6497 = vadd.f32 %v6454, %v6496
    %v6498 = vpop.f32.mrf.mxu0
    %v6499 = vadd.f32 %v6456, %v6498
    %v6500 = vpop.f32.mrf.mxu0
    %v6501 = vadd.f32 %v6458, %v6500
    %v6502 = vpop.f32.mrf.mxu0
    %v6503 = vadd.f32 %v6460, %v6502
    %6504 = vdwg.mxu0
    %6505 = vmatprep.subr.bf16.mxu0 %v5793
    %6506 = vmatpush1.bf16.msra.mxu0 %v5792
    %6507 = vmatprep.subr.bf16.mxu0 %v5785
    %6508 = vmatpush1.bf16.msra.mxu0 %v5784
    %6509 = vmatprep.subr.bf16.mxu0 %v5777
    %6510 = vmatpush1.bf16.msra.mxu0 %v5776
    %6511 = vmatprep.subr.bf16.mxu0 %v5769
    %6512 = vmatpush1.bf16.msra.mxu0 %v5768
    %6513 = vmatprep.subr.bf16.mxu0 %v5761
    %6514 = vmatpush1.bf16.msra.mxu0 %v5760
    %6515 = vmatprep.subr.bf16.mxu0 %v5753
    %6516 = vmatpush1.bf16.msra.mxu0 %v5752
    %6517 = vmatprep.subr.bf16.mxu0 %v5745
    %6518 = vmatpush1.bf16.msra.mxu0 %v5744
    %6519 = vmatprep.subr.bf16.mxu0 %v5737
    %6520 = vmatpush1.bf16.msra.mxu0 %v5736
    %6521 = vmatprep.subr.bf16.mxu0 %v5857
    %6522 = vmatpush2.bf16.msra.mxu0 %v5856
    %6523 = vmatprep.subr.bf16.mxu0 %v5849
    %6524 = vmatpush2.bf16.msra.mxu0 %v5848
    %6525 = vmatprep.subr.bf16.mxu0 %v5841
    %6526 = vmatpush2.bf16.msra.mxu0 %v5840
    %6527 = vmatprep.subr.bf16.mxu0 %v5833
    %6528 = vmatpush2.bf16.msra.mxu0 %v5832
    %6529 = vmatprep.subr.bf16.mxu0 %v5825
    %6530 = vmatpush2.bf16.msra.mxu0 %v5824
    %6531 = vmatprep.subr.bf16.mxu0 %v5817
    %6532 = vmatpush2.bf16.msra.mxu0 %v5816
    %6533 = vmatprep.subr.bf16.mxu0 %v5809
    %6534 = vmatpush2.bf16.msra.mxu0 %v5808
    %6535 = vmatprep.subr.bf16.mxu0 %v5801
    %6536 = vmatpush2.bf16.msra.mxu0 %v5800
    %6537 = vmatprep.mubr.bf16.mxu0 %v3303
    %6538 = vmatmul.mubr.bf16.gmra.mxu0 %v3302
    %v6539 = vpop.f32.mrf.mxu0
    %v6540 = vadd.f32 %v6497, %v6539
    %v6541 = vpop.f32.mrf.mxu0
    %v6542 = vadd.f32 %v6499, %v6541
    %v6543 = vpop.f32.mrf.mxu0
    %v6544 = vadd.f32 %v6501, %v6543
    %v6545 = vpop.f32.mrf.mxu0
    %v6546 = vadd.f32 %v6503, %v6545
    %6547 = vdwg.mxu0
    %6548 = vmatprep.subr.bf16.mxu0 %v5411
    %6549 = vmatpush1.bf16.msra.mxu0 %v5410
    %6550 = vmatprep.subr.bf16.mxu0 %v5403
    %6551 = vmatpush1.bf16.msra.mxu0 %v5402
    %6552 = vmatprep.subr.bf16.mxu0 %v5395
    %6553 = vmatpush1.bf16.msra.mxu0 %v5394
    %6554 = vmatprep.subr.bf16.mxu0 %v5387
    %6555 = vmatpush1.bf16.msra.mxu0 %v5386
    %6556 = vmatprep.subr.bf16.mxu0 %v5379
    %6557 = vmatpush1.bf16.msra.mxu0 %v5378
    %6558 = vmatprep.subr.bf16.mxu0 %v5371
    %6559 = vmatpush1.bf16.msra.mxu0 %v5370
    %6560 = vmatprep.subr.bf16.mxu0 %v5363
    %6561 = vmatpush1.bf16.msra.mxu0 %v5362
    %6562 = vmatprep.subr.bf16.mxu0 %v5355
    %6563 = vmatpush1.bf16.msra.mxu0 %v5354
    %6564 = vmatprep.subr.bf16.mxu0 %v5475
    %6565 = vmatpush2.bf16.msra.mxu0 %v5474
    %6566 = vmatprep.subr.bf16.mxu0 %v5467
    %6567 = vmatpush2.bf16.msra.mxu0 %v5466
    %6568 = vmatprep.subr.bf16.mxu0 %v5459
    %6569 = vmatpush2.bf16.msra.mxu0 %v5458
    %6570 = vmatprep.subr.bf16.mxu0 %v5451
    %6571 = vmatpush2.bf16.msra.mxu0 %v5450
    %6572 = vmatprep.subr.bf16.mxu0 %v5443
    %6573 = vmatpush2.bf16.msra.mxu0 %v5442
    %6574 = vmatprep.subr.bf16.mxu0 %v5435
    %6575 = vmatpush2.bf16.msra.mxu0 %v5434
    %6576 = vmatprep.subr.bf16.mxu0 %v5427
    %6577 = vmatpush2.bf16.msra.mxu0 %v5426
    %6578 = vmatprep.subr.bf16.mxu0 %v5419
    %6579 = vmatpush2.bf16.msra.mxu0 %v5418
    %6580 = vmatprep.mubr.bf16.mxu0 %v3297
    %6581 = vmatmul.mubr.bf16.gmra.mxu0 %v3296
    %v6582 = vpop.f32.mrf.mxu0
    %v6583 = vadd.f32 0.0, %v6582
    %v6584 = vpop.f32.mrf.mxu0
    %v6585 = vadd.f32 0.0, %v6584
    %v6586 = vpop.f32.mrf.mxu0
    %v6587 = vadd.f32 0.0, %v6586
    %v6588 = vpop.f32.mrf.mxu0
    %v6589 = vadd.f32 0.0, %v6588
    %6590 = vdwg.mxu0
    %6591 = vmatprep.subr.bf16.mxu0 %v5539
    %6592 = vmatpush1.bf16.msra.mxu0 %v5538
    %6593 = vmatprep.subr.bf16.mxu0 %v5531
    %6594 = vmatpush1.bf16.msra.mxu0 %v5530
    %6595 = vmatprep.subr.bf16.mxu0 %v5523
    %6596 = vmatpush1.bf16.msra.mxu0 %v5522
    %6597 = vmatprep.subr.bf16.mxu0 %v5515
    %6598 = vmatpush1.bf16.msra.mxu0 %v5514
    %6599 = vmatprep.subr.bf16.mxu0 %v5507
    %6600 = vmatpush1.bf16.msra.mxu0 %v5506
    %6601 = vmatprep.subr.bf16.mxu0 %v5499
    %6602 = vmatpush1.bf16.msra.mxu0 %v5498
    %6603 = vmatprep.subr.bf16.mxu0 %v5491
    %6604 = vmatpush1.bf16.msra.mxu0 %v5490
    %6605 = vmatprep.subr.bf16.mxu0 %v5483
    %6606 = vmatpush1.bf16.msra.mxu0 %v5482
    %6607 = vmatprep.subr.bf16.mxu0 %v5603
    %6608 = vmatpush2.bf16.msra.mxu0 %v5602
    %6609 = vmatprep.subr.bf16.mxu0 %v5595
    %6610 = vmatpush2.bf16.msra.mxu0 %v5594
    %6611 = vmatprep.subr.bf16.mxu0 %v5587
    %6612 = vmatpush2.bf16.msra.mxu0 %v5586
    %6613 = vmatprep.subr.bf16.mxu0 %v5579
    %6614 = vmatpush2.bf16.msra.mxu0 %v5578
    %6615 = vmatprep.subr.bf16.mxu0 %v5571
    %6616 = vmatpush2.bf16.msra.mxu0 %v5570
    %6617 = vmatprep.subr.bf16.mxu0 %v5563
    %6618 = vmatpush2.bf16.msra.mxu0 %v5562
    %6619 = vmatprep.subr.bf16.mxu0 %v5555
    %6620 = vmatpush2.bf16.msra.mxu0 %v5554
    %6621 = vmatprep.subr.bf16.mxu0 %v5547
    %6622 = vmatpush2.bf16.msra.mxu0 %v5546
    %6623 = vmatprep.mubr.bf16.mxu0 %v3299
    %6624 = vmatmul.mubr.bf16.gmra.mxu0 %v3298
    %v6625 = vpop.f32.mrf.mxu0
    %v6626 = vadd.f32 %v6583, %v6625
    %v6627 = vpop.f32.mrf.mxu0
    %v6628 = vadd.f32 %v6585, %v6627
    %v6629 = vpop.f32.mrf.mxu0
    %v6630 = vadd.f32 %v6587, %v6629
    %v6631 = vpop.f32.mrf.mxu0
    %v6632 = vadd.f32 %v6589, %v6631
    %6633 = vdwg.mxu0
    %6634 = vmatprep.subr.bf16.mxu0 %v5667
    %6635 = vmatpush1.bf16.msra.mxu0 %v5666
    %6636 = vmatprep.subr.bf16.mxu0 %v5659
    %6637 = vmatpush1.bf16.msra.mxu0 %v5658
    %6638 = vmatprep.subr.bf16.mxu0 %v5651
    %6639 = vmatpush1.bf16.msra.mxu0 %v5650
    %6640 = vmatprep.subr.bf16.mxu0 %v5643
    %6641 = vmatpush1.bf16.msra.mxu0 %v5642
    %6642 = vmatprep.subr.bf16.mxu0 %v5635
    %6643 = vmatpush1.bf16.msra.mxu0 %v5634
    %6644 = vmatprep.subr.bf16.mxu0 %v5627
    %6645 = vmatpush1.bf16.msra.mxu0 %v5626
    %6646 = vmatprep.subr.bf16.mxu0 %v5619
    %6647 = vmatpush1.bf16.msra.mxu0 %v5618
    %6648 = vmatprep.subr.bf16.mxu0 %v5611
    %6649 = vmatpush1.bf16.msra.mxu0 %v5610
    %6650 = vmatprep.subr.bf16.mxu0 %v5731
    %6651 = vmatpush2.bf16.msra.mxu0 %v5730
    %6652 = vmatprep.subr.bf16.mxu0 %v5723
    %6653 = vmatpush2.bf16.msra.mxu0 %v5722
    %6654 = vmatprep.subr.bf16.mxu0 %v5715
    %6655 = vmatpush2.bf16.msra.mxu0 %v5714
    %6656 = vmatprep.subr.bf16.mxu0 %v5707
    %6657 = vmatpush2.bf16.msra.mxu0 %v5706
    %6658 = vmatprep.subr.bf16.mxu0 %v5699
    %6659 = vmatpush2.bf16.msra.mxu0 %v5698
    %6660 = vmatprep.subr.bf16.mxu0 %v5691
    %6661 = vmatpush2.bf16.msra.mxu0 %v5690
    %6662 = vmatprep.subr.bf16.mxu0 %v5683
    %6663 = vmatpush2.bf16.msra.mxu0 %v5682
    %6664 = vmatprep.subr.bf16.mxu0 %v5675
    %6665 = vmatpush2.bf16.msra.mxu0 %v5674
    %6666 = vmatprep.mubr.bf16.mxu0 %v3301
    %6667 = vmatmul.mubr.bf16.gmra.mxu0 %v3300
    %v6668 = vpop.f32.mrf.mxu0
    %v6669 = vadd.f32 %v6626, %v6668
    %v6670 = vpop.f32.mrf.mxu0
    %v6671 = vadd.f32 %v6628, %v6670
    %v6672 = vpop.f32.mrf.mxu0
    %v6673 = vadd.f32 %v6630, %v6672
    %v6674 = vpop.f32.mrf.mxu0
    %v6675 = vadd.f32 %v6632, %v6674
    %6676 = vdwg.mxu0
    %6677 = vmatprep.subr.bf16.mxu0 %v5795
    %6678 = vmatpush1.bf16.msra.mxu0 %v5794
    %6679 = vmatprep.subr.bf16.mxu0 %v5787
    %6680 = vmatpush1.bf16.msra.mxu0 %v5786
    %6681 = vmatprep.subr.bf16.mxu0 %v5779
    %6682 = vmatpush1.bf16.msra.mxu0 %v5778
    %6683 = vmatprep.subr.bf16.mxu0 %v5771
    %6684 = vmatpush1.bf16.msra.mxu0 %v5770
    %6685 = vmatprep.subr.bf16.mxu0 %v5763
    %6686 = vmatpush1.bf16.msra.mxu0 %v5762
    %6687 = vmatprep.subr.bf16.mxu0 %v5755
    %6688 = vmatpush1.bf16.msra.mxu0 %v5754
    %6689 = vmatprep.subr.bf16.mxu0 %v5747
    %6690 = vmatpush1.bf16.msra.mxu0 %v5746
    %6691 = vmatprep.subr.bf16.mxu0 %v5739
    %6692 = vmatpush1.bf16.msra.mxu0 %v5738
    %6693 = vmatprep.subr.bf16.mxu0 %v5859
    %6694 = vmatpush2.bf16.msra.mxu0 %v5858
    %6695 = vmatprep.subr.bf16.mxu0 %v5851
    %6696 = vmatpush2.bf16.msra.mxu0 %v5850
    %6697 = vmatprep.subr.bf16.mxu0 %v5843
    %6698 = vmatpush2.bf16.msra.mxu0 %v5842
    %6699 = vmatprep.subr.bf16.mxu0 %v5835
    %6700 = vmatpush2.bf16.msra.mxu0 %v5834
    %6701 = vmatprep.subr.bf16.mxu0 %v5827
    %6702 = vmatpush2.bf16.msra.mxu0 %v5826
    %6703 = vmatprep.subr.bf16.mxu0 %v5819
    %6704 = vmatpush2.bf16.msra.mxu0 %v5818
    %6705 = vmatprep.subr.bf16.mxu0 %v5811
    %6706 = vmatpush2.bf16.msra.mxu0 %v5810
    %6707 = vmatprep.subr.bf16.mxu0 %v5803
    %6708 = vmatpush2.bf16.msra.mxu0 %v5802
    %6709 = vmatprep.mubr.bf16.mxu0 %v3303
    %6710 = vmatmul.mubr.bf16.gmra.mxu0 %v3302
    %v6711 = vpop.f32.mrf.mxu0
    %v6712 = vadd.f32 %v6669, %v6711
    %v6713 = vpop.f32.mrf.mxu0
    %v6714 = vadd.f32 %v6671, %v6713
    %v6715 = vpop.f32.mrf.mxu0
    %v6716 = vadd.f32 %v6673, %v6715
    %v6717 = vpop.f32.mrf.mxu0
    %v6718 = vadd.f32 %v6675, %v6717
    %6719 = vdwg.mxu0
    %6720 = vmatprep.subr.bf16.mxu0 %v5413
    %6721 = vmatpush1.bf16.msra.mxu0 %v5412
    %6722 = vmatprep.subr.bf16.mxu0 %v5405
    %6723 = vmatpush1.bf16.msra.mxu0 %v5404
    %6724 = vmatprep.subr.bf16.mxu0 %v5397
    %6725 = vmatpush1.bf16.msra.mxu0 %v5396
    %6726 = vmatprep.subr.bf16.mxu0 %v5389
    %6727 = vmatpush1.bf16.msra.mxu0 %v5388
    %6728 = vmatprep.subr.bf16.mxu0 %v5381
    %6729 = vmatpush1.bf16.msra.mxu0 %v5380
    %6730 = vmatprep.subr.bf16.mxu0 %v5373
    %6731 = vmatpush1.bf16.msra.mxu0 %v5372
    %6732 = vmatprep.subr.bf16.mxu0 %v5365
    %6733 = vmatpush1.bf16.msra.mxu0 %v5364
    %6734 = vmatprep.subr.bf16.mxu0 %v5357
    %6735 = vmatpush1.bf16.msra.mxu0 %v5356
    %6736 = vmatprep.subr.bf16.mxu0 %v5477
    %6737 = vmatpush2.bf16.msra.mxu0 %v5476
    %6738 = vmatprep.subr.bf16.mxu0 %v5469
    %6739 = vmatpush2.bf16.msra.mxu0 %v5468
    %6740 = vmatprep.subr.bf16.mxu0 %v5461
    %6741 = vmatpush2.bf16.msra.mxu0 %v5460
    %6742 = vmatprep.subr.bf16.mxu0 %v5453
    %6743 = vmatpush2.bf16.msra.mxu0 %v5452
    %6744 = vmatprep.subr.bf16.mxu0 %v5445
    %6745 = vmatpush2.bf16.msra.mxu0 %v5444
    %6746 = vmatprep.subr.bf16.mxu0 %v5437
    %6747 = vmatpush2.bf16.msra.mxu0 %v5436
    %6748 = vmatprep.subr.bf16.mxu0 %v5429
    %6749 = vmatpush2.bf16.msra.mxu0 %v5428
    %6750 = vmatprep.subr.bf16.mxu0 %v5421
    %6751 = vmatpush2.bf16.msra.mxu0 %v5420
    %6752 = vmatprep.mubr.bf16.mxu0 %v3297
    %6753 = vmatmul.mubr.bf16.gmra.mxu0 %v3296
    %v6754 = vpop.f32.mrf.mxu0
    %v6755 = vadd.f32 0.0, %v6754
    %v6756 = vpop.f32.mrf.mxu0
    %v6757 = vadd.f32 0.0, %v6756
    %v6758 = vpop.f32.mrf.mxu0
    %v6759 = vadd.f32 0.0, %v6758
    %v6760 = vpop.f32.mrf.mxu0
    %v6761 = vadd.f32 0.0, %v6760
    %6762 = vdwg.mxu0
    %6763 = vmatprep.subr.bf16.mxu0 %v5541
    %6764 = vmatpush1.bf16.msra.mxu0 %v5540
    %6765 = vmatprep.subr.bf16.mxu0 %v5533
    %6766 = vmatpush1.bf16.msra.mxu0 %v5532
    %6767 = vmatprep.subr.bf16.mxu0 %v5525
    %6768 = vmatpush1.bf16.msra.mxu0 %v5524
    %6769 = vmatprep.subr.bf16.mxu0 %v5517
    %6770 = vmatpush1.bf16.msra.mxu0 %v5516
    %6771 = vmatprep.subr.bf16.mxu0 %v5509
    %6772 = vmatpush1.bf16.msra.mxu0 %v5508
    %6773 = vmatprep.subr.bf16.mxu0 %v5501
    %6774 = vmatpush1.bf16.msra.mxu0 %v5500
    %6775 = vmatprep.subr.bf16.mxu0 %v5493
    %6776 = vmatpush1.bf16.msra.mxu0 %v5492
    %6777 = vmatprep.subr.bf16.mxu0 %v5485
    %6778 = vmatpush1.bf16.msra.mxu0 %v5484
    %6779 = vmatprep.subr.bf16.mxu0 %v5605
    %6780 = vmatpush2.bf16.msra.mxu0 %v5604
    %6781 = vmatprep.subr.bf16.mxu0 %v5597
    %6782 = vmatpush2.bf16.msra.mxu0 %v5596
    %6783 = vmatprep.subr.bf16.mxu0 %v5589
    %6784 = vmatpush2.bf16.msra.mxu0 %v5588
    %6785 = vmatprep.subr.bf16.mxu0 %v5581
    %6786 = vmatpush2.bf16.msra.mxu0 %v5580
    %6787 = vmatprep.subr.bf16.mxu0 %v5573
    %6788 = vmatpush2.bf16.msra.mxu0 %v5572
    %6789 = vmatprep.subr.bf16.mxu0 %v5565
    %6790 = vmatpush2.bf16.msra.mxu0 %v5564
    %6791 = vmatprep.subr.bf16.mxu0 %v5557
    %6792 = vmatpush2.bf16.msra.mxu0 %v5556
    %6793 = vmatprep.subr.bf16.mxu0 %v5549
    %6794 = vmatpush2.bf16.msra.mxu0 %v5548
    %6795 = vmatprep.mubr.bf16.mxu0 %v3299
    %6796 = vmatmul.mubr.bf16.gmra.mxu0 %v3298
    %v6797 = vpop.f32.mrf.mxu0
    %v6798 = vadd.f32 %v6755, %v6797
    %v6799 = vpop.f32.mrf.mxu0
    %v6800 = vadd.f32 %v6757, %v6799
    %v6801 = vpop.f32.mrf.mxu0
    %v6802 = vadd.f32 %v6759, %v6801
    %v6803 = vpop.f32.mrf.mxu0
    %v6804 = vadd.f32 %v6761, %v6803
    %6805 = vdwg.mxu0
    %6806 = vmatprep.subr.bf16.mxu0 %v5669
    %6807 = vmatpush1.bf16.msra.mxu0 %v5668
    %6808 = vmatprep.subr.bf16.mxu0 %v5661
    %6809 = vmatpush1.bf16.msra.mxu0 %v5660
    %6810 = vmatprep.subr.bf16.mxu0 %v5653
    %6811 = vmatpush1.bf16.msra.mxu0 %v5652
    %6812 = vmatprep.subr.bf16.mxu0 %v5645
    %6813 = vmatpush1.bf16.msra.mxu0 %v5644
    %6814 = vmatprep.subr.bf16.mxu0 %v5637
    %6815 = vmatpush1.bf16.msra.mxu0 %v5636
    %6816 = vmatprep.subr.bf16.mxu0 %v5629
    %6817 = vmatpush1.bf16.msra.mxu0 %v5628
    %6818 = vmatprep.subr.bf16.mxu0 %v5621
    %6819 = vmatpush1.bf16.msra.mxu0 %v5620
    %6820 = vmatprep.subr.bf16.mxu0 %v5613
    %6821 = vmatpush1.bf16.msra.mxu0 %v5612
    %6822 = vmatprep.subr.bf16.mxu0 %v5733
    %6823 = vmatpush2.bf16.msra.mxu0 %v5732
    %6824 = vmatprep.subr.bf16.mxu0 %v5725
    %6825 = vmatpush2.bf16.msra.mxu0 %v5724
    %6826 = vmatprep.subr.bf16.mxu0 %v5717
    %6827 = vmatpush2.bf16.msra.mxu0 %v5716
    %6828 = vmatprep.subr.bf16.mxu0 %v5709
    %6829 = vmatpush2.bf16.msra.mxu0 %v5708
    %6830 = vmatprep.subr.bf16.mxu0 %v5701
    %6831 = vmatpush2.bf16.msra.mxu0 %v5700
    %6832 = vmatprep.subr.bf16.mxu0 %v5693
    %6833 = vmatpush2.bf16.msra.mxu0 %v5692
    %6834 = vmatprep.subr.bf16.mxu0 %v5685
    %6835 = vmatpush2.bf16.msra.mxu0 %v5684
    %6836 = vmatprep.subr.bf16.mxu0 %v5677
    %6837 = vmatpush2.bf16.msra.mxu0 %v5676
    %6838 = vmatprep.mubr.bf16.mxu0 %v3301
    %6839 = vmatmul.mubr.bf16.gmra.mxu0 %v3300
    %v6840 = vpop.f32.mrf.mxu0
    %v6841 = vadd.f32 %v6798, %v6840
    %v6842 = vpop.f32.mrf.mxu0
    %v6843 = vadd.f32 %v6800, %v6842
    %v6844 = vpop.f32.mrf.mxu0
    %v6845 = vadd.f32 %v6802, %v6844
    %v6846 = vpop.f32.mrf.mxu0
    %v6847 = vadd.f32 %v6804, %v6846
    %6848 = vdwg.mxu0
    %6849 = vmatprep.subr.bf16.mxu0 %v5797
    %6850 = vmatpush1.bf16.msra.mxu0 %v5796
    %6851 = vmatprep.subr.bf16.mxu0 %v5789
    %6852 = vmatpush1.bf16.msra.mxu0 %v5788
    %6853 = vmatprep.subr.bf16.mxu0 %v5781
    %6854 = vmatpush1.bf16.msra.mxu0 %v5780
    %6855 = vmatprep.subr.bf16.mxu0 %v5773
    %6856 = vmatpush1.bf16.msra.mxu0 %v5772
    %6857 = vmatprep.subr.bf16.mxu0 %v5765
    %6858 = vmatpush1.bf16.msra.mxu0 %v5764
    %6859 = vmatprep.subr.bf16.mxu0 %v5757
    %6860 = vmatpush1.bf16.msra.mxu0 %v5756
    %6861 = vmatprep.subr.bf16.mxu0 %v5749
    %6862 = vmatpush1.bf16.msra.mxu0 %v5748
    %6863 = vmatprep.subr.bf16.mxu0 %v5741
    %6864 = vmatpush1.bf16.msra.mxu0 %v5740
    %6865 = vmatprep.subr.bf16.mxu0 %v5861
    %6866 = vmatpush2.bf16.msra.mxu0 %v5860
    %6867 = vmatprep.subr.bf16.mxu0 %v5853
    %6868 = vmatpush2.bf16.msra.mxu0 %v5852
    %6869 = vmatprep.subr.bf16.mxu0 %v5845
    %6870 = vmatpush2.bf16.msra.mxu0 %v5844
    %6871 = vmatprep.subr.bf16.mxu0 %v5837
    %6872 = vmatpush2.bf16.msra.mxu0 %v5836
    %6873 = vmatprep.subr.bf16.mxu0 %v5829
    %6874 = vmatpush2.bf16.msra.mxu0 %v5828
    %6875 = vmatprep.subr.bf16.mxu0 %v5821
    %6876 = vmatpush2.bf16.msra.mxu0 %v5820
    %6877 = vmatprep.subr.bf16.mxu0 %v5813
    %6878 = vmatpush2.bf16.msra.mxu0 %v5812
    %6879 = vmatprep.subr.bf16.mxu0 %v5805
    %6880 = vmatpush2.bf16.msra.mxu0 %v5804
    %6881 = vmatprep.mubr.bf16.mxu0 %v3303
    %6882 = vmatmul.mubr.bf16.gmra.mxu0 %v3302
    %v6883 = vpop.f32.mrf.mxu0
    %v6884 = vadd.f32 %v6841, %v6883
    %v6885 = vpop.f32.mrf.mxu0
    %v6886 = vadd.f32 %v6843, %v6885
    %v6887 = vpop.f32.mrf.mxu0
    %v6888 = vadd.f32 %v6845, %v6887
    %v6889 = vpop.f32.mrf.mxu0
    %v6890 = vadd.f32 %v6847, %v6889
    %6891 = vdwg.mxu0
    %6892 = vmatprep.subr.bf16.mxu0 %v5415
    %6893 = vmatpush1.bf16.msra.mxu0 %v5414
    %6894 = vmatprep.subr.bf16.mxu0 %v5407
    %6895 = vmatpush1.bf16.msra.mxu0 %v5406
    %6896 = vmatprep.subr.bf16.mxu0 %v5399
    %6897 = vmatpush1.bf16.msra.mxu0 %v5398
    %6898 = vmatprep.subr.bf16.mxu0 %v5391
    %6899 = vmatpush1.bf16.msra.mxu0 %v5390
    %6900 = vmatprep.subr.bf16.mxu0 %v5383
    %6901 = vmatpush1.bf16.msra.mxu0 %v5382
    %6902 = vmatprep.subr.bf16.mxu0 %v5375
    %6903 = vmatpush1.bf16.msra.mxu0 %v5374
    %6904 = vmatprep.subr.bf16.mxu0 %v5367
    %6905 = vmatpush1.bf16.msra.mxu0 %v5366
    %6906 = vmatprep.subr.bf16.mxu0 %v5359
    %6907 = vmatpush1.bf16.msra.mxu0 %v5358
    %6908 = vmatprep.subr.bf16.mxu0 %v5479
    %6909 = vmatpush2.bf16.msra.mxu0 %v5478
    %6910 = vmatprep.subr.bf16.mxu0 %v5471
    %6911 = vmatpush2.bf16.msra.mxu0 %v5470
    %6912 = vmatprep.subr.bf16.mxu0 %v5463
    %6913 = vmatpush2.bf16.msra.mxu0 %v5462
    %6914 = vmatprep.subr.bf16.mxu0 %v5455
    %6915 = vmatpush2.bf16.msra.mxu0 %v5454
    %6916 = vmatprep.subr.bf16.mxu0 %v5447
    %6917 = vmatpush2.bf16.msra.mxu0 %v5446
    %6918 = vmatprep.subr.bf16.mxu0 %v5439
    %6919 = vmatpush2.bf16.msra.mxu0 %v5438
    %6920 = vmatprep.subr.bf16.mxu0 %v5431
    %6921 = vmatpush2.bf16.msra.mxu0 %v5430
    %6922 = vmatprep.subr.bf16.mxu0 %v5423
    %6923 = vmatpush2.bf16.msra.mxu0 %v5422
    %6924 = vmatprep.mubr.bf16.mxu0 %v3297
    %6925 = vmatmul.mubr.bf16.gmra.mxu0 %v3296
    %v6926 = vpop.f32.mrf.mxu0
    %v6927 = vadd.f32 0.0, %v6926
    %v6928 = vpop.f32.mrf.mxu0
    %v6929 = vadd.f32 0.0, %v6928
    %v6930 = vpop.f32.mrf.mxu0
    %v6931 = vadd.f32 0.0, %v6930
    %v6932 = vpop.f32.mrf.mxu0
    %v6933 = vadd.f32 0.0, %v6932
    %6934 = vdwg.mxu0
    %6935 = vmatprep.subr.bf16.mxu0 %v5543
    %6936 = vmatpush1.bf16.msra.mxu0 %v5542
    %6937 = vmatprep.subr.bf16.mxu0 %v5535
    %6938 = vmatpush1.bf16.msra.mxu0 %v5534
    %6939 = vmatprep.subr.bf16.mxu0 %v5527
    %6940 = vmatpush1.bf16.msra.mxu0 %v5526
    %6941 = vmatprep.subr.bf16.mxu0 %v5519
    %6942 = vmatpush1.bf16.msra.mxu0 %v5518
    %6943 = vmatprep.subr.bf16.mxu0 %v5511
    %6944 = vmatpush1.bf16.msra.mxu0 %v5510
    %6945 = vmatprep.subr.bf16.mxu0 %v5503
    %6946 = vmatpush1.bf16.msra.mxu0 %v5502
    %6947 = vmatprep.subr.bf16.mxu0 %v5495
    %6948 = vmatpush1.bf16.msra.mxu0 %v5494
    %6949 = vmatprep.subr.bf16.mxu0 %v5487
    %6950 = vmatpush1.bf16.msra.mxu0 %v5486
    %6951 = vmatprep.subr.bf16.mxu0 %v5607
    %6952 = vmatpush2.bf16.msra.mxu0 %v5606
    %6953 = vmatprep.subr.bf16.mxu0 %v5599
    %6954 = vmatpush2.bf16.msra.mxu0 %v5598
    %6955 = vmatprep.subr.bf16.mxu0 %v5591
    %6956 = vmatpush2.bf16.msra.mxu0 %v5590
    %6957 = vmatprep.subr.bf16.mxu0 %v5583
    %6958 = vmatpush2.bf16.msra.mxu0 %v5582
    %6959 = vmatprep.subr.bf16.mxu0 %v5575
    %6960 = vmatpush2.bf16.msra.mxu0 %v5574
    %6961 = vmatprep.subr.bf16.mxu0 %v5567
    %6962 = vmatpush2.bf16.msra.mxu0 %v5566
    %6963 = vmatprep.subr.bf16.mxu0 %v5559
    %6964 = vmatpush2.bf16.msra.mxu0 %v5558
    %6965 = vmatprep.subr.bf16.mxu0 %v5551
    %6966 = vmatpush2.bf16.msra.mxu0 %v5550
    %6967 = vmatprep.mubr.bf16.mxu0 %v3299
    %6968 = vmatmul.mubr.bf16.gmra.mxu0 %v3298
    %v6969 = vpop.f32.mrf.mxu0
    %v6970 = vadd.f32 %v6927, %v6969
    %v6971 = vpop.f32.mrf.mxu0
    %v6972 = vadd.f32 %v6929, %v6971
    %v6973 = vpop.f32.mrf.mxu0
    %v6974 = vadd.f32 %v6931, %v6973
    %v6975 = vpop.f32.mrf.mxu0
    %v6976 = vadd.f32 %v6933, %v6975
    %6977 = vdwg.mxu0
    %6978 = vmatprep.subr.bf16.mxu0 %v5671
    %6979 = vmatpush1.bf16.msra.mxu0 %v5670
    %6980 = vmatprep.subr.bf16.mxu0 %v5663
    %6981 = vmatpush1.bf16.msra.mxu0 %v5662
    %6982 = vmatprep.subr.bf16.mxu0 %v5655
    %6983 = vmatpush1.bf16.msra.mxu0 %v5654
    %6984 = vmatprep.subr.bf16.mxu0 %v5647
    %6985 = vmatpush1.bf16.msra.mxu0 %v5646
    %6986 = vmatprep.subr.bf16.mxu0 %v5639
    %6987 = vmatpush1.bf16.msra.mxu0 %v5638
    %6988 = vmatprep.subr.bf16.mxu0 %v5631
    %6989 = vmatpush1.bf16.msra.mxu0 %v5630
    %6990 = vmatprep.subr.bf16.mxu0 %v5623
    %6991 = vmatpush1.bf16.msra.mxu0 %v5622
    %6992 = vmatprep.subr.bf16.mxu0 %v5615
    %6993 = vmatpush1.bf16.msra.mxu0 %v5614
    %6994 = vmatprep.subr.bf16.mxu0 %v5735
    %6995 = vmatpush2.bf16.msra.mxu0 %v5734
    %6996 = vmatprep.subr.bf16.mxu0 %v5727
    %6997 = vmatpush2.bf16.msra.mxu0 %v5726
    %6998 = vmatprep.subr.bf16.mxu0 %v5719
    %6999 = vmatpush2.bf16.msra.mxu0 %v5718
    %7000 = vmatprep.subr.bf16.mxu0 %v5711
    %7001 = vmatpush2.bf16.msra.mxu0 %v5710
    %7002 = vmatprep.subr.bf16.mxu0 %v5703
    %7003 = vmatpush2.bf16.msra.mxu0 %v5702
    %7004 = vmatprep.subr.bf16.mxu0 %v5695
    %7005 = vmatpush2.bf16.msra.mxu0 %v5694
    %7006 = vmatprep.subr.bf16.mxu0 %v5687
    %7007 = vmatpush2.bf16.msra.mxu0 %v5686
    %7008 = vmatprep.subr.bf16.mxu0 %v5679
    %7009 = vmatpush2.bf16.msra.mxu0 %v5678
    %7010 = vmatprep.mubr.bf16.mxu0 %v3301
    %7011 = vmatmul.mubr.bf16.gmra.mxu0 %v3300
    %v7012 = vpop.f32.mrf.mxu0
    %v7013 = vadd.f32 %v6970, %v7012
    %v7014 = vpop.f32.mrf.mxu0
    %v7015 = vadd.f32 %v6972, %v7014
    %v7016 = vpop.f32.mrf.mxu0
    %v7017 = vadd.f32 %v6974, %v7016
    %v7018 = vpop.f32.mrf.mxu0
    %v7019 = vadd.f32 %v6976, %v7018
    %7020 = vdwg.mxu0
    %7021 = vmatprep.subr.bf16.mxu0 %v5799
    %7022 = vmatpush1.bf16.msra.mxu0 %v5798
    %7023 = vmatprep.subr.bf16.mxu0 %v5791
    %7024 = vmatpush1.bf16.msra.mxu0 %v5790
    %7025 = vmatprep.subr.bf16.mxu0 %v5783
    %7026 = vmatpush1.bf16.msra.mxu0 %v5782
    %7027 = vmatprep.subr.bf16.mxu0 %v5775
    %7028 = vmatpush1.bf16.msra.mxu0 %v5774
    %7029 = vmatprep.subr.bf16.mxu0 %v5767
    %7030 = vmatpush1.bf16.msra.mxu0 %v5766
    %7031 = vmatprep.subr.bf16.mxu0 %v5759
    %7032 = vmatpush1.bf16.msra.mxu0 %v5758
    %7033 = vmatprep.subr.bf16.mxu0 %v5751
    %7034 = vmatpush1.bf16.msra.mxu0 %v5750
    %7035 = vmatprep.subr.bf16.mxu0 %v5743
    %7036 = vmatpush1.bf16.msra.mxu0 %v5742
    %7037 = vmatprep.subr.bf16.mxu0 %v5863
    %7038 = vmatpush2.bf16.msra.mxu0 %v5862
    %7039 = vmatprep.subr.bf16.mxu0 %v5855
    %7040 = vmatpush2.bf16.msra.mxu0 %v5854
    %7041 = vmatprep.subr.bf16.mxu0 %v5847
    %7042 = vmatpush2.bf16.msra.mxu0 %v5846
    %7043 = vmatprep.subr.bf16.mxu0 %v5839
    %7044 = vmatpush2.bf16.msra.mxu0 %v5838
    %7045 = vmatprep.subr.bf16.mxu0 %v5831
    %7046 = vmatpush2.bf16.msra.mxu0 %v5830
    %7047 = vmatprep.subr.bf16.mxu0 %v5823
    %7048 = vmatpush2.bf16.msra.mxu0 %v5822
    %7049 = vmatprep.subr.bf16.mxu0 %v5815
    %7050 = vmatpush2.bf16.msra.mxu0 %v5814
    %7051 = vmatprep.subr.bf16.mxu0 %v5807
    %7052 = vmatpush2.bf16.msra.mxu0 %v5806
    %7053 = vmatprep.mubr.bf16.mxu0 %v3303
    %7054 = vmatmul.mubr.bf16.gmra.mxu0 %v3302
    %v7055 = vpop.f32.mrf.mxu0
    %v7056 = vadd.f32 %v7013, %v7055
    %v7057 = vpop.f32.mrf.mxu0
    %v7058 = vadd.f32 %v7015, %v7057
    %v7059 = vpop.f32.mrf.mxu0
    %v7060 = vadd.f32 %v7017, %v7059
    %v7061 = vpop.f32.mrf.mxu0
    %v7062 = vadd.f32 %v7019, %v7061
    %7063 = vdwg.mxu0
    %v7064 = vmax.f32 %v6540, 0.0
    %v7065 = vmax.f32 %v6542, 0.0
    %v7066 = vmax.f32 %v6712, 0.0
    %v7067 = vmax.f32 %v6714, 0.0
    %v7068 = vmax.f32 %v6884, 0.0
    %v7069 = vmax.f32 %v6886, 0.0
    %v7070 = vmax.f32 %v7056, 0.0
    %v7071 = vmax.f32 %v7058, 0.0
    %v7072 = vmax.f32 %v6544, 0.0
    %v7073 = vmax.f32 %v6546, 0.0
    %v7074 = vmax.f32 %v6716, 0.0
    %v7075 = vmax.f32 %v6718, 0.0
    %v7076 = vmax.f32 %v6888, 0.0
    %v7077 = vmax.f32 %v6890, 0.0
    %v7078 = vmax.f32 %v7060, 0.0
    %v7079 = vmax.f32 %v7062, 0.0
    %v7080 = vadd.f32 %v7064, %v7072
    %v7081 = vrot.slane %v7080, 4
    %v7082 = vadd.f32 %v7080, %v7081
    %v7083 = vrot.slane %v7082, 2
    %v7084 = vadd.f32 %v7082, %v7083
    %v7085 = vrot.slane %v7084, 1
    %v7086 = vadd.f32 %v7084, %v7085
    %v7087 = vadd.f32 %v7065, %v7073
    %v7088 = vrot.slane %v7087, 4
    %v7089 = vadd.f32 %v7087, %v7088
    %v7090 = vrot.slane %v7089, 2
    %v7091 = vadd.f32 %v7089, %v7090
    %v7092 = vrot.slane %v7091, 1
    %v7093 = vadd.f32 %v7091, %v7092
    %v7094 = vadd.f32 %v7066, %v7074
    %v7095 = vrot.slane %v7094, 4
    %v7096 = vadd.f32 %v7094, %v7095
    %v7097 = vrot.slane %v7096, 2
    %v7098 = vadd.f32 %v7096, %v7097
    %v7099 = vrot.slane %v7098, 1
    %v7100 = vadd.f32 %v7098, %v7099
    %v7101 = vadd.f32 %v7067, %v7075
    %v7102 = vrot.slane %v7101, 4
    %v7103 = vadd.f32 %v7101, %v7102
    %v7104 = vrot.slane %v7103, 2
    %v7105 = vadd.f32 %v7103, %v7104
    %v7106 = vrot.slane %v7105, 1
    %v7107 = vadd.f32 %v7105, %v7106
    %v7108 = vadd.f32 %v7068, %v7076
    %v7109 = vrot.slane %v7108, 4
    %v7110 = vadd.f32 %v7108, %v7109
    %v7111 = vrot.slane %v7110, 2
    %v7112 = vadd.f32 %v7110, %v7111
    %v7113 = vrot.slane %v7112, 1
    %v7114 = vadd.f32 %v7112, %v7113
    %v7115 = vadd.f32 %v7069, %v7077
    %v7116 = vrot.slane %v7115, 4
    %v7117 = vadd.f32 %v7115, %v7116
    %v7118 = vrot.slane %v7117, 2
    %v7119 = vadd.f32 %v7117, %v7118
    %v7120 = vrot.slane %v7119, 1
    %v7121 = vadd.f32 %v7119, %v7120
    %v7122 = vadd.f32 %v7070, %v7078
    %v7123 = vrot.slane %v7122, 4
    %v7124 = vadd.f32 %v7122, %v7123
    %v7125 = vrot.slane %v7124, 2
    %v7126 = vadd.f32 %v7124, %v7125
    %v7127 = vrot.slane %v7126, 1
    %v7128 = vadd.f32 %v7126, %v7127
    %v7129 = vadd.f32 %v7071, %v7079
    %v7130 = vrot.slane %v7129, 4
    %v7131 = vadd.f32 %v7129, %v7130
    %v7132 = vrot.slane %v7131, 2
    %v7133 = vadd.f32 %v7131, %v7132
    %v7134 = vrot.slane %v7133, 1
    %v7135 = vadd.f32 %v7133, %v7134
    %v7144 = vcombine.low %v7086, %v7093
    %v7145 = vcombine.low %v7100, %v7107
    %v7146 = vcombine.low %v7114, %v7121
    %v7147 = vcombine.low %v7128, %v7135
    %v7149 = vunpack.c.l.s4 1966171168
    %v7150 = vunpack.c.0.s8 %v7149
    %v7151 = vlaneseq
    %v7152 = vshrl.u32 %v7151, 7
    %v7153 = vsub.s32 %v7150, %v7152
    %v7154 = vrot.slane %v7144, %v7153
    %v7156 = vunpack.c.l.s4 1966171168
    %v7157 = vunpack.c.0.s8 %v7156
    %v7158 = vlaneseq
    %v7159 = vshrl.u32 %v7158, 7
    %v7160 = vsub.s32 %v7157, %v7159
    %v7161 = vrot.slane %v7145, %v7160
    %v7163 = vunpack.c.l.s4 1966171168
    %v7164 = vunpack.c.0.s8 %v7163
    %v7165 = vlaneseq
    %v7166 = vshrl.u32 %v7165, 7
    %v7167 = vsub.s32 %v7164, %v7166
    %v7168 = vrot.slane %v7146, %v7167
    %v7170 = vunpack.c.l.s4 1966171168
    %v7171 = vunpack.c.0.s8 %v7170
    %v7172 = vlaneseq
    %v7173 = vshrl.u32 %v7172, 7
    %v7174 = vsub.s32 %v7171, %v7173
    %v7175 = vrot.slane %v7147, %v7174
    %v7176 = vcombine.low %v7154, %v7161
    %v7177 = vcombine.low %v7168, %v7175
    %v7179 = vunpack.c.l.s4 1966171168
    %v7180 = vunpack.c.0.s8 %v7179
    %v7181 = vlaneseq
    %v7182 = vshrl.u32 %v7181, 7
    %v7183 = vsub.s32 %v7180, %v7182
    %v7184 = vrot.slane %v7176, %v7183
    %v7186 = vunpack.c.l.s4 1966171168
    %v7187 = vunpack.c.0.s8 %v7186
    %v7188 = vlaneseq
    %v7189 = vshrl.u32 %v7188, 7
    %v7190 = vsub.s32 %v7187, %v7189
    %v7191 = vrot.slane %v7177, %v7190
    %v7192 = vcombine.low %v7184, %v7191
    %7194 = vst [vmem:[#allocation13] sm:$0xff] %v7192
    %v7195 = vpack.c.bf16 %v7072, %v7064
    %v7196 = vpack.c.bf16 %v7073, %v7065
    %v7197 = vpack.c.bf16 %v7074, %v7066
    %v7198 = vpack.c.bf16 %v7075, %v7067
    %v7199 = vpack.c.bf16 %v7076, %v7068
    %v7200 = vpack.c.bf16 %v7077, %v7069
    %v7201 = vpack.c.bf16 %v7078, %v7070
    %v7202 = vpack.c.bf16 %v7079, %v7071
    %v7203 = vld [vmem:[#allocation8] sm:$0xf]
    %v7204 = vld [vmem:[#allocation8 + $0x4] sm:$0xf]
    %v7205 = vld [vmem:[#allocation8 + $0x8] sm:$0xf]
    %v7206 = vld [vmem:[#allocation8 + $0xc] sm:$0xf]
    %v7207 = vld [vmem:[#allocation8 + $0x10] sm:$0xf]
    %v7208 = vld [vmem:[#allocation8 + $0x14] sm:$0xf]
    %v7209 = vld [vmem:[#allocation8 + $0x18] sm:$0xf]
    %v7210 = vld [vmem:[#allocation8 + $0x1c] sm:$0xf]
    %v7211 = vld [vmem:[#allocation8 + $0x20] sm:$0xf]
    %v7212 = vld [vmem:[#allocation8 + $0x24] sm:$0xf]
    %v7213 = vld [vmem:[#allocation8 + $0x28] sm:$0xf]
    %v7214 = vld [vmem:[#allocation8 + $0x2c] sm:$0xf]
    %v7215 = vld [vmem:[#allocation8 + $0x30] sm:$0xf]
    %v7216 = vld [vmem:[#allocation8 + $0x34] sm:$0xf]
    %v7217 = vld [vmem:[#allocation8 + $0x38] sm:$0xf]
    %v7218 = vld [vmem:[#allocation8 + $0x3c] sm:$0xf]
    %v7219 = vld [vmem:[#allocation8 + $0x40] sm:$0xf]
    %v7220 = vld [vmem:[#allocation8 + $0x44] sm:$0xf]
    %v7221 = vld [vmem:[#allocation8 + $0x48] sm:$0xf]
    %v7222 = vld [vmem:[#allocation8 + $0x4c] sm:$0xf]
    %v7223 = vld [vmem:[#allocation8 + $0x50] sm:$0xf]
    %v7224 = vld [vmem:[#allocation8 + $0x54] sm:$0xf]
    %v7225 = vld [vmem:[#allocation8 + $0x58] sm:$0xf]
    %v7226 = vld [vmem:[#allocation8 + $0x5c] sm:$0xf]
    %v7227 = vld [vmem:[#allocation8 + $0x60] sm:$0xf]
    %v7228 = vld [vmem:[#allocation8 + $0x64] sm:$0xf]
    %v7229 = vld [vmem:[#allocation8 + $0x68] sm:$0xf]
    %v7230 = vld [vmem:[#allocation8 + $0x6c] sm:$0xf]
    %v7231 = vld [vmem:[#allocation8 + $0x70] sm:$0xf]
    %v7232 = vld [vmem:[#allocation8 + $0x74] sm:$0xf]
    %v7233 = vld [vmem:[#allocation8 + $0x78] sm:$0xf]
    %v7234 = vld [vmem:[#allocation8 + $0x7c] sm:$0xf]
    %v7235 = vld [vmem:[#allocation8 + $0x80] sm:$0xf]
    %v7236 = vld [vmem:[#allocation8 + $0x84] sm:$0xf]
    %v7237 = vld [vmem:[#allocation8 + $0x88] sm:$0xf]
    %v7238 = vld [vmem:[#allocation8 + $0x8c] sm:$0xf]
    %v7239 = vld [vmem:[#allocation8 + $0x90] sm:$0xf]
    %v7240 = vld [vmem:[#allocation8 + $0x94] sm:$0xf]
    %v7241 = vld [vmem:[#allocation8 + $0x98] sm:$0xf]
    %v7242 = vld [vmem:[#allocation8 + $0x9c] sm:$0xf]
    %v7243 = vld [vmem:[#allocation8 + $0xa0] sm:$0xf]
    %v7244 = vld [vmem:[#allocation8 + $0xa4] sm:$0xf]
    %v7245 = vld [vmem:[#allocation8 + $0xa8] sm:$0xf]
    %v7246 = vld [vmem:[#allocation8 + $0xac] sm:$0xf]
    %v7247 = vld [vmem:[#allocation8 + $0xb0] sm:$0xf]
    %v7248 = vld [vmem:[#allocation8 + $0xb4] sm:$0xf]
    %v7249 = vld [vmem:[#allocation8 + $0xb8] sm:$0xf]
    %v7250 = vld [vmem:[#allocation8 + $0xbc] sm:$0xf]
    %v7251 = vld [vmem:[#allocation8 + $0xc0] sm:$0xf]
    %v7252 = vld [vmem:[#allocation8 + $0xc4] sm:$0xf]
    %v7253 = vld [vmem:[#allocation8 + $0xc8] sm:$0xf]
    %v7254 = vld [vmem:[#allocation8 + $0xcc] sm:$0xf]
    %v7255 = vld [vmem:[#allocation8 + $0xd0] sm:$0xf]
    %v7256 = vld [vmem:[#allocation8 + $0xd4] sm:$0xf]
    %v7257 = vld [vmem:[#allocation8 + $0xd8] sm:$0xf]
    %v7258 = vld [vmem:[#allocation8 + $0xdc] sm:$0xf]
    %v7259 = vld [vmem:[#allocation8 + $0xe0] sm:$0xf]
    %v7260 = vld [vmem:[#allocation8 + $0xe4] sm:$0xf]
    %v7261 = vld [vmem:[#allocation8 + $0xe8] sm:$0xf]
    %v7262 = vld [vmem:[#allocation8 + $0xec] sm:$0xf]
    %v7263 = vld [vmem:[#allocation8 + $0xf0] sm:$0xf]
    %v7264 = vld [vmem:[#allocation8 + $0xf4] sm:$0xf]
    %v7265 = vld [vmem:[#allocation8 + $0xf8] sm:$0xf]
    %v7266 = vld [vmem:[#allocation8 + $0xfc] sm:$0xf]
    %v7267 = vld [vmem:[#allocation8 + $0x100] sm:$0xf]
    %v7268 = vld [vmem:[#allocation8 + $0x104] sm:$0xf]
    %v7269 = vld [vmem:[#allocation8 + $0x108] sm:$0xf]
    %v7270 = vld [vmem:[#allocation8 + $0x10c] sm:$0xf]
    %v7271 = vld [vmem:[#allocation8 + $0x110] sm:$0xf]
    %v7272 = vld [vmem:[#allocation8 + $0x114] sm:$0xf]
    %v7273 = vld [vmem:[#allocation8 + $0x118] sm:$0xf]
    %v7274 = vld [vmem:[#allocation8 + $0x11c] sm:$0xf]
    %v7275 = vld [vmem:[#allocation8 + $0x120] sm:$0xf]
    %v7276 = vld [vmem:[#allocation8 + $0x124] sm:$0xf]
    %v7277 = vld [vmem:[#allocation8 + $0x128] sm:$0xf]
    %v7278 = vld [vmem:[#allocation8 + $0x12c] sm:$0xf]
    %v7279 = vld [vmem:[#allocation8 + $0x130] sm:$0xf]
    %v7280 = vld [vmem:[#allocation8 + $0x134] sm:$0xf]
    %v7281 = vld [vmem:[#allocation8 + $0x138] sm:$0xf]
    %v7282 = vld [vmem:[#allocation8 + $0x13c] sm:$0xf]
    %v7283 = vld [vmem:[#allocation8 + $0x140] sm:$0xf]
    %v7284 = vld [vmem:[#allocation8 + $0x144] sm:$0xf]
    %v7285 = vld [vmem:[#allocation8 + $0x148] sm:$0xf]
    %v7286 = vld [vmem:[#allocation8 + $0x14c] sm:$0xf]
    %v7287 = vld [vmem:[#allocation8 + $0x150] sm:$0xf]
    %v7288 = vld [vmem:[#allocation8 + $0x154] sm:$0xf]
    %v7289 = vld [vmem:[#allocation8 + $0x158] sm:$0xf]
    %v7290 = vld [vmem:[#allocation8 + $0x15c] sm:$0xf]
    %v7291 = vld [vmem:[#allocation8 + $0x160] sm:$0xf]
    %v7292 = vld [vmem:[#allocation8 + $0x164] sm:$0xf]
    %v7293 = vld [vmem:[#allocation8 + $0x168] sm:$0xf]
    %v7294 = vld [vmem:[#allocation8 + $0x16c] sm:$0xf]
    %v7295 = vld [vmem:[#allocation8 + $0x170] sm:$0xf]
    %v7296 = vld [vmem:[#allocation8 + $0x174] sm:$0xf]
    %v7297 = vld [vmem:[#allocation8 + $0x178] sm:$0xf]
    %v7298 = vld [vmem:[#allocation8 + $0x17c] sm:$0xf]
    %v7299 = vld [vmem:[#allocation8 + $0x180] sm:$0xf]
    %v7300 = vld [vmem:[#allocation8 + $0x184] sm:$0xf]
    %v7301 = vld [vmem:[#allocation8 + $0x188] sm:$0xf]
    %v7302 = vld [vmem:[#allocation8 + $0x18c] sm:$0xf]
    %v7303 = vld [vmem:[#allocation8 + $0x190] sm:$0xf]
    %v7304 = vld [vmem:[#allocation8 + $0x194] sm:$0xf]
    %v7305 = vld [vmem:[#allocation8 + $0x198] sm:$0xf]
    %v7306 = vld [vmem:[#allocation8 + $0x19c] sm:$0xf]
    %v7307 = vld [vmem:[#allocation8 + $0x1a0] sm:$0xf]
    %v7308 = vld [vmem:[#allocation8 + $0x1a4] sm:$0xf]
    %v7309 = vld [vmem:[#allocation8 + $0x1a8] sm:$0xf]
    %v7310 = vld [vmem:[#allocation8 + $0x1ac] sm:$0xf]
    %v7311 = vld [vmem:[#allocation8 + $0x1b0] sm:$0xf]
    %v7312 = vld [vmem:[#allocation8 + $0x1b4] sm:$0xf]
    %v7313 = vld [vmem:[#allocation8 + $0x1b8] sm:$0xf]
    %v7314 = vld [vmem:[#allocation8 + $0x1bc] sm:$0xf]
    %v7315 = vld [vmem:[#allocation8 + $0x1c0] sm:$0xf]
    %v7316 = vld [vmem:[#allocation8 + $0x1c4] sm:$0xf]
    %v7317 = vld [vmem:[#allocation8 + $0x1c8] sm:$0xf]
    %v7318 = vld [vmem:[#allocation8 + $0x1cc] sm:$0xf]
    %v7319 = vld [vmem:[#allocation8 + $0x1d0] sm:$0xf]
    %v7320 = vld [vmem:[#allocation8 + $0x1d4] sm:$0xf]
    %v7321 = vld [vmem:[#allocation8 + $0x1d8] sm:$0xf]
    %v7322 = vld [vmem:[#allocation8 + $0x1dc] sm:$0xf]
    %v7323 = vld [vmem:[#allocation8 + $0x1e0] sm:$0xf]
    %v7324 = vld [vmem:[#allocation8 + $0x1e4] sm:$0xf]
    %v7325 = vld [vmem:[#allocation8 + $0x1e8] sm:$0xf]
    %v7326 = vld [vmem:[#allocation8 + $0x1ec] sm:$0xf]
    %v7327 = vld [vmem:[#allocation8 + $0x1f0] sm:$0xf]
    %v7328 = vld [vmem:[#allocation8 + $0x1f4] sm:$0xf]
    %v7329 = vld [vmem:[#allocation8 + $0x1f8] sm:$0xf]
    %v7330 = vld [vmem:[#allocation8 + $0x1fc] sm:$0xf]
    %v7459 = vunpack.c.l.b16 %v7203
    %v7460 = vunpack.c.l.b16 %v7204
    %v7461 = vunpack.c.l.b16 %v7205
    %v7462 = vunpack.c.l.b16 %v7206
    %v7463 = vunpack.c.l.b16 %v7207
    %v7464 = vunpack.c.l.b16 %v7208
    %v7465 = vunpack.c.l.b16 %v7209
    %v7466 = vunpack.c.l.b16 %v7210
    %v7467 = vunpack.c.l.b16 %v7211
    %v7468 = vunpack.c.l.b16 %v7212
    %v7469 = vunpack.c.l.b16 %v7213
    %v7470 = vunpack.c.l.b16 %v7214
    %v7471 = vunpack.c.l.b16 %v7215
    %v7472 = vunpack.c.l.b16 %v7216
    %v7473 = vunpack.c.l.b16 %v7217
    %v7474 = vunpack.c.l.b16 %v7218
    %v7475 = vunpack.c.l.b16 %v7219
    %v7476 = vunpack.c.l.b16 %v7220
    %v7477 = vunpack.c.l.b16 %v7221
    %v7478 = vunpack.c.l.b16 %v7222
    %v7479 = vunpack.c.l.b16 %v7223
    %v7480 = vunpack.c.l.b16 %v7224
    %v7481 = vunpack.c.l.b16 %v7225
    %v7482 = vunpack.c.l.b16 %v7226
    %v7483 = vunpack.c.l.b16 %v7227
    %v7484 = vunpack.c.l.b16 %v7228
    %v7485 = vunpack.c.l.b16 %v7229
    %v7486 = vunpack.c.l.b16 %v7230
    %v7487 = vunpack.c.l.b16 %v7231
    %v7488 = vunpack.c.l.b16 %v7232
    %v7489 = vunpack.c.l.b16 %v7233
    %v7490 = vunpack.c.l.b16 %v7234
    %v7491 = vunpack.c.l.b16 %v7235
    %v7492 = vunpack.c.l.b16 %v7236
    %v7493 = vunpack.c.l.b16 %v7237
    %v7494 = vunpack.c.l.b16 %v7238
    %v7495 = vunpack.c.l.b16 %v7239
    %v7496 = vunpack.c.l.b16 %v7240
    %v7497 = vunpack.c.l.b16 %v7241
    %v7498 = vunpack.c.l.b16 %v7242
    %v7499 = vunpack.c.l.b16 %v7243
    %v7500 = vunpack.c.l.b16 %v7244
    %v7501 = vunpack.c.l.b16 %v7245
    %v7502 = vunpack.c.l.b16 %v7246
    %v7503 = vunpack.c.l.b16 %v7247
    %v7504 = vunpack.c.l.b16 %v7248
    %v7505 = vunpack.c.l.b16 %v7249
    %v7506 = vunpack.c.l.b16 %v7250
    %v7507 = vunpack.c.l.b16 %v7251
    %v7508 = vunpack.c.l.b16 %v7252
    %v7509 = vunpack.c.l.b16 %v7253
    %v7510 = vunpack.c.l.b16 %v7254
    %v7511 = vunpack.c.l.b16 %v7255
    %v7512 = vunpack.c.l.b16 %v7256
    %v7513 = vunpack.c.l.b16 %v7257
    %v7514 = vunpack.c.l.b16 %v7258
    %v7515 = vunpack.c.l.b16 %v7259
    %v7516 = vunpack.c.l.b16 %v7260
    %v7517 = vunpack.c.l.b16 %v7261
    %v7518 = vunpack.c.l.b16 %v7262
    %v7519 = vunpack.c.l.b16 %v7263
    %v7520 = vunpack.c.l.b16 %v7264
    %v7521 = vunpack.c.l.b16 %v7265
    %v7522 = vunpack.c.l.b16 %v7266
    %v7523 = vunpack.c.l.b16 %v7267
    %v7524 = vunpack.c.l.b16 %v7268
    %v7525 = vunpack.c.l.b16 %v7269
    %v7526 = vunpack.c.l.b16 %v7270
    %v7527 = vunpack.c.l.b16 %v7271
    %v7528 = vunpack.c.l.b16 %v7272
    %v7529 = vunpack.c.l.b16 %v7273
    %v7530 = vunpack.c.l.b16 %v7274
    %v7531 = vunpack.c.l.b16 %v7275
    %v7532 = vunpack.c.l.b16 %v7276
    %v7533 = vunpack.c.l.b16 %v7277
    %v7534 = vunpack.c.l.b16 %v7278
    %v7535 = vunpack.c.l.b16 %v7279
    %v7536 = vunpack.c.l.b16 %v7280
    %v7537 = vunpack.c.l.b16 %v7281
    %v7538 = vunpack.c.l.b16 %v7282
    %v7539 = vunpack.c.l.b16 %v7283
    %v7540 = vunpack.c.l.b16 %v7284
    %v7541 = vunpack.c.l.b16 %v7285
    %v7542 = vunpack.c.l.b16 %v7286
    %v7543 = vunpack.c.l.b16 %v7287
    %v7544 = vunpack.c.l.b16 %v7288
    %v7545 = vunpack.c.l.b16 %v7289
    %v7546 = vunpack.c.l.b16 %v7290
    %v7547 = vunpack.c.l.b16 %v7291
    %v7548 = vunpack.c.l.b16 %v7292
    %v7549 = vunpack.c.l.b16 %v7293
    %v7550 = vunpack.c.l.b16 %v7294
    %v7551 = vunpack.c.l.b16 %v7295
    %v7552 = vunpack.c.l.b16 %v7296
    %v7553 = vunpack.c.l.b16 %v7297
    %v7554 = vunpack.c.l.b16 %v7298
    %v7555 = vunpack.c.l.b16 %v7299
    %v7556 = vunpack.c.l.b16 %v7300
    %v7557 = vunpack.c.l.b16 %v7301
    %v7558 = vunpack.c.l.b16 %v7302
    %v7559 = vunpack.c.l.b16 %v7303
    %v7560 = vunpack.c.l.b16 %v7304
    %v7561 = vunpack.c.l.b16 %v7305
    %v7562 = vunpack.c.l.b16 %v7306
    %v7563 = vunpack.c.l.b16 %v7307
    %v7564 = vunpack.c.l.b16 %v7308
    %v7565 = vunpack.c.l.b16 %v7309
    %v7566 = vunpack.c.l.b16 %v7310
    %v7567 = vunpack.c.l.b16 %v7311
    %v7568 = vunpack.c.l.b16 %v7312
    %v7569 = vunpack.c.l.b16 %v7313
    %v7570 = vunpack.c.l.b16 %v7314
    %v7571 = vunpack.c.l.b16 %v7315
    %v7572 = vunpack.c.l.b16 %v7316
    %v7573 = vunpack.c.l.b16 %v7317
    %v7574 = vunpack.c.l.b16 %v7318
    %v7575 = vunpack.c.l.b16 %v7319
    %v7576 = vunpack.c.l.b16 %v7320
    %v7577 = vunpack.c.l.b16 %v7321
    %v7578 = vunpack.c.l.b16 %v7322
    %v7579 = vunpack.c.l.b16 %v7323
    %v7580 = vunpack.c.l.b16 %v7324
    %v7581 = vunpack.c.l.b16 %v7325
    %v7582 = vunpack.c.l.b16 %v7326
    %v7583 = vunpack.c.l.b16 %v7327
    %v7584 = vunpack.c.l.b16 %v7328
    %v7585 = vunpack.c.l.b16 %v7329
    %v7586 = vunpack.c.l.b16 %v7330
    %v7587 = vpack.c.b16 %v7460, %v7459
    %v7588 = vpack.c.b16 %v7462, %v7461
    %v7589 = vpack.c.b16 %v7464, %v7463
    %v7590 = vpack.c.b16 %v7466, %v7465
    %v7591 = vpack.c.b16 %v7468, %v7467
    %v7592 = vpack.c.b16 %v7470, %v7469
    %v7593 = vpack.c.b16 %v7472, %v7471
    %v7594 = vpack.c.b16 %v7474, %v7473
    %v7595 = vpack.c.b16 %v7476, %v7475
    %v7596 = vpack.c.b16 %v7478, %v7477
    %v7597 = vpack.c.b16 %v7480, %v7479
    %v7598 = vpack.c.b16 %v7482, %v7481
    %v7599 = vpack.c.b16 %v7484, %v7483
    %v7600 = vpack.c.b16 %v7486, %v7485
    %v7601 = vpack.c.b16 %v7488, %v7487
    %v7602 = vpack.c.b16 %v7490, %v7489
    %v7603 = vpack.c.b16 %v7492, %v7491
    %v7604 = vpack.c.b16 %v7494, %v7493
    %v7605 = vpack.c.b16 %v7496, %v7495
    %v7606 = vpack.c.b16 %v7498, %v7497
    %v7607 = vpack.c.b16 %v7500, %v7499
    %v7608 = vpack.c.b16 %v7502, %v7501
    %v7609 = vpack.c.b16 %v7504, %v7503
    %v7610 = vpack.c.b16 %v7506, %v7505
    %v7611 = vpack.c.b16 %v7508, %v7507
    %v7612 = vpack.c.b16 %v7510, %v7509
    %v7613 = vpack.c.b16 %v7512, %v7511
    %v7614 = vpack.c.b16 %v7514, %v7513
    %v7615 = vpack.c.b16 %v7516, %v7515
    %v7616 = vpack.c.b16 %v7518, %v7517
    %v7617 = vpack.c.b16 %v7520, %v7519
    %v7618 = vpack.c.b16 %v7522, %v7521
    %v7619 = vpack.c.b16 %v7524, %v7523
    %v7620 = vpack.c.b16 %v7526, %v7525
    %v7621 = vpack.c.b16 %v7528, %v7527
    %v7622 = vpack.c.b16 %v7530, %v7529
    %v7623 = vpack.c.b16 %v7532, %v7531
    %v7624 = vpack.c.b16 %v7534, %v7533
    %v7625 = vpack.c.b16 %v7536, %v7535
    %v7626 = vpack.c.b16 %v7538, %v7537
    %v7627 = vpack.c.b16 %v7540, %v7539
    %v7628 = vpack.c.b16 %v7542, %v7541
    %v7629 = vpack.c.b16 %v7544, %v7543
    %v7630 = vpack.c.b16 %v7546, %v7545
    %v7631 = vpack.c.b16 %v7548, %v7547
    %v7632 = vpack.c.b16 %v7550, %v7549
    %v7633 = vpack.c.b16 %v7552, %v7551
    %v7634 = vpack.c.b16 %v7554, %v7553
    %v7635 = vpack.c.b16 %v7556, %v7555
    %v7636 = vpack.c.b16 %v7558, %v7557
    %v7637 = vpack.c.b16 %v7560, %v7559
    %v7638 = vpack.c.b16 %v7562, %v7561
    %v7639 = vpack.c.b16 %v7564, %v7563
    %v7640 = vpack.c.b16 %v7566, %v7565
    %v7641 = vpack.c.b16 %v7568, %v7567
    %v7642 = vpack.c.b16 %v7570, %v7569
    %v7643 = vpack.c.b16 %v7572, %v7571
    %v7644 = vpack.c.b16 %v7574, %v7573
    %v7645 = vpack.c.b16 %v7576, %v7575
    %v7646 = vpack.c.b16 %v7578, %v7577
    %v7647 = vpack.c.b16 %v7580, %v7579
    %v7648 = vpack.c.b16 %v7582, %v7581
    %v7649 = vpack.c.b16 %v7584, %v7583
    %v7650 = vpack.c.b16 %v7586, %v7585
    %7715 = vmatprep.subr.bf16.mxu0 0
    %7716 = vmatpush1.bf16.msra.mxu0 %v7594
    %7717 = vmatprep.subr.bf16.mxu0 0
    %7718 = vmatpush1.bf16.msra.mxu0 %v7593
    %7719 = vmatprep.subr.bf16.mxu0 0
    %7720 = vmatpush1.bf16.msra.mxu0 %v7592
    %7721 = vmatprep.subr.bf16.mxu0 0
    %7722 = vmatpush1.bf16.msra.mxu0 %v7591
    %7723 = vmatprep.subr.bf16.mxu0 0
    %7724 = vmatpush1.bf16.msra.mxu0 %v7590
    %7725 = vmatprep.subr.bf16.mxu0 0
    %7726 = vmatpush1.bf16.msra.mxu0 %v7589
    %7727 = vmatprep.subr.bf16.mxu0 0
    %7728 = vmatpush1.bf16.msra.mxu0 %v7588
    %7729 = vmatprep.subr.bf16.mxu0 0
    %7730 = vmatpush1.bf16.msra.mxu0 %v7587
    %7731 = vmatprep.subr.bf16.mxu0 0
    %7732 = vmatpush2.bf16.msra.mxu0 %v7602
    %7733 = vmatprep.subr.bf16.mxu0 0
    %7734 = vmatpush2.bf16.msra.mxu0 %v7601
    %7735 = vmatprep.subr.bf16.mxu0 0
    %7736 = vmatpush2.bf16.msra.mxu0 %v7600
    %7737 = vmatprep.subr.bf16.mxu0 0
    %7738 = vmatpush2.bf16.msra.mxu0 %v7599
    %7739 = vmatprep.subr.bf16.mxu0 0
    %7740 = vmatpush2.bf16.msra.mxu0 %v7598
    %7741 = vmatprep.subr.bf16.mxu0 0
    %7742 = vmatpush2.bf16.msra.mxu0 %v7597
    %7743 = vmatprep.subr.bf16.mxu0 0
    %7744 = vmatpush2.bf16.msra.mxu0 %v7596
    %7745 = vmatprep.subr.bf16.mxu0 0
    %7746 = vmatpush2.bf16.msra.mxu0 %v7595
    %7747 = vmatprep.mubr.bf16.mxu0 %v7196
    %7748 = vmatmul.mubr.bf16.gmra.mxu0 %v7195
    %v7749 = vpop.f32.mrf.mxu0
    %v7750 = vadd.f32 0.0, %v7749
    %v7751 = vpop.f32.mrf.mxu0
    %v7752 = vpop.f32.mrf.mxu0
    %v7753 = vadd.f32 0.0, %v7752
    %v7754 = vpop.f32.mrf.mxu0
    %7755 = vdwg.mxu0
    %7756 = vmatprep.subr.bf16.mxu0 0
    %7757 = vmatpush1.bf16.msra.mxu0 %v7610
    %7758 = vmatprep.subr.bf16.mxu0 0
    %7759 = vmatpush1.bf16.msra.mxu0 %v7609
    %7760 = vmatprep.subr.bf16.mxu0 0
    %7761 = vmatpush1.bf16.msra.mxu0 %v7608
    %7762 = vmatprep.subr.bf16.mxu0 0
    %7763 = vmatpush1.bf16.msra.mxu0 %v7607
    %7764 = vmatprep.subr.bf16.mxu0 0
    %7765 = vmatpush1.bf16.msra.mxu0 %v7606
    %7766 = vmatprep.subr.bf16.mxu0 0
    %7767 = vmatpush1.bf16.msra.mxu0 %v7605
    %7768 = vmatprep.subr.bf16.mxu0 0
    %7769 = vmatpush1.bf16.msra.mxu0 %v7604
    %7770 = vmatprep.subr.bf16.mxu0 0
    %7771 = vmatpush1.bf16.msra.mxu0 %v7603
    %7772 = vmatprep.subr.bf16.mxu0 0
    %7773 = vmatpush2.bf16.msra.mxu0 %v7618
    %7774 = vmatprep.subr.bf16.mxu0 0
    %7775 = vmatpush2.bf16.msra.mxu0 %v7617
    %7776 = vmatprep.subr.bf16.mxu0 0
    %7777 = vmatpush2.bf16.msra.mxu0 %v7616
    %7778 = vmatprep.subr.bf16.mxu0 0
    %7779 = vmatpush2.bf16.msra.mxu0 %v7615
    %7780 = vmatprep.subr.bf16.mxu0 0
    %7781 = vmatpush2.bf16.msra.mxu0 %v7614
    %7782 = vmatprep.subr.bf16.mxu0 0
    %7783 = vmatpush2.bf16.msra.mxu0 %v7613
    %7784 = vmatprep.subr.bf16.mxu0 0
    %7785 = vmatpush2.bf16.msra.mxu0 %v7612
    %7786 = vmatprep.subr.bf16.mxu0 0
    %7787 = vmatpush2.bf16.msra.mxu0 %v7611
    %7788 = vmatprep.mubr.bf16.mxu0 %v7198
    %7789 = vmatmul.mubr.bf16.gmra.mxu0 %v7197
    %v7790 = vpop.f32.mrf.mxu0
    %v7791 = vadd.f32 %v7750, %v7790
    %v7792 = vpop.f32.mrf.mxu0
    %v7793 = vpop.f32.mrf.mxu0
    %v7794 = vadd.f32 %v7753, %v7793
    %v7795 = vpop.f32.mrf.mxu0
    %7796 = vdwg.mxu0
    %7797 = vmatprep.subr.bf16.mxu0 0
    %7798 = vmatpush1.bf16.msra.mxu0 %v7626
    %7799 = vmatprep.subr.bf16.mxu0 0
    %7800 = vmatpush1.bf16.msra.mxu0 %v7625
    %7801 = vmatprep.subr.bf16.mxu0 0
    %7802 = vmatpush1.bf16.msra.mxu0 %v7624
    %7803 = vmatprep.subr.bf16.mxu0 0
    %7804 = vmatpush1.bf16.msra.mxu0 %v7623
    %7805 = vmatprep.subr.bf16.mxu0 0
    %7806 = vmatpush1.bf16.msra.mxu0 %v7622
    %7807 = vmatprep.subr.bf16.mxu0 0
    %7808 = vmatpush1.bf16.msra.mxu0 %v7621
    %7809 = vmatprep.subr.bf16.mxu0 0
    %7810 = vmatpush1.bf16.msra.mxu0 %v7620
    %7811 = vmatprep.subr.bf16.mxu0 0
    %7812 = vmatpush1.bf16.msra.mxu0 %v7619
    %7813 = vmatprep.subr.bf16.mxu0 0
    %7814 = vmatpush2.bf16.msra.mxu0 %v7634
    %7815 = vmatprep.subr.bf16.mxu0 0
    %7816 = vmatpush2.bf16.msra.mxu0 %v7633
    %7817 = vmatprep.subr.bf16.mxu0 0
    %7818 = vmatpush2.bf16.msra.mxu0 %v7632
    %7819 = vmatprep.subr.bf16.mxu0 0
    %7820 = vmatpush2.bf16.msra.mxu0 %v7631
    %7821 = vmatprep.subr.bf16.mxu0 0
    %7822 = vmatpush2.bf16.msra.mxu0 %v7630
    %7823 = vmatprep.subr.bf16.mxu0 0
    %7824 = vmatpush2.bf16.msra.mxu0 %v7629
    %7825 = vmatprep.subr.bf16.mxu0 0
    %7826 = vmatpush2.bf16.msra.mxu0 %v7628
    %7827 = vmatprep.subr.bf16.mxu0 0
    %7828 = vmatpush2.bf16.msra.mxu0 %v7627
    %7829 = vmatprep.mubr.bf16.mxu0 %v7200
    %7830 = vmatmul.mubr.bf16.gmra.mxu0 %v7199
    %v7831 = vpop.f32.mrf.mxu0
    %v7832 = vadd.f32 %v7791, %v7831
    %v7833 = vpop.f32.mrf.mxu0
    %v7834 = vpop.f32.mrf.mxu0
    %v7835 = vadd.f32 %v7794, %v7834
    %v7836 = vpop.f32.mrf.mxu0
    %7837 = vdwg.mxu0
    %7838 = vmatprep.subr.bf16.mxu0 0
    %7839 = vmatpush1.bf16.msra.mxu0 %v7642
    %7840 = vmatprep.subr.bf16.mxu0 0
    %7841 = vmatpush1.bf16.msra.mxu0 %v7641
    %7842 = vmatprep.subr.bf16.mxu0 0
    %7843 = vmatpush1.bf16.msra.mxu0 %v7640
    %7844 = vmatprep.subr.bf16.mxu0 0
    %7845 = vmatpush1.bf16.msra.mxu0 %v7639
    %7846 = vmatprep.subr.bf16.mxu0 0
    %7847 = vmatpush1.bf16.msra.mxu0 %v7638
    %7848 = vmatprep.subr.bf16.mxu0 0
    %7849 = vmatpush1.bf16.msra.mxu0 %v7637
    %7850 = vmatprep.subr.bf16.mxu0 0
    %7851 = vmatpush1.bf16.msra.mxu0 %v7636
    %7852 = vmatprep.subr.bf16.mxu0 0
    %7853 = vmatpush1.bf16.msra.mxu0 %v7635
    %7854 = vmatprep.subr.bf16.mxu0 0
    %7855 = vmatpush2.bf16.msra.mxu0 %v7650
    %7856 = vmatprep.subr.bf16.mxu0 0
    %7857 = vmatpush2.bf16.msra.mxu0 %v7649
    %7858 = vmatprep.subr.bf16.mxu0 0
    %7859 = vmatpush2.bf16.msra.mxu0 %v7648
    %7860 = vmatprep.subr.bf16.mxu0 0
    %7861 = vmatpush2.bf16.msra.mxu0 %v7647
    %7862 = vmatprep.subr.bf16.mxu0 0
    %7863 = vmatpush2.bf16.msra.mxu0 %v7646
    %7864 = vmatprep.subr.bf16.mxu0 0
    %7865 = vmatpush2.bf16.msra.mxu0 %v7645
    %7866 = vmatprep.subr.bf16.mxu0 0
    %7867 = vmatpush2.bf16.msra.mxu0 %v7644
    %7868 = vmatprep.subr.bf16.mxu0 0
    %7869 = vmatpush2.bf16.msra.mxu0 %v7643
    %7870 = vmatprep.mubr.bf16.mxu0 %v7202
    %7871 = vmatmul.mubr.bf16.gmra.mxu0 %v7201
    %v7872 = vpop.f32.mrf.mxu0
    %v7873 = vadd.f32 %v7832, %v7872
    %v7874 = vpop.f32.mrf.mxu0
    %v7875 = vpop.f32.mrf.mxu0
    %v7876 = vadd.f32 %v7835, %v7875
    %v7877 = vpop.f32.mrf.mxu0
    %7878 = vdwg.mxu0
    %7879 = vst [vmem:[#allocation10] sm:$0xff] %v7873
    %7880 = vst [vmem:[#allocation10 + $0x8] sm:$0xff] %v7876
    // Predicated region
    $region34: #{tpu_custom_call.1} parent=1 // pred_check
      _
    $region35: #{tpu_custom_call.1} parent=1 // pred_check_branch
      %7882 = sbr.rel (0) target = $region37
    $region36: #{tpu_custom_call.1} parent=1 // pred_region
      %s7884 = ssub.s32 256, 256
      %7885 = vsyncadd [#allocation4], %s7884
      %s7886 = sshll.u32 [#allocation10], 4
      %s7887 = int_to_ptr.vmem [resolvable:$true] %s7886
      %7892 = dma.vmem_to_hbm [thread:$0]  %s7887, 256, %s4, [#allocation4], 128, 128, 8
    $region37: #{tpu_custom_call.1} parent=1 // pred_fallthru
      _
    // Predicated region
    $region38: #{tpu_custom_call.1} parent=1 // pred_check
      _
    $region39: #{tpu_custom_call.1} parent=1 // pred_check_branch
      %7894 = sbr.rel (0) target = $region41
    $region40: #{tpu_custom_call.1} parent=1 // pred_region
      %s7896 = ssub.s32 128, 128
      %7897 = vsyncadd [#allocation12], %s7896
      %s7899 = sshll.u32 [#allocation11], 4
      %s7900 = int_to_ptr.vmem [resolvable:$true] %s7899
      %7902 = dma.vmem_to_hbm [thread:$0]  %s7900, 128, %s5, [#allocation12]
    $region41: #{tpu_custom_call.1} parent=1 // pred_fallthru
      _
    // Predicated region
    $region42: #{tpu_custom_call.1} parent=1 // pred_check
      _
    $region43: #{tpu_custom_call.1} parent=1 // pred_check_branch
      %7904 = sbr.rel (0) target = $region45
    $region44: #{tpu_custom_call.1} parent=1 // pred_region
      %s7906 = ssub.s32 128, 128
      %7907 = vsyncadd [#allocation12], %s7906
      %s7909 = sshll.u32 [#allocation13], 4
      %s7910 = int_to_ptr.vmem [resolvable:$true] %s7909
      %7912 = dma.vmem_to_hbm [thread:$0]  %s7910, 128, %s6, [#allocation12]
    $region45: #{tpu_custom_call.1} parent=1 // pred_fallthru
      _
    // Predicated region
    $region46: #{tpu_custom_call.1} parent=1 // pred_check
      _
    $region47: #{tpu_custom_call.1} parent=1 // pred_check_branch
      %7914 = sbr.rel (0) target = $region49
    $region48: #{tpu_custom_call.1} parent=1 // pred_region
      %7915 = dma.done [#allocation4], 256
    $region49: #{tpu_custom_call.1} parent=1 // pred_fallthru
      _
    // Predicated region
    $region50: #{tpu_custom_call.1} parent=1 // pred_check
      _
    $region51: #{tpu_custom_call.1} parent=1 // pred_check_branch
      %7917 = sbr.rel (0) target = $region53
    $region52: #{tpu_custom_call.1} parent=1 // pred_region
      %7918 = dma.done [#allocation12], 128
    $region53: #{tpu_custom_call.1} parent=1 // pred_fallthru
      _
    // Predicated region
    $region54: #{tpu_custom_call.1} parent=1 // pred_check
      _
    $region55: #{tpu_custom_call.1} parent=1 // pred_check_branch
      %7920 = sbr.rel (0) target = $region57
    $region56: #{tpu_custom_call.1} parent=1 // pred_region
      %7921 = dma.done [#allocation12], 128
    $region57: #{tpu_custom_call.1} parent=1 // pred_fallthru
      _
    %7922 = vsyncpa [#allocation3], 1
    %7923 = vsyncpa [#allocation6], 1
    %7924 = vsyncpa [#allocation9], 1
    %7925 = vsyncpa [#allocation4], 1
    %7926 = vsyncpa [#allocation12], 1

</llo_original>
